<compile_context>
chip_gen: v6e
topology: v6e:2x2x1
jax: 0.10.0
libtpu: 0.0.40
codegen_flags: <defaults>
</compile_context>

<pallas_src>
import jax
import jax.numpy as jnp
from jax.experimental import pallas as pl
from jax.experimental.pallas import tpu as pltpu

_PRECISION = jax.lax.Precision.HIGHEST  # full-f32 MXU path in kernel AND reference


def _leaky(v):
    # LeakyReLU(negative_slope=0.1)
    return jnp.where(v >= 0, v, 0.1 * v)


def _dot(a, b):
    return jnp.dot(a, b, preferred_element_type=jnp.float32, precision=_PRECISION)


def _conv1d_rows(x2, w_taps, bias, not_first, not_last):
    """Conv1d(kernel_size=3, stride=1, padding=1) on batch-folded rows.

    x2:        (BT*L, Cin)   rows ordered (example, position)
    w_taps:    (3, Cin, Cout) tap k multiplies x[l + k - 1]
    bias:      (1, Cout)
    not_first: (BT*L, 1) 1.0 where l != 0      (rows that have a valid left neighbour)
    not_last:  (BT*L, 1) 1.0 where l != L - 1  (rows that have a valid right neighbour)
    """
    rows, cin = x2.shape
    zero_row = jnp.zeros((1, cin), dtype=x2.dtype)
    # Shift by one row along the folded (example, position) axis, then zero the
    # rows that crossed an example boundary so neighbouring examples in the
    # folded row axis never leak into each other (per-example zero padding).
    x_m1 = jnp.concatenate([zero_row, x2[:rows - 1, :]], axis=0) * not_first   # x[l-1]
    x_p1 = jnp.concatenate([x2[1:, :], zero_row], axis=0) * not_last           # x[l+1]
    y = (_dot(x_m1, w_taps[0]) + _dot(x2, w_taps[1]) + _dot(x_p1, w_taps[2])
         + bias)
    return _leaky(y)


def tensor_transform_kernel(x_ref,
                            c1w_ref, c1b_ref, c2w_ref, c2b_ref, c3w_ref, c3b_ref,
                            f1w_ref, f1b_ref, f2w_ref, f2b_ref, f3w_ref, f3b_ref,
                            o_ref):
    bt, seq_len, cin = x_ref.shape
    rows = bt * seq_len
    x2 = x_ref[...].reshape(rows, cin)                             # (BT*L, Cin)

    # Per-example boundary masks: computed once, re-used by all three conv
    # layers; (rows, 1) column broadcast over lanes instead of a full
    # (rows, Cin) iota per layer.
    pos = jax.lax.broadcasted_iota(jnp.int32, (rows, 1), 0) % seq_len
    not_first = (pos != 0).astype(jnp.float32)
    not_last = (pos != seq_len - 1).astype(jnp.float32)

    # Conv stack: channels-last rows, contraction over channels (MXU dots).
    h = _conv1d_rows(x2, c1w_ref[...], c1b_ref[...], not_first, not_last)
    h = _conv1d_rows(h, c2w_ref[...], c2b_ref[...], not_first, not_last)
    h = _conv1d_rows(h, c3w_ref[...], c3b_ref[...], not_first, not_last)  # (BT*L, Cout)

    # Layout switch: the FFNN stack contracts over the length axis L, so rows
    # become (example, out_channel) and features become L.
    cout = h.shape[-1]
    g = jnp.swapaxes(h.reshape(bt, seq_len, cout), 1, 2)           # (BT, Cout, L)
    g = g.reshape(bt * cout, seq_len)                              # (BT*Cout, L)

    z = _leaky(_dot(g, f1w_ref[...]) + f1b_ref[...])
    z = _leaky(_dot(z, f2w_ref[...]) + f2b_ref[...])
    z = _leaky(_dot(z, f3w_ref[...]) + f3b_ref[...])               # (BT*Cout, Fo)

    o_ref[...] = z.reshape(o_ref.shape).astype(o_ref.dtype)


def _const_spec(arr):
    idx = (0,) * arr.ndim
    return pl.BlockSpec(arr.shape, lambda i, _idx=idx: _idx)


def tensor_transform(x, params, *, batch_tile=None):
    """x: (B, C_in, L); params in PyTorch layout. Returns (B, C_out, F_out)."""
    (cw1, cb1), (cw2, cb2), (cw3, cb3), (fw1, fb1), (fw2, fb2), (fw3, fb3) = params
    B, c_in, L = x.shape
    hid_c1, hid_c2, c_out = cw1.shape[0], cw2.shape[0], cw3.shape[0]
    hid_f1, hid_f2, f_out = fw1.shape[0], fw2.shape[0], fw3.shape[0]
    assert fw1.shape[1] == L, "ffnn1 in_features must equal the conv length"

    if batch_tile is None:
        # Fold enough examples per grid step to give the MXU >=256 LHS rows.
        batch_tile = min(B, max(1, 256 // L))
    while B % batch_tile:
        batch_tile -= 1
    grid_steps = B // batch_tile

    # One-time parameter re-layout into kernel-friendly (in, out) form.
    taps = lambda w: jnp.transpose(w, (2, 1, 0))        # (Co, Ci, 3) -> (3, Ci, Co)
    c1w, c2w, c3w = taps(cw1), taps(cw2), taps(cw3)
    c1b, c2b, c3b = cb1.reshape(1, -1), cb2.reshape(1, -1), cb3.reshape(1, -1)
    f1w, f2w, f3w = fw1.T, fw2.T, fw3.T
    f1b, f2b, f3b = fb1.reshape(1, -1), fb2.reshape(1, -1), fb3.reshape(1, -1)

    # Channels-last activations so the conv runs as row-folded (B*L, C) matmuls
    # (a tiny transpose, fusible with whatever produces x).
    x_t = jnp.swapaxes(x, 1, 2)                          # (B, L, C_in)

    weights = (c1w, c1b, c2w, c2b, c3w, c3b, f1w, f1b, f2w, f2b, f3w, f3b)

    # Advisory cost estimate so XLA's scheduler sees the real work / traffic.
    flops = 2 * B * (
        L * 3 * (c_in * hid_c1 + hid_c1 * hid_c2 + hid_c2 * c_out)
        + c_out * (L * hid_f1 + hid_f1 * hid_f2 + hid_f2 * f_out))
    bytes_accessed = 4 * int(x.size + B * c_out * f_out
                             + sum(int(w.size) for w in weights))

    return pl.pallas_call(
        tensor_transform_kernel,
        out_shape=jax.ShapeDtypeStruct((B, c_out, f_out), x.dtype),
        grid=(grid_steps,),
        in_specs=[pl.BlockSpec((batch_tile, L, c_in), lambda i: (i, 0, 0))]
                 + [_const_spec(w) for w in weights],
        out_specs=pl.BlockSpec((batch_tile, c_out, f_out), lambda i: (i, 0, 0)),
        compiler_params=pltpu.CompilerParams(
            # Single-step grid (tiny batch): keep it on one TensorCore rather
            # than duplicating the constant-weight fetch across megacore cores.
            # With more than one batch tile, shard the grid across cores.
            dimension_semantics=("parallel",) if grid_steps > 1 else ("arbitrary",),
        ),
        cost_estimate=pl.CostEstimate(flops=int(flops), transcendentals=0,
                                      bytes_accessed=bytes_accessed),
    )(x_t, *weights)


def reference(x, params):
    """Pure-JAX reimplementation of the PyTorch forward (eval mode)."""
    (cw1, cb1), (cw2, cb2), (cw3, cb3), (fw1, fb1), (fw2, fb2), (fw3, fb3) = params

    def conv1d(h, w, b):
        L = h.shape[-1]
        hp = jnp.pad(h, ((0, 0), (0, 0), (1, 1)))
        y = (jnp.einsum("bcl,oc->bol", hp[:, :, 0:L], w[:, :, 0], precision=_PRECISION)
             + jnp.einsum("bcl,oc->bol", hp[:, :, 1:L + 1], w[:, :, 1], precision=_PRECISION)
             + jnp.einsum("bcl,oc->bol", hp[:, :, 2:L + 2], w[:, :, 2], precision=_PRECISION))
        return y + b[None, :, None]

    h = _leaky(conv1d(x, cw1, cb1))
    h = _leaky(conv1d(h, cw2, cb2))
    h = _leaky(conv1d(h, cw3, cb3))
    h = _leaky(jnp.einsum("bcl,fl->bcf", h, fw1, precision=_PRECISION) + fb1)
    h = _leaky(jnp.einsum("bcf,gf->bcg", h, fw2, precision=_PRECISION) + fb2)
    h = _leaky(jnp.einsum("bcg,og->bco", h, fw3, precision=_PRECISION) + fb3)
    return h


if __name__ == "__main__":
    # Small shapes consistent with the module (channel dims multiples of 8 and
    # L multiple of 8 keep every in-kernel reshape tile-aligned).
    B = 2
    C_IN, HID_C1, HID_C2, C_OUT = 8, 16, 16, 8
    L = 16                      # conv length == ffnn1 in_features_dim
    HID_F1, HID_F2, F_OUT = 32, 32, 16

    key = jax.random.PRNGKey(0)
    ks = jax.random.split(key, 13)

    x = jax.random.normal(ks[0], (B, C_IN, L), dtype=jnp.float32)

    params = (
        (jax.random.normal(ks[1], (HID_C1, C_IN, 3), dtype=jnp.float32) * 0.2,
         jax.random.normal(ks[2], (HID_C1,), dtype=jnp.float32) * 0.05),
        (jax.random.normal(ks[3], (HID_C2, HID_C1, 3), dtype=jnp.float32) * 0.2,
         jax.random.normal(ks[4], (HID_C2,), dtype=jnp.float32) * 0.05),
        (jax.random.normal(ks[5], (C_OUT, HID_C2, 3), dtype=jnp.float32) * 0.2,
         jax.random.normal(ks[6], (C_OUT,), dtype=jnp.float32) * 0.05),
        (jax.random.normal(ks[7], (HID_F1, L), dtype=jnp.float32) * 0.2,
         jax.random.normal(ks[8], (HID_F1,), dtype=jnp.float32) * 0.05),
        (jax.random.normal(ks[9], (HID_F2, HID_F1), dtype=jnp.float32) * 0.2,
         jax.random.normal(ks[10], (HID_F2,), dtype=jnp.float32) * 0.05),
        (jax.random.normal(ks[11], (F_OUT, HID_F2), dtype=jnp.float32) * 0.2,
         jax.random.normal(ks[12], (F_OUT,), dtype=jnp.float32) * 0.05),
    )

    out = tensor_transform(x, params)
    out = jax.block_until_ready(out)

    ref = reference(x, params)
    assert out.shape == (B, C_OUT, F_OUT), out.shape
    max_err = float(jnp.max(jnp.abs(out - ref)))
    assert jnp.allclose(out, ref, atol=1e-3, rtol=1e-3), f"mismatch, max_err={max_err}"

    print("KERNEL_OK")
</pallas_src>

<mosaic_0001>
module attributes {stable_mosaic.version = 11 : i64} {
  func.func @tensor_transform_kernel(%arg0: i32, %arg1: memref<2x16x8xf32, #tpu.memory_space<vmem>>, %arg2: memref<3x8x16xf32, #tpu.memory_space<vmem>>, %arg3: memref<1x16xf32, #tpu.memory_space<vmem>>, %arg4: memref<3x16x16xf32, #tpu.memory_space<vmem>>, %arg5: memref<1x16xf32, #tpu.memory_space<vmem>>, %arg6: memref<3x16x8xf32, #tpu.memory_space<vmem>>, %arg7: memref<1x8xf32, #tpu.memory_space<vmem>>, %arg8: memref<16x32xf32, #tpu.memory_space<vmem>>, %arg9: memref<1x32xf32, #tpu.memory_space<vmem>>, %arg10: memref<32x32xf32, #tpu.memory_space<vmem>>, %arg11: memref<1x32xf32, #tpu.memory_space<vmem>>, %arg12: memref<32x16xf32, #tpu.memory_space<vmem>>, %arg13: memref<1x16xf32, #tpu.memory_space<vmem>>, %arg14: memref<2x8x16xf32, #tpu.memory_space<vmem>>) attributes {dimension_semantics = [#tpu.dimension_semantics<arbitrary>], iteration_bounds = array<i64: 1>, scalar_prefetch = 0 : i64, scratch_operands = 0 : i64, tpu.core_type = #tpu.core_type<tc>, window_params = [{transform_indices = @transform_0, window_bounds = array<i64: 2, 16, 8>}, {pipeline_mode = #tpu.pipeline_mode<synchronous>, transform_indices = @transform_1, window_bounds = array<i64: 3, 8, 16>}, {pipeline_mode = #tpu.pipeline_mode<synchronous>, transform_indices = @transform_2, window_bounds = array<i64: 1, 16>}, {pipeline_mode = #tpu.pipeline_mode<synchronous>, transform_indices = @transform_3, window_bounds = array<i64: 3, 16, 16>}, {pipeline_mode = #tpu.pipeline_mode<synchronous>, transform_indices = @transform_4, window_bounds = array<i64: 1, 16>}, {pipeline_mode = #tpu.pipeline_mode<synchronous>, transform_indices = @transform_5, window_bounds = array<i64: 3, 16, 8>}, {pipeline_mode = #tpu.pipeline_mode<synchronous>, transform_indices = @transform_6, window_bounds = array<i64: 1, 8>}, {pipeline_mode = #tpu.pipeline_mode<synchronous>, transform_indices = @transform_7, window_bounds = array<i64: 16, 32>}, {pipeline_mode = #tpu.pipeline_mode<synchronous>, transform_indices = @transform_8, window_bounds = array<i64: 1, 32>}, {pipeline_mode = #tpu.pipeline_mode<synchronous>, transform_indices = @transform_9, window_bounds = array<i64: 32, 32>}, {pipeline_mode = #tpu.pipeline_mode<synchronous>, transform_indices = @transform_10, window_bounds = array<i64: 1, 32>}, {pipeline_mode = #tpu.pipeline_mode<synchronous>, transform_indices = @transform_11, window_bounds = array<i64: 32, 16>}, {pipeline_mode = #tpu.pipeline_mode<synchronous>, transform_indices = @transform_12, window_bounds = array<i64: 1, 16>}, {transform_indices = @transform_13, window_bounds = array<i64: 2, 8, 16>}]} {
    %c0 = arith.constant 0 : index
    %c0_0 = arith.constant 0 : index
    %c0_1 = arith.constant 0 : index
    %0 = vector.load %arg1[%c0, %c0_0, %c0_1] : memref<2x16x8xf32, #tpu.memory_space<vmem>>, vector<2x16x8xf32>
    %1 = vector.shape_cast %0 : vector<2x16x8xf32> to vector<32x8xf32>
    %2 = tpu.iota {dimensions = array<i32: 0>} : vector<32x1xi32>
    %c16_i32 = arith.constant 16 : i32
    %c0_i32 = arith.constant 0 : i32
    %3 = arith.cmpi eq, %c16_i32, %c0_i32 : i32
    %c1_i32 = arith.constant 1 : i32
    %4 = arith.select %3, %c1_i32, %c16_i32 : i32
    %5 = vector.broadcast %4 : i32 to vector<32x1xi32>
    %6 = arith.remsi %2, %5 : vector<32x1xi32>
    %c0_i32_2 = arith.constant 0 : i32
    %7 = vector.broadcast %c0_i32_2 : i32 to vector<32x1xi32>
    %8 = arith.cmpi ne, %6, %7 : vector<32x1xi32>
    %c0_i32_3 = arith.constant 0 : i32
    %9 = vector.broadcast %c0_i32_3 : i32 to vector<32x1xi32>
    %10 = arith.cmpi slt, %6, %9 : vector<32x1xi32>
    %c0_i32_4 = arith.constant 0 : i32
    %11 = arith.cmpi slt, %4, %c0_i32_4 : i32
    %12 = vector.broadcast %11 : i1 to vector<32x1xi1>
    %13 = vector.broadcast %12 : vector<32x1xi1> to vector<32x1xi1>
    %14 = arith.xori %10, %13 : vector<32x1xi1>
    %15 = arith.andi %14, %8 : vector<32x1xi1>
    %16 = vector.broadcast %4 : i32 to vector<32x1xi32>
    %17 = arith.addi %6, %16 : vector<32x1xi32>
    %18 = arith.select %15, %17, %6 : vector<32x1xi1>, vector<32x1xi32>
    %c0_i32_5 = arith.constant 0 : i32
    %19 = vector.broadcast %c0_i32_5 : i32 to vector<32x1xi32>
    %20 = arith.cmpi ne, %18, %19 : vector<32x1xi32>
    %21 = arith.extui %20 : vector<32x1xi1> to vector<32x1xi32>
    %22 = arith.sitofp %21 : vector<32x1xi32> to vector<32x1xf32>
    %c15_i32 = arith.constant 15 : i32
    %23 = vector.broadcast %c15_i32 : i32 to vector<32x1xi32>
    %24 = arith.cmpi ne, %18, %23 : vector<32x1xi32>
    %25 = arith.extui %24 : vector<32x1xi1> to vector<32x1xi32>
    %26 = arith.sitofp %25 : vector<32x1xi32> to vector<32x1xf32>
    %c0_6 = arith.constant 0 : index
    %c0_7 = arith.constant 0 : index
    %c0_8 = arith.constant 0 : index
    %27 = vector.load %arg2[%c0_6, %c0_7, %c0_8] : memref<3x8x16xf32, #tpu.memory_space<vmem>>, vector<3x8x16xf32>
    %c0_9 = arith.constant 0 : index
    %c0_10 = arith.constant 0 : index
    %28 = vector.load %arg3[%c0_9, %c0_10] : memref<1x16xf32, #tpu.memory_space<vmem>>, vector<1x16xf32>
    %cst = arith.constant 0.000000e+00 : f32
    %29 = vector.broadcast %cst : f32 to vector<1x8xf32>
    %30 = vector.extract_strided_slice %1 {offsets = [0, 0], sizes = [31, 8], strides = [1, 1]} : vector<32x8xf32> to vector<31x8xf32>
    %31 = tpu.concatenate %29, %30 in 0 : vector<1x8xf32>, vector<31x8xf32> -> vector<32x8xf32>
    %32 = vector.broadcast %22 : vector<32x1xf32> to vector<32x8xf32>
    %33 = arith.mulf %31, %32 : vector<32x8xf32>
    %34 = vector.extract_strided_slice %1 {offsets = [1, 0], sizes = [31, 8], strides = [1, 1]} : vector<32x8xf32> to vector<31x8xf32>
    %35 = tpu.concatenate %34, %29 in 0 : vector<31x8xf32>, vector<1x8xf32> -> vector<32x8xf32>
    %36 = vector.broadcast %26 : vector<32x1xf32> to vector<32x8xf32>
    %37 = arith.mulf %35, %36 : vector<32x8xf32>
    %38 = vector.extract_strided_slice %27 {offsets = [0, 0, 0], sizes = [1, 8, 16], strides = [1, 1, 1]} : vector<3x8x16xf32> to vector<1x8x16xf32>
    %39 = vector.shape_cast %38 : vector<1x8x16xf32> to vector<8x16xf32>
    %cst_11 = arith.constant dense<0.000000e+00> : vector<32x16xf32>
    %40 = tpu.matmul %33, %39, %cst_11 {dimension_numbers = #tpu.dot_dimension_numbers<[1], [0], [0], [1], [0, 0, 1, 1], [], []>, precision = #tpu.contract_precision<fp32>} : vector<32x8xf32>, vector<8x16xf32>, vector<32x16xf32> -> vector<32x16xf32>
    %41 = vector.extract_strided_slice %27 {offsets = [1, 0, 0], sizes = [1, 8, 16], strides = [1, 1, 1]} : vector<3x8x16xf32> to vector<1x8x16xf32>
    %42 = vector.shape_cast %41 : vector<1x8x16xf32> to vector<8x16xf32>
    %cst_12 = arith.constant dense<0.000000e+00> : vector<32x16xf32>
    %43 = tpu.matmul %1, %42, %cst_12 {dimension_numbers = #tpu.dot_dimension_numbers<[1], [0], [0], [1], [0, 0, 1, 1], [], []>, precision = #tpu.contract_precision<fp32>} : vector<32x8xf32>, vector<8x16xf32>, vector<32x16xf32> -> vector<32x16xf32>
    %44 = arith.addf %40, %43 : vector<32x16xf32>
    %45 = vector.extract_strided_slice %27 {offsets = [2, 0, 0], sizes = [1, 8, 16], strides = [1, 1, 1]} : vector<3x8x16xf32> to vector<1x8x16xf32>
    %46 = vector.shape_cast %45 : vector<1x8x16xf32> to vector<8x16xf32>
    %cst_13 = arith.constant dense<0.000000e+00> : vector<32x16xf32>
    %47 = tpu.matmul %37, %46, %cst_13 {dimension_numbers = #tpu.dot_dimension_numbers<[1], [0], [0], [1], [0, 0, 1, 1], [], []>, precision = #tpu.contract_precision<fp32>} : vector<32x8xf32>, vector<8x16xf32>, vector<32x16xf32> -> vector<32x16xf32>
    %48 = arith.addf %44, %47 : vector<32x16xf32>
    %49 = vector.broadcast %28 : vector<1x16xf32> to vector<32x16xf32>
    %50 = arith.addf %48, %49 : vector<32x16xf32>
    %cst_14 = arith.constant 0.000000e+00 : f32
    %51 = vector.broadcast %cst_14 : f32 to vector<32x16xf32>
    %52 = arith.cmpf oge, %50, %51 : vector<32x16xf32>
    %cst_15 = arith.constant 1.000000e-01 : f32
    %53 = vector.broadcast %cst_15 : f32 to vector<32x16xf32>
    %54 = arith.mulf %53, %50 : vector<32x16xf32>
    %55 = arith.select %52, %50, %54 : vector<32x16xi1>, vector<32x16xf32>
    %c0_16 = arith.constant 0 : index
    %c0_17 = arith.constant 0 : index
    %c0_18 = arith.constant 0 : index
    %56 = vector.load %arg4[%c0_16, %c0_17, %c0_18] : memref<3x16x16xf32, #tpu.memory_space<vmem>>, vector<3x16x16xf32>
    %c0_19 = arith.constant 0 : index
    %c0_20 = arith.constant 0 : index
    %57 = vector.load %arg5[%c0_19, %c0_20] : memref<1x16xf32, #tpu.memory_space<vmem>>, vector<1x16xf32>
    %cst_21 = arith.constant 0.000000e+00 : f32
    %58 = vector.broadcast %cst_21 : f32 to vector<1x16xf32>
    %59 = vector.extract_strided_slice %55 {offsets = [0, 0], sizes = [31, 16], strides = [1, 1]} : vector<32x16xf32> to vector<31x16xf32>
    %60 = tpu.concatenate %58, %59 in 0 : vector<1x16xf32>, vector<31x16xf32> -> vector<32x16xf32>
    %61 = vector.broadcast %22 : vector<32x1xf32> to vector<32x16xf32>
    %62 = arith.mulf %60, %61 : vector<32x16xf32>
    %63 = vector.extract_strided_slice %55 {offsets = [1, 0], sizes = [31, 16], strides = [1, 1]} : vector<32x16xf32> to vector<31x16xf32>
    %64 = tpu.concatenate %63, %58 in 0 : vector<31x16xf32>, vector<1x16xf32> -> vector<32x16xf32>
    %65 = vector.broadcast %26 : vector<32x1xf32> to vector<32x16xf32>
    %66 = arith.mulf %64, %65 : vector<32x16xf32>
    %67 = vector.extract_strided_slice %56 {offsets = [0, 0, 0], sizes = [1, 16, 16], strides = [1, 1, 1]} : vector<3x16x16xf32> to vector<1x16x16xf32>
    %68 = vector.shape_cast %67 : vector<1x16x16xf32> to vector<16x16xf32>
    %cst_22 = arith.constant dense<0.000000e+00> : vector<32x16xf32>
    %69 = tpu.matmul %62, %68, %cst_22 {dimension_numbers = #tpu.dot_dimension_numbers<[1], [0], [0], [1], [0, 0, 1, 1], [], []>, precision = #tpu.contract_precision<fp32>} : vector<32x16xf32>, vector<16x16xf32>, vector<32x16xf32> -> vector<32x16xf32>
    %70 = vector.extract_strided_slice %56 {offsets = [1, 0, 0], sizes = [1, 16, 16], strides = [1, 1, 1]} : vector<3x16x16xf32> to vector<1x16x16xf32>
    %71 = vector.shape_cast %70 : vector<1x16x16xf32> to vector<16x16xf32>
    %cst_23 = arith.constant dense<0.000000e+00> : vector<32x16xf32>
    %72 = tpu.matmul %55, %71, %cst_23 {dimension_numbers = #tpu.dot_dimension_numbers<[1], [0], [0], [1], [0, 0, 1, 1], [], []>, precision = #tpu.contract_precision<fp32>} : vector<32x16xf32>, vector<16x16xf32>, vector<32x16xf32> -> vector<32x16xf32>
    %73 = arith.addf %69, %72 : vector<32x16xf32>
    %74 = vector.extract_strided_slice %56 {offsets = [2, 0, 0], sizes = [1, 16, 16], strides = [1, 1, 1]} : vector<3x16x16xf32> to vector<1x16x16xf32>
    %75 = vector.shape_cast %74 : vector<1x16x16xf32> to vector<16x16xf32>
    %cst_24 = arith.constant dense<0.000000e+00> : vector<32x16xf32>
    %76 = tpu.matmul %66, %75, %cst_24 {dimension_numbers = #tpu.dot_dimension_numbers<[1], [0], [0], [1], [0, 0, 1, 1], [], []>, precision = #tpu.contract_precision<fp32>} : vector<32x16xf32>, vector<16x16xf32>, vector<32x16xf32> -> vector<32x16xf32>
    %77 = arith.addf %73, %76 : vector<32x16xf32>
    %78 = vector.broadcast %57 : vector<1x16xf32> to vector<32x16xf32>
    %79 = arith.addf %77, %78 : vector<32x16xf32>
    %cst_25 = arith.constant 0.000000e+00 : f32
    %80 = vector.broadcast %cst_25 : f32 to vector<32x16xf32>
    %81 = arith.cmpf oge, %79, %80 : vector<32x16xf32>
    %cst_26 = arith.constant 1.000000e-01 : f32
    %82 = vector.broadcast %cst_26 : f32 to vector<32x16xf32>
    %83 = arith.mulf %82, %79 : vector<32x16xf32>
    %84 = arith.select %81, %79, %83 : vector<32x16xi1>, vector<32x16xf32>
    %c0_27 = arith.constant 0 : index
    %c0_28 = arith.constant 0 : index
    %c0_29 = arith.constant 0 : index
    %85 = vector.load %arg6[%c0_27, %c0_28, %c0_29] : memref<3x16x8xf32, #tpu.memory_space<vmem>>, vector<3x16x8xf32>
    %c0_30 = arith.constant 0 : index
    %c0_31 = arith.constant 0 : index
    %86 = vector.load %arg7[%c0_30, %c0_31] : memref<1x8xf32, #tpu.memory_space<vmem>>, vector<1x8xf32>
    %cst_32 = arith.constant 0.000000e+00 : f32
    %87 = vector.broadcast %cst_32 : f32 to vector<1x16xf32>
    %88 = vector.extract_strided_slice %84 {offsets = [0, 0], sizes = [31, 16], strides = [1, 1]} : vector<32x16xf32> to vector<31x16xf32>
    %89 = tpu.concatenate %87, %88 in 0 : vector<1x16xf32>, vector<31x16xf32> -> vector<32x16xf32>
    %90 = vector.broadcast %22 : vector<32x1xf32> to vector<32x16xf32>
    %91 = arith.mulf %89, %90 : vector<32x16xf32>
    %92 = vector.extract_strided_slice %84 {offsets = [1, 0], sizes = [31, 16], strides = [1, 1]} : vector<32x16xf32> to vector<31x16xf32>
    %93 = tpu.concatenate %92, %87 in 0 : vector<31x16xf32>, vector<1x16xf32> -> vector<32x16xf32>
    %94 = vector.broadcast %26 : vector<32x1xf32> to vector<32x16xf32>
    %95 = arith.mulf %93, %94 : vector<32x16xf32>
    %96 = vector.extract_strided_slice %85 {offsets = [0, 0, 0], sizes = [1, 16, 8], strides = [1, 1, 1]} : vector<3x16x8xf32> to vector<1x16x8xf32>
    %97 = vector.shape_cast %96 : vector<1x16x8xf32> to vector<16x8xf32>
    %cst_33 = arith.constant dense<0.000000e+00> : vector<32x8xf32>
    %98 = tpu.matmul %91, %97, %cst_33 {dimension_numbers = #tpu.dot_dimension_numbers<[1], [0], [0], [1], [0, 0, 1, 1], [], []>, precision = #tpu.contract_precision<fp32>} : vector<32x16xf32>, vector<16x8xf32>, vector<32x8xf32> -> vector<32x8xf32>
    %99 = vector.extract_strided_slice %85 {offsets = [1, 0, 0], sizes = [1, 16, 8], strides = [1, 1, 1]} : vector<3x16x8xf32> to vector<1x16x8xf32>
    %100 = vector.shape_cast %99 : vector<1x16x8xf32> to vector<16x8xf32>
    %cst_34 = arith.constant dense<0.000000e+00> : vector<32x8xf32>
    %101 = tpu.matmul %84, %100, %cst_34 {dimension_numbers = #tpu.dot_dimension_numbers<[1], [0], [0], [1], [0, 0, 1, 1], [], []>, precision = #tpu.contract_precision<fp32>} : vector<32x16xf32>, vector<16x8xf32>, vector<32x8xf32> -> vector<32x8xf32>
    %102 = arith.addf %98, %101 : vector<32x8xf32>
    %103 = vector.extract_strided_slice %85 {offsets = [2, 0, 0], sizes = [1, 16, 8], strides = [1, 1, 1]} : vector<3x16x8xf32> to vector<1x16x8xf32>
    %104 = vector.shape_cast %103 : vector<1x16x8xf32> to vector<16x8xf32>
    %cst_35 = arith.constant dense<0.000000e+00> : vector<32x8xf32>
    %105 = tpu.matmul %95, %104, %cst_35 {dimension_numbers = #tpu.dot_dimension_numbers<[1], [0], [0], [1], [0, 0, 1, 1], [], []>, precision = #tpu.contract_precision<fp32>} : vector<32x16xf32>, vector<16x8xf32>, vector<32x8xf32> -> vector<32x8xf32>
    %106 = arith.addf %102, %105 : vector<32x8xf32>
    %107 = vector.broadcast %86 : vector<1x8xf32> to vector<32x8xf32>
    %108 = arith.addf %106, %107 : vector<32x8xf32>
    %cst_36 = arith.constant 0.000000e+00 : f32
    %109 = vector.broadcast %cst_36 : f32 to vector<32x8xf32>
    %110 = arith.cmpf oge, %108, %109 : vector<32x8xf32>
    %cst_37 = arith.constant 1.000000e-01 : f32
    %111 = vector.broadcast %cst_37 : f32 to vector<32x8xf32>
    %112 = arith.mulf %111, %108 : vector<32x8xf32>
    %113 = arith.select %110, %108, %112 : vector<32x8xi1>, vector<32x8xf32>
    %114 = vector.shape_cast %113 : vector<32x8xf32> to vector<2x16x8xf32>
    %115 = tpu.transpose %114, [0, 2, 1] : vector<2x16x8xf32> -> vector<2x8x16xf32>
    %116 = vector.shape_cast %115 : vector<2x8x16xf32> to vector<16x16xf32>
    %c0_38 = arith.constant 0 : index
    %c0_39 = arith.constant 0 : index
    %117 = vector.load %arg8[%c0_38, %c0_39] : memref<16x32xf32, #tpu.memory_space<vmem>>, vector<16x32xf32>
    %cst_40 = arith.constant dense<0.000000e+00> : vector<16x32xf32>
    %118 = tpu.matmul %116, %117, %cst_40 {dimension_numbers = #tpu.dot_dimension_numbers<[1], [0], [0], [1], [0, 0, 1, 1], [], []>, precision = #tpu.contract_precision<fp32>} : vector<16x16xf32>, vector<16x32xf32>, vector<16x32xf32> -> vector<16x32xf32>
    %c0_41 = arith.constant 0 : index
    %c0_42 = arith.constant 0 : index
    %119 = vector.load %arg9[%c0_41, %c0_42] : memref<1x32xf32, #tpu.memory_space<vmem>>, vector<1x32xf32>
    %120 = vector.broadcast %119 : vector<1x32xf32> to vector<16x32xf32>
    %121 = arith.addf %118, %120 : vector<16x32xf32>
    %cst_43 = arith.constant 0.000000e+00 : f32
    %122 = vector.broadcast %cst_43 : f32 to vector<16x32xf32>
    %123 = arith.cmpf oge, %121, %122 : vector<16x32xf32>
    %cst_44 = arith.constant 1.000000e-01 : f32
    %124 = vector.broadcast %cst_44 : f32 to vector<16x32xf32>
    %125 = arith.mulf %124, %121 : vector<16x32xf32>
    %126 = arith.select %123, %121, %125 : vector<16x32xi1>, vector<16x32xf32>
    %c0_45 = arith.constant 0 : index
    %c0_46 = arith.constant 0 : index
    %127 = vector.load %arg10[%c0_45, %c0_46] : memref<32x32xf32, #tpu.memory_space<vmem>>, vector<32x32xf32>
    %cst_47 = arith.constant dense<0.000000e+00> : vector<16x32xf32>
    %128 = tpu.matmul %126, %127, %cst_47 {dimension_numbers = #tpu.dot_dimension_numbers<[1], [0], [0], [1], [0, 0, 1, 1], [], []>, precision = #tpu.contract_precision<fp32>} : vector<16x32xf32>, vector<32x32xf32>, vector<16x32xf32> -> vector<16x32xf32>
    %c0_48 = arith.constant 0 : index
    %c0_49 = arith.constant 0 : index
    %129 = vector.load %arg11[%c0_48, %c0_49] : memref<1x32xf32, #tpu.memory_space<vmem>>, vector<1x32xf32>
    %130 = vector.broadcast %129 : vector<1x32xf32> to vector<16x32xf32>
    %131 = arith.addf %128, %130 : vector<16x32xf32>
    %cst_50 = arith.constant 0.000000e+00 : f32
    %132 = vector.broadcast %cst_50 : f32 to vector<16x32xf32>
    %133 = arith.cmpf oge, %131, %132 : vector<16x32xf32>
    %cst_51 = arith.constant 1.000000e-01 : f32
    %134 = vector.broadcast %cst_51 : f32 to vector<16x32xf32>
    %135 = arith.mulf %134, %131 : vector<16x32xf32>
    %136 = arith.select %133, %131, %135 : vector<16x32xi1>, vector<16x32xf32>
    %c0_52 = arith.constant 0 : index
    %c0_53 = arith.constant 0 : index
    %137 = vector.load %arg12[%c0_52, %c0_53] : memref<32x16xf32, #tpu.memory_space<vmem>>, vector<32x16xf32>
    %cst_54 = arith.constant dense<0.000000e+00> : vector<16x16xf32>
    %138 = tpu.matmul %136, %137, %cst_54 {dimension_numbers = #tpu.dot_dimension_numbers<[1], [0], [0], [1], [0, 0, 1, 1], [], []>, precision = #tpu.contract_precision<fp32>} : vector<16x32xf32>, vector<32x16xf32>, vector<16x16xf32> -> vector<16x16xf32>
    %c0_55 = arith.constant 0 : index
    %c0_56 = arith.constant 0 : index
    %139 = vector.load %arg13[%c0_55, %c0_56] : memref<1x16xf32, #tpu.memory_space<vmem>>, vector<1x16xf32>
    %140 = vector.broadcast %139 : vector<1x16xf32> to vector<16x16xf32>
    %141 = arith.addf %138, %140 : vector<16x16xf32>
    %cst_57 = arith.constant 0.000000e+00 : f32
    %142 = vector.broadcast %cst_57 : f32 to vector<16x16xf32>
    %143 = arith.cmpf oge, %141, %142 : vector<16x16xf32>
    %cst_58 = arith.constant 1.000000e-01 : f32
    %144 = vector.broadcast %cst_58 : f32 to vector<16x16xf32>
    %145 = arith.mulf %144, %141 : vector<16x16xf32>
    %146 = arith.select %143, %141, %145 : vector<16x16xi1>, vector<16x16xf32>
    %147 = vector.shape_cast %146 : vector<16x16xf32> to vector<2x8x16xf32>
    %c0_59 = arith.constant 0 : index
    %c0_60 = arith.constant 0 : index
    %c0_61 = arith.constant 0 : index
    %148 = vector.load %arg14[%c0_59, %c0_60, %c0_61] : memref<2x8x16xf32, #tpu.memory_space<vmem>>, vector<2x8x16xf32>
    tpu.vector_store %arg14[%c0_59, %c0_60, %c0_61], %147 {strides = array<i32>} : memref<2x8x16xf32, #tpu.memory_space<vmem>>, vector<2x8x16xf32>,
    return
  }
  func.func @transform_0(%arg0: i32) -> (i32, i32, i32) {
    %c0_i32 = arith.constant 0 : i32
    %c0_i32_0 = arith.constant 0 : i32
    %c0_i32_1 = arith.constant 0 : i32
    return %arg0, %c0_i32, %c0_i32_0 : i32, i32, i32
  }
  func.func @transform_1(%arg0: i32) -> (i32, i32, i32) {
    %c0_i32 = arith.constant 0 : i32
    %c0_i32_0 = arith.constant 0 : i32
    %c0_i32_1 = arith.constant 0 : i32
    %c0_i32_2 = arith.constant 0 : i32
    return %c0_i32, %c0_i32_0, %c0_i32_1 : i32, i32, i32
  }
  func.func @transform_2(%arg0: i32) -> (i32, i32) {
    %c0_i32 = arith.constant 0 : i32
    %c0_i32_0 = arith.constant 0 : i32
    %c0_i32_1 = arith.constant 0 : i32
    return %c0_i32, %c0_i32_0 : i32, i32
  }
  func.func @transform_3(%arg0: i32) -> (i32, i32, i32) {
    %c0_i32 = arith.constant 0 : i32
    %c0_i32_0 = arith.constant 0 : i32
    %c0_i32_1 = arith.constant 0 : i32
    %c0_i32_2 = arith.constant 0 : i32
    return %c0_i32, %c0_i32_0, %c0_i32_1 : i32, i32, i32
  }
  func.func @transform_4(%arg0: i32) -> (i32, i32) {
    %c0_i32 = arith.constant 0 : i32
    %c0_i32_0 = arith.constant 0 : i32
    %c0_i32_1 = arith.constant 0 : i32
    return %c0_i32, %c0_i32_0 : i32, i32
  }
  func.func @transform_5(%arg0: i32) -> (i32, i32, i32) {
    %c0_i32 = arith.constant 0 : i32
    %c0_i32_0 = arith.constant 0 : i32
    %c0_i32_1 = arith.constant 0 : i32
    %c0_i32_2 = arith.constant 0 : i32
    return %c0_i32, %c0_i32_0, %c0_i32_1 : i32, i32, i32
  }
  func.func @transform_6(%arg0: i32) -> (i32, i32) {
    %c0_i32 = arith.constant 0 : i32
    %c0_i32_0 = arith.constant 0 : i32
    %c0_i32_1 = arith.constant 0 : i32
    return %c0_i32, %c0_i32_0 : i32, i32
  }
  func.func @transform_7(%arg0: i32) -> (i32, i32) {
    %c0_i32 = arith.constant 0 : i32
    %c0_i32_0 = arith.constant 0 : i32
    %c0_i32_1 = arith.constant 0 : i32
    return %c0_i32, %c0_i32_0 : i32, i32
  }
  func.func @transform_8(%arg0: i32) -> (i32, i32) {
    %c0_i32 = arith.constant 0 : i32
    %c0_i32_0 = arith.constant 0 : i32
    %c0_i32_1 = arith.constant 0 : i32
    return %c0_i32, %c0_i32_0 : i32, i32
  }
  func.func @transform_9(%arg0: i32) -> (i32, i32) {
    %c0_i32 = arith.constant 0 : i32
    %c0_i32_0 = arith.constant 0 : i32
    %c0_i32_1 = arith.constant 0 : i32
    return %c0_i32, %c0_i32_0 : i32, i32
  }
  func.func @transform_10(%arg0: i32) -> (i32, i32) {
    %c0_i32 = arith.constant 0 : i32
    %c0_i32_0 = arith.constant 0 : i32
    %c0_i32_1 = arith.constant 0 : i32
    return %c0_i32, %c0_i32_0 : i32, i32
  }
  func.func @transform_11(%arg0: i32) -> (i32, i32) {
    %c0_i32 = arith.constant 0 : i32
    %c0_i32_0 = arith.constant 0 : i32
    %c0_i32_1 = arith.constant 0 : i32
    return %c0_i32, %c0_i32_0 : i32, i32
  }
  func.func @transform_12(%arg0: i32) -> (i32, i32) {
    %c0_i32 = arith.constant 0 : i32
    %c0_i32_0 = arith.constant 0 : i32
    %c0_i32_1 = arith.constant 0 : i32
    return %c0_i32, %c0_i32_0 : i32, i32
  }
  func.func @transform_13(%arg0: i32) -> (i32, i32, i32) {
    %c0_i32 = arith.constant 0 : i32
    %c0_i32_0 = arith.constant 0 : i32
    %c0_i32_1 = arith.constant 0 : i32
    return %arg0, %c0_i32, %c0_i32_0 : i32, i32, i32
  }
}

</mosaic_0001>

<llo_original>
// kernel: tpu_custom_call.1
$region0: #{tpu_custom_call.1}
  #allocation0 [shape = 'u32[]', space=smem, size = 0x4, offset = 0x4, fixed_abs, tag = 'smem constant byte address 0x4 - core index']
  #allocation1 [shape = 'u32[144,128]{1,0:T(1,128)}', space=vmem, size = 0x12000, scoped, tag = 'internal scratch']
  %s0 = inlined_call_operand.vmem [shape: f32[2,16,8], index: 0, kind: input, shape index: {}]
  %s1 = inlined_call_operand.vmem [shape: f32[3,8,16], index: 1, kind: input, shape index: {}]
  %s2 = inlined_call_operand.vmem [shape: f32[1,16], index: 2, kind: input, shape index: {}]
  %s3 = inlined_call_operand.vmem [shape: f32[3,16,16], index: 3, kind: input, shape index: {}]
  %s4 = inlined_call_operand.vmem [shape: f32[1,16], index: 4, kind: input, shape index: {}]
  %s5 = inlined_call_operand.vmem [shape: f32[3,16,8], index: 5, kind: input, shape index: {}]
  %s6 = inlined_call_operand.vmem [shape: f32[1,8], index: 6, kind: input, shape index: {}]
  %s7 = inlined_call_operand.vmem [shape: f32[16,32], index: 7, kind: input, shape index: {}]
  %s8 = inlined_call_operand.vmem [shape: f32[1,32], index: 8, kind: input, shape index: {}]
  %s9 = inlined_call_operand.vmem [shape: f32[32,32], index: 9, kind: input, shape index: {}]
  %s10 = inlined_call_operand.vmem [shape: f32[1,32], index: 10, kind: input, shape index: {}]
  %s11 = inlined_call_operand.vmem [shape: f32[32,16], index: 11, kind: input, shape index: {}]
  %s12 = inlined_call_operand.vmem [shape: f32[1,16], index: 12, kind: input, shape index: {}]
  %s13 = inlined_call_operand.hbm [shape: f32[2,8,16], index: 13, kind: output, shape index: {}]
  %s14 = sld [smem:[#allocation0]]
  $region62: #{tpu_custom_call.1} parent=0
    _
  %s16 = ssub.s32 1, %s14
  %s17 = scalar_select 0, %s16, %s14
  $region1: #{tpu_custom_call.1} parent=0
    #allocation2 [shape = 'u8[8192]{0}', space=vmem, size = 0x2000, scoped, tag = 'output window, operand 0, single buffered']
    #allocation3 [shape = 's32[1]{0}', space=sflag, size = 0x4, scoped, tag = 'scoped memory for tpu_custom_call.1']
    %18 = vsyncpa [#allocation3], 0
    // Predicated region
    $region2: #{tpu_custom_call.1} parent=1 // pred_check
      _
    $region3: #{tpu_custom_call.1} parent=1 // pred_check_branch
      %20 = sbr.rel (0) target = $region5
    $region4: #{tpu_custom_call.1} parent=1 // pred_region
      _
    $region5: #{tpu_custom_call.1} parent=1 // pred_fallthru
      _
    // Predicated region
    $region6: #{tpu_custom_call.1} parent=1 // pred_check
      _
    $region7: #{tpu_custom_call.1} parent=1 // pred_check_branch
      %22 = sbr.rel (0) target = $region9
    $region8: #{tpu_custom_call.1} parent=1 // pred_region
      _
    $region9: #{tpu_custom_call.1} parent=1 // pred_fallthru
      _
    // Predicated region
    $region10: #{tpu_custom_call.1} parent=1 // pred_check
      _
    $region11: #{tpu_custom_call.1} parent=1 // pred_check_branch
      %24 = sbr.rel (0) target = $region13
    $region12: #{tpu_custom_call.1} parent=1 // pred_region
      _
    $region13: #{tpu_custom_call.1} parent=1 // pred_fallthru
      _
    // Predicated region
    $region14: #{tpu_custom_call.1} parent=1 // pred_check
      _
    $region15: #{tpu_custom_call.1} parent=1 // pred_check_branch
      %26 = sbr.rel (0) target = $region17
    $region16: #{tpu_custom_call.1} parent=1 // pred_region
      _
    $region17: #{tpu_custom_call.1} parent=1 // pred_fallthru
      _
    // Predicated region
    $region18: #{tpu_custom_call.1} parent=1 // pred_check
      _
    $region19: #{tpu_custom_call.1} parent=1 // pred_check_branch
      %28 = sbr.rel (0) target = $region21
    $region20: #{tpu_custom_call.1} parent=1 // pred_region
      _
    $region21: #{tpu_custom_call.1} parent=1 // pred_fallthru
      _
    // Predicated region
    $region22: #{tpu_custom_call.1} parent=1 // pred_check
      _
    $region23: #{tpu_custom_call.1} parent=1 // pred_check_branch
      %30 = sbr.rel (0) target = $region25
    $region24: #{tpu_custom_call.1} parent=1 // pred_region
      _
    $region25: #{tpu_custom_call.1} parent=1 // pred_fallthru
      _
    // Predicated region
    $region26: #{tpu_custom_call.1} parent=1 // pred_check
      _
    $region27: #{tpu_custom_call.1} parent=1 // pred_check_branch
      %32 = sbr.rel (0) target = $region29
    $region28: #{tpu_custom_call.1} parent=1 // pred_region
      _
    $region29: #{tpu_custom_call.1} parent=1 // pred_fallthru
      _
    // Predicated region
    $region30: #{tpu_custom_call.1} parent=1 // pred_check
      _
    $region31: #{tpu_custom_call.1} parent=1 // pred_check_branch
      %34 = sbr.rel (0) target = $region33
    $region32: #{tpu_custom_call.1} parent=1 // pred_region
      _
    $region33: #{tpu_custom_call.1} parent=1 // pred_fallthru
      _
    // Predicated region
    $region34: #{tpu_custom_call.1} parent=1 // pred_check
      _
    $region35: #{tpu_custom_call.1} parent=1 // pred_check_branch
      %36 = sbr.rel (0) target = $region37
    $region36: #{tpu_custom_call.1} parent=1 // pred_region
      _
    $region37: #{tpu_custom_call.1} parent=1 // pred_fallthru
      _
    // Predicated region
    $region38: #{tpu_custom_call.1} parent=1 // pred_check
      _
    $region39: #{tpu_custom_call.1} parent=1 // pred_check_branch
      %38 = sbr.rel (0) target = $region41
    $region40: #{tpu_custom_call.1} parent=1 // pred_region
      _
    $region41: #{tpu_custom_call.1} parent=1 // pred_fallthru
      _
    // Predicated region
    $region42: #{tpu_custom_call.1} parent=1 // pred_check
      _
    $region43: #{tpu_custom_call.1} parent=1 // pred_check_branch
      %40 = sbr.rel (0) target = $region45
    $region44: #{tpu_custom_call.1} parent=1 // pred_region
      _
    $region45: #{tpu_custom_call.1} parent=1 // pred_fallthru
      _
    // Predicated region
    $region46: #{tpu_custom_call.1} parent=1 // pred_check
      _
    $region47: #{tpu_custom_call.1} parent=1 // pred_check_branch
      %42 = sbr.rel (0) target = $region49
    $region48: #{tpu_custom_call.1} parent=1 // pred_region
      _
    $region49: #{tpu_custom_call.1} parent=1 // pred_fallthru
      _
    // Predicated region
    $region50: #{tpu_custom_call.1} parent=1 // pred_check
      _
    $region51: #{tpu_custom_call.1} parent=1 // pred_check_branch
      %44 = sbr.rel (0) target = $region53
    $region52: #{tpu_custom_call.1} parent=1 // pred_region
      _
    $region53: #{tpu_custom_call.1} parent=1 // pred_fallthru
      _
    %v45 = vld [vmem:[%s0] sm:$0xff]
    %v46 = vld [vmem:[%s0 + $0x8] sm:$0xff]
    %v47 = vld [vmem:[%s0 + $0x10] sm:$0xff]
    %v48 = vld [vmem:[%s0 + $0x18] sm:$0xff]
    %v49 = vlaneseq
    %v50 = vshrl.u32 %v49, 7
    %v51 = vadd.s32 %v50, 8
    %v52 = vadd.s32 %v50, 16
    %v53 = vadd.s32 %v50, 24
    %vm54 = vcmp.lt.s32.totalorder %v50, 0
    %v55 = vsub.s32 0, %v50
    %v56 = vsel %vm54, %v55, %v50
    %v57 = vshrl.u32 %v56, 4
    %v58 = vand.u32 %v56, 15
    %v59 = vsub.s32 0, %v58
    %v60 = vsel %vm54, %v59, %v58
    %vm61 = vcmp.lt.s32.totalorder %v51, 0
    %v62 = vsub.s32 0, %v51
    %v63 = vsel %vm61, %v62, %v51
    %v64 = vshrl.u32 %v63, 4
    %v65 = vand.u32 %v63, 15
    %v66 = vsub.s32 0, %v65
    %v67 = vsel %vm61, %v66, %v65
    %vm68 = vcmp.lt.s32.totalorder %v52, 0
    %v69 = vsub.s32 0, %v52
    %v70 = vsel %vm68, %v69, %v52
    %v71 = vshrl.u32 %v70, 4
    %v72 = vand.u32 %v70, 15
    %v73 = vsub.s32 0, %v72
    %v74 = vsel %vm68, %v73, %v72
    %vm75 = vcmp.lt.s32.totalorder %v53, 0
    %v76 = vsub.s32 0, %v53
    %v77 = vsel %vm75, %v76, %v53
    %v78 = vshrl.u32 %v77, 4
    %v79 = vand.u32 %v77, 15
    %v80 = vsub.s32 0, %v79
    %v81 = vsel %vm75, %v80, %v79
    %vm82 = vcmp.ne.s32.totalorder %v60, 0
    %vm83 = vcmp.ne.s32.totalorder %v67, 0
    %vm84 = vcmp.ne.s32.totalorder %v74, 0
    %vm85 = vcmp.ne.s32.totalorder %v81, 0
    %vm86 = vcmp.lt.s32.totalorder %v60, 0
    %vm87 = vcmp.lt.s32.totalorder %v67, 0
    %vm88 = vcmp.lt.s32.totalorder %v74, 0
    %vm89 = vcmp.lt.s32.totalorder %v81, 0
    %vm90 = vmand %vm86, %vm82
    %vm91 = vmand %vm87, %vm83
    %vm92 = vmand %vm88, %vm84
    %vm93 = vmand %vm89, %vm85
    %v94 = vadd.s32 %v60, 16
    %v95 = vadd.s32 %v67, 16
    %v96 = vadd.s32 %v74, 16
    %v97 = vadd.s32 %v81, 16
    %v98 = vsel %vm90, %v94, %v60
    %v99 = vsel %vm91, %v95, %v67
    %v100 = vsel %vm92, %v96, %v74
    %v101 = vsel %vm93, %v97, %v81
    %vm102 = vcmp.ne.s32.totalorder %v98, 0
    %vm103 = vcmp.ne.s32.totalorder %v99, 0
    %vm104 = vcmp.ne.s32.totalorder %v100, 0
    %vm105 = vcmp.ne.s32.totalorder %v101, 0
    %v106 = vsel %vm102, 1, 0
    %v107 = vsel %vm103, 1, 0
    %v108 = vsel %vm104, 1, 0
    %v109 = vsel %vm105, 1, 0
    %v110 = vcvt.s32.f32 %v106
    %v111 = vcvt.s32.f32 %v107
    %v112 = vcvt.s32.f32 %v108
    %v113 = vcvt.s32.f32 %v109
    %vm114 = vcmp.ne.s32.totalorder %v98, 15
    %vm115 = vcmp.ne.s32.totalorder %v99, 15
    %vm116 = vcmp.ne.s32.totalorder %v100, 15
    %vm117 = vcmp.ne.s32.totalorder %v101, 15
    %v118 = vsel %vm114, 1, 0
    %v119 = vsel %vm115, 1, 0
    %v120 = vsel %vm116, 1, 0
    %v121 = vsel %vm117, 1, 0
    %v122 = vcvt.s32.f32 %v118
    %v123 = vcvt.s32.f32 %v119
    %v124 = vcvt.s32.f32 %v120
    %v125 = vcvt.s32.f32 %v121
    %v126 = vld [vmem:[%s1] sm:$0xff]
    %v127 = vld [vmem:[%s1 + $0x8] sm:$0xff]
    %v128 = vld [vmem:[%s1 + $0x10] sm:$0xff]
    %v129 = vld [vmem:[%s2] sm:$0x1]
    %vm134 = vcmask 1040384
    %v135 = vrot.slane %v45, 7
    %v136 = vrot.slane %v46, 7
    %v137 = vsel %vm134, %v135, %v136
    %v138 = vrot.slane %v47, 7
    %v139 = vsel %vm134, %v136, %v138
    %v140 = vrot.slane %v48, 7
    %v141 = vsel %vm134, %v138, %v140
    %v146 = vsel %vm134, 0.0, %v135
    %v147 = vmul.f32 %v146, %v110
    %v148 = vmul.f32 %v137, %v111
    %v149 = vmul.f32 %v139, %v112
    %v150 = vmul.f32 %v141, %v113
    %vm151 = vcmask 1046528
    %v152 = vrot.slane %v45, 1
    %v153 = vrot.slane %v46, 1
    %v154 = vsel %vm151, %v152, %v153
    %v155 = vrot.slane %v47, 1
    %v156 = vsel %vm151, %v153, %v155
    %v157 = vrot.slane %v48, 1
    %v158 = vsel %vm151, %v155, %v157
    %v163 = vsel %vm151, %v157, 0.0
    %v164 = vmul.f32 %v154, %v122
    %v165 = vmul.f32 %v156, %v123
    %v166 = vmul.f32 %v158, %v124
    %v167 = vmul.f32 %v163, %v125
    %vm168 = vcmask 64512
    %v169 = vsel %vm168, %v45, 0
    %v171 = vsel %vm168, %v46, 0
    %v173 = vsel %vm168, %v47, 0
    %v175 = vsel %vm168, %v48, 0
    %177 = vmatprep.subr.mxu0 0.0
    %178 = vmatpush1.msra.mxu0 0.0
    %179 = vmatprep.subr.mxu0 0.0
    %180 = vmatpush1.msra.mxu0 0.0
    %181 = vmatprep.subr.mxu0 0.0
    %182 = vmatpush1.msra.mxu0 0.0
    %183 = vmatprep.subr.mxu0 0.0
    %184 = vmatpush1.msra.mxu0 0.0
    %185 = vmatprep.subr.mxu0 0.0
    %186 = vmatpush1.msra.mxu0 0.0
    %187 = vmatprep.subr.mxu0 0.0
    %188 = vmatpush1.msra.mxu0 0.0
    %189 = vmatprep.subr.mxu0 0.0
    %190 = vmatpush1.msra.mxu0 0.0
    %191 = vmatprep.subr.mxu0 0.0
    %192 = vmatpush1.msra.mxu0 0.0
    %193 = vmatprep.subr.mxu0 0.0
    %194 = vmatpush1.msra.mxu0 0.0
    %195 = vmatprep.subr.mxu0 0.0
    %196 = vmatpush1.msra.mxu0 0.0
    %197 = vmatprep.subr.mxu0 0.0
    %198 = vmatpush1.msra.mxu0 0.0
    %199 = vmatprep.subr.mxu0 0.0
    %200 = vmatpush1.msra.mxu0 0.0
    %201 = vmatprep.subr.mxu0 0.0
    %202 = vmatpush1.msra.mxu0 0.0
    %203 = vmatprep.subr.mxu0 0.0
    %204 = vmatpush1.msra.mxu0 0.0
    %205 = vmatprep.subr.mxu0 0.0
    %206 = vmatpush1.msra.mxu0 0.0
    %207 = vmatprep.subr.mxu0 0.0
    %v208 = vand.u32 %v127, 4294901760
    %209 = vmatpush1.msra.mxu0 %v208
    %210 = vmatprep.subr.mxu0 0.0
    %211 = vmatpush2.msra.mxu0 0.0
    %212 = vmatprep.subr.mxu0 0.0
    %213 = vmatpush2.msra.mxu0 0.0
    %214 = vmatprep.subr.mxu0 0.0
    %215 = vmatpush2.msra.mxu0 0.0
    %216 = vmatprep.subr.mxu0 0.0
    %217 = vmatpush2.msra.mxu0 0.0
    %218 = vmatprep.subr.mxu0 0.0
    %219 = vmatpush2.msra.mxu0 0.0
    %220 = vmatprep.subr.mxu0 0.0
    %221 = vmatpush2.msra.mxu0 0.0
    %222 = vmatprep.subr.mxu0 0.0
    %223 = vmatpush2.msra.mxu0 0.0
    %224 = vmatprep.subr.mxu0 0.0
    %225 = vmatpush2.msra.mxu0 0.0
    %226 = vmatprep.subr.mxu0 0.0
    %227 = vmatpush2.msra.mxu0 0.0
    %228 = vmatprep.subr.mxu0 0.0
    %229 = vmatpush2.msra.mxu0 0.0
    %230 = vmatprep.subr.mxu0 0.0
    %231 = vmatpush2.msra.mxu0 0.0
    %232 = vmatprep.subr.mxu0 0.0
    %233 = vmatpush2.msra.mxu0 0.0
    %234 = vmatprep.subr.mxu0 0.0
    %235 = vmatpush2.msra.mxu0 0.0
    %236 = vmatprep.subr.mxu0 0.0
    %237 = vmatpush2.msra.mxu0 0.0
    %238 = vmatprep.subr.mxu0 0.0
    %239 = vmatpush2.msra.mxu0 0.0
    %240 = vmatprep.subr.mxu0 0.0
    %241 = vmatpush2.msra.mxu0 0.0
    %242 = vmatprep.mubr.f32.mxu0 0.0
    %v243 = vand.u32 %v169, 4294901760
    %v244 = vsub.f32 %v169, %v243
    %v245 = vand.u32 %v244, 4294901760
    %v246 = vsub.f32 %v244, %v245
    %v247 = vand.u32 %v246, 4294901760
    %248 = vmatmul.mubr.f32.gmra.mxu0 %v247
    %v249 = vpop.f32.mrf.mxu0
    %v250 = vadd.f32 0.0, %v249
    %v251 = vpop.f32.mrf.mxu0
    %252 = vmatprep.mubr.f32.mxu0 0.0
    %v253 = vand.u32 %v171, 4294901760
    %v254 = vsub.f32 %v171, %v253
    %v255 = vand.u32 %v254, 4294901760
    %v256 = vsub.f32 %v254, %v255
    %v257 = vand.u32 %v256, 4294901760
    %258 = vmatmul.mubr.f32.gmra.mxu0 %v257
    %v259 = vpop.f32.mrf.mxu0
    %v260 = vadd.f32 0.0, %v259
    %v261 = vpop.f32.mrf.mxu0
    %262 = vmatprep.mubr.f32.mxu0 0.0
    %v263 = vand.u32 %v173, 4294901760
    %v264 = vsub.f32 %v173, %v263
    %v265 = vand.u32 %v264, 4294901760
    %v266 = vsub.f32 %v264, %v265
    %v267 = vand.u32 %v266, 4294901760
    %268 = vmatmul.mubr.f32.gmra.mxu0 %v267
    %v269 = vpop.f32.mrf.mxu0
    %v270 = vadd.f32 0.0, %v269
    %v271 = vpop.f32.mrf.mxu0
    %272 = vmatprep.mubr.f32.mxu0 0.0
    %v273 = vand.u32 %v175, 4294901760
    %v274 = vsub.f32 %v175, %v273
    %v275 = vand.u32 %v274, 4294901760
    %v276 = vsub.f32 %v274, %v275
    %v277 = vand.u32 %v276, 4294901760
    %278 = vmatmul.mubr.f32.gmra.mxu0 %v277
    %v279 = vpop.f32.mrf.mxu0
    %v280 = vadd.f32 0.0, %v279
    %v281 = vpop.f32.mrf.mxu0
    %282 = vdwg.mxu0
    %283 = vmatprep.subr.mxu0 0.0
    %284 = vmatpush1.msra.mxu0 0.0
    %285 = vmatprep.subr.mxu0 0.0
    %286 = vmatpush1.msra.mxu0 0.0
    %287 = vmatprep.subr.mxu0 0.0
    %288 = vmatpush1.msra.mxu0 0.0
    %289 = vmatprep.subr.mxu0 0.0
    %290 = vmatpush1.msra.mxu0 0.0
    %291 = vmatprep.subr.mxu0 0.0
    %292 = vmatpush1.msra.mxu0 0.0
    %293 = vmatprep.subr.mxu0 0.0
    %294 = vmatpush1.msra.mxu0 0.0
    %295 = vmatprep.subr.mxu0 0.0
    %296 = vmatpush1.msra.mxu0 0.0
    %297 = vmatprep.subr.mxu0 0.0
    %298 = vmatpush1.msra.mxu0 0.0
    %299 = vmatprep.subr.mxu0 0.0
    %300 = vmatpush1.msra.mxu0 0.0
    %301 = vmatprep.subr.mxu0 0.0
    %302 = vmatpush1.msra.mxu0 0.0
    %303 = vmatprep.subr.mxu0 0.0
    %304 = vmatpush1.msra.mxu0 0.0
    %305 = vmatprep.subr.mxu0 0.0
    %306 = vmatpush1.msra.mxu0 0.0
    %307 = vmatprep.subr.mxu0 0.0
    %308 = vmatpush1.msra.mxu0 0.0
    %309 = vmatprep.subr.mxu0 0.0
    %310 = vmatpush1.msra.mxu0 0.0
    %311 = vmatprep.subr.mxu0 0.0
    %312 = vmatpush1.msra.mxu0 0.0
    %313 = vmatprep.subr.mxu0 0.0
    %v314 = vand.u32 %v127, 4294901760
    %v315 = vsub.f32 %v127, %v314
    %v316 = vand.u32 %v315, 4294901760
    %v317 = vsub.f32 %v315, %v316
    %v318 = vand.u32 %v317, 4294901760
    %319 = vmatpush1.msra.mxu0 %v318
    %320 = vmatprep.subr.mxu0 0.0
    %321 = vmatpush2.msra.mxu0 0.0
    %322 = vmatprep.subr.mxu0 0.0
    %323 = vmatpush2.msra.mxu0 0.0
    %324 = vmatprep.subr.mxu0 0.0
    %325 = vmatpush2.msra.mxu0 0.0
    %326 = vmatprep.subr.mxu0 0.0
    %327 = vmatpush2.msra.mxu0 0.0
    %328 = vmatprep.subr.mxu0 0.0
    %329 = vmatpush2.msra.mxu0 0.0
    %330 = vmatprep.subr.mxu0 0.0
    %331 = vmatpush2.msra.mxu0 0.0
    %332 = vmatprep.subr.mxu0 0.0
    %333 = vmatpush2.msra.mxu0 0.0
    %334 = vmatprep.subr.mxu0 0.0
    %335 = vmatpush2.msra.mxu0 0.0
    %336 = vmatprep.subr.mxu0 0.0
    %337 = vmatpush2.msra.mxu0 0.0
    %338 = vmatprep.subr.mxu0 0.0
    %339 = vmatpush2.msra.mxu0 0.0
    %340 = vmatprep.subr.mxu0 0.0
    %341 = vmatpush2.msra.mxu0 0.0
    %342 = vmatprep.subr.mxu0 0.0
    %343 = vmatpush2.msra.mxu0 0.0
    %344 = vmatprep.subr.mxu0 0.0
    %345 = vmatpush2.msra.mxu0 0.0
    %346 = vmatprep.subr.mxu0 0.0
    %347 = vmatpush2.msra.mxu0 0.0
    %348 = vmatprep.subr.mxu0 0.0
    %349 = vmatpush2.msra.mxu0 0.0
    %350 = vmatprep.subr.mxu0 0.0
    %351 = vmatpush2.msra.mxu0 0.0
    %352 = vmatprep.mubr.f32.mxu0 0.0
    %v353 = vand.u32 %v169, 4294901760
    %354 = vmatmul.mubr.f32.gmra.mxu0 %v353
    %v355 = vpop.f32.mrf.mxu0
    %v356 = vadd.f32 %v250, %v355
    %v357 = vpop.f32.mrf.mxu0
    %358 = vmatprep.mubr.f32.mxu0 0.0
    %v359 = vand.u32 %v171, 4294901760
    %360 = vmatmul.mubr.f32.gmra.mxu0 %v359
    %v361 = vpop.f32.mrf.mxu0
    %v362 = vadd.f32 %v260, %v361
    %v363 = vpop.f32.mrf.mxu0
    %364 = vmatprep.mubr.f32.mxu0 0.0
    %v365 = vand.u32 %v173, 4294901760
    %366 = vmatmul.mubr.f32.gmra.mxu0 %v365
    %v367 = vpop.f32.mrf.mxu0
    %v368 = vadd.f32 %v270, %v367
    %v369 = vpop.f32.mrf.mxu0
    %370 = vmatprep.mubr.f32.mxu0 0.0
    %v371 = vand.u32 %v175, 4294901760
    %372 = vmatmul.mubr.f32.gmra.mxu0 %v371
    %v373 = vpop.f32.mrf.mxu0
    %v374 = vadd.f32 %v280, %v373
    %v375 = vpop.f32.mrf.mxu0
    %376 = vdwg.mxu0
    %377 = vmatprep.subr.mxu0 0.0
    %378 = vmatpush1.msra.mxu0 0.0
    %379 = vmatprep.subr.mxu0 0.0
    %380 = vmatpush1.msra.mxu0 0.0
    %381 = vmatprep.subr.mxu0 0.0
    %382 = vmatpush1.msra.mxu0 0.0
    %383 = vmatprep.subr.mxu0 0.0
    %384 = vmatpush1.msra.mxu0 0.0
    %385 = vmatprep.subr.mxu0 0.0
    %386 = vmatpush1.msra.mxu0 0.0
    %387 = vmatprep.subr.mxu0 0.0
    %388 = vmatpush1.msra.mxu0 0.0
    %389 = vmatprep.subr.mxu0 0.0
    %390 = vmatpush1.msra.mxu0 0.0
    %391 = vmatprep.subr.mxu0 0.0
    %392 = vmatpush1.msra.mxu0 0.0
    %393 = vmatprep.subr.mxu0 0.0
    %394 = vmatpush1.msra.mxu0 0.0
    %395 = vmatprep.subr.mxu0 0.0
    %396 = vmatpush1.msra.mxu0 0.0
    %397 = vmatprep.subr.mxu0 0.0
    %398 = vmatpush1.msra.mxu0 0.0
    %399 = vmatprep.subr.mxu0 0.0
    %400 = vmatpush1.msra.mxu0 0.0
    %401 = vmatprep.subr.mxu0 0.0
    %402 = vmatpush1.msra.mxu0 0.0
    %403 = vmatprep.subr.mxu0 0.0
    %404 = vmatpush1.msra.mxu0 0.0
    %405 = vmatprep.subr.mxu0 0.0
    %406 = vmatpush1.msra.mxu0 0.0
    %407 = vmatprep.subr.mxu0 0.0
    %v408 = vand.u32 %v127, 4294901760
    %v409 = vsub.f32 %v127, %v408
    %410 = vmatpush1.msra.mxu0 %v409
    %411 = vmatprep.subr.mxu0 0.0
    %412 = vmatpush2.msra.mxu0 0.0
    %413 = vmatprep.subr.mxu0 0.0
    %414 = vmatpush2.msra.mxu0 0.0
    %415 = vmatprep.subr.mxu0 0.0
    %416 = vmatpush2.msra.mxu0 0.0
    %417 = vmatprep.subr.mxu0 0.0
    %418 = vmatpush2.msra.mxu0 0.0
    %419 = vmatprep.subr.mxu0 0.0
    %420 = vmatpush2.msra.mxu0 0.0
    %421 = vmatprep.subr.mxu0 0.0
    %422 = vmatpush2.msra.mxu0 0.0
    %423 = vmatprep.subr.mxu0 0.0
    %424 = vmatpush2.msra.mxu0 0.0
    %425 = vmatprep.subr.mxu0 0.0
    %426 = vmatpush2.msra.mxu0 0.0
    %427 = vmatprep.subr.mxu0 0.0
    %428 = vmatpush2.msra.mxu0 0.0
    %429 = vmatprep.subr.mxu0 0.0
    %430 = vmatpush2.msra.mxu0 0.0
    %431 = vmatprep.subr.mxu0 0.0
    %432 = vmatpush2.msra.mxu0 0.0
    %433 = vmatprep.subr.mxu0 0.0
    %434 = vmatpush2.msra.mxu0 0.0
    %435 = vmatprep.subr.mxu0 0.0
    %436 = vmatpush2.msra.mxu0 0.0
    %437 = vmatprep.subr.mxu0 0.0
    %438 = vmatpush2.msra.mxu0 0.0
    %439 = vmatprep.subr.mxu0 0.0
    %440 = vmatpush2.msra.mxu0 0.0
    %441 = vmatprep.subr.mxu0 0.0
    %442 = vmatpush2.msra.mxu0 0.0
    %443 = vmatprep.mubr.f32.mxu0 0.0
    %v444 = vand.u32 %v169, 4294901760
    %v445 = vsub.f32 %v169, %v444
    %446 = vmatmul.mubr.f32.gmra.mxu0 %v445
    %v447 = vpop.f32.mrf.mxu0
    %v448 = vadd.f32 %v356, %v447
    %v449 = vpop.f32.mrf.mxu0
    %450 = vmatprep.mubr.f32.mxu0 0.0
    %v451 = vand.u32 %v171, 4294901760
    %v452 = vsub.f32 %v171, %v451
    %453 = vmatmul.mubr.f32.gmra.mxu0 %v452
    %v454 = vpop.f32.mrf.mxu0
    %v455 = vadd.f32 %v362, %v454
    %v456 = vpop.f32.mrf.mxu0
    %457 = vmatprep.mubr.f32.mxu0 0.0
    %v458 = vand.u32 %v173, 4294901760
    %v459 = vsub.f32 %v173, %v458
    %460 = vmatmul.mubr.f32.gmra.mxu0 %v459
    %v461 = vpop.f32.mrf.mxu0
    %v462 = vadd.f32 %v368, %v461
    %v463 = vpop.f32.mrf.mxu0
    %464 = vmatprep.mubr.f32.mxu0 0.0
    %v465 = vand.u32 %v175, 4294901760
    %v466 = vsub.f32 %v175, %v465
    %467 = vmatmul.mubr.f32.gmra.mxu0 %v466
    %v468 = vpop.f32.mrf.mxu0
    %v469 = vadd.f32 %v374, %v468
    %v470 = vpop.f32.mrf.mxu0
    %471 = vdwg.mxu0
    %472 = vmatprep.subr.mxu0 0.0
    %473 = vmatpush1.msra.mxu0 0.0
    %474 = vmatprep.subr.mxu0 0.0
    %475 = vmatpush1.msra.mxu0 0.0
    %476 = vmatprep.subr.mxu0 0.0
    %477 = vmatpush1.msra.mxu0 0.0
    %478 = vmatprep.subr.mxu0 0.0
    %479 = vmatpush1.msra.mxu0 0.0
    %480 = vmatprep.subr.mxu0 0.0
    %481 = vmatpush1.msra.mxu0 0.0
    %482 = vmatprep.subr.mxu0 0.0
    %483 = vmatpush1.msra.mxu0 0.0
    %484 = vmatprep.subr.mxu0 0.0
    %485 = vmatpush1.msra.mxu0 0.0
    %486 = vmatprep.subr.mxu0 0.0
    %487 = vmatpush1.msra.mxu0 0.0
    %488 = vmatprep.subr.mxu0 0.0
    %489 = vmatpush1.msra.mxu0 0.0
    %490 = vmatprep.subr.mxu0 0.0
    %491 = vmatpush1.msra.mxu0 0.0
    %492 = vmatprep.subr.mxu0 0.0
    %493 = vmatpush1.msra.mxu0 0.0
    %494 = vmatprep.subr.mxu0 0.0
    %495 = vmatpush1.msra.mxu0 0.0
    %496 = vmatprep.subr.mxu0 0.0
    %497 = vmatpush1.msra.mxu0 0.0
    %498 = vmatprep.subr.mxu0 0.0
    %499 = vmatpush1.msra.mxu0 0.0
    %500 = vmatprep.subr.mxu0 0.0
    %501 = vmatpush1.msra.mxu0 0.0
    %502 = vmatprep.subr.mxu0 0.0
    %v503 = vand.u32 %v127, 4294901760
    %504 = vmatpush1.msra.mxu0 %v503
    %505 = vmatprep.subr.mxu0 0.0
    %506 = vmatpush2.msra.mxu0 0.0
    %507 = vmatprep.subr.mxu0 0.0
    %508 = vmatpush2.msra.mxu0 0.0
    %509 = vmatprep.subr.mxu0 0.0
    %510 = vmatpush2.msra.mxu0 0.0
    %511 = vmatprep.subr.mxu0 0.0
    %512 = vmatpush2.msra.mxu0 0.0
    %513 = vmatprep.subr.mxu0 0.0
    %514 = vmatpush2.msra.mxu0 0.0
    %515 = vmatprep.subr.mxu0 0.0
    %516 = vmatpush2.msra.mxu0 0.0
    %517 = vmatprep.subr.mxu0 0.0
    %518 = vmatpush2.msra.mxu0 0.0
    %519 = vmatprep.subr.mxu0 0.0
    %520 = vmatpush2.msra.mxu0 0.0
    %521 = vmatprep.subr.mxu0 0.0
    %522 = vmatpush2.msra.mxu0 0.0
    %523 = vmatprep.subr.mxu0 0.0
    %524 = vmatpush2.msra.mxu0 0.0
    %525 = vmatprep.subr.mxu0 0.0
    %526 = vmatpush2.msra.mxu0 0.0
    %527 = vmatprep.subr.mxu0 0.0
    %528 = vmatpush2.msra.mxu0 0.0
    %529 = vmatprep.subr.mxu0 0.0
    %530 = vmatpush2.msra.mxu0 0.0
    %531 = vmatprep.subr.mxu0 0.0
    %532 = vmatpush2.msra.mxu0 0.0
    %533 = vmatprep.subr.mxu0 0.0
    %534 = vmatpush2.msra.mxu0 0.0
    %535 = vmatprep.subr.mxu0 0.0
    %536 = vmatpush2.msra.mxu0 0.0
    %537 = vmatprep.mubr.f32.mxu0 0.0
    %v538 = vand.u32 %v169, 4294901760
    %v539 = vsub.f32 %v169, %v538
    %v540 = vand.u32 %v539, 4294901760
    %541 = vmatmul.mubr.f32.gmra.mxu0 %v540
    %v542 = vpop.f32.mrf.mxu0
    %v543 = vadd.f32 %v448, %v542
    %v544 = vpop.f32.mrf.mxu0
    %545 = vmatprep.mubr.f32.mxu0 0.0
    %v546 = vand.u32 %v171, 4294901760
    %v547 = vsub.f32 %v171, %v546
    %v548 = vand.u32 %v547, 4294901760
    %549 = vmatmul.mubr.f32.gmra.mxu0 %v548
    %v550 = vpop.f32.mrf.mxu0
    %v551 = vadd.f32 %v455, %v550
    %v552 = vpop.f32.mrf.mxu0
    %553 = vmatprep.mubr.f32.mxu0 0.0
    %v554 = vand.u32 %v173, 4294901760
    %v555 = vsub.f32 %v173, %v554
    %v556 = vand.u32 %v555, 4294901760
    %557 = vmatmul.mubr.f32.gmra.mxu0 %v556
    %v558 = vpop.f32.mrf.mxu0
    %v559 = vadd.f32 %v462, %v558
    %v560 = vpop.f32.mrf.mxu0
    %561 = vmatprep.mubr.f32.mxu0 0.0
    %v562 = vand.u32 %v175, 4294901760
    %v563 = vsub.f32 %v175, %v562
    %v564 = vand.u32 %v563, 4294901760
    %565 = vmatmul.mubr.f32.gmra.mxu0 %v564
    %v566 = vpop.f32.mrf.mxu0
    %v567 = vadd.f32 %v469, %v566
    %v568 = vpop.f32.mrf.mxu0
    %569 = vdwg.mxu0
    %570 = vmatprep.subr.mxu0 0.0
    %571 = vmatpush1.msra.mxu0 0.0
    %572 = vmatprep.subr.mxu0 0.0
    %573 = vmatpush1.msra.mxu0 0.0
    %574 = vmatprep.subr.mxu0 0.0
    %575 = vmatpush1.msra.mxu0 0.0
    %576 = vmatprep.subr.mxu0 0.0
    %577 = vmatpush1.msra.mxu0 0.0
    %578 = vmatprep.subr.mxu0 0.0
    %579 = vmatpush1.msra.mxu0 0.0
    %580 = vmatprep.subr.mxu0 0.0
    %581 = vmatpush1.msra.mxu0 0.0
    %582 = vmatprep.subr.mxu0 0.0
    %583 = vmatpush1.msra.mxu0 0.0
    %584 = vmatprep.subr.mxu0 0.0
    %585 = vmatpush1.msra.mxu0 0.0
    %586 = vmatprep.subr.mxu0 0.0
    %587 = vmatpush1.msra.mxu0 0.0
    %588 = vmatprep.subr.mxu0 0.0
    %589 = vmatpush1.msra.mxu0 0.0
    %590 = vmatprep.subr.mxu0 0.0
    %591 = vmatpush1.msra.mxu0 0.0
    %592 = vmatprep.subr.mxu0 0.0
    %593 = vmatpush1.msra.mxu0 0.0
    %594 = vmatprep.subr.mxu0 0.0
    %595 = vmatpush1.msra.mxu0 0.0
    %596 = vmatprep.subr.mxu0 0.0
    %597 = vmatpush1.msra.mxu0 0.0
    %598 = vmatprep.subr.mxu0 0.0
    %599 = vmatpush1.msra.mxu0 0.0
    %600 = vmatprep.subr.mxu0 0.0
    %v601 = vand.u32 %v127, 4294901760
    %v602 = vsub.f32 %v127, %v601
    %v603 = vand.u32 %v602, 4294901760
    %604 = vmatpush1.msra.mxu0 %v603
    %605 = vmatprep.subr.mxu0 0.0
    %606 = vmatpush2.msra.mxu0 0.0
    %607 = vmatprep.subr.mxu0 0.0
    %608 = vmatpush2.msra.mxu0 0.0
    %609 = vmatprep.subr.mxu0 0.0
    %610 = vmatpush2.msra.mxu0 0.0
    %611 = vmatprep.subr.mxu0 0.0
    %612 = vmatpush2.msra.mxu0 0.0
    %613 = vmatprep.subr.mxu0 0.0
    %614 = vmatpush2.msra.mxu0 0.0
    %615 = vmatprep.subr.mxu0 0.0
    %616 = vmatpush2.msra.mxu0 0.0
    %617 = vmatprep.subr.mxu0 0.0
    %618 = vmatpush2.msra.mxu0 0.0
    %619 = vmatprep.subr.mxu0 0.0
    %620 = vmatpush2.msra.mxu0 0.0
    %621 = vmatprep.subr.mxu0 0.0
    %622 = vmatpush2.msra.mxu0 0.0
    %623 = vmatprep.subr.mxu0 0.0
    %624 = vmatpush2.msra.mxu0 0.0
    %625 = vmatprep.subr.mxu0 0.0
    %626 = vmatpush2.msra.mxu0 0.0
    %627 = vmatprep.subr.mxu0 0.0
    %628 = vmatpush2.msra.mxu0 0.0
    %629 = vmatprep.subr.mxu0 0.0
    %630 = vmatpush2.msra.mxu0 0.0
    %631 = vmatprep.subr.mxu0 0.0
    %632 = vmatpush2.msra.mxu0 0.0
    %633 = vmatprep.subr.mxu0 0.0
    %634 = vmatpush2.msra.mxu0 0.0
    %635 = vmatprep.subr.mxu0 0.0
    %636 = vmatpush2.msra.mxu0 0.0
    %637 = vmatprep.mubr.f32.mxu0 0.0
    %v638 = vand.u32 %v169, 4294901760
    %639 = vmatmul.mubr.f32.gmra.mxu0 %v638
    %v640 = vpop.f32.mrf.mxu0
    %v641 = vadd.f32 %v543, %v640
    %v642 = vpop.f32.mrf.mxu0
    %643 = vmatprep.mubr.f32.mxu0 0.0
    %v644 = vand.u32 %v171, 4294901760
    %645 = vmatmul.mubr.f32.gmra.mxu0 %v644
    %v646 = vpop.f32.mrf.mxu0
    %v647 = vadd.f32 %v551, %v646
    %v648 = vpop.f32.mrf.mxu0
    %649 = vmatprep.mubr.f32.mxu0 0.0
    %v650 = vand.u32 %v173, 4294901760
    %651 = vmatmul.mubr.f32.gmra.mxu0 %v650
    %v652 = vpop.f32.mrf.mxu0
    %v653 = vadd.f32 %v559, %v652
    %v654 = vpop.f32.mrf.mxu0
    %655 = vmatprep.mubr.f32.mxu0 0.0
    %v656 = vand.u32 %v175, 4294901760
    %657 = vmatmul.mubr.f32.gmra.mxu0 %v656
    %v658 = vpop.f32.mrf.mxu0
    %v659 = vadd.f32 %v567, %v658
    %v660 = vpop.f32.mrf.mxu0
    %661 = vdwg.mxu0
    %662 = vmatprep.subr.mxu0 0.0
    %663 = vmatpush1.msra.mxu0 0.0
    %664 = vmatprep.subr.mxu0 0.0
    %665 = vmatpush1.msra.mxu0 0.0
    %666 = vmatprep.subr.mxu0 0.0
    %667 = vmatpush1.msra.mxu0 0.0
    %668 = vmatprep.subr.mxu0 0.0
    %669 = vmatpush1.msra.mxu0 0.0
    %670 = vmatprep.subr.mxu0 0.0
    %671 = vmatpush1.msra.mxu0 0.0
    %672 = vmatprep.subr.mxu0 0.0
    %673 = vmatpush1.msra.mxu0 0.0
    %674 = vmatprep.subr.mxu0 0.0
    %675 = vmatpush1.msra.mxu0 0.0
    %676 = vmatprep.subr.mxu0 0.0
    %677 = vmatpush1.msra.mxu0 0.0
    %678 = vmatprep.subr.mxu0 0.0
    %679 = vmatpush1.msra.mxu0 0.0
    %680 = vmatprep.subr.mxu0 0.0
    %681 = vmatpush1.msra.mxu0 0.0
    %682 = vmatprep.subr.mxu0 0.0
    %683 = vmatpush1.msra.mxu0 0.0
    %684 = vmatprep.subr.mxu0 0.0
    %685 = vmatpush1.msra.mxu0 0.0
    %686 = vmatprep.subr.mxu0 0.0
    %687 = vmatpush1.msra.mxu0 0.0
    %688 = vmatprep.subr.mxu0 0.0
    %689 = vmatpush1.msra.mxu0 0.0
    %690 = vmatprep.subr.mxu0 0.0
    %691 = vmatpush1.msra.mxu0 0.0
    %692 = vmatprep.subr.mxu0 0.0
    %v693 = vand.u32 %v127, 4294901760
    %694 = vmatpush1.msra.mxu0 %v693
    %695 = vmatprep.subr.mxu0 0.0
    %696 = vmatpush2.msra.mxu0 0.0
    %697 = vmatprep.subr.mxu0 0.0
    %698 = vmatpush2.msra.mxu0 0.0
    %699 = vmatprep.subr.mxu0 0.0
    %700 = vmatpush2.msra.mxu0 0.0
    %701 = vmatprep.subr.mxu0 0.0
    %702 = vmatpush2.msra.mxu0 0.0
    %703 = vmatprep.subr.mxu0 0.0
    %704 = vmatpush2.msra.mxu0 0.0
    %705 = vmatprep.subr.mxu0 0.0
    %706 = vmatpush2.msra.mxu0 0.0
    %707 = vmatprep.subr.mxu0 0.0
    %708 = vmatpush2.msra.mxu0 0.0
    %709 = vmatprep.subr.mxu0 0.0
    %710 = vmatpush2.msra.mxu0 0.0
    %711 = vmatprep.subr.mxu0 0.0
    %712 = vmatpush2.msra.mxu0 0.0
    %713 = vmatprep.subr.mxu0 0.0
    %714 = vmatpush2.msra.mxu0 0.0
    %715 = vmatprep.subr.mxu0 0.0
    %716 = vmatpush2.msra.mxu0 0.0
    %717 = vmatprep.subr.mxu0 0.0
    %718 = vmatpush2.msra.mxu0 0.0
    %719 = vmatprep.subr.mxu0 0.0
    %720 = vmatpush2.msra.mxu0 0.0
    %721 = vmatprep.subr.mxu0 0.0
    %722 = vmatpush2.msra.mxu0 0.0
    %723 = vmatprep.subr.mxu0 0.0
    %724 = vmatpush2.msra.mxu0 0.0
    %725 = vmatprep.subr.mxu0 0.0
    %726 = vmatpush2.msra.mxu0 0.0
    %727 = vmatprep.mubr.f32.mxu0 0.0
    %v728 = vand.u32 %v169, 4294901760
    %729 = vmatmul.mubr.f32.gmra.mxu0 %v728
    %v730 = vpop.f32.mrf.mxu0
    %v731 = vadd.f32 %v641, %v730
    %v732 = vpop.f32.mrf.mxu0
    %733 = vmatprep.mubr.f32.mxu0 0.0
    %v734 = vand.u32 %v171, 4294901760
    %735 = vmatmul.mubr.f32.gmra.mxu0 %v734
    %v736 = vpop.f32.mrf.mxu0
    %v737 = vadd.f32 %v647, %v736
    %v738 = vpop.f32.mrf.mxu0
    %739 = vmatprep.mubr.f32.mxu0 0.0
    %v740 = vand.u32 %v173, 4294901760
    %741 = vmatmul.mubr.f32.gmra.mxu0 %v740
    %v742 = vpop.f32.mrf.mxu0
    %v743 = vadd.f32 %v653, %v742
    %v744 = vpop.f32.mrf.mxu0
    %745 = vmatprep.mubr.f32.mxu0 0.0
    %v746 = vand.u32 %v175, 4294901760
    %747 = vmatmul.mubr.f32.gmra.mxu0 %v746
    %v748 = vpop.f32.mrf.mxu0
    %v749 = vadd.f32 %v659, %v748
    %v750 = vpop.f32.mrf.mxu0
    %751 = vdwg.mxu0
    %v753 = vsel %vm168, %v147, 0
    %v756 = vsel %vm168, %v148, 0
    %v759 = vsel %vm168, %v149, 0
    %v762 = vsel %vm168, %v150, 0
    %764 = vmatprep.subr.mxu0 0.0
    %765 = vmatpush1.msra.mxu0 0.0
    %766 = vmatprep.subr.mxu0 0.0
    %767 = vmatpush1.msra.mxu0 0.0
    %768 = vmatprep.subr.mxu0 0.0
    %769 = vmatpush1.msra.mxu0 0.0
    %770 = vmatprep.subr.mxu0 0.0
    %771 = vmatpush1.msra.mxu0 0.0
    %772 = vmatprep.subr.mxu0 0.0
    %773 = vmatpush1.msra.mxu0 0.0
    %774 = vmatprep.subr.mxu0 0.0
    %775 = vmatpush1.msra.mxu0 0.0
    %776 = vmatprep.subr.mxu0 0.0
    %777 = vmatpush1.msra.mxu0 0.0
    %778 = vmatprep.subr.mxu0 0.0
    %779 = vmatpush1.msra.mxu0 0.0
    %780 = vmatprep.subr.mxu0 0.0
    %781 = vmatpush1.msra.mxu0 0.0
    %782 = vmatprep.subr.mxu0 0.0
    %783 = vmatpush1.msra.mxu0 0.0
    %784 = vmatprep.subr.mxu0 0.0
    %785 = vmatpush1.msra.mxu0 0.0
    %786 = vmatprep.subr.mxu0 0.0
    %787 = vmatpush1.msra.mxu0 0.0
    %788 = vmatprep.subr.mxu0 0.0
    %789 = vmatpush1.msra.mxu0 0.0
    %790 = vmatprep.subr.mxu0 0.0
    %791 = vmatpush1.msra.mxu0 0.0
    %792 = vmatprep.subr.mxu0 0.0
    %793 = vmatpush1.msra.mxu0 0.0
    %794 = vmatprep.subr.mxu0 0.0
    %v795 = vand.u32 %v126, 4294901760
    %796 = vmatpush1.msra.mxu0 %v795
    %797 = vmatprep.subr.mxu0 0.0
    %798 = vmatpush2.msra.mxu0 0.0
    %799 = vmatprep.subr.mxu0 0.0
    %800 = vmatpush2.msra.mxu0 0.0
    %801 = vmatprep.subr.mxu0 0.0
    %802 = vmatpush2.msra.mxu0 0.0
    %803 = vmatprep.subr.mxu0 0.0
    %804 = vmatpush2.msra.mxu0 0.0
    %805 = vmatprep.subr.mxu0 0.0
    %806 = vmatpush2.msra.mxu0 0.0
    %807 = vmatprep.subr.mxu0 0.0
    %808 = vmatpush2.msra.mxu0 0.0
    %809 = vmatprep.subr.mxu0 0.0
    %810 = vmatpush2.msra.mxu0 0.0
    %811 = vmatprep.subr.mxu0 0.0
    %812 = vmatpush2.msra.mxu0 0.0
    %813 = vmatprep.subr.mxu0 0.0
    %814 = vmatpush2.msra.mxu0 0.0
    %815 = vmatprep.subr.mxu0 0.0
    %816 = vmatpush2.msra.mxu0 0.0
    %817 = vmatprep.subr.mxu0 0.0
    %818 = vmatpush2.msra.mxu0 0.0
    %819 = vmatprep.subr.mxu0 0.0
    %820 = vmatpush2.msra.mxu0 0.0
    %821 = vmatprep.subr.mxu0 0.0
    %822 = vmatpush2.msra.mxu0 0.0
    %823 = vmatprep.subr.mxu0 0.0
    %824 = vmatpush2.msra.mxu0 0.0
    %825 = vmatprep.subr.mxu0 0.0
    %826 = vmatpush2.msra.mxu0 0.0
    %827 = vmatprep.subr.mxu0 0.0
    %828 = vmatpush2.msra.mxu0 0.0
    %829 = vmatprep.mubr.f32.mxu0 0.0
    %v830 = vand.u32 %v753, 4294901760
    %v831 = vsub.f32 %v753, %v830
    %v832 = vand.u32 %v831, 4294901760
    %v833 = vsub.f32 %v831, %v832
    %v834 = vand.u32 %v833, 4294901760
    %835 = vmatmul.mubr.f32.gmra.mxu0 %v834
    %v836 = vpop.f32.mrf.mxu0
    %v837 = vadd.f32 %v731, %v836
    %v838 = vpop.f32.mrf.mxu0
    %839 = vmatprep.mubr.f32.mxu0 0.0
    %v840 = vand.u32 %v756, 4294901760
    %v841 = vsub.f32 %v756, %v840
    %v842 = vand.u32 %v841, 4294901760
    %v843 = vsub.f32 %v841, %v842
    %v844 = vand.u32 %v843, 4294901760
    %845 = vmatmul.mubr.f32.gmra.mxu0 %v844
    %v846 = vpop.f32.mrf.mxu0
    %v847 = vadd.f32 %v737, %v846
    %v848 = vpop.f32.mrf.mxu0
    %849 = vmatprep.mubr.f32.mxu0 0.0
    %v850 = vand.u32 %v759, 4294901760
    %v851 = vsub.f32 %v759, %v850
    %v852 = vand.u32 %v851, 4294901760
    %v853 = vsub.f32 %v851, %v852
    %v854 = vand.u32 %v853, 4294901760
    %855 = vmatmul.mubr.f32.gmra.mxu0 %v854
    %v856 = vpop.f32.mrf.mxu0
    %v857 = vadd.f32 %v743, %v856
    %v858 = vpop.f32.mrf.mxu0
    %859 = vmatprep.mubr.f32.mxu0 0.0
    %v860 = vand.u32 %v762, 4294901760
    %v861 = vsub.f32 %v762, %v860
    %v862 = vand.u32 %v861, 4294901760
    %v863 = vsub.f32 %v861, %v862
    %v864 = vand.u32 %v863, 4294901760
    %865 = vmatmul.mubr.f32.gmra.mxu0 %v864
    %v866 = vpop.f32.mrf.mxu0
    %v867 = vadd.f32 %v749, %v866
    %v868 = vpop.f32.mrf.mxu0
    %869 = vdwg.mxu0
    %870 = vmatprep.subr.mxu0 0.0
    %871 = vmatpush1.msra.mxu0 0.0
    %872 = vmatprep.subr.mxu0 0.0
    %873 = vmatpush1.msra.mxu0 0.0
    %874 = vmatprep.subr.mxu0 0.0
    %875 = vmatpush1.msra.mxu0 0.0
    %876 = vmatprep.subr.mxu0 0.0
    %877 = vmatpush1.msra.mxu0 0.0
    %878 = vmatprep.subr.mxu0 0.0
    %879 = vmatpush1.msra.mxu0 0.0
    %880 = vmatprep.subr.mxu0 0.0
    %881 = vmatpush1.msra.mxu0 0.0
    %882 = vmatprep.subr.mxu0 0.0
    %883 = vmatpush1.msra.mxu0 0.0
    %884 = vmatprep.subr.mxu0 0.0
    %885 = vmatpush1.msra.mxu0 0.0
    %886 = vmatprep.subr.mxu0 0.0
    %887 = vmatpush1.msra.mxu0 0.0
    %888 = vmatprep.subr.mxu0 0.0
    %889 = vmatpush1.msra.mxu0 0.0
    %890 = vmatprep.subr.mxu0 0.0
    %891 = vmatpush1.msra.mxu0 0.0
    %892 = vmatprep.subr.mxu0 0.0
    %893 = vmatpush1.msra.mxu0 0.0
    %894 = vmatprep.subr.mxu0 0.0
    %895 = vmatpush1.msra.mxu0 0.0
    %896 = vmatprep.subr.mxu0 0.0
    %897 = vmatpush1.msra.mxu0 0.0
    %898 = vmatprep.subr.mxu0 0.0
    %899 = vmatpush1.msra.mxu0 0.0
    %900 = vmatprep.subr.mxu0 0.0
    %v901 = vand.u32 %v126, 4294901760
    %v902 = vsub.f32 %v126, %v901
    %v903 = vand.u32 %v902, 4294901760
    %v904 = vsub.f32 %v902, %v903
    %v905 = vand.u32 %v904, 4294901760
    %906 = vmatpush1.msra.mxu0 %v905
    %907 = vmatprep.subr.mxu0 0.0
    %908 = vmatpush2.msra.mxu0 0.0
    %909 = vmatprep.subr.mxu0 0.0
    %910 = vmatpush2.msra.mxu0 0.0
    %911 = vmatprep.subr.mxu0 0.0
    %912 = vmatpush2.msra.mxu0 0.0
    %913 = vmatprep.subr.mxu0 0.0
    %914 = vmatpush2.msra.mxu0 0.0
    %915 = vmatprep.subr.mxu0 0.0
    %916 = vmatpush2.msra.mxu0 0.0
    %917 = vmatprep.subr.mxu0 0.0
    %918 = vmatpush2.msra.mxu0 0.0
    %919 = vmatprep.subr.mxu0 0.0
    %920 = vmatpush2.msra.mxu0 0.0
    %921 = vmatprep.subr.mxu0 0.0
    %922 = vmatpush2.msra.mxu0 0.0
    %923 = vmatprep.subr.mxu0 0.0
    %924 = vmatpush2.msra.mxu0 0.0
    %925 = vmatprep.subr.mxu0 0.0
    %926 = vmatpush2.msra.mxu0 0.0
    %927 = vmatprep.subr.mxu0 0.0
    %928 = vmatpush2.msra.mxu0 0.0
    %929 = vmatprep.subr.mxu0 0.0
    %930 = vmatpush2.msra.mxu0 0.0
    %931 = vmatprep.subr.mxu0 0.0
    %932 = vmatpush2.msra.mxu0 0.0
    %933 = vmatprep.subr.mxu0 0.0
    %934 = vmatpush2.msra.mxu0 0.0
    %935 = vmatprep.subr.mxu0 0.0
    %936 = vmatpush2.msra.mxu0 0.0
    %937 = vmatprep.subr.mxu0 0.0
    %938 = vmatpush2.msra.mxu0 0.0
    %939 = vmatprep.mubr.f32.mxu0 0.0
    %v940 = vand.u32 %v753, 4294901760
    %941 = vmatmul.mubr.f32.gmra.mxu0 %v940
    %v942 = vpop.f32.mrf.mxu0
    %v943 = vadd.f32 %v837, %v942
    %v944 = vpop.f32.mrf.mxu0
    %945 = vmatprep.mubr.f32.mxu0 0.0
    %v946 = vand.u32 %v756, 4294901760
    %947 = vmatmul.mubr.f32.gmra.mxu0 %v946
    %v948 = vpop.f32.mrf.mxu0
    %v949 = vadd.f32 %v847, %v948
    %v950 = vpop.f32.mrf.mxu0
    %951 = vmatprep.mubr.f32.mxu0 0.0
    %v952 = vand.u32 %v759, 4294901760
    %953 = vmatmul.mubr.f32.gmra.mxu0 %v952
    %v954 = vpop.f32.mrf.mxu0
    %v955 = vadd.f32 %v857, %v954
    %v956 = vpop.f32.mrf.mxu0
    %957 = vmatprep.mubr.f32.mxu0 0.0
    %v958 = vand.u32 %v762, 4294901760
    %959 = vmatmul.mubr.f32.gmra.mxu0 %v958
    %v960 = vpop.f32.mrf.mxu0
    %v961 = vadd.f32 %v867, %v960
    %v962 = vpop.f32.mrf.mxu0
    %963 = vdwg.mxu0
    %964 = vmatprep.subr.mxu0 0.0
    %965 = vmatpush1.msra.mxu0 0.0
    %966 = vmatprep.subr.mxu0 0.0
    %967 = vmatpush1.msra.mxu0 0.0
    %968 = vmatprep.subr.mxu0 0.0
    %969 = vmatpush1.msra.mxu0 0.0
    %970 = vmatprep.subr.mxu0 0.0
    %971 = vmatpush1.msra.mxu0 0.0
    %972 = vmatprep.subr.mxu0 0.0
    %973 = vmatpush1.msra.mxu0 0.0
    %974 = vmatprep.subr.mxu0 0.0
    %975 = vmatpush1.msra.mxu0 0.0
    %976 = vmatprep.subr.mxu0 0.0
    %977 = vmatpush1.msra.mxu0 0.0
    %978 = vmatprep.subr.mxu0 0.0
    %979 = vmatpush1.msra.mxu0 0.0
    %980 = vmatprep.subr.mxu0 0.0
    %981 = vmatpush1.msra.mxu0 0.0
    %982 = vmatprep.subr.mxu0 0.0
    %983 = vmatpush1.msra.mxu0 0.0
    %984 = vmatprep.subr.mxu0 0.0
    %985 = vmatpush1.msra.mxu0 0.0
    %986 = vmatprep.subr.mxu0 0.0
    %987 = vmatpush1.msra.mxu0 0.0
    %988 = vmatprep.subr.mxu0 0.0
    %989 = vmatpush1.msra.mxu0 0.0
    %990 = vmatprep.subr.mxu0 0.0
    %991 = vmatpush1.msra.mxu0 0.0
    %992 = vmatprep.subr.mxu0 0.0
    %993 = vmatpush1.msra.mxu0 0.0
    %994 = vmatprep.subr.mxu0 0.0
    %v995 = vand.u32 %v126, 4294901760
    %v996 = vsub.f32 %v126, %v995
    %997 = vmatpush1.msra.mxu0 %v996
    %998 = vmatprep.subr.mxu0 0.0
    %999 = vmatpush2.msra.mxu0 0.0
    %1000 = vmatprep.subr.mxu0 0.0
    %1001 = vmatpush2.msra.mxu0 0.0
    %1002 = vmatprep.subr.mxu0 0.0
    %1003 = vmatpush2.msra.mxu0 0.0
    %1004 = vmatprep.subr.mxu0 0.0
    %1005 = vmatpush2.msra.mxu0 0.0
    %1006 = vmatprep.subr.mxu0 0.0
    %1007 = vmatpush2.msra.mxu0 0.0
    %1008 = vmatprep.subr.mxu0 0.0
    %1009 = vmatpush2.msra.mxu0 0.0
    %1010 = vmatprep.subr.mxu0 0.0
    %1011 = vmatpush2.msra.mxu0 0.0
    %1012 = vmatprep.subr.mxu0 0.0
    %1013 = vmatpush2.msra.mxu0 0.0
    %1014 = vmatprep.subr.mxu0 0.0
    %1015 = vmatpush2.msra.mxu0 0.0
    %1016 = vmatprep.subr.mxu0 0.0
    %1017 = vmatpush2.msra.mxu0 0.0
    %1018 = vmatprep.subr.mxu0 0.0
    %1019 = vmatpush2.msra.mxu0 0.0
    %1020 = vmatprep.subr.mxu0 0.0
    %1021 = vmatpush2.msra.mxu0 0.0
    %1022 = vmatprep.subr.mxu0 0.0
    %1023 = vmatpush2.msra.mxu0 0.0
    %1024 = vmatprep.subr.mxu0 0.0
    %1025 = vmatpush2.msra.mxu0 0.0
    %1026 = vmatprep.subr.mxu0 0.0
    %1027 = vmatpush2.msra.mxu0 0.0
    %1028 = vmatprep.subr.mxu0 0.0
    %1029 = vmatpush2.msra.mxu0 0.0
    %1030 = vmatprep.mubr.f32.mxu0 0.0
    %v1031 = vand.u32 %v753, 4294901760
    %v1032 = vsub.f32 %v753, %v1031
    %1033 = vmatmul.mubr.f32.gmra.mxu0 %v1032
    %v1034 = vpop.f32.mrf.mxu0
    %v1035 = vadd.f32 %v943, %v1034
    %v1036 = vpop.f32.mrf.mxu0
    %1037 = vmatprep.mubr.f32.mxu0 0.0
    %v1038 = vand.u32 %v756, 4294901760
    %v1039 = vsub.f32 %v756, %v1038
    %1040 = vmatmul.mubr.f32.gmra.mxu0 %v1039
    %v1041 = vpop.f32.mrf.mxu0
    %v1042 = vadd.f32 %v949, %v1041
    %v1043 = vpop.f32.mrf.mxu0
    %1044 = vmatprep.mubr.f32.mxu0 0.0
    %v1045 = vand.u32 %v759, 4294901760
    %v1046 = vsub.f32 %v759, %v1045
    %1047 = vmatmul.mubr.f32.gmra.mxu0 %v1046
    %v1048 = vpop.f32.mrf.mxu0
    %v1049 = vadd.f32 %v955, %v1048
    %v1050 = vpop.f32.mrf.mxu0
    %1051 = vmatprep.mubr.f32.mxu0 0.0
    %v1052 = vand.u32 %v762, 4294901760
    %v1053 = vsub.f32 %v762, %v1052
    %1054 = vmatmul.mubr.f32.gmra.mxu0 %v1053
    %v1055 = vpop.f32.mrf.mxu0
    %v1056 = vadd.f32 %v961, %v1055
    %v1057 = vpop.f32.mrf.mxu0
    %1058 = vdwg.mxu0
    %1059 = vmatprep.subr.mxu0 0.0
    %1060 = vmatpush1.msra.mxu0 0.0
    %1061 = vmatprep.subr.mxu0 0.0
    %1062 = vmatpush1.msra.mxu0 0.0
    %1063 = vmatprep.subr.mxu0 0.0
    %1064 = vmatpush1.msra.mxu0 0.0
    %1065 = vmatprep.subr.mxu0 0.0
    %1066 = vmatpush1.msra.mxu0 0.0
    %1067 = vmatprep.subr.mxu0 0.0
    %1068 = vmatpush1.msra.mxu0 0.0
    %1069 = vmatprep.subr.mxu0 0.0
    %1070 = vmatpush1.msra.mxu0 0.0
    %1071 = vmatprep.subr.mxu0 0.0
    %1072 = vmatpush1.msra.mxu0 0.0
    %1073 = vmatprep.subr.mxu0 0.0
    %1074 = vmatpush1.msra.mxu0 0.0
    %1075 = vmatprep.subr.mxu0 0.0
    %1076 = vmatpush1.msra.mxu0 0.0
    %1077 = vmatprep.subr.mxu0 0.0
    %1078 = vmatpush1.msra.mxu0 0.0
    %1079 = vmatprep.subr.mxu0 0.0
    %1080 = vmatpush1.msra.mxu0 0.0
    %1081 = vmatprep.subr.mxu0 0.0
    %1082 = vmatpush1.msra.mxu0 0.0
    %1083 = vmatprep.subr.mxu0 0.0
    %1084 = vmatpush1.msra.mxu0 0.0
    %1085 = vmatprep.subr.mxu0 0.0
    %1086 = vmatpush1.msra.mxu0 0.0
    %1087 = vmatprep.subr.mxu0 0.0
    %1088 = vmatpush1.msra.mxu0 0.0
    %1089 = vmatprep.subr.mxu0 0.0
    %v1090 = vand.u32 %v126, 4294901760
    %1091 = vmatpush1.msra.mxu0 %v1090
    %1092 = vmatprep.subr.mxu0 0.0
    %1093 = vmatpush2.msra.mxu0 0.0
    %1094 = vmatprep.subr.mxu0 0.0
    %1095 = vmatpush2.msra.mxu0 0.0
    %1096 = vmatprep.subr.mxu0 0.0
    %1097 = vmatpush2.msra.mxu0 0.0
    %1098 = vmatprep.subr.mxu0 0.0
    %1099 = vmatpush2.msra.mxu0 0.0
    %1100 = vmatprep.subr.mxu0 0.0
    %1101 = vmatpush2.msra.mxu0 0.0
    %1102 = vmatprep.subr.mxu0 0.0
    %1103 = vmatpush2.msra.mxu0 0.0
    %1104 = vmatprep.subr.mxu0 0.0
    %1105 = vmatpush2.msra.mxu0 0.0
    %1106 = vmatprep.subr.mxu0 0.0
    %1107 = vmatpush2.msra.mxu0 0.0
    %1108 = vmatprep.subr.mxu0 0.0
    %1109 = vmatpush2.msra.mxu0 0.0
    %1110 = vmatprep.subr.mxu0 0.0
    %1111 = vmatpush2.msra.mxu0 0.0
    %1112 = vmatprep.subr.mxu0 0.0
    %1113 = vmatpush2.msra.mxu0 0.0
    %1114 = vmatprep.subr.mxu0 0.0
    %1115 = vmatpush2.msra.mxu0 0.0
    %1116 = vmatprep.subr.mxu0 0.0
    %1117 = vmatpush2.msra.mxu0 0.0
    %1118 = vmatprep.subr.mxu0 0.0
    %1119 = vmatpush2.msra.mxu0 0.0
    %1120 = vmatprep.subr.mxu0 0.0
    %1121 = vmatpush2.msra.mxu0 0.0
    %1122 = vmatprep.subr.mxu0 0.0
    %1123 = vmatpush2.msra.mxu0 0.0
    %1124 = vmatprep.mubr.f32.mxu0 0.0
    %v1125 = vand.u32 %v753, 4294901760
    %v1126 = vsub.f32 %v753, %v1125
    %v1127 = vand.u32 %v1126, 4294901760
    %1128 = vmatmul.mubr.f32.gmra.mxu0 %v1127
    %v1129 = vpop.f32.mrf.mxu0
    %v1130 = vadd.f32 %v1035, %v1129
    %v1131 = vpop.f32.mrf.mxu0
    %1132 = vmatprep.mubr.f32.mxu0 0.0
    %v1133 = vand.u32 %v756, 4294901760
    %v1134 = vsub.f32 %v756, %v1133
    %v1135 = vand.u32 %v1134, 4294901760
    %1136 = vmatmul.mubr.f32.gmra.mxu0 %v1135
    %v1137 = vpop.f32.mrf.mxu0
    %v1138 = vadd.f32 %v1042, %v1137
    %v1139 = vpop.f32.mrf.mxu0
    %1140 = vmatprep.mubr.f32.mxu0 0.0
    %v1141 = vand.u32 %v759, 4294901760
    %v1142 = vsub.f32 %v759, %v1141
    %v1143 = vand.u32 %v1142, 4294901760
    %1144 = vmatmul.mubr.f32.gmra.mxu0 %v1143
    %v1145 = vpop.f32.mrf.mxu0
    %v1146 = vadd.f32 %v1049, %v1145
    %v1147 = vpop.f32.mrf.mxu0
    %1148 = vmatprep.mubr.f32.mxu0 0.0
    %v1149 = vand.u32 %v762, 4294901760
    %v1150 = vsub.f32 %v762, %v1149
    %v1151 = vand.u32 %v1150, 4294901760
    %1152 = vmatmul.mubr.f32.gmra.mxu0 %v1151
    %v1153 = vpop.f32.mrf.mxu0
    %v1154 = vadd.f32 %v1056, %v1153
    %v1155 = vpop.f32.mrf.mxu0
    %1156 = vdwg.mxu0
    %1157 = vmatprep.subr.mxu0 0.0
    %1158 = vmatpush1.msra.mxu0 0.0
    %1159 = vmatprep.subr.mxu0 0.0
    %1160 = vmatpush1.msra.mxu0 0.0
    %1161 = vmatprep.subr.mxu0 0.0
    %1162 = vmatpush1.msra.mxu0 0.0
    %1163 = vmatprep.subr.mxu0 0.0
    %1164 = vmatpush1.msra.mxu0 0.0
    %1165 = vmatprep.subr.mxu0 0.0
    %1166 = vmatpush1.msra.mxu0 0.0
    %1167 = vmatprep.subr.mxu0 0.0
    %1168 = vmatpush1.msra.mxu0 0.0
    %1169 = vmatprep.subr.mxu0 0.0
    %1170 = vmatpush1.msra.mxu0 0.0
    %1171 = vmatprep.subr.mxu0 0.0
    %1172 = vmatpush1.msra.mxu0 0.0
    %1173 = vmatprep.subr.mxu0 0.0
    %1174 = vmatpush1.msra.mxu0 0.0
    %1175 = vmatprep.subr.mxu0 0.0
    %1176 = vmatpush1.msra.mxu0 0.0
    %1177 = vmatprep.subr.mxu0 0.0
    %1178 = vmatpush1.msra.mxu0 0.0
    %1179 = vmatprep.subr.mxu0 0.0
    %1180 = vmatpush1.msra.mxu0 0.0
    %1181 = vmatprep.subr.mxu0 0.0
    %1182 = vmatpush1.msra.mxu0 0.0
    %1183 = vmatprep.subr.mxu0 0.0
    %1184 = vmatpush1.msra.mxu0 0.0
    %1185 = vmatprep.subr.mxu0 0.0
    %1186 = vmatpush1.msra.mxu0 0.0
    %1187 = vmatprep.subr.mxu0 0.0
    %v1188 = vand.u32 %v126, 4294901760
    %v1189 = vsub.f32 %v126, %v1188
    %v1190 = vand.u32 %v1189, 4294901760
    %1191 = vmatpush1.msra.mxu0 %v1190
    %1192 = vmatprep.subr.mxu0 0.0
    %1193 = vmatpush2.msra.mxu0 0.0
    %1194 = vmatprep.subr.mxu0 0.0
    %1195 = vmatpush2.msra.mxu0 0.0
    %1196 = vmatprep.subr.mxu0 0.0
    %1197 = vmatpush2.msra.mxu0 0.0
    %1198 = vmatprep.subr.mxu0 0.0
    %1199 = vmatpush2.msra.mxu0 0.0
    %1200 = vmatprep.subr.mxu0 0.0
    %1201 = vmatpush2.msra.mxu0 0.0
    %1202 = vmatprep.subr.mxu0 0.0
    %1203 = vmatpush2.msra.mxu0 0.0
    %1204 = vmatprep.subr.mxu0 0.0
    %1205 = vmatpush2.msra.mxu0 0.0
    %1206 = vmatprep.subr.mxu0 0.0
    %1207 = vmatpush2.msra.mxu0 0.0
    %1208 = vmatprep.subr.mxu0 0.0
    %1209 = vmatpush2.msra.mxu0 0.0
    %1210 = vmatprep.subr.mxu0 0.0
    %1211 = vmatpush2.msra.mxu0 0.0
    %1212 = vmatprep.subr.mxu0 0.0
    %1213 = vmatpush2.msra.mxu0 0.0
    %1214 = vmatprep.subr.mxu0 0.0
    %1215 = vmatpush2.msra.mxu0 0.0
    %1216 = vmatprep.subr.mxu0 0.0
    %1217 = vmatpush2.msra.mxu0 0.0
    %1218 = vmatprep.subr.mxu0 0.0
    %1219 = vmatpush2.msra.mxu0 0.0
    %1220 = vmatprep.subr.mxu0 0.0
    %1221 = vmatpush2.msra.mxu0 0.0
    %1222 = vmatprep.subr.mxu0 0.0
    %1223 = vmatpush2.msra.mxu0 0.0
    %1224 = vmatprep.mubr.f32.mxu0 0.0
    %v1225 = vand.u32 %v753, 4294901760
    %1226 = vmatmul.mubr.f32.gmra.mxu0 %v1225
    %v1227 = vpop.f32.mrf.mxu0
    %v1228 = vadd.f32 %v1130, %v1227
    %v1229 = vpop.f32.mrf.mxu0
    %1230 = vmatprep.mubr.f32.mxu0 0.0
    %v1231 = vand.u32 %v756, 4294901760
    %1232 = vmatmul.mubr.f32.gmra.mxu0 %v1231
    %v1233 = vpop.f32.mrf.mxu0
    %v1234 = vadd.f32 %v1138, %v1233
    %v1235 = vpop.f32.mrf.mxu0
    %1236 = vmatprep.mubr.f32.mxu0 0.0
    %v1237 = vand.u32 %v759, 4294901760
    %1238 = vmatmul.mubr.f32.gmra.mxu0 %v1237
    %v1239 = vpop.f32.mrf.mxu0
    %v1240 = vadd.f32 %v1146, %v1239
    %v1241 = vpop.f32.mrf.mxu0
    %1242 = vmatprep.mubr.f32.mxu0 0.0
    %v1243 = vand.u32 %v762, 4294901760
    %1244 = vmatmul.mubr.f32.gmra.mxu0 %v1243
    %v1245 = vpop.f32.mrf.mxu0
    %v1246 = vadd.f32 %v1154, %v1245
    %v1247 = vpop.f32.mrf.mxu0
    %1248 = vdwg.mxu0
    %1249 = vmatprep.subr.mxu0 0.0
    %1250 = vmatpush1.msra.mxu0 0.0
    %1251 = vmatprep.subr.mxu0 0.0
    %1252 = vmatpush1.msra.mxu0 0.0
    %1253 = vmatprep.subr.mxu0 0.0
    %1254 = vmatpush1.msra.mxu0 0.0
    %1255 = vmatprep.subr.mxu0 0.0
    %1256 = vmatpush1.msra.mxu0 0.0
    %1257 = vmatprep.subr.mxu0 0.0
    %1258 = vmatpush1.msra.mxu0 0.0
    %1259 = vmatprep.subr.mxu0 0.0
    %1260 = vmatpush1.msra.mxu0 0.0
    %1261 = vmatprep.subr.mxu0 0.0
    %1262 = vmatpush1.msra.mxu0 0.0
    %1263 = vmatprep.subr.mxu0 0.0
    %1264 = vmatpush1.msra.mxu0 0.0
    %1265 = vmatprep.subr.mxu0 0.0
    %1266 = vmatpush1.msra.mxu0 0.0
    %1267 = vmatprep.subr.mxu0 0.0
    %1268 = vmatpush1.msra.mxu0 0.0
    %1269 = vmatprep.subr.mxu0 0.0
    %1270 = vmatpush1.msra.mxu0 0.0
    %1271 = vmatprep.subr.mxu0 0.0
    %1272 = vmatpush1.msra.mxu0 0.0
    %1273 = vmatprep.subr.mxu0 0.0
    %1274 = vmatpush1.msra.mxu0 0.0
    %1275 = vmatprep.subr.mxu0 0.0
    %1276 = vmatpush1.msra.mxu0 0.0
    %1277 = vmatprep.subr.mxu0 0.0
    %1278 = vmatpush1.msra.mxu0 0.0
    %1279 = vmatprep.subr.mxu0 0.0
    %v1280 = vand.u32 %v126, 4294901760
    %1281 = vmatpush1.msra.mxu0 %v1280
    %1282 = vmatprep.subr.mxu0 0.0
    %1283 = vmatpush2.msra.mxu0 0.0
    %1284 = vmatprep.subr.mxu0 0.0
    %1285 = vmatpush2.msra.mxu0 0.0
    %1286 = vmatprep.subr.mxu0 0.0
    %1287 = vmatpush2.msra.mxu0 0.0
    %1288 = vmatprep.subr.mxu0 0.0
    %1289 = vmatpush2.msra.mxu0 0.0
    %1290 = vmatprep.subr.mxu0 0.0
    %1291 = vmatpush2.msra.mxu0 0.0
    %1292 = vmatprep.subr.mxu0 0.0
    %1293 = vmatpush2.msra.mxu0 0.0
    %1294 = vmatprep.subr.mxu0 0.0
    %1295 = vmatpush2.msra.mxu0 0.0
    %1296 = vmatprep.subr.mxu0 0.0
    %1297 = vmatpush2.msra.mxu0 0.0
    %1298 = vmatprep.subr.mxu0 0.0
    %1299 = vmatpush2.msra.mxu0 0.0
    %1300 = vmatprep.subr.mxu0 0.0
    %1301 = vmatpush2.msra.mxu0 0.0
    %1302 = vmatprep.subr.mxu0 0.0
    %1303 = vmatpush2.msra.mxu0 0.0
    %1304 = vmatprep.subr.mxu0 0.0
    %1305 = vmatpush2.msra.mxu0 0.0
    %1306 = vmatprep.subr.mxu0 0.0
    %1307 = vmatpush2.msra.mxu0 0.0
    %1308 = vmatprep.subr.mxu0 0.0
    %1309 = vmatpush2.msra.mxu0 0.0
    %1310 = vmatprep.subr.mxu0 0.0
    %1311 = vmatpush2.msra.mxu0 0.0
    %1312 = vmatprep.subr.mxu0 0.0
    %1313 = vmatpush2.msra.mxu0 0.0
    %1314 = vmatprep.mubr.f32.mxu0 0.0
    %v1315 = vand.u32 %v753, 4294901760
    %1316 = vmatmul.mubr.f32.gmra.mxu0 %v1315
    %v1317 = vpop.f32.mrf.mxu0
    %v1318 = vadd.f32 %v1228, %v1317
    %v1319 = vpop.f32.mrf.mxu0
    %1320 = vmatprep.mubr.f32.mxu0 0.0
    %v1321 = vand.u32 %v756, 4294901760
    %1322 = vmatmul.mubr.f32.gmra.mxu0 %v1321
    %v1323 = vpop.f32.mrf.mxu0
    %v1324 = vadd.f32 %v1234, %v1323
    %v1325 = vpop.f32.mrf.mxu0
    %1326 = vmatprep.mubr.f32.mxu0 0.0
    %v1327 = vand.u32 %v759, 4294901760
    %1328 = vmatmul.mubr.f32.gmra.mxu0 %v1327
    %v1329 = vpop.f32.mrf.mxu0
    %v1330 = vadd.f32 %v1240, %v1329
    %v1331 = vpop.f32.mrf.mxu0
    %1332 = vmatprep.mubr.f32.mxu0 0.0
    %v1333 = vand.u32 %v762, 4294901760
    %1334 = vmatmul.mubr.f32.gmra.mxu0 %v1333
    %v1335 = vpop.f32.mrf.mxu0
    %v1336 = vadd.f32 %v1246, %v1335
    %v1337 = vpop.f32.mrf.mxu0
    %1338 = vdwg.mxu0
    %v1340 = vsel %vm168, %v164, 0
    %v1343 = vsel %vm168, %v165, 0
    %v1346 = vsel %vm168, %v166, 0
    %v1349 = vsel %vm168, %v167, 0
    %1351 = vmatprep.subr.mxu0 0.0
    %1352 = vmatpush1.msra.mxu0 0.0
    %1353 = vmatprep.subr.mxu0 0.0
    %1354 = vmatpush1.msra.mxu0 0.0
    %1355 = vmatprep.subr.mxu0 0.0
    %1356 = vmatpush1.msra.mxu0 0.0
    %1357 = vmatprep.subr.mxu0 0.0
    %1358 = vmatpush1.msra.mxu0 0.0
    %1359 = vmatprep.subr.mxu0 0.0
    %1360 = vmatpush1.msra.mxu0 0.0
    %1361 = vmatprep.subr.mxu0 0.0
    %1362 = vmatpush1.msra.mxu0 0.0
    %1363 = vmatprep.subr.mxu0 0.0
    %1364 = vmatpush1.msra.mxu0 0.0
    %1365 = vmatprep.subr.mxu0 0.0
    %1366 = vmatpush1.msra.mxu0 0.0
    %1367 = vmatprep.subr.mxu0 0.0
    %1368 = vmatpush1.msra.mxu0 0.0
    %1369 = vmatprep.subr.mxu0 0.0
    %1370 = vmatpush1.msra.mxu0 0.0
    %1371 = vmatprep.subr.mxu0 0.0
    %1372 = vmatpush1.msra.mxu0 0.0
    %1373 = vmatprep.subr.mxu0 0.0
    %1374 = vmatpush1.msra.mxu0 0.0
    %1375 = vmatprep.subr.mxu0 0.0
    %1376 = vmatpush1.msra.mxu0 0.0
    %1377 = vmatprep.subr.mxu0 0.0
    %1378 = vmatpush1.msra.mxu0 0.0
    %1379 = vmatprep.subr.mxu0 0.0
    %1380 = vmatpush1.msra.mxu0 0.0
    %1381 = vmatprep.subr.mxu0 0.0
    %v1382 = vand.u32 %v128, 4294901760
    %1383 = vmatpush1.msra.mxu0 %v1382
    %1384 = vmatprep.subr.mxu0 0.0
    %1385 = vmatpush2.msra.mxu0 0.0
    %1386 = vmatprep.subr.mxu0 0.0
    %1387 = vmatpush2.msra.mxu0 0.0
    %1388 = vmatprep.subr.mxu0 0.0
    %1389 = vmatpush2.msra.mxu0 0.0
    %1390 = vmatprep.subr.mxu0 0.0
    %1391 = vmatpush2.msra.mxu0 0.0
    %1392 = vmatprep.subr.mxu0 0.0
    %1393 = vmatpush2.msra.mxu0 0.0
    %1394 = vmatprep.subr.mxu0 0.0
    %1395 = vmatpush2.msra.mxu0 0.0
    %1396 = vmatprep.subr.mxu0 0.0
    %1397 = vmatpush2.msra.mxu0 0.0
    %1398 = vmatprep.subr.mxu0 0.0
    %1399 = vmatpush2.msra.mxu0 0.0
    %1400 = vmatprep.subr.mxu0 0.0
    %1401 = vmatpush2.msra.mxu0 0.0
    %1402 = vmatprep.subr.mxu0 0.0
    %1403 = vmatpush2.msra.mxu0 0.0
    %1404 = vmatprep.subr.mxu0 0.0
    %1405 = vmatpush2.msra.mxu0 0.0
    %1406 = vmatprep.subr.mxu0 0.0
    %1407 = vmatpush2.msra.mxu0 0.0
    %1408 = vmatprep.subr.mxu0 0.0
    %1409 = vmatpush2.msra.mxu0 0.0
    %1410 = vmatprep.subr.mxu0 0.0
    %1411 = vmatpush2.msra.mxu0 0.0
    %1412 = vmatprep.subr.mxu0 0.0
    %1413 = vmatpush2.msra.mxu0 0.0
    %1414 = vmatprep.subr.mxu0 0.0
    %1415 = vmatpush2.msra.mxu0 0.0
    %1416 = vmatprep.mubr.f32.mxu0 0.0
    %v1417 = vand.u32 %v1340, 4294901760
    %v1418 = vsub.f32 %v1340, %v1417
    %v1419 = vand.u32 %v1418, 4294901760
    %v1420 = vsub.f32 %v1418, %v1419
    %v1421 = vand.u32 %v1420, 4294901760
    %1422 = vmatmul.mubr.f32.gmra.mxu0 %v1421
    %v1423 = vpop.f32.mrf.mxu0
    %v1424 = vadd.f32 0.0, %v1423
    %v1425 = vpop.f32.mrf.mxu0
    %1426 = vmatprep.mubr.f32.mxu0 0.0
    %v1427 = vand.u32 %v1343, 4294901760
    %v1428 = vsub.f32 %v1343, %v1427
    %v1429 = vand.u32 %v1428, 4294901760
    %v1430 = vsub.f32 %v1428, %v1429
    %v1431 = vand.u32 %v1430, 4294901760
    %1432 = vmatmul.mubr.f32.gmra.mxu0 %v1431
    %v1433 = vpop.f32.mrf.mxu0
    %v1434 = vadd.f32 0.0, %v1433
    %v1435 = vpop.f32.mrf.mxu0
    %1436 = vmatprep.mubr.f32.mxu0 0.0
    %v1437 = vand.u32 %v1346, 4294901760
    %v1438 = vsub.f32 %v1346, %v1437
    %v1439 = vand.u32 %v1438, 4294901760
    %v1440 = vsub.f32 %v1438, %v1439
    %v1441 = vand.u32 %v1440, 4294901760
    %1442 = vmatmul.mubr.f32.gmra.mxu0 %v1441
    %v1443 = vpop.f32.mrf.mxu0
    %v1444 = vadd.f32 0.0, %v1443
    %v1445 = vpop.f32.mrf.mxu0
    %1446 = vmatprep.mubr.f32.mxu0 0.0
    %v1447 = vand.u32 %v1349, 4294901760
    %v1448 = vsub.f32 %v1349, %v1447
    %v1449 = vand.u32 %v1448, 4294901760
    %v1450 = vsub.f32 %v1448, %v1449
    %v1451 = vand.u32 %v1450, 4294901760
    %1452 = vmatmul.mubr.f32.gmra.mxu0 %v1451
    %v1453 = vpop.f32.mrf.mxu0
    %v1454 = vadd.f32 0.0, %v1453
    %v1455 = vpop.f32.mrf.mxu0
    %1456 = vdwg.mxu0
    %1457 = vmatprep.subr.mxu0 0.0
    %1458 = vmatpush1.msra.mxu0 0.0
    %1459 = vmatprep.subr.mxu0 0.0
    %1460 = vmatpush1.msra.mxu0 0.0
    %1461 = vmatprep.subr.mxu0 0.0
    %1462 = vmatpush1.msra.mxu0 0.0
    %1463 = vmatprep.subr.mxu0 0.0
    %1464 = vmatpush1.msra.mxu0 0.0
    %1465 = vmatprep.subr.mxu0 0.0
    %1466 = vmatpush1.msra.mxu0 0.0
    %1467 = vmatprep.subr.mxu0 0.0
    %1468 = vmatpush1.msra.mxu0 0.0
    %1469 = vmatprep.subr.mxu0 0.0
    %1470 = vmatpush1.msra.mxu0 0.0
    %1471 = vmatprep.subr.mxu0 0.0
    %1472 = vmatpush1.msra.mxu0 0.0
    %1473 = vmatprep.subr.mxu0 0.0
    %1474 = vmatpush1.msra.mxu0 0.0
    %1475 = vmatprep.subr.mxu0 0.0
    %1476 = vmatpush1.msra.mxu0 0.0
    %1477 = vmatprep.subr.mxu0 0.0
    %1478 = vmatpush1.msra.mxu0 0.0
    %1479 = vmatprep.subr.mxu0 0.0
    %1480 = vmatpush1.msra.mxu0 0.0
    %1481 = vmatprep.subr.mxu0 0.0
    %1482 = vmatpush1.msra.mxu0 0.0
    %1483 = vmatprep.subr.mxu0 0.0
    %1484 = vmatpush1.msra.mxu0 0.0
    %1485 = vmatprep.subr.mxu0 0.0
    %1486 = vmatpush1.msra.mxu0 0.0
    %1487 = vmatprep.subr.mxu0 0.0
    %v1488 = vand.u32 %v128, 4294901760
    %v1489 = vsub.f32 %v128, %v1488
    %v1490 = vand.u32 %v1489, 4294901760
    %v1491 = vsub.f32 %v1489, %v1490
    %v1492 = vand.u32 %v1491, 4294901760
    %1493 = vmatpush1.msra.mxu0 %v1492
    %1494 = vmatprep.subr.mxu0 0.0
    %1495 = vmatpush2.msra.mxu0 0.0
    %1496 = vmatprep.subr.mxu0 0.0
    %1497 = vmatpush2.msra.mxu0 0.0
    %1498 = vmatprep.subr.mxu0 0.0
    %1499 = vmatpush2.msra.mxu0 0.0
    %1500 = vmatprep.subr.mxu0 0.0
    %1501 = vmatpush2.msra.mxu0 0.0
    %1502 = vmatprep.subr.mxu0 0.0
    %1503 = vmatpush2.msra.mxu0 0.0
    %1504 = vmatprep.subr.mxu0 0.0
    %1505 = vmatpush2.msra.mxu0 0.0
    %1506 = vmatprep.subr.mxu0 0.0
    %1507 = vmatpush2.msra.mxu0 0.0
    %1508 = vmatprep.subr.mxu0 0.0
    %1509 = vmatpush2.msra.mxu0 0.0
    %1510 = vmatprep.subr.mxu0 0.0
    %1511 = vmatpush2.msra.mxu0 0.0
    %1512 = vmatprep.subr.mxu0 0.0
    %1513 = vmatpush2.msra.mxu0 0.0
    %1514 = vmatprep.subr.mxu0 0.0
    %1515 = vmatpush2.msra.mxu0 0.0
    %1516 = vmatprep.subr.mxu0 0.0
    %1517 = vmatpush2.msra.mxu0 0.0
    %1518 = vmatprep.subr.mxu0 0.0
    %1519 = vmatpush2.msra.mxu0 0.0
    %1520 = vmatprep.subr.mxu0 0.0
    %1521 = vmatpush2.msra.mxu0 0.0
    %1522 = vmatprep.subr.mxu0 0.0
    %1523 = vmatpush2.msra.mxu0 0.0
    %1524 = vmatprep.subr.mxu0 0.0
    %1525 = vmatpush2.msra.mxu0 0.0
    %1526 = vmatprep.mubr.f32.mxu0 0.0
    %v1527 = vand.u32 %v1340, 4294901760
    %1528 = vmatmul.mubr.f32.gmra.mxu0 %v1527
    %v1529 = vpop.f32.mrf.mxu0
    %v1530 = vadd.f32 %v1424, %v1529
    %v1531 = vpop.f32.mrf.mxu0
    %1532 = vmatprep.mubr.f32.mxu0 0.0
    %v1533 = vand.u32 %v1343, 4294901760
    %1534 = vmatmul.mubr.f32.gmra.mxu0 %v1533
    %v1535 = vpop.f32.mrf.mxu0
    %v1536 = vadd.f32 %v1434, %v1535
    %v1537 = vpop.f32.mrf.mxu0
    %1538 = vmatprep.mubr.f32.mxu0 0.0
    %v1539 = vand.u32 %v1346, 4294901760
    %1540 = vmatmul.mubr.f32.gmra.mxu0 %v1539
    %v1541 = vpop.f32.mrf.mxu0
    %v1542 = vadd.f32 %v1444, %v1541
    %v1543 = vpop.f32.mrf.mxu0
    %1544 = vmatprep.mubr.f32.mxu0 0.0
    %v1545 = vand.u32 %v1349, 4294901760
    %1546 = vmatmul.mubr.f32.gmra.mxu0 %v1545
    %v1547 = vpop.f32.mrf.mxu0
    %v1548 = vadd.f32 %v1454, %v1547
    %v1549 = vpop.f32.mrf.mxu0
    %1550 = vdwg.mxu0
    %1551 = vmatprep.subr.mxu0 0.0
    %1552 = vmatpush1.msra.mxu0 0.0
    %1553 = vmatprep.subr.mxu0 0.0
    %1554 = vmatpush1.msra.mxu0 0.0
    %1555 = vmatprep.subr.mxu0 0.0
    %1556 = vmatpush1.msra.mxu0 0.0
    %1557 = vmatprep.subr.mxu0 0.0
    %1558 = vmatpush1.msra.mxu0 0.0
    %1559 = vmatprep.subr.mxu0 0.0
    %1560 = vmatpush1.msra.mxu0 0.0
    %1561 = vmatprep.subr.mxu0 0.0
    %1562 = vmatpush1.msra.mxu0 0.0
    %1563 = vmatprep.subr.mxu0 0.0
    %1564 = vmatpush1.msra.mxu0 0.0
    %1565 = vmatprep.subr.mxu0 0.0
    %1566 = vmatpush1.msra.mxu0 0.0
    %1567 = vmatprep.subr.mxu0 0.0
    %1568 = vmatpush1.msra.mxu0 0.0
    %1569 = vmatprep.subr.mxu0 0.0
    %1570 = vmatpush1.msra.mxu0 0.0
    %1571 = vmatprep.subr.mxu0 0.0
    %1572 = vmatpush1.msra.mxu0 0.0
    %1573 = vmatprep.subr.mxu0 0.0
    %1574 = vmatpush1.msra.mxu0 0.0
    %1575 = vmatprep.subr.mxu0 0.0
    %1576 = vmatpush1.msra.mxu0 0.0
    %1577 = vmatprep.subr.mxu0 0.0
    %1578 = vmatpush1.msra.mxu0 0.0
    %1579 = vmatprep.subr.mxu0 0.0
    %1580 = vmatpush1.msra.mxu0 0.0
    %1581 = vmatprep.subr.mxu0 0.0
    %v1582 = vand.u32 %v128, 4294901760
    %v1583 = vsub.f32 %v128, %v1582
    %1584 = vmatpush1.msra.mxu0 %v1583
    %1585 = vmatprep.subr.mxu0 0.0
    %1586 = vmatpush2.msra.mxu0 0.0
    %1587 = vmatprep.subr.mxu0 0.0
    %1588 = vmatpush2.msra.mxu0 0.0
    %1589 = vmatprep.subr.mxu0 0.0
    %1590 = vmatpush2.msra.mxu0 0.0
    %1591 = vmatprep.subr.mxu0 0.0
    %1592 = vmatpush2.msra.mxu0 0.0
    %1593 = vmatprep.subr.mxu0 0.0
    %1594 = vmatpush2.msra.mxu0 0.0
    %1595 = vmatprep.subr.mxu0 0.0
    %1596 = vmatpush2.msra.mxu0 0.0
    %1597 = vmatprep.subr.mxu0 0.0
    %1598 = vmatpush2.msra.mxu0 0.0
    %1599 = vmatprep.subr.mxu0 0.0
    %1600 = vmatpush2.msra.mxu0 0.0
    %1601 = vmatprep.subr.mxu0 0.0
    %1602 = vmatpush2.msra.mxu0 0.0
    %1603 = vmatprep.subr.mxu0 0.0
    %1604 = vmatpush2.msra.mxu0 0.0
    %1605 = vmatprep.subr.mxu0 0.0
    %1606 = vmatpush2.msra.mxu0 0.0
    %1607 = vmatprep.subr.mxu0 0.0
    %1608 = vmatpush2.msra.mxu0 0.0
    %1609 = vmatprep.subr.mxu0 0.0
    %1610 = vmatpush2.msra.mxu0 0.0
    %1611 = vmatprep.subr.mxu0 0.0
    %1612 = vmatpush2.msra.mxu0 0.0
    %1613 = vmatprep.subr.mxu0 0.0
    %1614 = vmatpush2.msra.mxu0 0.0
    %1615 = vmatprep.subr.mxu0 0.0
    %1616 = vmatpush2.msra.mxu0 0.0
    %1617 = vmatprep.mubr.f32.mxu0 0.0
    %v1618 = vand.u32 %v1340, 4294901760
    %v1619 = vsub.f32 %v1340, %v1618
    %1620 = vmatmul.mubr.f32.gmra.mxu0 %v1619
    %v1621 = vpop.f32.mrf.mxu0
    %v1622 = vadd.f32 %v1530, %v1621
    %v1623 = vpop.f32.mrf.mxu0
    %1624 = vmatprep.mubr.f32.mxu0 0.0
    %v1625 = vand.u32 %v1343, 4294901760
    %v1626 = vsub.f32 %v1343, %v1625
    %1627 = vmatmul.mubr.f32.gmra.mxu0 %v1626
    %v1628 = vpop.f32.mrf.mxu0
    %v1629 = vadd.f32 %v1536, %v1628
    %v1630 = vpop.f32.mrf.mxu0
    %1631 = vmatprep.mubr.f32.mxu0 0.0
    %v1632 = vand.u32 %v1346, 4294901760
    %v1633 = vsub.f32 %v1346, %v1632
    %1634 = vmatmul.mubr.f32.gmra.mxu0 %v1633
    %v1635 = vpop.f32.mrf.mxu0
    %v1636 = vadd.f32 %v1542, %v1635
    %v1637 = vpop.f32.mrf.mxu0
    %1638 = vmatprep.mubr.f32.mxu0 0.0
    %v1639 = vand.u32 %v1349, 4294901760
    %v1640 = vsub.f32 %v1349, %v1639
    %1641 = vmatmul.mubr.f32.gmra.mxu0 %v1640
    %v1642 = vpop.f32.mrf.mxu0
    %v1643 = vadd.f32 %v1548, %v1642
    %v1644 = vpop.f32.mrf.mxu0
    %1645 = vdwg.mxu0
    %1646 = vmatprep.subr.mxu0 0.0
    %1647 = vmatpush1.msra.mxu0 0.0
    %1648 = vmatprep.subr.mxu0 0.0
    %1649 = vmatpush1.msra.mxu0 0.0
    %1650 = vmatprep.subr.mxu0 0.0
    %1651 = vmatpush1.msra.mxu0 0.0
    %1652 = vmatprep.subr.mxu0 0.0
    %1653 = vmatpush1.msra.mxu0 0.0
    %1654 = vmatprep.subr.mxu0 0.0
    %1655 = vmatpush1.msra.mxu0 0.0
    %1656 = vmatprep.subr.mxu0 0.0
    %1657 = vmatpush1.msra.mxu0 0.0
    %1658 = vmatprep.subr.mxu0 0.0
    %1659 = vmatpush1.msra.mxu0 0.0
    %1660 = vmatprep.subr.mxu0 0.0
    %1661 = vmatpush1.msra.mxu0 0.0
    %1662 = vmatprep.subr.mxu0 0.0
    %1663 = vmatpush1.msra.mxu0 0.0
    %1664 = vmatprep.subr.mxu0 0.0
    %1665 = vmatpush1.msra.mxu0 0.0
    %1666 = vmatprep.subr.mxu0 0.0
    %1667 = vmatpush1.msra.mxu0 0.0
    %1668 = vmatprep.subr.mxu0 0.0
    %1669 = vmatpush1.msra.mxu0 0.0
    %1670 = vmatprep.subr.mxu0 0.0
    %1671 = vmatpush1.msra.mxu0 0.0
    %1672 = vmatprep.subr.mxu0 0.0
    %1673 = vmatpush1.msra.mxu0 0.0
    %1674 = vmatprep.subr.mxu0 0.0
    %1675 = vmatpush1.msra.mxu0 0.0
    %1676 = vmatprep.subr.mxu0 0.0
    %v1677 = vand.u32 %v128, 4294901760
    %1678 = vmatpush1.msra.mxu0 %v1677
    %1679 = vmatprep.subr.mxu0 0.0
    %1680 = vmatpush2.msra.mxu0 0.0
    %1681 = vmatprep.subr.mxu0 0.0
    %1682 = vmatpush2.msra.mxu0 0.0
    %1683 = vmatprep.subr.mxu0 0.0
    %1684 = vmatpush2.msra.mxu0 0.0
    %1685 = vmatprep.subr.mxu0 0.0
    %1686 = vmatpush2.msra.mxu0 0.0
    %1687 = vmatprep.subr.mxu0 0.0
    %1688 = vmatpush2.msra.mxu0 0.0
    %1689 = vmatprep.subr.mxu0 0.0
    %1690 = vmatpush2.msra.mxu0 0.0
    %1691 = vmatprep.subr.mxu0 0.0
    %1692 = vmatpush2.msra.mxu0 0.0
    %1693 = vmatprep.subr.mxu0 0.0
    %1694 = vmatpush2.msra.mxu0 0.0
    %1695 = vmatprep.subr.mxu0 0.0
    %1696 = vmatpush2.msra.mxu0 0.0
    %1697 = vmatprep.subr.mxu0 0.0
    %1698 = vmatpush2.msra.mxu0 0.0
    %1699 = vmatprep.subr.mxu0 0.0
    %1700 = vmatpush2.msra.mxu0 0.0
    %1701 = vmatprep.subr.mxu0 0.0
    %1702 = vmatpush2.msra.mxu0 0.0
    %1703 = vmatprep.subr.mxu0 0.0
    %1704 = vmatpush2.msra.mxu0 0.0
    %1705 = vmatprep.subr.mxu0 0.0
    %1706 = vmatpush2.msra.mxu0 0.0
    %1707 = vmatprep.subr.mxu0 0.0
    %1708 = vmatpush2.msra.mxu0 0.0
    %1709 = vmatprep.subr.mxu0 0.0
    %1710 = vmatpush2.msra.mxu0 0.0
    %1711 = vmatprep.mubr.f32.mxu0 0.0
    %v1712 = vand.u32 %v1340, 4294901760
    %v1713 = vsub.f32 %v1340, %v1712
    %v1714 = vand.u32 %v1713, 4294901760
    %1715 = vmatmul.mubr.f32.gmra.mxu0 %v1714
    %v1716 = vpop.f32.mrf.mxu0
    %v1717 = vadd.f32 %v1622, %v1716
    %v1718 = vpop.f32.mrf.mxu0
    %1719 = vmatprep.mubr.f32.mxu0 0.0
    %v1720 = vand.u32 %v1343, 4294901760
    %v1721 = vsub.f32 %v1343, %v1720
    %v1722 = vand.u32 %v1721, 4294901760
    %1723 = vmatmul.mubr.f32.gmra.mxu0 %v1722
    %v1724 = vpop.f32.mrf.mxu0
    %v1725 = vadd.f32 %v1629, %v1724
    %v1726 = vpop.f32.mrf.mxu0
    %1727 = vmatprep.mubr.f32.mxu0 0.0
    %v1728 = vand.u32 %v1346, 4294901760
    %v1729 = vsub.f32 %v1346, %v1728
    %v1730 = vand.u32 %v1729, 4294901760
    %1731 = vmatmul.mubr.f32.gmra.mxu0 %v1730
    %v1732 = vpop.f32.mrf.mxu0
    %v1733 = vadd.f32 %v1636, %v1732
    %v1734 = vpop.f32.mrf.mxu0
    %1735 = vmatprep.mubr.f32.mxu0 0.0
    %v1736 = vand.u32 %v1349, 4294901760
    %v1737 = vsub.f32 %v1349, %v1736
    %v1738 = vand.u32 %v1737, 4294901760
    %1739 = vmatmul.mubr.f32.gmra.mxu0 %v1738
    %v1740 = vpop.f32.mrf.mxu0
    %v1741 = vadd.f32 %v1643, %v1740
    %v1742 = vpop.f32.mrf.mxu0
    %1743 = vdwg.mxu0
    %1744 = vmatprep.subr.mxu0 0.0
    %1745 = vmatpush1.msra.mxu0 0.0
    %1746 = vmatprep.subr.mxu0 0.0
    %1747 = vmatpush1.msra.mxu0 0.0
    %1748 = vmatprep.subr.mxu0 0.0
    %1749 = vmatpush1.msra.mxu0 0.0
    %1750 = vmatprep.subr.mxu0 0.0
    %1751 = vmatpush1.msra.mxu0 0.0
    %1752 = vmatprep.subr.mxu0 0.0
    %1753 = vmatpush1.msra.mxu0 0.0
    %1754 = vmatprep.subr.mxu0 0.0
    %1755 = vmatpush1.msra.mxu0 0.0
    %1756 = vmatprep.subr.mxu0 0.0
    %1757 = vmatpush1.msra.mxu0 0.0
    %1758 = vmatprep.subr.mxu0 0.0
    %1759 = vmatpush1.msra.mxu0 0.0
    %1760 = vmatprep.subr.mxu0 0.0
    %1761 = vmatpush1.msra.mxu0 0.0
    %1762 = vmatprep.subr.mxu0 0.0
    %1763 = vmatpush1.msra.mxu0 0.0
    %1764 = vmatprep.subr.mxu0 0.0
    %1765 = vmatpush1.msra.mxu0 0.0
    %1766 = vmatprep.subr.mxu0 0.0
    %1767 = vmatpush1.msra.mxu0 0.0
    %1768 = vmatprep.subr.mxu0 0.0
    %1769 = vmatpush1.msra.mxu0 0.0
    %1770 = vmatprep.subr.mxu0 0.0
    %1771 = vmatpush1.msra.mxu0 0.0
    %1772 = vmatprep.subr.mxu0 0.0
    %1773 = vmatpush1.msra.mxu0 0.0
    %1774 = vmatprep.subr.mxu0 0.0
    %v1775 = vand.u32 %v128, 4294901760
    %v1776 = vsub.f32 %v128, %v1775
    %v1777 = vand.u32 %v1776, 4294901760
    %1778 = vmatpush1.msra.mxu0 %v1777
    %1779 = vmatprep.subr.mxu0 0.0
    %1780 = vmatpush2.msra.mxu0 0.0
    %1781 = vmatprep.subr.mxu0 0.0
    %1782 = vmatpush2.msra.mxu0 0.0
    %1783 = vmatprep.subr.mxu0 0.0
    %1784 = vmatpush2.msra.mxu0 0.0
    %1785 = vmatprep.subr.mxu0 0.0
    %1786 = vmatpush2.msra.mxu0 0.0
    %1787 = vmatprep.subr.mxu0 0.0
    %1788 = vmatpush2.msra.mxu0 0.0
    %1789 = vmatprep.subr.mxu0 0.0
    %1790 = vmatpush2.msra.mxu0 0.0
    %1791 = vmatprep.subr.mxu0 0.0
    %1792 = vmatpush2.msra.mxu0 0.0
    %1793 = vmatprep.subr.mxu0 0.0
    %1794 = vmatpush2.msra.mxu0 0.0
    %1795 = vmatprep.subr.mxu0 0.0
    %1796 = vmatpush2.msra.mxu0 0.0
    %1797 = vmatprep.subr.mxu0 0.0
    %1798 = vmatpush2.msra.mxu0 0.0
    %1799 = vmatprep.subr.mxu0 0.0
    %1800 = vmatpush2.msra.mxu0 0.0
    %1801 = vmatprep.subr.mxu0 0.0
    %1802 = vmatpush2.msra.mxu0 0.0
    %1803 = vmatprep.subr.mxu0 0.0
    %1804 = vmatpush2.msra.mxu0 0.0
    %1805 = vmatprep.subr.mxu0 0.0
    %1806 = vmatpush2.msra.mxu0 0.0
    %1807 = vmatprep.subr.mxu0 0.0
    %1808 = vmatpush2.msra.mxu0 0.0
    %1809 = vmatprep.subr.mxu0 0.0
    %1810 = vmatpush2.msra.mxu0 0.0
    %1811 = vmatprep.mubr.f32.mxu0 0.0
    %v1812 = vand.u32 %v1340, 4294901760
    %1813 = vmatmul.mubr.f32.gmra.mxu0 %v1812
    %v1814 = vpop.f32.mrf.mxu0
    %v1815 = vadd.f32 %v1717, %v1814
    %v1816 = vpop.f32.mrf.mxu0
    %1817 = vmatprep.mubr.f32.mxu0 0.0
    %v1818 = vand.u32 %v1343, 4294901760
    %1819 = vmatmul.mubr.f32.gmra.mxu0 %v1818
    %v1820 = vpop.f32.mrf.mxu0
    %v1821 = vadd.f32 %v1725, %v1820
    %v1822 = vpop.f32.mrf.mxu0
    %1823 = vmatprep.mubr.f32.mxu0 0.0
    %v1824 = vand.u32 %v1346, 4294901760
    %1825 = vmatmul.mubr.f32.gmra.mxu0 %v1824
    %v1826 = vpop.f32.mrf.mxu0
    %v1827 = vadd.f32 %v1733, %v1826
    %v1828 = vpop.f32.mrf.mxu0
    %1829 = vmatprep.mubr.f32.mxu0 0.0
    %v1830 = vand.u32 %v1349, 4294901760
    %1831 = vmatmul.mubr.f32.gmra.mxu0 %v1830
    %v1832 = vpop.f32.mrf.mxu0
    %v1833 = vadd.f32 %v1741, %v1832
    %v1834 = vpop.f32.mrf.mxu0
    %1835 = vdwg.mxu0
    %1836 = vmatprep.subr.mxu0 0.0
    %1837 = vmatpush1.msra.mxu0 0.0
    %1838 = vmatprep.subr.mxu0 0.0
    %1839 = vmatpush1.msra.mxu0 0.0
    %1840 = vmatprep.subr.mxu0 0.0
    %1841 = vmatpush1.msra.mxu0 0.0
    %1842 = vmatprep.subr.mxu0 0.0
    %1843 = vmatpush1.msra.mxu0 0.0
    %1844 = vmatprep.subr.mxu0 0.0
    %1845 = vmatpush1.msra.mxu0 0.0
    %1846 = vmatprep.subr.mxu0 0.0
    %1847 = vmatpush1.msra.mxu0 0.0
    %1848 = vmatprep.subr.mxu0 0.0
    %1849 = vmatpush1.msra.mxu0 0.0
    %1850 = vmatprep.subr.mxu0 0.0
    %1851 = vmatpush1.msra.mxu0 0.0
    %1852 = vmatprep.subr.mxu0 0.0
    %1853 = vmatpush1.msra.mxu0 0.0
    %1854 = vmatprep.subr.mxu0 0.0
    %1855 = vmatpush1.msra.mxu0 0.0
    %1856 = vmatprep.subr.mxu0 0.0
    %1857 = vmatpush1.msra.mxu0 0.0
    %1858 = vmatprep.subr.mxu0 0.0
    %1859 = vmatpush1.msra.mxu0 0.0
    %1860 = vmatprep.subr.mxu0 0.0
    %1861 = vmatpush1.msra.mxu0 0.0
    %1862 = vmatprep.subr.mxu0 0.0
    %1863 = vmatpush1.msra.mxu0 0.0
    %1864 = vmatprep.subr.mxu0 0.0
    %1865 = vmatpush1.msra.mxu0 0.0
    %1866 = vmatprep.subr.mxu0 0.0
    %v1867 = vand.u32 %v128, 4294901760
    %1868 = vmatpush1.msra.mxu0 %v1867
    %1869 = vmatprep.subr.mxu0 0.0
    %1870 = vmatpush2.msra.mxu0 0.0
    %1871 = vmatprep.subr.mxu0 0.0
    %1872 = vmatpush2.msra.mxu0 0.0
    %1873 = vmatprep.subr.mxu0 0.0
    %1874 = vmatpush2.msra.mxu0 0.0
    %1875 = vmatprep.subr.mxu0 0.0
    %1876 = vmatpush2.msra.mxu0 0.0
    %1877 = vmatprep.subr.mxu0 0.0
    %1878 = vmatpush2.msra.mxu0 0.0
    %1879 = vmatprep.subr.mxu0 0.0
    %1880 = vmatpush2.msra.mxu0 0.0
    %1881 = vmatprep.subr.mxu0 0.0
    %1882 = vmatpush2.msra.mxu0 0.0
    %1883 = vmatprep.subr.mxu0 0.0
    %1884 = vmatpush2.msra.mxu0 0.0
    %1885 = vmatprep.subr.mxu0 0.0
    %1886 = vmatpush2.msra.mxu0 0.0
    %1887 = vmatprep.subr.mxu0 0.0
    %1888 = vmatpush2.msra.mxu0 0.0
    %1889 = vmatprep.subr.mxu0 0.0
    %1890 = vmatpush2.msra.mxu0 0.0
    %1891 = vmatprep.subr.mxu0 0.0
    %1892 = vmatpush2.msra.mxu0 0.0
    %1893 = vmatprep.subr.mxu0 0.0
    %1894 = vmatpush2.msra.mxu0 0.0
    %1895 = vmatprep.subr.mxu0 0.0
    %1896 = vmatpush2.msra.mxu0 0.0
    %1897 = vmatprep.subr.mxu0 0.0
    %1898 = vmatpush2.msra.mxu0 0.0
    %1899 = vmatprep.subr.mxu0 0.0
    %1900 = vmatpush2.msra.mxu0 0.0
    %1901 = vmatprep.mubr.f32.mxu0 0.0
    %v1902 = vand.u32 %v1340, 4294901760
    %1903 = vmatmul.mubr.f32.gmra.mxu0 %v1902
    %v1904 = vpop.f32.mrf.mxu0
    %v1905 = vadd.f32 %v1815, %v1904
    %v1906 = vpop.f32.mrf.mxu0
    %1907 = vmatprep.mubr.f32.mxu0 0.0
    %v1908 = vand.u32 %v1343, 4294901760
    %1909 = vmatmul.mubr.f32.gmra.mxu0 %v1908
    %v1910 = vpop.f32.mrf.mxu0
    %v1911 = vadd.f32 %v1821, %v1910
    %v1912 = vpop.f32.mrf.mxu0
    %1913 = vmatprep.mubr.f32.mxu0 0.0
    %v1914 = vand.u32 %v1346, 4294901760
    %1915 = vmatmul.mubr.f32.gmra.mxu0 %v1914
    %v1916 = vpop.f32.mrf.mxu0
    %v1917 = vadd.f32 %v1827, %v1916
    %v1918 = vpop.f32.mrf.mxu0
    %1919 = vmatprep.mubr.f32.mxu0 0.0
    %v1920 = vand.u32 %v1349, 4294901760
    %1921 = vmatmul.mubr.f32.gmra.mxu0 %v1920
    %v1922 = vpop.f32.mrf.mxu0
    %v1923 = vadd.f32 %v1833, %v1922
    %v1924 = vpop.f32.mrf.mxu0
    %1925 = vdwg.mxu0
    %v1926 = vadd.f32 %v1318, %v1905
    %v1927 = vadd.f32 %v1324, %v1911
    %v1928 = vadd.f32 %v1330, %v1917
    %v1929 = vadd.f32 %v1336, %v1923
    %v1931 = vlaneseq
    %v1932 = vshrl.u32 %v1931, 7
    %v1933 = vsub.s32 0, %v1932
    %v1934 = vrot.slane %v129, %v1933
    %v1936 = vadd.f32 %v1926, %v1934
    %v1937 = vadd.f32 %v1927, %v1934
    %v1938 = vadd.f32 %v1928, %v1934
    %v1939 = vadd.f32 %v1929, %v1934
    %vm1940 = vcmp.ge.f32.partialorder %v1936, 0.0
    %vm1941 = vcmp.ge.f32.partialorder %v1937, 0.0
    %vm1942 = vcmp.ge.f32.partialorder %v1938, 0.0
    %vm1943 = vcmp.ge.f32.partialorder %v1939, 0.0
    %v1944 = vmul.f32 %v1936, 0.1
    %v1945 = vmul.f32 %v1937, 0.1
    %v1946 = vmul.f32 %v1938, 0.1
    %v1947 = vmul.f32 %v1939, 0.1
    %v1948 = vsel %vm1940, %v1936, %v1944
    %v1949 = vsel %vm1941, %v1937, %v1945
    %v1950 = vsel %vm1942, %v1938, %v1946
    %v1951 = vsel %vm1943, %v1939, %v1947
    %v1952 = vld [vmem:[%s3] sm:$0xff]
    %v1953 = vld [vmem:[%s3 + $0x8] sm:$0xff]
    %v1954 = vld [vmem:[%s3 + $0x10] sm:$0xff]
    %v1955 = vld [vmem:[%s3 + $0x18] sm:$0xff]
    %v1956 = vld [vmem:[%s3 + $0x20] sm:$0xff]
    %v1957 = vld [vmem:[%s3 + $0x28] sm:$0xff]
    %v1958 = vld [vmem:[%s4] sm:$0x1]
    %v1963 = vrot.slane %v1948, 7
    %v1964 = vrot.slane %v1949, 7
    %v1965 = vsel %vm134, %v1963, %v1964
    %v1966 = vrot.slane %v1950, 7
    %v1967 = vsel %vm134, %v1964, %v1966
    %v1968 = vrot.slane %v1951, 7
    %v1969 = vsel %vm134, %v1966, %v1968
    %v1974 = vsel %vm134, 0.0, %v1963
    %v1975 = vmul.f32 %v1974, %v110
    %v1976 = vmul.f32 %v1965, %v111
    %v1977 = vmul.f32 %v1967, %v112
    %v1978 = vmul.f32 %v1969, %v113
    %v1979 = vrot.slane %v1948, 1
    %v1980 = vrot.slane %v1949, 1
    %v1981 = vsel %vm151, %v1979, %v1980
    %v1982 = vrot.slane %v1950, 1
    %v1983 = vsel %vm151, %v1980, %v1982
    %v1984 = vrot.slane %v1951, 1
    %v1985 = vsel %vm151, %v1982, %v1984
    %v1990 = vsel %vm151, %v1984, 0.0
    %v1991 = vmul.f32 %v1981, %v122
    %v1992 = vmul.f32 %v1983, %v123
    %v1993 = vmul.f32 %v1985, %v124
    %v1994 = vmul.f32 %v1990, %v125
    %vm1995 = vcmask 130048
    %v1996 = vsel %vm1995, %v1948, 0
    %v1998 = vsel %vm1995, %v1949, 0
    %v2000 = vsel %vm1995, %v1950, 0
    %v2002 = vsel %vm1995, %v1951, 0
    %2004 = vmatprep.subr.mxu0 0.0
    %2005 = vmatpush1.msra.mxu0 0.0
    %2006 = vmatprep.subr.mxu0 0.0
    %2007 = vmatpush1.msra.mxu0 0.0
    %2008 = vmatprep.subr.mxu0 0.0
    %2009 = vmatpush1.msra.mxu0 0.0
    %2010 = vmatprep.subr.mxu0 0.0
    %2011 = vmatpush1.msra.mxu0 0.0
    %2012 = vmatprep.subr.mxu0 0.0
    %2013 = vmatpush1.msra.mxu0 0.0
    %2014 = vmatprep.subr.mxu0 0.0
    %2015 = vmatpush1.msra.mxu0 0.0
    %2016 = vmatprep.subr.mxu0 0.0
    %2017 = vmatpush1.msra.mxu0 0.0
    %2018 = vmatprep.subr.mxu0 0.0
    %2019 = vmatpush1.msra.mxu0 0.0
    %2020 = vmatprep.subr.mxu0 0.0
    %2021 = vmatpush1.msra.mxu0 0.0
    %2022 = vmatprep.subr.mxu0 0.0
    %2023 = vmatpush1.msra.mxu0 0.0
    %2024 = vmatprep.subr.mxu0 0.0
    %2025 = vmatpush1.msra.mxu0 0.0
    %2026 = vmatprep.subr.mxu0 0.0
    %2027 = vmatpush1.msra.mxu0 0.0
    %2028 = vmatprep.subr.mxu0 0.0
    %2029 = vmatpush1.msra.mxu0 0.0
    %2030 = vmatprep.subr.mxu0 0.0
    %2031 = vmatpush1.msra.mxu0 0.0
    %2032 = vmatprep.subr.mxu0 0.0
    %v2033 = vand.u32 %v1955, 4294901760
    %2034 = vmatpush1.msra.mxu0 %v2033
    %2035 = vmatprep.subr.mxu0 0.0
    %v2036 = vand.u32 %v1954, 4294901760
    %2037 = vmatpush1.msra.mxu0 %v2036
    %2038 = vmatprep.subr.mxu0 0.0
    %2039 = vmatpush2.msra.mxu0 0.0
    %2040 = vmatprep.subr.mxu0 0.0
    %2041 = vmatpush2.msra.mxu0 0.0
    %2042 = vmatprep.subr.mxu0 0.0
    %2043 = vmatpush2.msra.mxu0 0.0
    %2044 = vmatprep.subr.mxu0 0.0
    %2045 = vmatpush2.msra.mxu0 0.0
    %2046 = vmatprep.subr.mxu0 0.0
    %2047 = vmatpush2.msra.mxu0 0.0
    %2048 = vmatprep.subr.mxu0 0.0
    %2049 = vmatpush2.msra.mxu0 0.0
    %2050 = vmatprep.subr.mxu0 0.0
    %2051 = vmatpush2.msra.mxu0 0.0
    %2052 = vmatprep.subr.mxu0 0.0
    %2053 = vmatpush2.msra.mxu0 0.0
    %2054 = vmatprep.subr.mxu0 0.0
    %2055 = vmatpush2.msra.mxu0 0.0
    %2056 = vmatprep.subr.mxu0 0.0
    %2057 = vmatpush2.msra.mxu0 0.0
    %2058 = vmatprep.subr.mxu0 0.0
    %2059 = vmatpush2.msra.mxu0 0.0
    %2060 = vmatprep.subr.mxu0 0.0
    %2061 = vmatpush2.msra.mxu0 0.0
    %2062 = vmatprep.subr.mxu0 0.0
    %2063 = vmatpush2.msra.mxu0 0.0
    %2064 = vmatprep.subr.mxu0 0.0
    %2065 = vmatpush2.msra.mxu0 0.0
    %2066 = vmatprep.subr.mxu0 0.0
    %2067 = vmatpush2.msra.mxu0 0.0
    %2068 = vmatprep.subr.mxu0 0.0
    %2069 = vmatpush2.msra.mxu0 0.0
    %2070 = vmatprep.mubr.f32.mxu0 0.0
    %v2071 = vand.u32 %v1996, 4294901760
    %v2072 = vsub.f32 %v1996, %v2071
    %v2073 = vand.u32 %v2072, 4294901760
    %v2074 = vsub.f32 %v2072, %v2073
    %v2075 = vand.u32 %v2074, 4294901760
    %2076 = vmatmul.mubr.f32.gmra.mxu0 %v2075
    %v2077 = vpop.f32.mrf.mxu0
    %v2078 = vadd.f32 0.0, %v2077
    %v2079 = vpop.f32.mrf.mxu0
    %2080 = vmatprep.mubr.f32.mxu0 0.0
    %v2081 = vand.u32 %v1998, 4294901760
    %v2082 = vsub.f32 %v1998, %v2081
    %v2083 = vand.u32 %v2082, 4294901760
    %v2084 = vsub.f32 %v2082, %v2083
    %v2085 = vand.u32 %v2084, 4294901760
    %2086 = vmatmul.mubr.f32.gmra.mxu0 %v2085
    %v2087 = vpop.f32.mrf.mxu0
    %v2088 = vadd.f32 0.0, %v2087
    %v2089 = vpop.f32.mrf.mxu0
    %2090 = vmatprep.mubr.f32.mxu0 0.0
    %v2091 = vand.u32 %v2000, 4294901760
    %v2092 = vsub.f32 %v2000, %v2091
    %v2093 = vand.u32 %v2092, 4294901760
    %v2094 = vsub.f32 %v2092, %v2093
    %v2095 = vand.u32 %v2094, 4294901760
    %2096 = vmatmul.mubr.f32.gmra.mxu0 %v2095
    %v2097 = vpop.f32.mrf.mxu0
    %v2098 = vadd.f32 0.0, %v2097
    %v2099 = vpop.f32.mrf.mxu0
    %2100 = vmatprep.mubr.f32.mxu0 0.0
    %v2101 = vand.u32 %v2002, 4294901760
    %v2102 = vsub.f32 %v2002, %v2101
    %v2103 = vand.u32 %v2102, 4294901760
    %v2104 = vsub.f32 %v2102, %v2103
    %v2105 = vand.u32 %v2104, 4294901760
    %2106 = vmatmul.mubr.f32.gmra.mxu0 %v2105
    %v2107 = vpop.f32.mrf.mxu0
    %v2108 = vadd.f32 0.0, %v2107
    %v2109 = vpop.f32.mrf.mxu0
    %2110 = vdwg.mxu0
    %2111 = vmatprep.subr.mxu0 0.0
    %2112 = vmatpush1.msra.mxu0 0.0
    %2113 = vmatprep.subr.mxu0 0.0
    %2114 = vmatpush1.msra.mxu0 0.0
    %2115 = vmatprep.subr.mxu0 0.0
    %2116 = vmatpush1.msra.mxu0 0.0
    %2117 = vmatprep.subr.mxu0 0.0
    %2118 = vmatpush1.msra.mxu0 0.0
    %2119 = vmatprep.subr.mxu0 0.0
    %2120 = vmatpush1.msra.mxu0 0.0
    %2121 = vmatprep.subr.mxu0 0.0
    %2122 = vmatpush1.msra.mxu0 0.0
    %2123 = vmatprep.subr.mxu0 0.0
    %2124 = vmatpush1.msra.mxu0 0.0
    %2125 = vmatprep.subr.mxu0 0.0
    %2126 = vmatpush1.msra.mxu0 0.0
    %2127 = vmatprep.subr.mxu0 0.0
    %2128 = vmatpush1.msra.mxu0 0.0
    %2129 = vmatprep.subr.mxu0 0.0
    %2130 = vmatpush1.msra.mxu0 0.0
    %2131 = vmatprep.subr.mxu0 0.0
    %2132 = vmatpush1.msra.mxu0 0.0
    %2133 = vmatprep.subr.mxu0 0.0
    %2134 = vmatpush1.msra.mxu0 0.0
    %2135 = vmatprep.subr.mxu0 0.0
    %2136 = vmatpush1.msra.mxu0 0.0
    %2137 = vmatprep.subr.mxu0 0.0
    %2138 = vmatpush1.msra.mxu0 0.0
    %2139 = vmatprep.subr.mxu0 0.0
    %v2140 = vand.u32 %v1955, 4294901760
    %v2141 = vsub.f32 %v1955, %v2140
    %v2142 = vand.u32 %v2141, 4294901760
    %v2143 = vsub.f32 %v2141, %v2142
    %v2144 = vand.u32 %v2143, 4294901760
    %2145 = vmatpush1.msra.mxu0 %v2144
    %2146 = vmatprep.subr.mxu0 0.0
    %v2147 = vand.u32 %v1954, 4294901760
    %v2148 = vsub.f32 %v1954, %v2147
    %v2149 = vand.u32 %v2148, 4294901760
    %v2150 = vsub.f32 %v2148, %v2149
    %v2151 = vand.u32 %v2150, 4294901760
    %2152 = vmatpush1.msra.mxu0 %v2151
    %2153 = vmatprep.subr.mxu0 0.0
    %2154 = vmatpush2.msra.mxu0 0.0
    %2155 = vmatprep.subr.mxu0 0.0
    %2156 = vmatpush2.msra.mxu0 0.0
    %2157 = vmatprep.subr.mxu0 0.0
    %2158 = vmatpush2.msra.mxu0 0.0
    %2159 = vmatprep.subr.mxu0 0.0
    %2160 = vmatpush2.msra.mxu0 0.0
    %2161 = vmatprep.subr.mxu0 0.0
    %2162 = vmatpush2.msra.mxu0 0.0
    %2163 = vmatprep.subr.mxu0 0.0
    %2164 = vmatpush2.msra.mxu0 0.0
    %2165 = vmatprep.subr.mxu0 0.0
    %2166 = vmatpush2.msra.mxu0 0.0
    %2167 = vmatprep.subr.mxu0 0.0
    %2168 = vmatpush2.msra.mxu0 0.0
    %2169 = vmatprep.subr.mxu0 0.0
    %2170 = vmatpush2.msra.mxu0 0.0
    %2171 = vmatprep.subr.mxu0 0.0
    %2172 = vmatpush2.msra.mxu0 0.0
    %2173 = vmatprep.subr.mxu0 0.0
    %2174 = vmatpush2.msra.mxu0 0.0
    %2175 = vmatprep.subr.mxu0 0.0
    %2176 = vmatpush2.msra.mxu0 0.0
    %2177 = vmatprep.subr.mxu0 0.0
    %2178 = vmatpush2.msra.mxu0 0.0
    %2179 = vmatprep.subr.mxu0 0.0
    %2180 = vmatpush2.msra.mxu0 0.0
    %2181 = vmatprep.subr.mxu0 0.0
    %2182 = vmatpush2.msra.mxu0 0.0
    %2183 = vmatprep.subr.mxu0 0.0
    %2184 = vmatpush2.msra.mxu0 0.0
    %2185 = vmatprep.mubr.f32.mxu0 0.0
    %v2186 = vand.u32 %v1996, 4294901760
    %2187 = vmatmul.mubr.f32.gmra.mxu0 %v2186
    %v2188 = vpop.f32.mrf.mxu0
    %v2189 = vadd.f32 %v2078, %v2188
    %v2190 = vpop.f32.mrf.mxu0
    %2191 = vmatprep.mubr.f32.mxu0 0.0
    %v2192 = vand.u32 %v1998, 4294901760
    %2193 = vmatmul.mubr.f32.gmra.mxu0 %v2192
    %v2194 = vpop.f32.mrf.mxu0
    %v2195 = vadd.f32 %v2088, %v2194
    %v2196 = vpop.f32.mrf.mxu0
    %2197 = vmatprep.mubr.f32.mxu0 0.0
    %v2198 = vand.u32 %v2000, 4294901760
    %2199 = vmatmul.mubr.f32.gmra.mxu0 %v2198
    %v2200 = vpop.f32.mrf.mxu0
    %v2201 = vadd.f32 %v2098, %v2200
    %v2202 = vpop.f32.mrf.mxu0
    %2203 = vmatprep.mubr.f32.mxu0 0.0
    %v2204 = vand.u32 %v2002, 4294901760
    %2205 = vmatmul.mubr.f32.gmra.mxu0 %v2204
    %v2206 = vpop.f32.mrf.mxu0
    %v2207 = vadd.f32 %v2108, %v2206
    %v2208 = vpop.f32.mrf.mxu0
    %2209 = vdwg.mxu0
    %2210 = vmatprep.subr.mxu0 0.0
    %2211 = vmatpush1.msra.mxu0 0.0
    %2212 = vmatprep.subr.mxu0 0.0
    %2213 = vmatpush1.msra.mxu0 0.0
    %2214 = vmatprep.subr.mxu0 0.0
    %2215 = vmatpush1.msra.mxu0 0.0
    %2216 = vmatprep.subr.mxu0 0.0
    %2217 = vmatpush1.msra.mxu0 0.0
    %2218 = vmatprep.subr.mxu0 0.0
    %2219 = vmatpush1.msra.mxu0 0.0
    %2220 = vmatprep.subr.mxu0 0.0
    %2221 = vmatpush1.msra.mxu0 0.0
    %2222 = vmatprep.subr.mxu0 0.0
    %2223 = vmatpush1.msra.mxu0 0.0
    %2224 = vmatprep.subr.mxu0 0.0
    %2225 = vmatpush1.msra.mxu0 0.0
    %2226 = vmatprep.subr.mxu0 0.0
    %2227 = vmatpush1.msra.mxu0 0.0
    %2228 = vmatprep.subr.mxu0 0.0
    %2229 = vmatpush1.msra.mxu0 0.0
    %2230 = vmatprep.subr.mxu0 0.0
    %2231 = vmatpush1.msra.mxu0 0.0
    %2232 = vmatprep.subr.mxu0 0.0
    %2233 = vmatpush1.msra.mxu0 0.0
    %2234 = vmatprep.subr.mxu0 0.0
    %2235 = vmatpush1.msra.mxu0 0.0
    %2236 = vmatprep.subr.mxu0 0.0
    %2237 = vmatpush1.msra.mxu0 0.0
    %2238 = vmatprep.subr.mxu0 0.0
    %v2239 = vand.u32 %v1955, 4294901760
    %v2240 = vsub.f32 %v1955, %v2239
    %2241 = vmatpush1.msra.mxu0 %v2240
    %2242 = vmatprep.subr.mxu0 0.0
    %v2243 = vand.u32 %v1954, 4294901760
    %v2244 = vsub.f32 %v1954, %v2243
    %2245 = vmatpush1.msra.mxu0 %v2244
    %2246 = vmatprep.subr.mxu0 0.0
    %2247 = vmatpush2.msra.mxu0 0.0
    %2248 = vmatprep.subr.mxu0 0.0
    %2249 = vmatpush2.msra.mxu0 0.0
    %2250 = vmatprep.subr.mxu0 0.0
    %2251 = vmatpush2.msra.mxu0 0.0
    %2252 = vmatprep.subr.mxu0 0.0
    %2253 = vmatpush2.msra.mxu0 0.0
    %2254 = vmatprep.subr.mxu0 0.0
    %2255 = vmatpush2.msra.mxu0 0.0
    %2256 = vmatprep.subr.mxu0 0.0
    %2257 = vmatpush2.msra.mxu0 0.0
    %2258 = vmatprep.subr.mxu0 0.0
    %2259 = vmatpush2.msra.mxu0 0.0
    %2260 = vmatprep.subr.mxu0 0.0
    %2261 = vmatpush2.msra.mxu0 0.0
    %2262 = vmatprep.subr.mxu0 0.0
    %2263 = vmatpush2.msra.mxu0 0.0
    %2264 = vmatprep.subr.mxu0 0.0
    %2265 = vmatpush2.msra.mxu0 0.0
    %2266 = vmatprep.subr.mxu0 0.0
    %2267 = vmatpush2.msra.mxu0 0.0
    %2268 = vmatprep.subr.mxu0 0.0
    %2269 = vmatpush2.msra.mxu0 0.0
    %2270 = vmatprep.subr.mxu0 0.0
    %2271 = vmatpush2.msra.mxu0 0.0
    %2272 = vmatprep.subr.mxu0 0.0
    %2273 = vmatpush2.msra.mxu0 0.0
    %2274 = vmatprep.subr.mxu0 0.0
    %2275 = vmatpush2.msra.mxu0 0.0
    %2276 = vmatprep.subr.mxu0 0.0
    %2277 = vmatpush2.msra.mxu0 0.0
    %2278 = vmatprep.mubr.f32.mxu0 0.0
    %v2279 = vand.u32 %v1996, 4294901760
    %v2280 = vsub.f32 %v1996, %v2279
    %2281 = vmatmul.mubr.f32.gmra.mxu0 %v2280
    %v2282 = vpop.f32.mrf.mxu0
    %v2283 = vadd.f32 %v2189, %v2282
    %v2284 = vpop.f32.mrf.mxu0
    %2285 = vmatprep.mubr.f32.mxu0 0.0
    %v2286 = vand.u32 %v1998, 4294901760
    %v2287 = vsub.f32 %v1998, %v2286
    %2288 = vmatmul.mubr.f32.gmra.mxu0 %v2287
    %v2289 = vpop.f32.mrf.mxu0
    %v2290 = vadd.f32 %v2195, %v2289
    %v2291 = vpop.f32.mrf.mxu0
    %2292 = vmatprep.mubr.f32.mxu0 0.0
    %v2293 = vand.u32 %v2000, 4294901760
    %v2294 = vsub.f32 %v2000, %v2293
    %2295 = vmatmul.mubr.f32.gmra.mxu0 %v2294
    %v2296 = vpop.f32.mrf.mxu0
    %v2297 = vadd.f32 %v2201, %v2296
    %v2298 = vpop.f32.mrf.mxu0
    %2299 = vmatprep.mubr.f32.mxu0 0.0
    %v2300 = vand.u32 %v2002, 4294901760
    %v2301 = vsub.f32 %v2002, %v2300
    %2302 = vmatmul.mubr.f32.gmra.mxu0 %v2301
    %v2303 = vpop.f32.mrf.mxu0
    %v2304 = vadd.f32 %v2207, %v2303
    %v2305 = vpop.f32.mrf.mxu0
    %2306 = vdwg.mxu0
    %2307 = vmatprep.subr.mxu0 0.0
    %2308 = vmatpush1.msra.mxu0 0.0
    %2309 = vmatprep.subr.mxu0 0.0
    %2310 = vmatpush1.msra.mxu0 0.0
    %2311 = vmatprep.subr.mxu0 0.0
    %2312 = vmatpush1.msra.mxu0 0.0
    %2313 = vmatprep.subr.mxu0 0.0
    %2314 = vmatpush1.msra.mxu0 0.0
    %2315 = vmatprep.subr.mxu0 0.0
    %2316 = vmatpush1.msra.mxu0 0.0
    %2317 = vmatprep.subr.mxu0 0.0
    %2318 = vmatpush1.msra.mxu0 0.0
    %2319 = vmatprep.subr.mxu0 0.0
    %2320 = vmatpush1.msra.mxu0 0.0
    %2321 = vmatprep.subr.mxu0 0.0
    %2322 = vmatpush1.msra.mxu0 0.0
    %2323 = vmatprep.subr.mxu0 0.0
    %2324 = vmatpush1.msra.mxu0 0.0
    %2325 = vmatprep.subr.mxu0 0.0
    %2326 = vmatpush1.msra.mxu0 0.0
    %2327 = vmatprep.subr.mxu0 0.0
    %2328 = vmatpush1.msra.mxu0 0.0
    %2329 = vmatprep.subr.mxu0 0.0
    %2330 = vmatpush1.msra.mxu0 0.0
    %2331 = vmatprep.subr.mxu0 0.0
    %2332 = vmatpush1.msra.mxu0 0.0
    %2333 = vmatprep.subr.mxu0 0.0
    %2334 = vmatpush1.msra.mxu0 0.0
    %2335 = vmatprep.subr.mxu0 0.0
    %v2336 = vand.u32 %v1955, 4294901760
    %2337 = vmatpush1.msra.mxu0 %v2336
    %2338 = vmatprep.subr.mxu0 0.0
    %v2339 = vand.u32 %v1954, 4294901760
    %2340 = vmatpush1.msra.mxu0 %v2339
    %2341 = vmatprep.subr.mxu0 0.0
    %2342 = vmatpush2.msra.mxu0 0.0
    %2343 = vmatprep.subr.mxu0 0.0
    %2344 = vmatpush2.msra.mxu0 0.0
    %2345 = vmatprep.subr.mxu0 0.0
    %2346 = vmatpush2.msra.mxu0 0.0
    %2347 = vmatprep.subr.mxu0 0.0
    %2348 = vmatpush2.msra.mxu0 0.0
    %2349 = vmatprep.subr.mxu0 0.0
    %2350 = vmatpush2.msra.mxu0 0.0
    %2351 = vmatprep.subr.mxu0 0.0
    %2352 = vmatpush2.msra.mxu0 0.0
    %2353 = vmatprep.subr.mxu0 0.0
    %2354 = vmatpush2.msra.mxu0 0.0
    %2355 = vmatprep.subr.mxu0 0.0
    %2356 = vmatpush2.msra.mxu0 0.0
    %2357 = vmatprep.subr.mxu0 0.0
    %2358 = vmatpush2.msra.mxu0 0.0
    %2359 = vmatprep.subr.mxu0 0.0
    %2360 = vmatpush2.msra.mxu0 0.0
    %2361 = vmatprep.subr.mxu0 0.0
    %2362 = vmatpush2.msra.mxu0 0.0
    %2363 = vmatprep.subr.mxu0 0.0
    %2364 = vmatpush2.msra.mxu0 0.0
    %2365 = vmatprep.subr.mxu0 0.0
    %2366 = vmatpush2.msra.mxu0 0.0
    %2367 = vmatprep.subr.mxu0 0.0
    %2368 = vmatpush2.msra.mxu0 0.0
    %2369 = vmatprep.subr.mxu0 0.0
    %2370 = vmatpush2.msra.mxu0 0.0
    %2371 = vmatprep.subr.mxu0 0.0
    %2372 = vmatpush2.msra.mxu0 0.0
    %2373 = vmatprep.mubr.f32.mxu0 0.0
    %v2374 = vand.u32 %v1996, 4294901760
    %v2375 = vsub.f32 %v1996, %v2374
    %v2376 = vand.u32 %v2375, 4294901760
    %2377 = vmatmul.mubr.f32.gmra.mxu0 %v2376
    %v2378 = vpop.f32.mrf.mxu0
    %v2379 = vadd.f32 %v2283, %v2378
    %v2380 = vpop.f32.mrf.mxu0
    %2381 = vmatprep.mubr.f32.mxu0 0.0
    %v2382 = vand.u32 %v1998, 4294901760
    %v2383 = vsub.f32 %v1998, %v2382
    %v2384 = vand.u32 %v2383, 4294901760
    %2385 = vmatmul.mubr.f32.gmra.mxu0 %v2384
    %v2386 = vpop.f32.mrf.mxu0
    %v2387 = vadd.f32 %v2290, %v2386
    %v2388 = vpop.f32.mrf.mxu0
    %2389 = vmatprep.mubr.f32.mxu0 0.0
    %v2390 = vand.u32 %v2000, 4294901760
    %v2391 = vsub.f32 %v2000, %v2390
    %v2392 = vand.u32 %v2391, 4294901760
    %2393 = vmatmul.mubr.f32.gmra.mxu0 %v2392
    %v2394 = vpop.f32.mrf.mxu0
    %v2395 = vadd.f32 %v2297, %v2394
    %v2396 = vpop.f32.mrf.mxu0
    %2397 = vmatprep.mubr.f32.mxu0 0.0
    %v2398 = vand.u32 %v2002, 4294901760
    %v2399 = vsub.f32 %v2002, %v2398
    %v2400 = vand.u32 %v2399, 4294901760
    %2401 = vmatmul.mubr.f32.gmra.mxu0 %v2400
    %v2402 = vpop.f32.mrf.mxu0
    %v2403 = vadd.f32 %v2304, %v2402
    %v2404 = vpop.f32.mrf.mxu0
    %2405 = vdwg.mxu0
    %2406 = vmatprep.subr.mxu0 0.0
    %2407 = vmatpush1.msra.mxu0 0.0
    %2408 = vmatprep.subr.mxu0 0.0
    %2409 = vmatpush1.msra.mxu0 0.0
    %2410 = vmatprep.subr.mxu0 0.0
    %2411 = vmatpush1.msra.mxu0 0.0
    %2412 = vmatprep.subr.mxu0 0.0
    %2413 = vmatpush1.msra.mxu0 0.0
    %2414 = vmatprep.subr.mxu0 0.0
    %2415 = vmatpush1.msra.mxu0 0.0
    %2416 = vmatprep.subr.mxu0 0.0
    %2417 = vmatpush1.msra.mxu0 0.0
    %2418 = vmatprep.subr.mxu0 0.0
    %2419 = vmatpush1.msra.mxu0 0.0
    %2420 = vmatprep.subr.mxu0 0.0
    %2421 = vmatpush1.msra.mxu0 0.0
    %2422 = vmatprep.subr.mxu0 0.0
    %2423 = vmatpush1.msra.mxu0 0.0
    %2424 = vmatprep.subr.mxu0 0.0
    %2425 = vmatpush1.msra.mxu0 0.0
    %2426 = vmatprep.subr.mxu0 0.0
    %2427 = vmatpush1.msra.mxu0 0.0
    %2428 = vmatprep.subr.mxu0 0.0
    %2429 = vmatpush1.msra.mxu0 0.0
    %2430 = vmatprep.subr.mxu0 0.0
    %2431 = vmatpush1.msra.mxu0 0.0
    %2432 = vmatprep.subr.mxu0 0.0
    %2433 = vmatpush1.msra.mxu0 0.0
    %2434 = vmatprep.subr.mxu0 0.0
    %v2435 = vand.u32 %v1955, 4294901760
    %v2436 = vsub.f32 %v1955, %v2435
    %v2437 = vand.u32 %v2436, 4294901760
    %2438 = vmatpush1.msra.mxu0 %v2437
    %2439 = vmatprep.subr.mxu0 0.0
    %v2440 = vand.u32 %v1954, 4294901760
    %v2441 = vsub.f32 %v1954, %v2440
    %v2442 = vand.u32 %v2441, 4294901760
    %2443 = vmatpush1.msra.mxu0 %v2442
    %2444 = vmatprep.subr.mxu0 0.0
    %2445 = vmatpush2.msra.mxu0 0.0
    %2446 = vmatprep.subr.mxu0 0.0
    %2447 = vmatpush2.msra.mxu0 0.0
    %2448 = vmatprep.subr.mxu0 0.0
    %2449 = vmatpush2.msra.mxu0 0.0
    %2450 = vmatprep.subr.mxu0 0.0
    %2451 = vmatpush2.msra.mxu0 0.0
    %2452 = vmatprep.subr.mxu0 0.0
    %2453 = vmatpush2.msra.mxu0 0.0
    %2454 = vmatprep.subr.mxu0 0.0
    %2455 = vmatpush2.msra.mxu0 0.0
    %2456 = vmatprep.subr.mxu0 0.0
    %2457 = vmatpush2.msra.mxu0 0.0
    %2458 = vmatprep.subr.mxu0 0.0
    %2459 = vmatpush2.msra.mxu0 0.0
    %2460 = vmatprep.subr.mxu0 0.0
    %2461 = vmatpush2.msra.mxu0 0.0
    %2462 = vmatprep.subr.mxu0 0.0
    %2463 = vmatpush2.msra.mxu0 0.0
    %2464 = vmatprep.subr.mxu0 0.0
    %2465 = vmatpush2.msra.mxu0 0.0
    %2466 = vmatprep.subr.mxu0 0.0
    %2467 = vmatpush2.msra.mxu0 0.0
    %2468 = vmatprep.subr.mxu0 0.0
    %2469 = vmatpush2.msra.mxu0 0.0
    %2470 = vmatprep.subr.mxu0 0.0
    %2471 = vmatpush2.msra.mxu0 0.0
    %2472 = vmatprep.subr.mxu0 0.0
    %2473 = vmatpush2.msra.mxu0 0.0
    %2474 = vmatprep.subr.mxu0 0.0
    %2475 = vmatpush2.msra.mxu0 0.0
    %2476 = vmatprep.mubr.f32.mxu0 0.0
    %v2477 = vand.u32 %v1996, 4294901760
    %2478 = vmatmul.mubr.f32.gmra.mxu0 %v2477
    %v2479 = vpop.f32.mrf.mxu0
    %v2480 = vadd.f32 %v2379, %v2479
    %v2481 = vpop.f32.mrf.mxu0
    %2482 = vmatprep.mubr.f32.mxu0 0.0
    %v2483 = vand.u32 %v1998, 4294901760
    %2484 = vmatmul.mubr.f32.gmra.mxu0 %v2483
    %v2485 = vpop.f32.mrf.mxu0
    %v2486 = vadd.f32 %v2387, %v2485
    %v2487 = vpop.f32.mrf.mxu0
    %2488 = vmatprep.mubr.f32.mxu0 0.0
    %v2489 = vand.u32 %v2000, 4294901760
    %2490 = vmatmul.mubr.f32.gmra.mxu0 %v2489
    %v2491 = vpop.f32.mrf.mxu0
    %v2492 = vadd.f32 %v2395, %v2491
    %v2493 = vpop.f32.mrf.mxu0
    %2494 = vmatprep.mubr.f32.mxu0 0.0
    %v2495 = vand.u32 %v2002, 4294901760
    %2496 = vmatmul.mubr.f32.gmra.mxu0 %v2495
    %v2497 = vpop.f32.mrf.mxu0
    %v2498 = vadd.f32 %v2403, %v2497
    %v2499 = vpop.f32.mrf.mxu0
    %2500 = vdwg.mxu0
    %2501 = vmatprep.subr.mxu0 0.0
    %2502 = vmatpush1.msra.mxu0 0.0
    %2503 = vmatprep.subr.mxu0 0.0
    %2504 = vmatpush1.msra.mxu0 0.0
    %2505 = vmatprep.subr.mxu0 0.0
    %2506 = vmatpush1.msra.mxu0 0.0
    %2507 = vmatprep.subr.mxu0 0.0
    %2508 = vmatpush1.msra.mxu0 0.0
    %2509 = vmatprep.subr.mxu0 0.0
    %2510 = vmatpush1.msra.mxu0 0.0
    %2511 = vmatprep.subr.mxu0 0.0
    %2512 = vmatpush1.msra.mxu0 0.0
    %2513 = vmatprep.subr.mxu0 0.0
    %2514 = vmatpush1.msra.mxu0 0.0
    %2515 = vmatprep.subr.mxu0 0.0
    %2516 = vmatpush1.msra.mxu0 0.0
    %2517 = vmatprep.subr.mxu0 0.0
    %2518 = vmatpush1.msra.mxu0 0.0
    %2519 = vmatprep.subr.mxu0 0.0
    %2520 = vmatpush1.msra.mxu0 0.0
    %2521 = vmatprep.subr.mxu0 0.0
    %2522 = vmatpush1.msra.mxu0 0.0
    %2523 = vmatprep.subr.mxu0 0.0
    %2524 = vmatpush1.msra.mxu0 0.0
    %2525 = vmatprep.subr.mxu0 0.0
    %2526 = vmatpush1.msra.mxu0 0.0
    %2527 = vmatprep.subr.mxu0 0.0
    %2528 = vmatpush1.msra.mxu0 0.0
    %2529 = vmatprep.subr.mxu0 0.0
    %v2530 = vand.u32 %v1955, 4294901760
    %2531 = vmatpush1.msra.mxu0 %v2530
    %2532 = vmatprep.subr.mxu0 0.0
    %v2533 = vand.u32 %v1954, 4294901760
    %2534 = vmatpush1.msra.mxu0 %v2533
    %2535 = vmatprep.subr.mxu0 0.0
    %2536 = vmatpush2.msra.mxu0 0.0
    %2537 = vmatprep.subr.mxu0 0.0
    %2538 = vmatpush2.msra.mxu0 0.0
    %2539 = vmatprep.subr.mxu0 0.0
    %2540 = vmatpush2.msra.mxu0 0.0
    %2541 = vmatprep.subr.mxu0 0.0
    %2542 = vmatpush2.msra.mxu0 0.0
    %2543 = vmatprep.subr.mxu0 0.0
    %2544 = vmatpush2.msra.mxu0 0.0
    %2545 = vmatprep.subr.mxu0 0.0
    %2546 = vmatpush2.msra.mxu0 0.0
    %2547 = vmatprep.subr.mxu0 0.0
    %2548 = vmatpush2.msra.mxu0 0.0
    %2549 = vmatprep.subr.mxu0 0.0
    %2550 = vmatpush2.msra.mxu0 0.0
    %2551 = vmatprep.subr.mxu0 0.0
    %2552 = vmatpush2.msra.mxu0 0.0
    %2553 = vmatprep.subr.mxu0 0.0
    %2554 = vmatpush2.msra.mxu0 0.0
    %2555 = vmatprep.subr.mxu0 0.0
    %2556 = vmatpush2.msra.mxu0 0.0
    %2557 = vmatprep.subr.mxu0 0.0
    %2558 = vmatpush2.msra.mxu0 0.0
    %2559 = vmatprep.subr.mxu0 0.0
    %2560 = vmatpush2.msra.mxu0 0.0
    %2561 = vmatprep.subr.mxu0 0.0
    %2562 = vmatpush2.msra.mxu0 0.0
    %2563 = vmatprep.subr.mxu0 0.0
    %2564 = vmatpush2.msra.mxu0 0.0
    %2565 = vmatprep.subr.mxu0 0.0
    %2566 = vmatpush2.msra.mxu0 0.0
    %2567 = vmatprep.mubr.f32.mxu0 0.0
    %v2568 = vand.u32 %v1996, 4294901760
    %2569 = vmatmul.mubr.f32.gmra.mxu0 %v2568
    %v2570 = vpop.f32.mrf.mxu0
    %v2571 = vadd.f32 %v2480, %v2570
    %v2572 = vpop.f32.mrf.mxu0
    %2573 = vmatprep.mubr.f32.mxu0 0.0
    %v2574 = vand.u32 %v1998, 4294901760
    %2575 = vmatmul.mubr.f32.gmra.mxu0 %v2574
    %v2576 = vpop.f32.mrf.mxu0
    %v2577 = vadd.f32 %v2486, %v2576
    %v2578 = vpop.f32.mrf.mxu0
    %2579 = vmatprep.mubr.f32.mxu0 0.0
    %v2580 = vand.u32 %v2000, 4294901760
    %2581 = vmatmul.mubr.f32.gmra.mxu0 %v2580
    %v2582 = vpop.f32.mrf.mxu0
    %v2583 = vadd.f32 %v2492, %v2582
    %v2584 = vpop.f32.mrf.mxu0
    %2585 = vmatprep.mubr.f32.mxu0 0.0
    %v2586 = vand.u32 %v2002, 4294901760
    %2587 = vmatmul.mubr.f32.gmra.mxu0 %v2586
    %v2588 = vpop.f32.mrf.mxu0
    %v2589 = vadd.f32 %v2498, %v2588
    %v2590 = vpop.f32.mrf.mxu0
    %2591 = vdwg.mxu0
    %v2593 = vsel %vm1995, %v1975, 0
    %v2596 = vsel %vm1995, %v1976, 0
    %v2599 = vsel %vm1995, %v1977, 0
    %v2602 = vsel %vm1995, %v1978, 0
    %2604 = vmatprep.subr.mxu0 0.0
    %2605 = vmatpush1.msra.mxu0 0.0
    %2606 = vmatprep.subr.mxu0 0.0
    %2607 = vmatpush1.msra.mxu0 0.0
    %2608 = vmatprep.subr.mxu0 0.0
    %2609 = vmatpush1.msra.mxu0 0.0
    %2610 = vmatprep.subr.mxu0 0.0
    %2611 = vmatpush1.msra.mxu0 0.0
    %2612 = vmatprep.subr.mxu0 0.0
    %2613 = vmatpush1.msra.mxu0 0.0
    %2614 = vmatprep.subr.mxu0 0.0
    %2615 = vmatpush1.msra.mxu0 0.0
    %2616 = vmatprep.subr.mxu0 0.0
    %2617 = vmatpush1.msra.mxu0 0.0
    %2618 = vmatprep.subr.mxu0 0.0
    %2619 = vmatpush1.msra.mxu0 0.0
    %2620 = vmatprep.subr.mxu0 0.0
    %2621 = vmatpush1.msra.mxu0 0.0
    %2622 = vmatprep.subr.mxu0 0.0
    %2623 = vmatpush1.msra.mxu0 0.0
    %2624 = vmatprep.subr.mxu0 0.0
    %2625 = vmatpush1.msra.mxu0 0.0
    %2626 = vmatprep.subr.mxu0 0.0
    %2627 = vmatpush1.msra.mxu0 0.0
    %2628 = vmatprep.subr.mxu0 0.0
    %2629 = vmatpush1.msra.mxu0 0.0
    %2630 = vmatprep.subr.mxu0 0.0
    %2631 = vmatpush1.msra.mxu0 0.0
    %2632 = vmatprep.subr.mxu0 0.0
    %v2633 = vand.u32 %v1953, 4294901760
    %2634 = vmatpush1.msra.mxu0 %v2633
    %2635 = vmatprep.subr.mxu0 0.0
    %v2636 = vand.u32 %v1952, 4294901760
    %2637 = vmatpush1.msra.mxu0 %v2636
    %2638 = vmatprep.subr.mxu0 0.0
    %2639 = vmatpush2.msra.mxu0 0.0
    %2640 = vmatprep.subr.mxu0 0.0
    %2641 = vmatpush2.msra.mxu0 0.0
    %2642 = vmatprep.subr.mxu0 0.0
    %2643 = vmatpush2.msra.mxu0 0.0
    %2644 = vmatprep.subr.mxu0 0.0
    %2645 = vmatpush2.msra.mxu0 0.0
    %2646 = vmatprep.subr.mxu0 0.0
    %2647 = vmatpush2.msra.mxu0 0.0
    %2648 = vmatprep.subr.mxu0 0.0
    %2649 = vmatpush2.msra.mxu0 0.0
    %2650 = vmatprep.subr.mxu0 0.0
    %2651 = vmatpush2.msra.mxu0 0.0
    %2652 = vmatprep.subr.mxu0 0.0
    %2653 = vmatpush2.msra.mxu0 0.0
    %2654 = vmatprep.subr.mxu0 0.0
    %2655 = vmatpush2.msra.mxu0 0.0
    %2656 = vmatprep.subr.mxu0 0.0
    %2657 = vmatpush2.msra.mxu0 0.0
    %2658 = vmatprep.subr.mxu0 0.0
    %2659 = vmatpush2.msra.mxu0 0.0
    %2660 = vmatprep.subr.mxu0 0.0
    %2661 = vmatpush2.msra.mxu0 0.0
    %2662 = vmatprep.subr.mxu0 0.0
    %2663 = vmatpush2.msra.mxu0 0.0
    %2664 = vmatprep.subr.mxu0 0.0
    %2665 = vmatpush2.msra.mxu0 0.0
    %2666 = vmatprep.subr.mxu0 0.0
    %2667 = vmatpush2.msra.mxu0 0.0
    %2668 = vmatprep.subr.mxu0 0.0
    %2669 = vmatpush2.msra.mxu0 0.0
    %2670 = vmatprep.mubr.f32.mxu0 0.0
    %v2671 = vand.u32 %v2593, 4294901760
    %v2672 = vsub.f32 %v2593, %v2671
    %v2673 = vand.u32 %v2672, 4294901760
    %v2674 = vsub.f32 %v2672, %v2673
    %v2675 = vand.u32 %v2674, 4294901760
    %2676 = vmatmul.mubr.f32.gmra.mxu0 %v2675
    %v2677 = vpop.f32.mrf.mxu0
    %v2678 = vadd.f32 %v2571, %v2677
    %v2679 = vpop.f32.mrf.mxu0
    %2680 = vmatprep.mubr.f32.mxu0 0.0
    %v2681 = vand.u32 %v2596, 4294901760
    %v2682 = vsub.f32 %v2596, %v2681
    %v2683 = vand.u32 %v2682, 4294901760
    %v2684 = vsub.f32 %v2682, %v2683
    %v2685 = vand.u32 %v2684, 4294901760
    %2686 = vmatmul.mubr.f32.gmra.mxu0 %v2685
    %v2687 = vpop.f32.mrf.mxu0
    %v2688 = vadd.f32 %v2577, %v2687
    %v2689 = vpop.f32.mrf.mxu0
    %2690 = vmatprep.mubr.f32.mxu0 0.0
    %v2691 = vand.u32 %v2599, 4294901760
    %v2692 = vsub.f32 %v2599, %v2691
    %v2693 = vand.u32 %v2692, 4294901760
    %v2694 = vsub.f32 %v2692, %v2693
    %v2695 = vand.u32 %v2694, 4294901760
    %2696 = vmatmul.mubr.f32.gmra.mxu0 %v2695
    %v2697 = vpop.f32.mrf.mxu0
    %v2698 = vadd.f32 %v2583, %v2697
    %v2699 = vpop.f32.mrf.mxu0
    %2700 = vmatprep.mubr.f32.mxu0 0.0
    %v2701 = vand.u32 %v2602, 4294901760
    %v2702 = vsub.f32 %v2602, %v2701
    %v2703 = vand.u32 %v2702, 4294901760
    %v2704 = vsub.f32 %v2702, %v2703
    %v2705 = vand.u32 %v2704, 4294901760
    %2706 = vmatmul.mubr.f32.gmra.mxu0 %v2705
    %v2707 = vpop.f32.mrf.mxu0
    %v2708 = vadd.f32 %v2589, %v2707
    %v2709 = vpop.f32.mrf.mxu0
    %2710 = vdwg.mxu0
    %2711 = vmatprep.subr.mxu0 0.0
    %2712 = vmatpush1.msra.mxu0 0.0
    %2713 = vmatprep.subr.mxu0 0.0
    %2714 = vmatpush1.msra.mxu0 0.0
    %2715 = vmatprep.subr.mxu0 0.0
    %2716 = vmatpush1.msra.mxu0 0.0
    %2717 = vmatprep.subr.mxu0 0.0
    %2718 = vmatpush1.msra.mxu0 0.0
    %2719 = vmatprep.subr.mxu0 0.0
    %2720 = vmatpush1.msra.mxu0 0.0
    %2721 = vmatprep.subr.mxu0 0.0
    %2722 = vmatpush1.msra.mxu0 0.0
    %2723 = vmatprep.subr.mxu0 0.0
    %2724 = vmatpush1.msra.mxu0 0.0
    %2725 = vmatprep.subr.mxu0 0.0
    %2726 = vmatpush1.msra.mxu0 0.0
    %2727 = vmatprep.subr.mxu0 0.0
    %2728 = vmatpush1.msra.mxu0 0.0
    %2729 = vmatprep.subr.mxu0 0.0
    %2730 = vmatpush1.msra.mxu0 0.0
    %2731 = vmatprep.subr.mxu0 0.0
    %2732 = vmatpush1.msra.mxu0 0.0
    %2733 = vmatprep.subr.mxu0 0.0
    %2734 = vmatpush1.msra.mxu0 0.0
    %2735 = vmatprep.subr.mxu0 0.0
    %2736 = vmatpush1.msra.mxu0 0.0
    %2737 = vmatprep.subr.mxu0 0.0
    %2738 = vmatpush1.msra.mxu0 0.0
    %2739 = vmatprep.subr.mxu0 0.0
    %v2740 = vand.u32 %v1953, 4294901760
    %v2741 = vsub.f32 %v1953, %v2740
    %v2742 = vand.u32 %v2741, 4294901760
    %v2743 = vsub.f32 %v2741, %v2742
    %v2744 = vand.u32 %v2743, 4294901760
    %2745 = vmatpush1.msra.mxu0 %v2744
    %2746 = vmatprep.subr.mxu0 0.0
    %v2747 = vand.u32 %v1952, 4294901760
    %v2748 = vsub.f32 %v1952, %v2747
    %v2749 = vand.u32 %v2748, 4294901760
    %v2750 = vsub.f32 %v2748, %v2749
    %v2751 = vand.u32 %v2750, 4294901760
    %2752 = vmatpush1.msra.mxu0 %v2751
    %2753 = vmatprep.subr.mxu0 0.0
    %2754 = vmatpush2.msra.mxu0 0.0
    %2755 = vmatprep.subr.mxu0 0.0
    %2756 = vmatpush2.msra.mxu0 0.0
    %2757 = vmatprep.subr.mxu0 0.0
    %2758 = vmatpush2.msra.mxu0 0.0
    %2759 = vmatprep.subr.mxu0 0.0
    %2760 = vmatpush2.msra.mxu0 0.0
    %2761 = vmatprep.subr.mxu0 0.0
    %2762 = vmatpush2.msra.mxu0 0.0
    %2763 = vmatprep.subr.mxu0 0.0
    %2764 = vmatpush2.msra.mxu0 0.0
    %2765 = vmatprep.subr.mxu0 0.0
    %2766 = vmatpush2.msra.mxu0 0.0
    %2767 = vmatprep.subr.mxu0 0.0
    %2768 = vmatpush2.msra.mxu0 0.0
    %2769 = vmatprep.subr.mxu0 0.0
    %2770 = vmatpush2.msra.mxu0 0.0
    %2771 = vmatprep.subr.mxu0 0.0
    %2772 = vmatpush2.msra.mxu0 0.0
    %2773 = vmatprep.subr.mxu0 0.0
    %2774 = vmatpush2.msra.mxu0 0.0
    %2775 = vmatprep.subr.mxu0 0.0
    %2776 = vmatpush2.msra.mxu0 0.0
    %2777 = vmatprep.subr.mxu0 0.0
    %2778 = vmatpush2.msra.mxu0 0.0
    %2779 = vmatprep.subr.mxu0 0.0
    %2780 = vmatpush2.msra.mxu0 0.0
    %2781 = vmatprep.subr.mxu0 0.0
    %2782 = vmatpush2.msra.mxu0 0.0
    %2783 = vmatprep.subr.mxu0 0.0
    %2784 = vmatpush2.msra.mxu0 0.0
    %2785 = vmatprep.mubr.f32.mxu0 0.0
    %v2786 = vand.u32 %v2593, 4294901760
    %2787 = vmatmul.mubr.f32.gmra.mxu0 %v2786
    %v2788 = vpop.f32.mrf.mxu0
    %v2789 = vadd.f32 %v2678, %v2788
    %v2790 = vpop.f32.mrf.mxu0
    %2791 = vmatprep.mubr.f32.mxu0 0.0
    %v2792 = vand.u32 %v2596, 4294901760
    %2793 = vmatmul.mubr.f32.gmra.mxu0 %v2792
    %v2794 = vpop.f32.mrf.mxu0
    %v2795 = vadd.f32 %v2688, %v2794
    %v2796 = vpop.f32.mrf.mxu0
    %2797 = vmatprep.mubr.f32.mxu0 0.0
    %v2798 = vand.u32 %v2599, 4294901760
    %2799 = vmatmul.mubr.f32.gmra.mxu0 %v2798
    %v2800 = vpop.f32.mrf.mxu0
    %v2801 = vadd.f32 %v2698, %v2800
    %v2802 = vpop.f32.mrf.mxu0
    %2803 = vmatprep.mubr.f32.mxu0 0.0
    %v2804 = vand.u32 %v2602, 4294901760
    %2805 = vmatmul.mubr.f32.gmra.mxu0 %v2804
    %v2806 = vpop.f32.mrf.mxu0
    %v2807 = vadd.f32 %v2708, %v2806
    %v2808 = vpop.f32.mrf.mxu0
    %2809 = vdwg.mxu0
    %2810 = vmatprep.subr.mxu0 0.0
    %2811 = vmatpush1.msra.mxu0 0.0
    %2812 = vmatprep.subr.mxu0 0.0
    %2813 = vmatpush1.msra.mxu0 0.0
    %2814 = vmatprep.subr.mxu0 0.0
    %2815 = vmatpush1.msra.mxu0 0.0
    %2816 = vmatprep.subr.mxu0 0.0
    %2817 = vmatpush1.msra.mxu0 0.0
    %2818 = vmatprep.subr.mxu0 0.0
    %2819 = vmatpush1.msra.mxu0 0.0
    %2820 = vmatprep.subr.mxu0 0.0
    %2821 = vmatpush1.msra.mxu0 0.0
    %2822 = vmatprep.subr.mxu0 0.0
    %2823 = vmatpush1.msra.mxu0 0.0
    %2824 = vmatprep.subr.mxu0 0.0
    %2825 = vmatpush1.msra.mxu0 0.0
    %2826 = vmatprep.subr.mxu0 0.0
    %2827 = vmatpush1.msra.mxu0 0.0
    %2828 = vmatprep.subr.mxu0 0.0
    %2829 = vmatpush1.msra.mxu0 0.0
    %2830 = vmatprep.subr.mxu0 0.0
    %2831 = vmatpush1.msra.mxu0 0.0
    %2832 = vmatprep.subr.mxu0 0.0
    %2833 = vmatpush1.msra.mxu0 0.0
    %2834 = vmatprep.subr.mxu0 0.0
    %2835 = vmatpush1.msra.mxu0 0.0
    %2836 = vmatprep.subr.mxu0 0.0
    %2837 = vmatpush1.msra.mxu0 0.0
    %2838 = vmatprep.subr.mxu0 0.0
    %v2839 = vand.u32 %v1953, 4294901760
    %v2840 = vsub.f32 %v1953, %v2839
    %2841 = vmatpush1.msra.mxu0 %v2840
    %2842 = vmatprep.subr.mxu0 0.0
    %v2843 = vand.u32 %v1952, 4294901760
    %v2844 = vsub.f32 %v1952, %v2843
    %2845 = vmatpush1.msra.mxu0 %v2844
    %2846 = vmatprep.subr.mxu0 0.0
    %2847 = vmatpush2.msra.mxu0 0.0
    %2848 = vmatprep.subr.mxu0 0.0
    %2849 = vmatpush2.msra.mxu0 0.0
    %2850 = vmatprep.subr.mxu0 0.0
    %2851 = vmatpush2.msra.mxu0 0.0
    %2852 = vmatprep.subr.mxu0 0.0
    %2853 = vmatpush2.msra.mxu0 0.0
    %2854 = vmatprep.subr.mxu0 0.0
    %2855 = vmatpush2.msra.mxu0 0.0
    %2856 = vmatprep.subr.mxu0 0.0
    %2857 = vmatpush2.msra.mxu0 0.0
    %2858 = vmatprep.subr.mxu0 0.0
    %2859 = vmatpush2.msra.mxu0 0.0
    %2860 = vmatprep.subr.mxu0 0.0
    %2861 = vmatpush2.msra.mxu0 0.0
    %2862 = vmatprep.subr.mxu0 0.0
    %2863 = vmatpush2.msra.mxu0 0.0
    %2864 = vmatprep.subr.mxu0 0.0
    %2865 = vmatpush2.msra.mxu0 0.0
    %2866 = vmatprep.subr.mxu0 0.0
    %2867 = vmatpush2.msra.mxu0 0.0
    %2868 = vmatprep.subr.mxu0 0.0
    %2869 = vmatpush2.msra.mxu0 0.0
    %2870 = vmatprep.subr.mxu0 0.0
    %2871 = vmatpush2.msra.mxu0 0.0
    %2872 = vmatprep.subr.mxu0 0.0
    %2873 = vmatpush2.msra.mxu0 0.0
    %2874 = vmatprep.subr.mxu0 0.0
    %2875 = vmatpush2.msra.mxu0 0.0
    %2876 = vmatprep.subr.mxu0 0.0
    %2877 = vmatpush2.msra.mxu0 0.0
    %2878 = vmatprep.mubr.f32.mxu0 0.0
    %v2879 = vand.u32 %v2593, 4294901760
    %v2880 = vsub.f32 %v2593, %v2879
    %2881 = vmatmul.mubr.f32.gmra.mxu0 %v2880
    %v2882 = vpop.f32.mrf.mxu0
    %v2883 = vadd.f32 %v2789, %v2882
    %v2884 = vpop.f32.mrf.mxu0
    %2885 = vmatprep.mubr.f32.mxu0 0.0
    %v2886 = vand.u32 %v2596, 4294901760
    %v2887 = vsub.f32 %v2596, %v2886
    %2888 = vmatmul.mubr.f32.gmra.mxu0 %v2887
    %v2889 = vpop.f32.mrf.mxu0
    %v2890 = vadd.f32 %v2795, %v2889
    %v2891 = vpop.f32.mrf.mxu0
    %2892 = vmatprep.mubr.f32.mxu0 0.0
    %v2893 = vand.u32 %v2599, 4294901760
    %v2894 = vsub.f32 %v2599, %v2893
    %2895 = vmatmul.mubr.f32.gmra.mxu0 %v2894
    %v2896 = vpop.f32.mrf.mxu0
    %v2897 = vadd.f32 %v2801, %v2896
    %v2898 = vpop.f32.mrf.mxu0
    %2899 = vmatprep.mubr.f32.mxu0 0.0
    %v2900 = vand.u32 %v2602, 4294901760
    %v2901 = vsub.f32 %v2602, %v2900
    %2902 = vmatmul.mubr.f32.gmra.mxu0 %v2901
    %v2903 = vpop.f32.mrf.mxu0
    %v2904 = vadd.f32 %v2807, %v2903
    %v2905 = vpop.f32.mrf.mxu0
    %2906 = vdwg.mxu0
    %2907 = vmatprep.subr.mxu0 0.0
    %2908 = vmatpush1.msra.mxu0 0.0
    %2909 = vmatprep.subr.mxu0 0.0
    %2910 = vmatpush1.msra.mxu0 0.0
    %2911 = vmatprep.subr.mxu0 0.0
    %2912 = vmatpush1.msra.mxu0 0.0
    %2913 = vmatprep.subr.mxu0 0.0
    %2914 = vmatpush1.msra.mxu0 0.0
    %2915 = vmatprep.subr.mxu0 0.0
    %2916 = vmatpush1.msra.mxu0 0.0
    %2917 = vmatprep.subr.mxu0 0.0
    %2918 = vmatpush1.msra.mxu0 0.0
    %2919 = vmatprep.subr.mxu0 0.0
    %2920 = vmatpush1.msra.mxu0 0.0
    %2921 = vmatprep.subr.mxu0 0.0
    %2922 = vmatpush1.msra.mxu0 0.0
    %2923 = vmatprep.subr.mxu0 0.0
    %2924 = vmatpush1.msra.mxu0 0.0
    %2925 = vmatprep.subr.mxu0 0.0
    %2926 = vmatpush1.msra.mxu0 0.0
    %2927 = vmatprep.subr.mxu0 0.0
    %2928 = vmatpush1.msra.mxu0 0.0
    %2929 = vmatprep.subr.mxu0 0.0
    %2930 = vmatpush1.msra.mxu0 0.0
    %2931 = vmatprep.subr.mxu0 0.0
    %2932 = vmatpush1.msra.mxu0 0.0
    %2933 = vmatprep.subr.mxu0 0.0
    %2934 = vmatpush1.msra.mxu0 0.0
    %2935 = vmatprep.subr.mxu0 0.0
    %v2936 = vand.u32 %v1953, 4294901760
    %2937 = vmatpush1.msra.mxu0 %v2936
    %2938 = vmatprep.subr.mxu0 0.0
    %v2939 = vand.u32 %v1952, 4294901760
    %2940 = vmatpush1.msra.mxu0 %v2939
    %2941 = vmatprep.subr.mxu0 0.0
    %2942 = vmatpush2.msra.mxu0 0.0
    %2943 = vmatprep.subr.mxu0 0.0
    %2944 = vmatpush2.msra.mxu0 0.0
    %2945 = vmatprep.subr.mxu0 0.0
    %2946 = vmatpush2.msra.mxu0 0.0
    %2947 = vmatprep.subr.mxu0 0.0
    %2948 = vmatpush2.msra.mxu0 0.0
    %2949 = vmatprep.subr.mxu0 0.0
    %2950 = vmatpush2.msra.mxu0 0.0
    %2951 = vmatprep.subr.mxu0 0.0
    %2952 = vmatpush2.msra.mxu0 0.0
    %2953 = vmatprep.subr.mxu0 0.0
    %2954 = vmatpush2.msra.mxu0 0.0
    %2955 = vmatprep.subr.mxu0 0.0
    %2956 = vmatpush2.msra.mxu0 0.0
    %2957 = vmatprep.subr.mxu0 0.0
    %2958 = vmatpush2.msra.mxu0 0.0
    %2959 = vmatprep.subr.mxu0 0.0
    %2960 = vmatpush2.msra.mxu0 0.0
    %2961 = vmatprep.subr.mxu0 0.0
    %2962 = vmatpush2.msra.mxu0 0.0
    %2963 = vmatprep.subr.mxu0 0.0
    %2964 = vmatpush2.msra.mxu0 0.0
    %2965 = vmatprep.subr.mxu0 0.0
    %2966 = vmatpush2.msra.mxu0 0.0
    %2967 = vmatprep.subr.mxu0 0.0
    %2968 = vmatpush2.msra.mxu0 0.0
    %2969 = vmatprep.subr.mxu0 0.0
    %2970 = vmatpush2.msra.mxu0 0.0
    %2971 = vmatprep.subr.mxu0 0.0
    %2972 = vmatpush2.msra.mxu0 0.0
    %2973 = vmatprep.mubr.f32.mxu0 0.0
    %v2974 = vand.u32 %v2593, 4294901760
    %v2975 = vsub.f32 %v2593, %v2974
    %v2976 = vand.u32 %v2975, 4294901760
    %2977 = vmatmul.mubr.f32.gmra.mxu0 %v2976
    %v2978 = vpop.f32.mrf.mxu0
    %v2979 = vadd.f32 %v2883, %v2978
    %v2980 = vpop.f32.mrf.mxu0
    %2981 = vmatprep.mubr.f32.mxu0 0.0
    %v2982 = vand.u32 %v2596, 4294901760
    %v2983 = vsub.f32 %v2596, %v2982
    %v2984 = vand.u32 %v2983, 4294901760
    %2985 = vmatmul.mubr.f32.gmra.mxu0 %v2984
    %v2986 = vpop.f32.mrf.mxu0
    %v2987 = vadd.f32 %v2890, %v2986
    %v2988 = vpop.f32.mrf.mxu0
    %2989 = vmatprep.mubr.f32.mxu0 0.0
    %v2990 = vand.u32 %v2599, 4294901760
    %v2991 = vsub.f32 %v2599, %v2990
    %v2992 = vand.u32 %v2991, 4294901760
    %2993 = vmatmul.mubr.f32.gmra.mxu0 %v2992
    %v2994 = vpop.f32.mrf.mxu0
    %v2995 = vadd.f32 %v2897, %v2994
    %v2996 = vpop.f32.mrf.mxu0
    %2997 = vmatprep.mubr.f32.mxu0 0.0
    %v2998 = vand.u32 %v2602, 4294901760
    %v2999 = vsub.f32 %v2602, %v2998
    %v3000 = vand.u32 %v2999, 4294901760
    %3001 = vmatmul.mubr.f32.gmra.mxu0 %v3000
    %v3002 = vpop.f32.mrf.mxu0
    %v3003 = vadd.f32 %v2904, %v3002
    %v3004 = vpop.f32.mrf.mxu0
    %3005 = vdwg.mxu0
    %3006 = vmatprep.subr.mxu0 0.0
    %3007 = vmatpush1.msra.mxu0 0.0
    %3008 = vmatprep.subr.mxu0 0.0
    %3009 = vmatpush1.msra.mxu0 0.0
    %3010 = vmatprep.subr.mxu0 0.0
    %3011 = vmatpush1.msra.mxu0 0.0
    %3012 = vmatprep.subr.mxu0 0.0
    %3013 = vmatpush1.msra.mxu0 0.0
    %3014 = vmatprep.subr.mxu0 0.0
    %3015 = vmatpush1.msra.mxu0 0.0
    %3016 = vmatprep.subr.mxu0 0.0
    %3017 = vmatpush1.msra.mxu0 0.0
    %3018 = vmatprep.subr.mxu0 0.0
    %3019 = vmatpush1.msra.mxu0 0.0
    %3020 = vmatprep.subr.mxu0 0.0
    %3021 = vmatpush1.msra.mxu0 0.0
    %3022 = vmatprep.subr.mxu0 0.0
    %3023 = vmatpush1.msra.mxu0 0.0
    %3024 = vmatprep.subr.mxu0 0.0
    %3025 = vmatpush1.msra.mxu0 0.0
    %3026 = vmatprep.subr.mxu0 0.0
    %3027 = vmatpush1.msra.mxu0 0.0
    %3028 = vmatprep.subr.mxu0 0.0
    %3029 = vmatpush1.msra.mxu0 0.0
    %3030 = vmatprep.subr.mxu0 0.0
    %3031 = vmatpush1.msra.mxu0 0.0
    %3032 = vmatprep.subr.mxu0 0.0
    %3033 = vmatpush1.msra.mxu0 0.0
    %3034 = vmatprep.subr.mxu0 0.0
    %v3035 = vand.u32 %v1953, 4294901760
    %v3036 = vsub.f32 %v1953, %v3035
    %v3037 = vand.u32 %v3036, 4294901760
    %3038 = vmatpush1.msra.mxu0 %v3037
    %3039 = vmatprep.subr.mxu0 0.0
    %v3040 = vand.u32 %v1952, 4294901760
    %v3041 = vsub.f32 %v1952, %v3040
    %v3042 = vand.u32 %v3041, 4294901760
    %3043 = vmatpush1.msra.mxu0 %v3042
    %3044 = vmatprep.subr.mxu0 0.0
    %3045 = vmatpush2.msra.mxu0 0.0
    %3046 = vmatprep.subr.mxu0 0.0
    %3047 = vmatpush2.msra.mxu0 0.0
    %3048 = vmatprep.subr.mxu0 0.0
    %3049 = vmatpush2.msra.mxu0 0.0
    %3050 = vmatprep.subr.mxu0 0.0
    %3051 = vmatpush2.msra.mxu0 0.0
    %3052 = vmatprep.subr.mxu0 0.0
    %3053 = vmatpush2.msra.mxu0 0.0
    %3054 = vmatprep.subr.mxu0 0.0
    %3055 = vmatpush2.msra.mxu0 0.0
    %3056 = vmatprep.subr.mxu0 0.0
    %3057 = vmatpush2.msra.mxu0 0.0
    %3058 = vmatprep.subr.mxu0 0.0
    %3059 = vmatpush2.msra.mxu0 0.0
    %3060 = vmatprep.subr.mxu0 0.0
    %3061 = vmatpush2.msra.mxu0 0.0
    %3062 = vmatprep.subr.mxu0 0.0
    %3063 = vmatpush2.msra.mxu0 0.0
    %3064 = vmatprep.subr.mxu0 0.0
    %3065 = vmatpush2.msra.mxu0 0.0
    %3066 = vmatprep.subr.mxu0 0.0
    %3067 = vmatpush2.msra.mxu0 0.0
    %3068 = vmatprep.subr.mxu0 0.0
    %3069 = vmatpush2.msra.mxu0 0.0
    %3070 = vmatprep.subr.mxu0 0.0
    %3071 = vmatpush2.msra.mxu0 0.0
    %3072 = vmatprep.subr.mxu0 0.0
    %3073 = vmatpush2.msra.mxu0 0.0
    %3074 = vmatprep.subr.mxu0 0.0
    %3075 = vmatpush2.msra.mxu0 0.0
    %3076 = vmatprep.mubr.f32.mxu0 0.0
    %v3077 = vand.u32 %v2593, 4294901760
    %3078 = vmatmul.mubr.f32.gmra.mxu0 %v3077
    %v3079 = vpop.f32.mrf.mxu0
    %v3080 = vadd.f32 %v2979, %v3079
    %v3081 = vpop.f32.mrf.mxu0
    %3082 = vmatprep.mubr.f32.mxu0 0.0
    %v3083 = vand.u32 %v2596, 4294901760
    %3084 = vmatmul.mubr.f32.gmra.mxu0 %v3083
    %v3085 = vpop.f32.mrf.mxu0
    %v3086 = vadd.f32 %v2987, %v3085
    %v3087 = vpop.f32.mrf.mxu0
    %3088 = vmatprep.mubr.f32.mxu0 0.0
    %v3089 = vand.u32 %v2599, 4294901760
    %3090 = vmatmul.mubr.f32.gmra.mxu0 %v3089
    %v3091 = vpop.f32.mrf.mxu0
    %v3092 = vadd.f32 %v2995, %v3091
    %v3093 = vpop.f32.mrf.mxu0
    %3094 = vmatprep.mubr.f32.mxu0 0.0
    %v3095 = vand.u32 %v2602, 4294901760
    %3096 = vmatmul.mubr.f32.gmra.mxu0 %v3095
    %v3097 = vpop.f32.mrf.mxu0
    %v3098 = vadd.f32 %v3003, %v3097
    %v3099 = vpop.f32.mrf.mxu0
    %3100 = vdwg.mxu0
    %3101 = vmatprep.subr.mxu0 0.0
    %3102 = vmatpush1.msra.mxu0 0.0
    %3103 = vmatprep.subr.mxu0 0.0
    %3104 = vmatpush1.msra.mxu0 0.0
    %3105 = vmatprep.subr.mxu0 0.0
    %3106 = vmatpush1.msra.mxu0 0.0
    %3107 = vmatprep.subr.mxu0 0.0
    %3108 = vmatpush1.msra.mxu0 0.0
    %3109 = vmatprep.subr.mxu0 0.0
    %3110 = vmatpush1.msra.mxu0 0.0
    %3111 = vmatprep.subr.mxu0 0.0
    %3112 = vmatpush1.msra.mxu0 0.0
    %3113 = vmatprep.subr.mxu0 0.0
    %3114 = vmatpush1.msra.mxu0 0.0
    %3115 = vmatprep.subr.mxu0 0.0
    %3116 = vmatpush1.msra.mxu0 0.0
    %3117 = vmatprep.subr.mxu0 0.0
    %3118 = vmatpush1.msra.mxu0 0.0
    %3119 = vmatprep.subr.mxu0 0.0
    %3120 = vmatpush1.msra.mxu0 0.0
    %3121 = vmatprep.subr.mxu0 0.0
    %3122 = vmatpush1.msra.mxu0 0.0
    %3123 = vmatprep.subr.mxu0 0.0
    %3124 = vmatpush1.msra.mxu0 0.0
    %3125 = vmatprep.subr.mxu0 0.0
    %3126 = vmatpush1.msra.mxu0 0.0
    %3127 = vmatprep.subr.mxu0 0.0
    %3128 = vmatpush1.msra.mxu0 0.0
    %3129 = vmatprep.subr.mxu0 0.0
    %v3130 = vand.u32 %v1953, 4294901760
    %3131 = vmatpush1.msra.mxu0 %v3130
    %3132 = vmatprep.subr.mxu0 0.0
    %v3133 = vand.u32 %v1952, 4294901760
    %3134 = vmatpush1.msra.mxu0 %v3133
    %3135 = vmatprep.subr.mxu0 0.0
    %3136 = vmatpush2.msra.mxu0 0.0
    %3137 = vmatprep.subr.mxu0 0.0
    %3138 = vmatpush2.msra.mxu0 0.0
    %3139 = vmatprep.subr.mxu0 0.0
    %3140 = vmatpush2.msra.mxu0 0.0
    %3141 = vmatprep.subr.mxu0 0.0
    %3142 = vmatpush2.msra.mxu0 0.0
    %3143 = vmatprep.subr.mxu0 0.0
    %3144 = vmatpush2.msra.mxu0 0.0
    %3145 = vmatprep.subr.mxu0 0.0
    %3146 = vmatpush2.msra.mxu0 0.0
    %3147 = vmatprep.subr.mxu0 0.0
    %3148 = vmatpush2.msra.mxu0 0.0
    %3149 = vmatprep.subr.mxu0 0.0
    %3150 = vmatpush2.msra.mxu0 0.0
    %3151 = vmatprep.subr.mxu0 0.0
    %3152 = vmatpush2.msra.mxu0 0.0
    %3153 = vmatprep.subr.mxu0 0.0
    %3154 = vmatpush2.msra.mxu0 0.0
    %3155 = vmatprep.subr.mxu0 0.0
    %3156 = vmatpush2.msra.mxu0 0.0
    %3157 = vmatprep.subr.mxu0 0.0
    %3158 = vmatpush2.msra.mxu0 0.0
    %3159 = vmatprep.subr.mxu0 0.0
    %3160 = vmatpush2.msra.mxu0 0.0
    %3161 = vmatprep.subr.mxu0 0.0
    %3162 = vmatpush2.msra.mxu0 0.0
    %3163 = vmatprep.subr.mxu0 0.0
    %3164 = vmatpush2.msra.mxu0 0.0
    %3165 = vmatprep.subr.mxu0 0.0
    %3166 = vmatpush2.msra.mxu0 0.0
    %3167 = vmatprep.mubr.f32.mxu0 0.0
    %v3168 = vand.u32 %v2593, 4294901760
    %3169 = vmatmul.mubr.f32.gmra.mxu0 %v3168
    %v3170 = vpop.f32.mrf.mxu0
    %v3171 = vadd.f32 %v3080, %v3170
    %v3172 = vpop.f32.mrf.mxu0
    %3173 = vmatprep.mubr.f32.mxu0 0.0
    %v3174 = vand.u32 %v2596, 4294901760
    %3175 = vmatmul.mubr.f32.gmra.mxu0 %v3174
    %v3176 = vpop.f32.mrf.mxu0
    %v3177 = vadd.f32 %v3086, %v3176
    %v3178 = vpop.f32.mrf.mxu0
    %3179 = vmatprep.mubr.f32.mxu0 0.0
    %v3180 = vand.u32 %v2599, 4294901760
    %3181 = vmatmul.mubr.f32.gmra.mxu0 %v3180
    %v3182 = vpop.f32.mrf.mxu0
    %v3183 = vadd.f32 %v3092, %v3182
    %v3184 = vpop.f32.mrf.mxu0
    %3185 = vmatprep.mubr.f32.mxu0 0.0
    %v3186 = vand.u32 %v2602, 4294901760
    %3187 = vmatmul.mubr.f32.gmra.mxu0 %v3186
    %v3188 = vpop.f32.mrf.mxu0
    %v3189 = vadd.f32 %v3098, %v3188
    %v3190 = vpop.f32.mrf.mxu0
    %3191 = vdwg.mxu0
    %v3193 = vsel %vm1995, %v1991, 0
    %v3196 = vsel %vm1995, %v1992, 0
    %v3199 = vsel %vm1995, %v1993, 0
    %v3202 = vsel %vm1995, %v1994, 0
    %3204 = vmatprep.subr.mxu0 0.0
    %3205 = vmatpush1.msra.mxu0 0.0
    %3206 = vmatprep.subr.mxu0 0.0
    %3207 = vmatpush1.msra.mxu0 0.0
    %3208 = vmatprep.subr.mxu0 0.0
    %3209 = vmatpush1.msra.mxu0 0.0
    %3210 = vmatprep.subr.mxu0 0.0
    %3211 = vmatpush1.msra.mxu0 0.0
    %3212 = vmatprep.subr.mxu0 0.0
    %3213 = vmatpush1.msra.mxu0 0.0
    %3214 = vmatprep.subr.mxu0 0.0
    %3215 = vmatpush1.msra.mxu0 0.0
    %3216 = vmatprep.subr.mxu0 0.0
    %3217 = vmatpush1.msra.mxu0 0.0
    %3218 = vmatprep.subr.mxu0 0.0
    %3219 = vmatpush1.msra.mxu0 0.0
    %3220 = vmatprep.subr.mxu0 0.0
    %3221 = vmatpush1.msra.mxu0 0.0
    %3222 = vmatprep.subr.mxu0 0.0
    %3223 = vmatpush1.msra.mxu0 0.0
    %3224 = vmatprep.subr.mxu0 0.0
    %3225 = vmatpush1.msra.mxu0 0.0
    %3226 = vmatprep.subr.mxu0 0.0
    %3227 = vmatpush1.msra.mxu0 0.0
    %3228 = vmatprep.subr.mxu0 0.0
    %3229 = vmatpush1.msra.mxu0 0.0
    %3230 = vmatprep.subr.mxu0 0.0
    %3231 = vmatpush1.msra.mxu0 0.0
    %3232 = vmatprep.subr.mxu0 0.0
    %v3233 = vand.u32 %v1957, 4294901760
    %3234 = vmatpush1.msra.mxu0 %v3233
    %3235 = vmatprep.subr.mxu0 0.0
    %v3236 = vand.u32 %v1956, 4294901760
    %3237 = vmatpush1.msra.mxu0 %v3236
    %3238 = vmatprep.subr.mxu0 0.0
    %3239 = vmatpush2.msra.mxu0 0.0
    %3240 = vmatprep.subr.mxu0 0.0
    %3241 = vmatpush2.msra.mxu0 0.0
    %3242 = vmatprep.subr.mxu0 0.0
    %3243 = vmatpush2.msra.mxu0 0.0
    %3244 = vmatprep.subr.mxu0 0.0
    %3245 = vmatpush2.msra.mxu0 0.0
    %3246 = vmatprep.subr.mxu0 0.0
    %3247 = vmatpush2.msra.mxu0 0.0
    %3248 = vmatprep.subr.mxu0 0.0
    %3249 = vmatpush2.msra.mxu0 0.0
    %3250 = vmatprep.subr.mxu0 0.0
    %3251 = vmatpush2.msra.mxu0 0.0
    %3252 = vmatprep.subr.mxu0 0.0
    %3253 = vmatpush2.msra.mxu0 0.0
    %3254 = vmatprep.subr.mxu0 0.0
    %3255 = vmatpush2.msra.mxu0 0.0
    %3256 = vmatprep.subr.mxu0 0.0
    %3257 = vmatpush2.msra.mxu0 0.0
    %3258 = vmatprep.subr.mxu0 0.0
    %3259 = vmatpush2.msra.mxu0 0.0
    %3260 = vmatprep.subr.mxu0 0.0
    %3261 = vmatpush2.msra.mxu0 0.0
    %3262 = vmatprep.subr.mxu0 0.0
    %3263 = vmatpush2.msra.mxu0 0.0
    %3264 = vmatprep.subr.mxu0 0.0
    %3265 = vmatpush2.msra.mxu0 0.0
    %3266 = vmatprep.subr.mxu0 0.0
    %3267 = vmatpush2.msra.mxu0 0.0
    %3268 = vmatprep.subr.mxu0 0.0
    %3269 = vmatpush2.msra.mxu0 0.0
    %3270 = vmatprep.mubr.f32.mxu0 0.0
    %v3271 = vand.u32 %v3193, 4294901760
    %v3272 = vsub.f32 %v3193, %v3271
    %v3273 = vand.u32 %v3272, 4294901760
    %v3274 = vsub.f32 %v3272, %v3273
    %v3275 = vand.u32 %v3274, 4294901760
    %3276 = vmatmul.mubr.f32.gmra.mxu0 %v3275
    %v3277 = vpop.f32.mrf.mxu0
    %v3278 = vadd.f32 0.0, %v3277
    %v3279 = vpop.f32.mrf.mxu0
    %3280 = vmatprep.mubr.f32.mxu0 0.0
    %v3281 = vand.u32 %v3196, 4294901760
    %v3282 = vsub.f32 %v3196, %v3281
    %v3283 = vand.u32 %v3282, 4294901760
    %v3284 = vsub.f32 %v3282, %v3283
    %v3285 = vand.u32 %v3284, 4294901760
    %3286 = vmatmul.mubr.f32.gmra.mxu0 %v3285
    %v3287 = vpop.f32.mrf.mxu0
    %v3288 = vadd.f32 0.0, %v3287
    %v3289 = vpop.f32.mrf.mxu0
    %3290 = vmatprep.mubr.f32.mxu0 0.0
    %v3291 = vand.u32 %v3199, 4294901760
    %v3292 = vsub.f32 %v3199, %v3291
    %v3293 = vand.u32 %v3292, 4294901760
    %v3294 = vsub.f32 %v3292, %v3293
    %v3295 = vand.u32 %v3294, 4294901760
    %3296 = vmatmul.mubr.f32.gmra.mxu0 %v3295
    %v3297 = vpop.f32.mrf.mxu0
    %v3298 = vadd.f32 0.0, %v3297
    %v3299 = vpop.f32.mrf.mxu0
    %3300 = vmatprep.mubr.f32.mxu0 0.0
    %v3301 = vand.u32 %v3202, 4294901760
    %v3302 = vsub.f32 %v3202, %v3301
    %v3303 = vand.u32 %v3302, 4294901760
    %v3304 = vsub.f32 %v3302, %v3303
    %v3305 = vand.u32 %v3304, 4294901760
    %3306 = vmatmul.mubr.f32.gmra.mxu0 %v3305
    %v3307 = vpop.f32.mrf.mxu0
    %v3308 = vadd.f32 0.0, %v3307
    %v3309 = vpop.f32.mrf.mxu0
    %3310 = vdwg.mxu0
    %3311 = vmatprep.subr.mxu0 0.0
    %3312 = vmatpush1.msra.mxu0 0.0
    %3313 = vmatprep.subr.mxu0 0.0
    %3314 = vmatpush1.msra.mxu0 0.0
    %3315 = vmatprep.subr.mxu0 0.0
    %3316 = vmatpush1.msra.mxu0 0.0
    %3317 = vmatprep.subr.mxu0 0.0
    %3318 = vmatpush1.msra.mxu0 0.0
    %3319 = vmatprep.subr.mxu0 0.0
    %3320 = vmatpush1.msra.mxu0 0.0
    %3321 = vmatprep.subr.mxu0 0.0
    %3322 = vmatpush1.msra.mxu0 0.0
    %3323 = vmatprep.subr.mxu0 0.0
    %3324 = vmatpush1.msra.mxu0 0.0
    %3325 = vmatprep.subr.mxu0 0.0
    %3326 = vmatpush1.msra.mxu0 0.0
    %3327 = vmatprep.subr.mxu0 0.0
    %3328 = vmatpush1.msra.mxu0 0.0
    %3329 = vmatprep.subr.mxu0 0.0
    %3330 = vmatpush1.msra.mxu0 0.0
    %3331 = vmatprep.subr.mxu0 0.0
    %3332 = vmatpush1.msra.mxu0 0.0
    %3333 = vmatprep.subr.mxu0 0.0
    %3334 = vmatpush1.msra.mxu0 0.0
    %3335 = vmatprep.subr.mxu0 0.0
    %3336 = vmatpush1.msra.mxu0 0.0
    %3337 = vmatprep.subr.mxu0 0.0
    %3338 = vmatpush1.msra.mxu0 0.0
    %3339 = vmatprep.subr.mxu0 0.0
    %v3340 = vand.u32 %v1957, 4294901760
    %v3341 = vsub.f32 %v1957, %v3340
    %v3342 = vand.u32 %v3341, 4294901760
    %v3343 = vsub.f32 %v3341, %v3342
    %v3344 = vand.u32 %v3343, 4294901760
    %3345 = vmatpush1.msra.mxu0 %v3344
    %3346 = vmatprep.subr.mxu0 0.0
    %v3347 = vand.u32 %v1956, 4294901760
    %v3348 = vsub.f32 %v1956, %v3347
    %v3349 = vand.u32 %v3348, 4294901760
    %v3350 = vsub.f32 %v3348, %v3349
    %v3351 = vand.u32 %v3350, 4294901760
    %3352 = vmatpush1.msra.mxu0 %v3351
    %3353 = vmatprep.subr.mxu0 0.0
    %3354 = vmatpush2.msra.mxu0 0.0
    %3355 = vmatprep.subr.mxu0 0.0
    %3356 = vmatpush2.msra.mxu0 0.0
    %3357 = vmatprep.subr.mxu0 0.0
    %3358 = vmatpush2.msra.mxu0 0.0
    %3359 = vmatprep.subr.mxu0 0.0
    %3360 = vmatpush2.msra.mxu0 0.0
    %3361 = vmatprep.subr.mxu0 0.0
    %3362 = vmatpush2.msra.mxu0 0.0
    %3363 = vmatprep.subr.mxu0 0.0
    %3364 = vmatpush2.msra.mxu0 0.0
    %3365 = vmatprep.subr.mxu0 0.0
    %3366 = vmatpush2.msra.mxu0 0.0
    %3367 = vmatprep.subr.mxu0 0.0
    %3368 = vmatpush2.msra.mxu0 0.0
    %3369 = vmatprep.subr.mxu0 0.0
    %3370 = vmatpush2.msra.mxu0 0.0
    %3371 = vmatprep.subr.mxu0 0.0
    %3372 = vmatpush2.msra.mxu0 0.0
    %3373 = vmatprep.subr.mxu0 0.0
    %3374 = vmatpush2.msra.mxu0 0.0
    %3375 = vmatprep.subr.mxu0 0.0
    %3376 = vmatpush2.msra.mxu0 0.0
    %3377 = vmatprep.subr.mxu0 0.0
    %3378 = vmatpush2.msra.mxu0 0.0
    %3379 = vmatprep.subr.mxu0 0.0
    %3380 = vmatpush2.msra.mxu0 0.0
    %3381 = vmatprep.subr.mxu0 0.0
    %3382 = vmatpush2.msra.mxu0 0.0
    %3383 = vmatprep.subr.mxu0 0.0
    %3384 = vmatpush2.msra.mxu0 0.0
    %3385 = vmatprep.mubr.f32.mxu0 0.0
    %v3386 = vand.u32 %v3193, 4294901760
    %3387 = vmatmul.mubr.f32.gmra.mxu0 %v3386
    %v3388 = vpop.f32.mrf.mxu0
    %v3389 = vadd.f32 %v3278, %v3388
    %v3390 = vpop.f32.mrf.mxu0
    %3391 = vmatprep.mubr.f32.mxu0 0.0
    %v3392 = vand.u32 %v3196, 4294901760
    %3393 = vmatmul.mubr.f32.gmra.mxu0 %v3392
    %v3394 = vpop.f32.mrf.mxu0
    %v3395 = vadd.f32 %v3288, %v3394
    %v3396 = vpop.f32.mrf.mxu0
    %3397 = vmatprep.mubr.f32.mxu0 0.0
    %v3398 = vand.u32 %v3199, 4294901760
    %3399 = vmatmul.mubr.f32.gmra.mxu0 %v3398
    %v3400 = vpop.f32.mrf.mxu0
    %v3401 = vadd.f32 %v3298, %v3400
    %v3402 = vpop.f32.mrf.mxu0
    %3403 = vmatprep.mubr.f32.mxu0 0.0
    %v3404 = vand.u32 %v3202, 4294901760
    %3405 = vmatmul.mubr.f32.gmra.mxu0 %v3404
    %v3406 = vpop.f32.mrf.mxu0
    %v3407 = vadd.f32 %v3308, %v3406
    %v3408 = vpop.f32.mrf.mxu0
    %3409 = vdwg.mxu0
    %3410 = vmatprep.subr.mxu0 0.0
    %3411 = vmatpush1.msra.mxu0 0.0
    %3412 = vmatprep.subr.mxu0 0.0
    %3413 = vmatpush1.msra.mxu0 0.0
    %3414 = vmatprep.subr.mxu0 0.0
    %3415 = vmatpush1.msra.mxu0 0.0
    %3416 = vmatprep.subr.mxu0 0.0
    %3417 = vmatpush1.msra.mxu0 0.0
    %3418 = vmatprep.subr.mxu0 0.0
    %3419 = vmatpush1.msra.mxu0 0.0
    %3420 = vmatprep.subr.mxu0 0.0
    %3421 = vmatpush1.msra.mxu0 0.0
    %3422 = vmatprep.subr.mxu0 0.0
    %3423 = vmatpush1.msra.mxu0 0.0
    %3424 = vmatprep.subr.mxu0 0.0
    %3425 = vmatpush1.msra.mxu0 0.0
    %3426 = vmatprep.subr.mxu0 0.0
    %3427 = vmatpush1.msra.mxu0 0.0
    %3428 = vmatprep.subr.mxu0 0.0
    %3429 = vmatpush1.msra.mxu0 0.0
    %3430 = vmatprep.subr.mxu0 0.0
    %3431 = vmatpush1.msra.mxu0 0.0
    %3432 = vmatprep.subr.mxu0 0.0
    %3433 = vmatpush1.msra.mxu0 0.0
    %3434 = vmatprep.subr.mxu0 0.0
    %3435 = vmatpush1.msra.mxu0 0.0
    %3436 = vmatprep.subr.mxu0 0.0
    %3437 = vmatpush1.msra.mxu0 0.0
    %3438 = vmatprep.subr.mxu0 0.0
    %v3439 = vand.u32 %v1957, 4294901760
    %v3440 = vsub.f32 %v1957, %v3439
    %3441 = vmatpush1.msra.mxu0 %v3440
    %3442 = vmatprep.subr.mxu0 0.0
    %v3443 = vand.u32 %v1956, 4294901760
    %v3444 = vsub.f32 %v1956, %v3443
    %3445 = vmatpush1.msra.mxu0 %v3444
    %3446 = vmatprep.subr.mxu0 0.0
    %3447 = vmatpush2.msra.mxu0 0.0
    %3448 = vmatprep.subr.mxu0 0.0
    %3449 = vmatpush2.msra.mxu0 0.0
    %3450 = vmatprep.subr.mxu0 0.0
    %3451 = vmatpush2.msra.mxu0 0.0
    %3452 = vmatprep.subr.mxu0 0.0
    %3453 = vmatpush2.msra.mxu0 0.0
    %3454 = vmatprep.subr.mxu0 0.0
    %3455 = vmatpush2.msra.mxu0 0.0
    %3456 = vmatprep.subr.mxu0 0.0
    %3457 = vmatpush2.msra.mxu0 0.0
    %3458 = vmatprep.subr.mxu0 0.0
    %3459 = vmatpush2.msra.mxu0 0.0
    %3460 = vmatprep.subr.mxu0 0.0
    %3461 = vmatpush2.msra.mxu0 0.0
    %3462 = vmatprep.subr.mxu0 0.0
    %3463 = vmatpush2.msra.mxu0 0.0
    %3464 = vmatprep.subr.mxu0 0.0
    %3465 = vmatpush2.msra.mxu0 0.0
    %3466 = vmatprep.subr.mxu0 0.0
    %3467 = vmatpush2.msra.mxu0 0.0
    %3468 = vmatprep.subr.mxu0 0.0
    %3469 = vmatpush2.msra.mxu0 0.0
    %3470 = vmatprep.subr.mxu0 0.0
    %3471 = vmatpush2.msra.mxu0 0.0
    %3472 = vmatprep.subr.mxu0 0.0
    %3473 = vmatpush2.msra.mxu0 0.0
    %3474 = vmatprep.subr.mxu0 0.0
    %3475 = vmatpush2.msra.mxu0 0.0
    %3476 = vmatprep.subr.mxu0 0.0
    %3477 = vmatpush2.msra.mxu0 0.0
    %3478 = vmatprep.mubr.f32.mxu0 0.0
    %v3479 = vand.u32 %v3193, 4294901760
    %v3480 = vsub.f32 %v3193, %v3479
    %3481 = vmatmul.mubr.f32.gmra.mxu0 %v3480
    %v3482 = vpop.f32.mrf.mxu0
    %v3483 = vadd.f32 %v3389, %v3482
    %v3484 = vpop.f32.mrf.mxu0
    %3485 = vmatprep.mubr.f32.mxu0 0.0
    %v3486 = vand.u32 %v3196, 4294901760
    %v3487 = vsub.f32 %v3196, %v3486
    %3488 = vmatmul.mubr.f32.gmra.mxu0 %v3487
    %v3489 = vpop.f32.mrf.mxu0
    %v3490 = vadd.f32 %v3395, %v3489
    %v3491 = vpop.f32.mrf.mxu0
    %3492 = vmatprep.mubr.f32.mxu0 0.0
    %v3493 = vand.u32 %v3199, 4294901760
    %v3494 = vsub.f32 %v3199, %v3493
    %3495 = vmatmul.mubr.f32.gmra.mxu0 %v3494
    %v3496 = vpop.f32.mrf.mxu0
    %v3497 = vadd.f32 %v3401, %v3496
    %v3498 = vpop.f32.mrf.mxu0
    %3499 = vmatprep.mubr.f32.mxu0 0.0
    %v3500 = vand.u32 %v3202, 4294901760
    %v3501 = vsub.f32 %v3202, %v3500
    %3502 = vmatmul.mubr.f32.gmra.mxu0 %v3501
    %v3503 = vpop.f32.mrf.mxu0
    %v3504 = vadd.f32 %v3407, %v3503
    %v3505 = vpop.f32.mrf.mxu0
    %3506 = vdwg.mxu0
    %3507 = vmatprep.subr.mxu0 0.0
    %3508 = vmatpush1.msra.mxu0 0.0
    %3509 = vmatprep.subr.mxu0 0.0
    %3510 = vmatpush1.msra.mxu0 0.0
    %3511 = vmatprep.subr.mxu0 0.0
    %3512 = vmatpush1.msra.mxu0 0.0
    %3513 = vmatprep.subr.mxu0 0.0
    %3514 = vmatpush1.msra.mxu0 0.0
    %3515 = vmatprep.subr.mxu0 0.0
    %3516 = vmatpush1.msra.mxu0 0.0
    %3517 = vmatprep.subr.mxu0 0.0
    %3518 = vmatpush1.msra.mxu0 0.0
    %3519 = vmatprep.subr.mxu0 0.0
    %3520 = vmatpush1.msra.mxu0 0.0
    %3521 = vmatprep.subr.mxu0 0.0
    %3522 = vmatpush1.msra.mxu0 0.0
    %3523 = vmatprep.subr.mxu0 0.0
    %3524 = vmatpush1.msra.mxu0 0.0
    %3525 = vmatprep.subr.mxu0 0.0
    %3526 = vmatpush1.msra.mxu0 0.0
    %3527 = vmatprep.subr.mxu0 0.0
    %3528 = vmatpush1.msra.mxu0 0.0
    %3529 = vmatprep.subr.mxu0 0.0
    %3530 = vmatpush1.msra.mxu0 0.0
    %3531 = vmatprep.subr.mxu0 0.0
    %3532 = vmatpush1.msra.mxu0 0.0
    %3533 = vmatprep.subr.mxu0 0.0
    %3534 = vmatpush1.msra.mxu0 0.0
    %3535 = vmatprep.subr.mxu0 0.0
    %v3536 = vand.u32 %v1957, 4294901760
    %3537 = vmatpush1.msra.mxu0 %v3536
    %3538 = vmatprep.subr.mxu0 0.0
    %v3539 = vand.u32 %v1956, 4294901760
    %3540 = vmatpush1.msra.mxu0 %v3539
    %3541 = vmatprep.subr.mxu0 0.0
    %3542 = vmatpush2.msra.mxu0 0.0
    %3543 = vmatprep.subr.mxu0 0.0
    %3544 = vmatpush2.msra.mxu0 0.0
    %3545 = vmatprep.subr.mxu0 0.0
    %3546 = vmatpush2.msra.mxu0 0.0
    %3547 = vmatprep.subr.mxu0 0.0
    %3548 = vmatpush2.msra.mxu0 0.0
    %3549 = vmatprep.subr.mxu0 0.0
    %3550 = vmatpush2.msra.mxu0 0.0
    %3551 = vmatprep.subr.mxu0 0.0
    %3552 = vmatpush2.msra.mxu0 0.0
    %3553 = vmatprep.subr.mxu0 0.0
    %3554 = vmatpush2.msra.mxu0 0.0
    %3555 = vmatprep.subr.mxu0 0.0
    %3556 = vmatpush2.msra.mxu0 0.0
    %3557 = vmatprep.subr.mxu0 0.0
    %3558 = vmatpush2.msra.mxu0 0.0
    %3559 = vmatprep.subr.mxu0 0.0
    %3560 = vmatpush2.msra.mxu0 0.0
    %3561 = vmatprep.subr.mxu0 0.0
    %3562 = vmatpush2.msra.mxu0 0.0
    %3563 = vmatprep.subr.mxu0 0.0
    %3564 = vmatpush2.msra.mxu0 0.0
    %3565 = vmatprep.subr.mxu0 0.0
    %3566 = vmatpush2.msra.mxu0 0.0
    %3567 = vmatprep.subr.mxu0 0.0
    %3568 = vmatpush2.msra.mxu0 0.0
    %3569 = vmatprep.subr.mxu0 0.0
    %3570 = vmatpush2.msra.mxu0 0.0
    %3571 = vmatprep.subr.mxu0 0.0
    %3572 = vmatpush2.msra.mxu0 0.0
    %3573 = vmatprep.mubr.f32.mxu0 0.0
    %v3574 = vand.u32 %v3193, 4294901760
    %v3575 = vsub.f32 %v3193, %v3574
    %v3576 = vand.u32 %v3575, 4294901760
    %3577 = vmatmul.mubr.f32.gmra.mxu0 %v3576
    %v3578 = vpop.f32.mrf.mxu0
    %v3579 = vadd.f32 %v3483, %v3578
    %v3580 = vpop.f32.mrf.mxu0
    %3581 = vmatprep.mubr.f32.mxu0 0.0
    %v3582 = vand.u32 %v3196, 4294901760
    %v3583 = vsub.f32 %v3196, %v3582
    %v3584 = vand.u32 %v3583, 4294901760
    %3585 = vmatmul.mubr.f32.gmra.mxu0 %v3584
    %v3586 = vpop.f32.mrf.mxu0
    %v3587 = vadd.f32 %v3490, %v3586
    %v3588 = vpop.f32.mrf.mxu0
    %3589 = vmatprep.mubr.f32.mxu0 0.0
    %v3590 = vand.u32 %v3199, 4294901760
    %v3591 = vsub.f32 %v3199, %v3590
    %v3592 = vand.u32 %v3591, 4294901760
    %3593 = vmatmul.mubr.f32.gmra.mxu0 %v3592
    %v3594 = vpop.f32.mrf.mxu0
    %v3595 = vadd.f32 %v3497, %v3594
    %v3596 = vpop.f32.mrf.mxu0
    %3597 = vmatprep.mubr.f32.mxu0 0.0
    %v3598 = vand.u32 %v3202, 4294901760
    %v3599 = vsub.f32 %v3202, %v3598
    %v3600 = vand.u32 %v3599, 4294901760
    %3601 = vmatmul.mubr.f32.gmra.mxu0 %v3600
    %v3602 = vpop.f32.mrf.mxu0
    %v3603 = vadd.f32 %v3504, %v3602
    %v3604 = vpop.f32.mrf.mxu0
    %3605 = vdwg.mxu0
    %3606 = vmatprep.subr.mxu0 0.0
    %3607 = vmatpush1.msra.mxu0 0.0
    %3608 = vmatprep.subr.mxu0 0.0
    %3609 = vmatpush1.msra.mxu0 0.0
    %3610 = vmatprep.subr.mxu0 0.0
    %3611 = vmatpush1.msra.mxu0 0.0
    %3612 = vmatprep.subr.mxu0 0.0
    %3613 = vmatpush1.msra.mxu0 0.0
    %3614 = vmatprep.subr.mxu0 0.0
    %3615 = vmatpush1.msra.mxu0 0.0
    %3616 = vmatprep.subr.mxu0 0.0
    %3617 = vmatpush1.msra.mxu0 0.0
    %3618 = vmatprep.subr.mxu0 0.0
    %3619 = vmatpush1.msra.mxu0 0.0
    %3620 = vmatprep.subr.mxu0 0.0
    %3621 = vmatpush1.msra.mxu0 0.0
    %3622 = vmatprep.subr.mxu0 0.0
    %3623 = vmatpush1.msra.mxu0 0.0
    %3624 = vmatprep.subr.mxu0 0.0
    %3625 = vmatpush1.msra.mxu0 0.0
    %3626 = vmatprep.subr.mxu0 0.0
    %3627 = vmatpush1.msra.mxu0 0.0
    %3628 = vmatprep.subr.mxu0 0.0
    %3629 = vmatpush1.msra.mxu0 0.0
    %3630 = vmatprep.subr.mxu0 0.0
    %3631 = vmatpush1.msra.mxu0 0.0
    %3632 = vmatprep.subr.mxu0 0.0
    %3633 = vmatpush1.msra.mxu0 0.0
    %3634 = vmatprep.subr.mxu0 0.0
    %v3635 = vand.u32 %v1957, 4294901760
    %v3636 = vsub.f32 %v1957, %v3635
    %v3637 = vand.u32 %v3636, 4294901760
    %3638 = vmatpush1.msra.mxu0 %v3637
    %3639 = vmatprep.subr.mxu0 0.0
    %v3640 = vand.u32 %v1956, 4294901760
    %v3641 = vsub.f32 %v1956, %v3640
    %v3642 = vand.u32 %v3641, 4294901760
    %3643 = vmatpush1.msra.mxu0 %v3642
    %3644 = vmatprep.subr.mxu0 0.0
    %3645 = vmatpush2.msra.mxu0 0.0
    %3646 = vmatprep.subr.mxu0 0.0
    %3647 = vmatpush2.msra.mxu0 0.0
    %3648 = vmatprep.subr.mxu0 0.0
    %3649 = vmatpush2.msra.mxu0 0.0
    %3650 = vmatprep.subr.mxu0 0.0
    %3651 = vmatpush2.msra.mxu0 0.0
    %3652 = vmatprep.subr.mxu0 0.0
    %3653 = vmatpush2.msra.mxu0 0.0
    %3654 = vmatprep.subr.mxu0 0.0
    %3655 = vmatpush2.msra.mxu0 0.0
    %3656 = vmatprep.subr.mxu0 0.0
    %3657 = vmatpush2.msra.mxu0 0.0
    %3658 = vmatprep.subr.mxu0 0.0
    %3659 = vmatpush2.msra.mxu0 0.0
    %3660 = vmatprep.subr.mxu0 0.0
    %3661 = vmatpush2.msra.mxu0 0.0
    %3662 = vmatprep.subr.mxu0 0.0
    %3663 = vmatpush2.msra.mxu0 0.0
    %3664 = vmatprep.subr.mxu0 0.0
    %3665 = vmatpush2.msra.mxu0 0.0
    %3666 = vmatprep.subr.mxu0 0.0
    %3667 = vmatpush2.msra.mxu0 0.0
    %3668 = vmatprep.subr.mxu0 0.0
    %3669 = vmatpush2.msra.mxu0 0.0
    %3670 = vmatprep.subr.mxu0 0.0
    %3671 = vmatpush2.msra.mxu0 0.0
    %3672 = vmatprep.subr.mxu0 0.0
    %3673 = vmatpush2.msra.mxu0 0.0
    %3674 = vmatprep.subr.mxu0 0.0
    %3675 = vmatpush2.msra.mxu0 0.0
    %3676 = vmatprep.mubr.f32.mxu0 0.0
    %v3677 = vand.u32 %v3193, 4294901760
    %3678 = vmatmul.mubr.f32.gmra.mxu0 %v3677
    %v3679 = vpop.f32.mrf.mxu0
    %v3680 = vadd.f32 %v3579, %v3679
    %v3681 = vpop.f32.mrf.mxu0
    %3682 = vmatprep.mubr.f32.mxu0 0.0
    %v3683 = vand.u32 %v3196, 4294901760
    %3684 = vmatmul.mubr.f32.gmra.mxu0 %v3683
    %v3685 = vpop.f32.mrf.mxu0
    %v3686 = vadd.f32 %v3587, %v3685
    %v3687 = vpop.f32.mrf.mxu0
    %3688 = vmatprep.mubr.f32.mxu0 0.0
    %v3689 = vand.u32 %v3199, 4294901760
    %3690 = vmatmul.mubr.f32.gmra.mxu0 %v3689
    %v3691 = vpop.f32.mrf.mxu0
    %v3692 = vadd.f32 %v3595, %v3691
    %v3693 = vpop.f32.mrf.mxu0
    %3694 = vmatprep.mubr.f32.mxu0 0.0
    %v3695 = vand.u32 %v3202, 4294901760
    %3696 = vmatmul.mubr.f32.gmra.mxu0 %v3695
    %v3697 = vpop.f32.mrf.mxu0
    %v3698 = vadd.f32 %v3603, %v3697
    %v3699 = vpop.f32.mrf.mxu0
    %3700 = vdwg.mxu0
    %3701 = vmatprep.subr.mxu0 0.0
    %3702 = vmatpush1.msra.mxu0 0.0
    %3703 = vmatprep.subr.mxu0 0.0
    %3704 = vmatpush1.msra.mxu0 0.0
    %3705 = vmatprep.subr.mxu0 0.0
    %3706 = vmatpush1.msra.mxu0 0.0
    %3707 = vmatprep.subr.mxu0 0.0
    %3708 = vmatpush1.msra.mxu0 0.0
    %3709 = vmatprep.subr.mxu0 0.0
    %3710 = vmatpush1.msra.mxu0 0.0
    %3711 = vmatprep.subr.mxu0 0.0
    %3712 = vmatpush1.msra.mxu0 0.0
    %3713 = vmatprep.subr.mxu0 0.0
    %3714 = vmatpush1.msra.mxu0 0.0
    %3715 = vmatprep.subr.mxu0 0.0
    %3716 = vmatpush1.msra.mxu0 0.0
    %3717 = vmatprep.subr.mxu0 0.0
    %3718 = vmatpush1.msra.mxu0 0.0
    %3719 = vmatprep.subr.mxu0 0.0
    %3720 = vmatpush1.msra.mxu0 0.0
    %3721 = vmatprep.subr.mxu0 0.0
    %3722 = vmatpush1.msra.mxu0 0.0
    %3723 = vmatprep.subr.mxu0 0.0
    %3724 = vmatpush1.msra.mxu0 0.0
    %3725 = vmatprep.subr.mxu0 0.0
    %3726 = vmatpush1.msra.mxu0 0.0
    %3727 = vmatprep.subr.mxu0 0.0
    %3728 = vmatpush1.msra.mxu0 0.0
    %3729 = vmatprep.subr.mxu0 0.0
    %v3730 = vand.u32 %v1957, 4294901760
    %3731 = vmatpush1.msra.mxu0 %v3730
    %3732 = vmatprep.subr.mxu0 0.0
    %v3733 = vand.u32 %v1956, 4294901760
    %3734 = vmatpush1.msra.mxu0 %v3733
    %3735 = vmatprep.subr.mxu0 0.0
    %3736 = vmatpush2.msra.mxu0 0.0
    %3737 = vmatprep.subr.mxu0 0.0
    %3738 = vmatpush2.msra.mxu0 0.0
    %3739 = vmatprep.subr.mxu0 0.0
    %3740 = vmatpush2.msra.mxu0 0.0
    %3741 = vmatprep.subr.mxu0 0.0
    %3742 = vmatpush2.msra.mxu0 0.0
    %3743 = vmatprep.subr.mxu0 0.0
    %3744 = vmatpush2.msra.mxu0 0.0
    %3745 = vmatprep.subr.mxu0 0.0
    %3746 = vmatpush2.msra.mxu0 0.0
    %3747 = vmatprep.subr.mxu0 0.0
    %3748 = vmatpush2.msra.mxu0 0.0
    %3749 = vmatprep.subr.mxu0 0.0
    %3750 = vmatpush2.msra.mxu0 0.0
    %3751 = vmatprep.subr.mxu0 0.0
    %3752 = vmatpush2.msra.mxu0 0.0
    %3753 = vmatprep.subr.mxu0 0.0
    %3754 = vmatpush2.msra.mxu0 0.0
    %3755 = vmatprep.subr.mxu0 0.0
    %3756 = vmatpush2.msra.mxu0 0.0
    %3757 = vmatprep.subr.mxu0 0.0
    %3758 = vmatpush2.msra.mxu0 0.0
    %3759 = vmatprep.subr.mxu0 0.0
    %3760 = vmatpush2.msra.mxu0 0.0
    %3761 = vmatprep.subr.mxu0 0.0
    %3762 = vmatpush2.msra.mxu0 0.0
    %3763 = vmatprep.subr.mxu0 0.0
    %3764 = vmatpush2.msra.mxu0 0.0
    %3765 = vmatprep.subr.mxu0 0.0
    %3766 = vmatpush2.msra.mxu0 0.0
    %3767 = vmatprep.mubr.f32.mxu0 0.0
    %v3768 = vand.u32 %v3193, 4294901760
    %3769 = vmatmul.mubr.f32.gmra.mxu0 %v3768
    %v3770 = vpop.f32.mrf.mxu0
    %v3771 = vadd.f32 %v3680, %v3770
    %v3772 = vpop.f32.mrf.mxu0
    %3773 = vmatprep.mubr.f32.mxu0 0.0
    %v3774 = vand.u32 %v3196, 4294901760
    %3775 = vmatmul.mubr.f32.gmra.mxu0 %v3774
    %v3776 = vpop.f32.mrf.mxu0
    %v3777 = vadd.f32 %v3686, %v3776
    %v3778 = vpop.f32.mrf.mxu0
    %3779 = vmatprep.mubr.f32.mxu0 0.0
    %v3780 = vand.u32 %v3199, 4294901760
    %3781 = vmatmul.mubr.f32.gmra.mxu0 %v3780
    %v3782 = vpop.f32.mrf.mxu0
    %v3783 = vadd.f32 %v3692, %v3782
    %v3784 = vpop.f32.mrf.mxu0
    %3785 = vmatprep.mubr.f32.mxu0 0.0
    %v3786 = vand.u32 %v3202, 4294901760
    %3787 = vmatmul.mubr.f32.gmra.mxu0 %v3786
    %v3788 = vpop.f32.mrf.mxu0
    %v3789 = vadd.f32 %v3698, %v3788
    %v3790 = vpop.f32.mrf.mxu0
    %3791 = vdwg.mxu0
    %v3792 = vadd.f32 %v3171, %v3771
    %v3793 = vadd.f32 %v3177, %v3777
    %v3794 = vadd.f32 %v3183, %v3783
    %v3795 = vadd.f32 %v3189, %v3789
    %v3797 = vlaneseq
    %v3798 = vshrl.u32 %v3797, 7
    %v3799 = vsub.s32 0, %v3798
    %v3800 = vrot.slane %v1958, %v3799
    %v3802 = vadd.f32 %v3792, %v3800
    %v3803 = vadd.f32 %v3793, %v3800
    %v3804 = vadd.f32 %v3794, %v3800
    %v3805 = vadd.f32 %v3795, %v3800
    %vm3806 = vcmp.ge.f32.partialorder %v3802, 0.0
    %vm3807 = vcmp.ge.f32.partialorder %v3803, 0.0
    %vm3808 = vcmp.ge.f32.partialorder %v3804, 0.0
    %vm3809 = vcmp.ge.f32.partialorder %v3805, 0.0
    %v3810 = vmul.f32 %v3802, 0.1
    %v3811 = vmul.f32 %v3803, 0.1
    %v3812 = vmul.f32 %v3804, 0.1
    %v3813 = vmul.f32 %v3805, 0.1
    %v3814 = vsel %vm3806, %v3802, %v3810
    %v3815 = vsel %vm3807, %v3803, %v3811
    %v3816 = vsel %vm3808, %v3804, %v3812
    %v3817 = vsel %vm3809, %v3805, %v3813
    %v3818 = vld [vmem:[%s5] sm:$0xff]
    %v3819 = vld [vmem:[%s5 + $0x8] sm:$0xff]
    %v3820 = vld [vmem:[%s5 + $0x10] sm:$0xff]
    %v3821 = vld [vmem:[%s5 + $0x18] sm:$0xff]
    %v3822 = vld [vmem:[%s5 + $0x20] sm:$0xff]
    %v3823 = vld [vmem:[%s5 + $0x28] sm:$0xff]
    %v3824 = vld [vmem:[%s6] sm:$0x1]
    %v3829 = vrot.slane %v3814, 7
    %v3830 = vrot.slane %v3815, 7
    %v3831 = vsel %vm134, %v3829, %v3830
    %v3832 = vrot.slane %v3816, 7
    %v3833 = vsel %vm134, %v3830, %v3832
    %v3834 = vrot.slane %v3817, 7
    %v3835 = vsel %vm134, %v3832, %v3834
    %v3840 = vsel %vm134, 0.0, %v3829
    %v3841 = vmul.f32 %v3840, %v110
    %v3842 = vmul.f32 %v3831, %v111
    %v3843 = vmul.f32 %v3833, %v112
    %v3844 = vmul.f32 %v3835, %v113
    %v3845 = vrot.slane %v3814, 1
    %v3846 = vrot.slane %v3815, 1
    %v3847 = vsel %vm151, %v3845, %v3846
    %v3848 = vrot.slane %v3816, 1
    %v3849 = vsel %vm151, %v3846, %v3848
    %v3850 = vrot.slane %v3817, 1
    %v3851 = vsel %vm151, %v3848, %v3850
    %v3856 = vsel %vm151, %v3850, 0.0
    %v3857 = vmul.f32 %v3847, %v122
    %v3858 = vmul.f32 %v3849, %v123
    %v3859 = vmul.f32 %v3851, %v124
    %v3860 = vmul.f32 %v3856, %v125
    %v3861 = vsel %vm1995, %v3814, 0
    %v3863 = vsel %vm1995, %v3815, 0
    %v3865 = vsel %vm1995, %v3816, 0
    %v3867 = vsel %vm1995, %v3817, 0
    %3869 = vmatprep.subr.mxu0 0.0
    %3870 = vmatpush1.msra.mxu0 0.0
    %3871 = vmatprep.subr.mxu0 0.0
    %3872 = vmatpush1.msra.mxu0 0.0
    %3873 = vmatprep.subr.mxu0 0.0
    %3874 = vmatpush1.msra.mxu0 0.0
    %3875 = vmatprep.subr.mxu0 0.0
    %3876 = vmatpush1.msra.mxu0 0.0
    %3877 = vmatprep.subr.mxu0 0.0
    %3878 = vmatpush1.msra.mxu0 0.0
    %3879 = vmatprep.subr.mxu0 0.0
    %3880 = vmatpush1.msra.mxu0 0.0
    %3881 = vmatprep.subr.mxu0 0.0
    %3882 = vmatpush1.msra.mxu0 0.0
    %3883 = vmatprep.subr.mxu0 0.0
    %3884 = vmatpush1.msra.mxu0 0.0
    %3885 = vmatprep.subr.mxu0 0.0
    %3886 = vmatpush1.msra.mxu0 0.0
    %3887 = vmatprep.subr.mxu0 0.0
    %3888 = vmatpush1.msra.mxu0 0.0
    %3889 = vmatprep.subr.mxu0 0.0
    %3890 = vmatpush1.msra.mxu0 0.0
    %3891 = vmatprep.subr.mxu0 0.0
    %3892 = vmatpush1.msra.mxu0 0.0
    %3893 = vmatprep.subr.mxu0 0.0
    %3894 = vmatpush1.msra.mxu0 0.0
    %3895 = vmatprep.subr.mxu0 0.0
    %3896 = vmatpush1.msra.mxu0 0.0
    %3897 = vmatprep.subr.mxu0 0.0
    %v3898 = vand.u32 %v3821, 4294901760
    %3899 = vmatpush1.msra.mxu0 %v3898
    %3900 = vmatprep.subr.mxu0 0.0
    %v3901 = vand.u32 %v3820, 4294901760
    %3902 = vmatpush1.msra.mxu0 %v3901
    %3903 = vmatprep.subr.mxu0 0.0
    %3904 = vmatpush2.msra.mxu0 0.0
    %3905 = vmatprep.subr.mxu0 0.0
    %3906 = vmatpush2.msra.mxu0 0.0
    %3907 = vmatprep.subr.mxu0 0.0
    %3908 = vmatpush2.msra.mxu0 0.0
    %3909 = vmatprep.subr.mxu0 0.0
    %3910 = vmatpush2.msra.mxu0 0.0
    %3911 = vmatprep.subr.mxu0 0.0
    %3912 = vmatpush2.msra.mxu0 0.0
    %3913 = vmatprep.subr.mxu0 0.0
    %3914 = vmatpush2.msra.mxu0 0.0
    %3915 = vmatprep.subr.mxu0 0.0
    %3916 = vmatpush2.msra.mxu0 0.0
    %3917 = vmatprep.subr.mxu0 0.0
    %3918 = vmatpush2.msra.mxu0 0.0
    %3919 = vmatprep.subr.mxu0 0.0
    %3920 = vmatpush2.msra.mxu0 0.0
    %3921 = vmatprep.subr.mxu0 0.0
    %3922 = vmatpush2.msra.mxu0 0.0
    %3923 = vmatprep.subr.mxu0 0.0
    %3924 = vmatpush2.msra.mxu0 0.0
    %3925 = vmatprep.subr.mxu0 0.0
    %3926 = vmatpush2.msra.mxu0 0.0
    %3927 = vmatprep.subr.mxu0 0.0
    %3928 = vmatpush2.msra.mxu0 0.0
    %3929 = vmatprep.subr.mxu0 0.0
    %3930 = vmatpush2.msra.mxu0 0.0
    %3931 = vmatprep.subr.mxu0 0.0
    %3932 = vmatpush2.msra.mxu0 0.0
    %3933 = vmatprep.subr.mxu0 0.0
    %3934 = vmatpush2.msra.mxu0 0.0
    %3935 = vmatprep.mubr.f32.mxu0 0.0
    %v3936 = vand.u32 %v3861, 4294901760
    %v3937 = vsub.f32 %v3861, %v3936
    %v3938 = vand.u32 %v3937, 4294901760
    %v3939 = vsub.f32 %v3937, %v3938
    %v3940 = vand.u32 %v3939, 4294901760
    %3941 = vmatmul.mubr.f32.gmra.mxu0 %v3940
    %v3942 = vpop.f32.mrf.mxu0
    %v3943 = vadd.f32 0.0, %v3942
    %v3944 = vpop.f32.mrf.mxu0
    %3945 = vmatprep.mubr.f32.mxu0 0.0
    %v3946 = vand.u32 %v3863, 4294901760
    %v3947 = vsub.f32 %v3863, %v3946
    %v3948 = vand.u32 %v3947, 4294901760
    %v3949 = vsub.f32 %v3947, %v3948
    %v3950 = vand.u32 %v3949, 4294901760
    %3951 = vmatmul.mubr.f32.gmra.mxu0 %v3950
    %v3952 = vpop.f32.mrf.mxu0
    %v3953 = vadd.f32 0.0, %v3952
    %v3954 = vpop.f32.mrf.mxu0
    %3955 = vmatprep.mubr.f32.mxu0 0.0
    %v3956 = vand.u32 %v3865, 4294901760
    %v3957 = vsub.f32 %v3865, %v3956
    %v3958 = vand.u32 %v3957, 4294901760
    %v3959 = vsub.f32 %v3957, %v3958
    %v3960 = vand.u32 %v3959, 4294901760
    %3961 = vmatmul.mubr.f32.gmra.mxu0 %v3960
    %v3962 = vpop.f32.mrf.mxu0
    %v3963 = vadd.f32 0.0, %v3962
    %v3964 = vpop.f32.mrf.mxu0
    %3965 = vmatprep.mubr.f32.mxu0 0.0
    %v3966 = vand.u32 %v3867, 4294901760
    %v3967 = vsub.f32 %v3867, %v3966
    %v3968 = vand.u32 %v3967, 4294901760
    %v3969 = vsub.f32 %v3967, %v3968
    %v3970 = vand.u32 %v3969, 4294901760
    %3971 = vmatmul.mubr.f32.gmra.mxu0 %v3970
    %v3972 = vpop.f32.mrf.mxu0
    %v3973 = vadd.f32 0.0, %v3972
    %v3974 = vpop.f32.mrf.mxu0
    %3975 = vdwg.mxu0
    %3976 = vmatprep.subr.mxu0 0.0
    %3977 = vmatpush1.msra.mxu0 0.0
    %3978 = vmatprep.subr.mxu0 0.0
    %3979 = vmatpush1.msra.mxu0 0.0
    %3980 = vmatprep.subr.mxu0 0.0
    %3981 = vmatpush1.msra.mxu0 0.0
    %3982 = vmatprep.subr.mxu0 0.0
    %3983 = vmatpush1.msra.mxu0 0.0
    %3984 = vmatprep.subr.mxu0 0.0
    %3985 = vmatpush1.msra.mxu0 0.0
    %3986 = vmatprep.subr.mxu0 0.0
    %3987 = vmatpush1.msra.mxu0 0.0
    %3988 = vmatprep.subr.mxu0 0.0
    %3989 = vmatpush1.msra.mxu0 0.0
    %3990 = vmatprep.subr.mxu0 0.0
    %3991 = vmatpush1.msra.mxu0 0.0
    %3992 = vmatprep.subr.mxu0 0.0
    %3993 = vmatpush1.msra.mxu0 0.0
    %3994 = vmatprep.subr.mxu0 0.0
    %3995 = vmatpush1.msra.mxu0 0.0
    %3996 = vmatprep.subr.mxu0 0.0
    %3997 = vmatpush1.msra.mxu0 0.0
    %3998 = vmatprep.subr.mxu0 0.0
    %3999 = vmatpush1.msra.mxu0 0.0
    %4000 = vmatprep.subr.mxu0 0.0
    %4001 = vmatpush1.msra.mxu0 0.0
    %4002 = vmatprep.subr.mxu0 0.0
    %4003 = vmatpush1.msra.mxu0 0.0
    %4004 = vmatprep.subr.mxu0 0.0
    %v4005 = vand.u32 %v3821, 4294901760
    %v4006 = vsub.f32 %v3821, %v4005
    %v4007 = vand.u32 %v4006, 4294901760
    %v4008 = vsub.f32 %v4006, %v4007
    %v4009 = vand.u32 %v4008, 4294901760
    %4010 = vmatpush1.msra.mxu0 %v4009
    %4011 = vmatprep.subr.mxu0 0.0
    %v4012 = vand.u32 %v3820, 4294901760
    %v4013 = vsub.f32 %v3820, %v4012
    %v4014 = vand.u32 %v4013, 4294901760
    %v4015 = vsub.f32 %v4013, %v4014
    %v4016 = vand.u32 %v4015, 4294901760
    %4017 = vmatpush1.msra.mxu0 %v4016
    %4018 = vmatprep.subr.mxu0 0.0
    %4019 = vmatpush2.msra.mxu0 0.0
    %4020 = vmatprep.subr.mxu0 0.0
    %4021 = vmatpush2.msra.mxu0 0.0
    %4022 = vmatprep.subr.mxu0 0.0
    %4023 = vmatpush2.msra.mxu0 0.0
    %4024 = vmatprep.subr.mxu0 0.0
    %4025 = vmatpush2.msra.mxu0 0.0
    %4026 = vmatprep.subr.mxu0 0.0
    %4027 = vmatpush2.msra.mxu0 0.0
    %4028 = vmatprep.subr.mxu0 0.0
    %4029 = vmatpush2.msra.mxu0 0.0
    %4030 = vmatprep.subr.mxu0 0.0
    %4031 = vmatpush2.msra.mxu0 0.0
    %4032 = vmatprep.subr.mxu0 0.0
    %4033 = vmatpush2.msra.mxu0 0.0
    %4034 = vmatprep.subr.mxu0 0.0
    %4035 = vmatpush2.msra.mxu0 0.0
    %4036 = vmatprep.subr.mxu0 0.0
    %4037 = vmatpush2.msra.mxu0 0.0
    %4038 = vmatprep.subr.mxu0 0.0
    %4039 = vmatpush2.msra.mxu0 0.0
    %4040 = vmatprep.subr.mxu0 0.0
    %4041 = vmatpush2.msra.mxu0 0.0
    %4042 = vmatprep.subr.mxu0 0.0
    %4043 = vmatpush2.msra.mxu0 0.0
    %4044 = vmatprep.subr.mxu0 0.0
    %4045 = vmatpush2.msra.mxu0 0.0
    %4046 = vmatprep.subr.mxu0 0.0
    %4047 = vmatpush2.msra.mxu0 0.0
    %4048 = vmatprep.subr.mxu0 0.0
    %4049 = vmatpush2.msra.mxu0 0.0
    %4050 = vmatprep.mubr.f32.mxu0 0.0
    %v4051 = vand.u32 %v3861, 4294901760
    %4052 = vmatmul.mubr.f32.gmra.mxu0 %v4051
    %v4053 = vpop.f32.mrf.mxu0
    %v4054 = vadd.f32 %v3943, %v4053
    %v4055 = vpop.f32.mrf.mxu0
    %4056 = vmatprep.mubr.f32.mxu0 0.0
    %v4057 = vand.u32 %v3863, 4294901760
    %4058 = vmatmul.mubr.f32.gmra.mxu0 %v4057
    %v4059 = vpop.f32.mrf.mxu0
    %v4060 = vadd.f32 %v3953, %v4059
    %v4061 = vpop.f32.mrf.mxu0
    %4062 = vmatprep.mubr.f32.mxu0 0.0
    %v4063 = vand.u32 %v3865, 4294901760
    %4064 = vmatmul.mubr.f32.gmra.mxu0 %v4063
    %v4065 = vpop.f32.mrf.mxu0
    %v4066 = vadd.f32 %v3963, %v4065
    %v4067 = vpop.f32.mrf.mxu0
    %4068 = vmatprep.mubr.f32.mxu0 0.0
    %v4069 = vand.u32 %v3867, 4294901760
    %4070 = vmatmul.mubr.f32.gmra.mxu0 %v4069
    %v4071 = vpop.f32.mrf.mxu0
    %v4072 = vadd.f32 %v3973, %v4071
    %v4073 = vpop.f32.mrf.mxu0
    %4074 = vdwg.mxu0
    %4075 = vmatprep.subr.mxu0 0.0
    %4076 = vmatpush1.msra.mxu0 0.0
    %4077 = vmatprep.subr.mxu0 0.0
    %4078 = vmatpush1.msra.mxu0 0.0
    %4079 = vmatprep.subr.mxu0 0.0
    %4080 = vmatpush1.msra.mxu0 0.0
    %4081 = vmatprep.subr.mxu0 0.0
    %4082 = vmatpush1.msra.mxu0 0.0
    %4083 = vmatprep.subr.mxu0 0.0
    %4084 = vmatpush1.msra.mxu0 0.0
    %4085 = vmatprep.subr.mxu0 0.0
    %4086 = vmatpush1.msra.mxu0 0.0
    %4087 = vmatprep.subr.mxu0 0.0
    %4088 = vmatpush1.msra.mxu0 0.0
    %4089 = vmatprep.subr.mxu0 0.0
    %4090 = vmatpush1.msra.mxu0 0.0
    %4091 = vmatprep.subr.mxu0 0.0
    %4092 = vmatpush1.msra.mxu0 0.0
    %4093 = vmatprep.subr.mxu0 0.0
    %4094 = vmatpush1.msra.mxu0 0.0
    %4095 = vmatprep.subr.mxu0 0.0
    %4096 = vmatpush1.msra.mxu0 0.0
    %4097 = vmatprep.subr.mxu0 0.0
    %4098 = vmatpush1.msra.mxu0 0.0
    %4099 = vmatprep.subr.mxu0 0.0
    %4100 = vmatpush1.msra.mxu0 0.0
    %4101 = vmatprep.subr.mxu0 0.0
    %4102 = vmatpush1.msra.mxu0 0.0
    %4103 = vmatprep.subr.mxu0 0.0
    %v4104 = vand.u32 %v3821, 4294901760
    %v4105 = vsub.f32 %v3821, %v4104
    %4106 = vmatpush1.msra.mxu0 %v4105
    %4107 = vmatprep.subr.mxu0 0.0
    %v4108 = vand.u32 %v3820, 4294901760
    %v4109 = vsub.f32 %v3820, %v4108
    %4110 = vmatpush1.msra.mxu0 %v4109
    %4111 = vmatprep.subr.mxu0 0.0
    %4112 = vmatpush2.msra.mxu0 0.0
    %4113 = vmatprep.subr.mxu0 0.0
    %4114 = vmatpush2.msra.mxu0 0.0
    %4115 = vmatprep.subr.mxu0 0.0
    %4116 = vmatpush2.msra.mxu0 0.0
    %4117 = vmatprep.subr.mxu0 0.0
    %4118 = vmatpush2.msra.mxu0 0.0
    %4119 = vmatprep.subr.mxu0 0.0
    %4120 = vmatpush2.msra.mxu0 0.0
    %4121 = vmatprep.subr.mxu0 0.0
    %4122 = vmatpush2.msra.mxu0 0.0
    %4123 = vmatprep.subr.mxu0 0.0
    %4124 = vmatpush2.msra.mxu0 0.0
    %4125 = vmatprep.subr.mxu0 0.0
    %4126 = vmatpush2.msra.mxu0 0.0
    %4127 = vmatprep.subr.mxu0 0.0
    %4128 = vmatpush2.msra.mxu0 0.0
    %4129 = vmatprep.subr.mxu0 0.0
    %4130 = vmatpush2.msra.mxu0 0.0
    %4131 = vmatprep.subr.mxu0 0.0
    %4132 = vmatpush2.msra.mxu0 0.0
    %4133 = vmatprep.subr.mxu0 0.0
    %4134 = vmatpush2.msra.mxu0 0.0
    %4135 = vmatprep.subr.mxu0 0.0
    %4136 = vmatpush2.msra.mxu0 0.0
    %4137 = vmatprep.subr.mxu0 0.0
    %4138 = vmatpush2.msra.mxu0 0.0
    %4139 = vmatprep.subr.mxu0 0.0
    %4140 = vmatpush2.msra.mxu0 0.0
    %4141 = vmatprep.subr.mxu0 0.0
    %4142 = vmatpush2.msra.mxu0 0.0
    %4143 = vmatprep.mubr.f32.mxu0 0.0
    %v4144 = vand.u32 %v3861, 4294901760
    %v4145 = vsub.f32 %v3861, %v4144
    %4146 = vmatmul.mubr.f32.gmra.mxu0 %v4145
    %v4147 = vpop.f32.mrf.mxu0
    %v4148 = vadd.f32 %v4054, %v4147
    %v4149 = vpop.f32.mrf.mxu0
    %4150 = vmatprep.mubr.f32.mxu0 0.0
    %v4151 = vand.u32 %v3863, 4294901760
    %v4152 = vsub.f32 %v3863, %v4151
    %4153 = vmatmul.mubr.f32.gmra.mxu0 %v4152
    %v4154 = vpop.f32.mrf.mxu0
    %v4155 = vadd.f32 %v4060, %v4154
    %v4156 = vpop.f32.mrf.mxu0
    %4157 = vmatprep.mubr.f32.mxu0 0.0
    %v4158 = vand.u32 %v3865, 4294901760
    %v4159 = vsub.f32 %v3865, %v4158
    %4160 = vmatmul.mubr.f32.gmra.mxu0 %v4159
    %v4161 = vpop.f32.mrf.mxu0
    %v4162 = vadd.f32 %v4066, %v4161
    %v4163 = vpop.f32.mrf.mxu0
    %4164 = vmatprep.mubr.f32.mxu0 0.0
    %v4165 = vand.u32 %v3867, 4294901760
    %v4166 = vsub.f32 %v3867, %v4165
    %4167 = vmatmul.mubr.f32.gmra.mxu0 %v4166
    %v4168 = vpop.f32.mrf.mxu0
    %v4169 = vadd.f32 %v4072, %v4168
    %v4170 = vpop.f32.mrf.mxu0
    %4171 = vdwg.mxu0
    %4172 = vmatprep.subr.mxu0 0.0
    %4173 = vmatpush1.msra.mxu0 0.0
    %4174 = vmatprep.subr.mxu0 0.0
    %4175 = vmatpush1.msra.mxu0 0.0
    %4176 = vmatprep.subr.mxu0 0.0
    %4177 = vmatpush1.msra.mxu0 0.0
    %4178 = vmatprep.subr.mxu0 0.0
    %4179 = vmatpush1.msra.mxu0 0.0
    %4180 = vmatprep.subr.mxu0 0.0
    %4181 = vmatpush1.msra.mxu0 0.0
    %4182 = vmatprep.subr.mxu0 0.0
    %4183 = vmatpush1.msra.mxu0 0.0
    %4184 = vmatprep.subr.mxu0 0.0
    %4185 = vmatpush1.msra.mxu0 0.0
    %4186 = vmatprep.subr.mxu0 0.0
    %4187 = vmatpush1.msra.mxu0 0.0
    %4188 = vmatprep.subr.mxu0 0.0
    %4189 = vmatpush1.msra.mxu0 0.0
    %4190 = vmatprep.subr.mxu0 0.0
    %4191 = vmatpush1.msra.mxu0 0.0
    %4192 = vmatprep.subr.mxu0 0.0
    %4193 = vmatpush1.msra.mxu0 0.0
    %4194 = vmatprep.subr.mxu0 0.0
    %4195 = vmatpush1.msra.mxu0 0.0
    %4196 = vmatprep.subr.mxu0 0.0
    %4197 = vmatpush1.msra.mxu0 0.0
    %4198 = vmatprep.subr.mxu0 0.0
    %4199 = vmatpush1.msra.mxu0 0.0
    %4200 = vmatprep.subr.mxu0 0.0
    %v4201 = vand.u32 %v3821, 4294901760
    %4202 = vmatpush1.msra.mxu0 %v4201
    %4203 = vmatprep.subr.mxu0 0.0
    %v4204 = vand.u32 %v3820, 4294901760
    %4205 = vmatpush1.msra.mxu0 %v4204
    %4206 = vmatprep.subr.mxu0 0.0
    %4207 = vmatpush2.msra.mxu0 0.0
    %4208 = vmatprep.subr.mxu0 0.0
    %4209 = vmatpush2.msra.mxu0 0.0
    %4210 = vmatprep.subr.mxu0 0.0
    %4211 = vmatpush2.msra.mxu0 0.0
    %4212 = vmatprep.subr.mxu0 0.0
    %4213 = vmatpush2.msra.mxu0 0.0
    %4214 = vmatprep.subr.mxu0 0.0
    %4215 = vmatpush2.msra.mxu0 0.0
    %4216 = vmatprep.subr.mxu0 0.0
    %4217 = vmatpush2.msra.mxu0 0.0
    %4218 = vmatprep.subr.mxu0 0.0
    %4219 = vmatpush2.msra.mxu0 0.0
    %4220 = vmatprep.subr.mxu0 0.0
    %4221 = vmatpush2.msra.mxu0 0.0
    %4222 = vmatprep.subr.mxu0 0.0
    %4223 = vmatpush2.msra.mxu0 0.0
    %4224 = vmatprep.subr.mxu0 0.0
    %4225 = vmatpush2.msra.mxu0 0.0
    %4226 = vmatprep.subr.mxu0 0.0
    %4227 = vmatpush2.msra.mxu0 0.0
    %4228 = vmatprep.subr.mxu0 0.0
    %4229 = vmatpush2.msra.mxu0 0.0
    %4230 = vmatprep.subr.mxu0 0.0
    %4231 = vmatpush2.msra.mxu0 0.0
    %4232 = vmatprep.subr.mxu0 0.0
    %4233 = vmatpush2.msra.mxu0 0.0
    %4234 = vmatprep.subr.mxu0 0.0
    %4235 = vmatpush2.msra.mxu0 0.0
    %4236 = vmatprep.subr.mxu0 0.0
    %4237 = vmatpush2.msra.mxu0 0.0
    %4238 = vmatprep.mubr.f32.mxu0 0.0
    %v4239 = vand.u32 %v3861, 4294901760
    %v4240 = vsub.f32 %v3861, %v4239
    %v4241 = vand.u32 %v4240, 4294901760
    %4242 = vmatmul.mubr.f32.gmra.mxu0 %v4241
    %v4243 = vpop.f32.mrf.mxu0
    %v4244 = vadd.f32 %v4148, %v4243
    %v4245 = vpop.f32.mrf.mxu0
    %4246 = vmatprep.mubr.f32.mxu0 0.0
    %v4247 = vand.u32 %v3863, 4294901760
    %v4248 = vsub.f32 %v3863, %v4247
    %v4249 = vand.u32 %v4248, 4294901760
    %4250 = vmatmul.mubr.f32.gmra.mxu0 %v4249
    %v4251 = vpop.f32.mrf.mxu0
    %v4252 = vadd.f32 %v4155, %v4251
    %v4253 = vpop.f32.mrf.mxu0
    %4254 = vmatprep.mubr.f32.mxu0 0.0
    %v4255 = vand.u32 %v3865, 4294901760
    %v4256 = vsub.f32 %v3865, %v4255
    %v4257 = vand.u32 %v4256, 4294901760
    %4258 = vmatmul.mubr.f32.gmra.mxu0 %v4257
    %v4259 = vpop.f32.mrf.mxu0
    %v4260 = vadd.f32 %v4162, %v4259
    %v4261 = vpop.f32.mrf.mxu0
    %4262 = vmatprep.mubr.f32.mxu0 0.0
    %v4263 = vand.u32 %v3867, 4294901760
    %v4264 = vsub.f32 %v3867, %v4263
    %v4265 = vand.u32 %v4264, 4294901760
    %4266 = vmatmul.mubr.f32.gmra.mxu0 %v4265
    %v4267 = vpop.f32.mrf.mxu0
    %v4268 = vadd.f32 %v4169, %v4267
    %v4269 = vpop.f32.mrf.mxu0
    %4270 = vdwg.mxu0
    %4271 = vmatprep.subr.mxu0 0.0
    %4272 = vmatpush1.msra.mxu0 0.0
    %4273 = vmatprep.subr.mxu0 0.0
    %4274 = vmatpush1.msra.mxu0 0.0
    %4275 = vmatprep.subr.mxu0 0.0
    %4276 = vmatpush1.msra.mxu0 0.0
    %4277 = vmatprep.subr.mxu0 0.0
    %4278 = vmatpush1.msra.mxu0 0.0
    %4279 = vmatprep.subr.mxu0 0.0
    %4280 = vmatpush1.msra.mxu0 0.0
    %4281 = vmatprep.subr.mxu0 0.0
    %4282 = vmatpush1.msra.mxu0 0.0
    %4283 = vmatprep.subr.mxu0 0.0
    %4284 = vmatpush1.msra.mxu0 0.0
    %4285 = vmatprep.subr.mxu0 0.0
    %4286 = vmatpush1.msra.mxu0 0.0
    %4287 = vmatprep.subr.mxu0 0.0
    %4288 = vmatpush1.msra.mxu0 0.0
    %4289 = vmatprep.subr.mxu0 0.0
    %4290 = vmatpush1.msra.mxu0 0.0
    %4291 = vmatprep.subr.mxu0 0.0
    %4292 = vmatpush1.msra.mxu0 0.0
    %4293 = vmatprep.subr.mxu0 0.0
    %4294 = vmatpush1.msra.mxu0 0.0
    %4295 = vmatprep.subr.mxu0 0.0
    %4296 = vmatpush1.msra.mxu0 0.0
    %4297 = vmatprep.subr.mxu0 0.0
    %4298 = vmatpush1.msra.mxu0 0.0
    %4299 = vmatprep.subr.mxu0 0.0
    %v4300 = vand.u32 %v3821, 4294901760
    %v4301 = vsub.f32 %v3821, %v4300
    %v4302 = vand.u32 %v4301, 4294901760
    %4303 = vmatpush1.msra.mxu0 %v4302
    %4304 = vmatprep.subr.mxu0 0.0
    %v4305 = vand.u32 %v3820, 4294901760
    %v4306 = vsub.f32 %v3820, %v4305
    %v4307 = vand.u32 %v4306, 4294901760
    %4308 = vmatpush1.msra.mxu0 %v4307
    %4309 = vmatprep.subr.mxu0 0.0
    %4310 = vmatpush2.msra.mxu0 0.0
    %4311 = vmatprep.subr.mxu0 0.0
    %4312 = vmatpush2.msra.mxu0 0.0
    %4313 = vmatprep.subr.mxu0 0.0
    %4314 = vmatpush2.msra.mxu0 0.0
    %4315 = vmatprep.subr.mxu0 0.0
    %4316 = vmatpush2.msra.mxu0 0.0
    %4317 = vmatprep.subr.mxu0 0.0
    %4318 = vmatpush2.msra.mxu0 0.0
    %4319 = vmatprep.subr.mxu0 0.0
    %4320 = vmatpush2.msra.mxu0 0.0
    %4321 = vmatprep.subr.mxu0 0.0
    %4322 = vmatpush2.msra.mxu0 0.0
    %4323 = vmatprep.subr.mxu0 0.0
    %4324 = vmatpush2.msra.mxu0 0.0
    %4325 = vmatprep.subr.mxu0 0.0
    %4326 = vmatpush2.msra.mxu0 0.0
    %4327 = vmatprep.subr.mxu0 0.0
    %4328 = vmatpush2.msra.mxu0 0.0
    %4329 = vmatprep.subr.mxu0 0.0
    %4330 = vmatpush2.msra.mxu0 0.0
    %4331 = vmatprep.subr.mxu0 0.0
    %4332 = vmatpush2.msra.mxu0 0.0
    %4333 = vmatprep.subr.mxu0 0.0
    %4334 = vmatpush2.msra.mxu0 0.0
    %4335 = vmatprep.subr.mxu0 0.0
    %4336 = vmatpush2.msra.mxu0 0.0
    %4337 = vmatprep.subr.mxu0 0.0
    %4338 = vmatpush2.msra.mxu0 0.0
    %4339 = vmatprep.subr.mxu0 0.0
    %4340 = vmatpush2.msra.mxu0 0.0
    %4341 = vmatprep.mubr.f32.mxu0 0.0
    %v4342 = vand.u32 %v3861, 4294901760
    %4343 = vmatmul.mubr.f32.gmra.mxu0 %v4342
    %v4344 = vpop.f32.mrf.mxu0
    %v4345 = vadd.f32 %v4244, %v4344
    %v4346 = vpop.f32.mrf.mxu0
    %4347 = vmatprep.mubr.f32.mxu0 0.0
    %v4348 = vand.u32 %v3863, 4294901760
    %4349 = vmatmul.mubr.f32.gmra.mxu0 %v4348
    %v4350 = vpop.f32.mrf.mxu0
    %v4351 = vadd.f32 %v4252, %v4350
    %v4352 = vpop.f32.mrf.mxu0
    %4353 = vmatprep.mubr.f32.mxu0 0.0
    %v4354 = vand.u32 %v3865, 4294901760
    %4355 = vmatmul.mubr.f32.gmra.mxu0 %v4354
    %v4356 = vpop.f32.mrf.mxu0
    %v4357 = vadd.f32 %v4260, %v4356
    %v4358 = vpop.f32.mrf.mxu0
    %4359 = vmatprep.mubr.f32.mxu0 0.0
    %v4360 = vand.u32 %v3867, 4294901760
    %4361 = vmatmul.mubr.f32.gmra.mxu0 %v4360
    %v4362 = vpop.f32.mrf.mxu0
    %v4363 = vadd.f32 %v4268, %v4362
    %v4364 = vpop.f32.mrf.mxu0
    %4365 = vdwg.mxu0
    %4366 = vmatprep.subr.mxu0 0.0
    %4367 = vmatpush1.msra.mxu0 0.0
    %4368 = vmatprep.subr.mxu0 0.0
    %4369 = vmatpush1.msra.mxu0 0.0
    %4370 = vmatprep.subr.mxu0 0.0
    %4371 = vmatpush1.msra.mxu0 0.0
    %4372 = vmatprep.subr.mxu0 0.0
    %4373 = vmatpush1.msra.mxu0 0.0
    %4374 = vmatprep.subr.mxu0 0.0
    %4375 = vmatpush1.msra.mxu0 0.0
    %4376 = vmatprep.subr.mxu0 0.0
    %4377 = vmatpush1.msra.mxu0 0.0
    %4378 = vmatprep.subr.mxu0 0.0
    %4379 = vmatpush1.msra.mxu0 0.0
    %4380 = vmatprep.subr.mxu0 0.0
    %4381 = vmatpush1.msra.mxu0 0.0
    %4382 = vmatprep.subr.mxu0 0.0
    %4383 = vmatpush1.msra.mxu0 0.0
    %4384 = vmatprep.subr.mxu0 0.0
    %4385 = vmatpush1.msra.mxu0 0.0
    %4386 = vmatprep.subr.mxu0 0.0
    %4387 = vmatpush1.msra.mxu0 0.0
    %4388 = vmatprep.subr.mxu0 0.0
    %4389 = vmatpush1.msra.mxu0 0.0
    %4390 = vmatprep.subr.mxu0 0.0
    %4391 = vmatpush1.msra.mxu0 0.0
    %4392 = vmatprep.subr.mxu0 0.0
    %4393 = vmatpush1.msra.mxu0 0.0
    %4394 = vmatprep.subr.mxu0 0.0
    %v4395 = vand.u32 %v3821, 4294901760
    %4396 = vmatpush1.msra.mxu0 %v4395
    %4397 = vmatprep.subr.mxu0 0.0
    %v4398 = vand.u32 %v3820, 4294901760
    %4399 = vmatpush1.msra.mxu0 %v4398
    %4400 = vmatprep.subr.mxu0 0.0
    %4401 = vmatpush2.msra.mxu0 0.0
    %4402 = vmatprep.subr.mxu0 0.0
    %4403 = vmatpush2.msra.mxu0 0.0
    %4404 = vmatprep.subr.mxu0 0.0
    %4405 = vmatpush2.msra.mxu0 0.0
    %4406 = vmatprep.subr.mxu0 0.0
    %4407 = vmatpush2.msra.mxu0 0.0
    %4408 = vmatprep.subr.mxu0 0.0
    %4409 = vmatpush2.msra.mxu0 0.0
    %4410 = vmatprep.subr.mxu0 0.0
    %4411 = vmatpush2.msra.mxu0 0.0
    %4412 = vmatprep.subr.mxu0 0.0
    %4413 = vmatpush2.msra.mxu0 0.0
    %4414 = vmatprep.subr.mxu0 0.0
    %4415 = vmatpush2.msra.mxu0 0.0
    %4416 = vmatprep.subr.mxu0 0.0
    %4417 = vmatpush2.msra.mxu0 0.0
    %4418 = vmatprep.subr.mxu0 0.0
    %4419 = vmatpush2.msra.mxu0 0.0
    %4420 = vmatprep.subr.mxu0 0.0
    %4421 = vmatpush2.msra.mxu0 0.0
    %4422 = vmatprep.subr.mxu0 0.0
    %4423 = vmatpush2.msra.mxu0 0.0
    %4424 = vmatprep.subr.mxu0 0.0
    %4425 = vmatpush2.msra.mxu0 0.0
    %4426 = vmatprep.subr.mxu0 0.0
    %4427 = vmatpush2.msra.mxu0 0.0
    %4428 = vmatprep.subr.mxu0 0.0
    %4429 = vmatpush2.msra.mxu0 0.0
    %4430 = vmatprep.subr.mxu0 0.0
    %4431 = vmatpush2.msra.mxu0 0.0
    %4432 = vmatprep.mubr.f32.mxu0 0.0
    %v4433 = vand.u32 %v3861, 4294901760
    %4434 = vmatmul.mubr.f32.gmra.mxu0 %v4433
    %v4435 = vpop.f32.mrf.mxu0
    %v4436 = vadd.f32 %v4345, %v4435
    %v4437 = vpop.f32.mrf.mxu0
    %4438 = vmatprep.mubr.f32.mxu0 0.0
    %v4439 = vand.u32 %v3863, 4294901760
    %4440 = vmatmul.mubr.f32.gmra.mxu0 %v4439
    %v4441 = vpop.f32.mrf.mxu0
    %v4442 = vadd.f32 %v4351, %v4441
    %v4443 = vpop.f32.mrf.mxu0
    %4444 = vmatprep.mubr.f32.mxu0 0.0
    %v4445 = vand.u32 %v3865, 4294901760
    %4446 = vmatmul.mubr.f32.gmra.mxu0 %v4445
    %v4447 = vpop.f32.mrf.mxu0
    %v4448 = vadd.f32 %v4357, %v4447
    %v4449 = vpop.f32.mrf.mxu0
    %4450 = vmatprep.mubr.f32.mxu0 0.0
    %v4451 = vand.u32 %v3867, 4294901760
    %4452 = vmatmul.mubr.f32.gmra.mxu0 %v4451
    %v4453 = vpop.f32.mrf.mxu0
    %v4454 = vadd.f32 %v4363, %v4453
    %v4455 = vpop.f32.mrf.mxu0
    %4456 = vdwg.mxu0
    %v4458 = vsel %vm1995, %v3841, 0
    %v4461 = vsel %vm1995, %v3842, 0
    %v4464 = vsel %vm1995, %v3843, 0
    %v4467 = vsel %vm1995, %v3844, 0
    %4469 = vmatprep.subr.mxu0 0.0
    %4470 = vmatpush1.msra.mxu0 0.0
    %4471 = vmatprep.subr.mxu0 0.0
    %4472 = vmatpush1.msra.mxu0 0.0
    %4473 = vmatprep.subr.mxu0 0.0
    %4474 = vmatpush1.msra.mxu0 0.0
    %4475 = vmatprep.subr.mxu0 0.0
    %4476 = vmatpush1.msra.mxu0 0.0
    %4477 = vmatprep.subr.mxu0 0.0
    %4478 = vmatpush1.msra.mxu0 0.0
    %4479 = vmatprep.subr.mxu0 0.0
    %4480 = vmatpush1.msra.mxu0 0.0
    %4481 = vmatprep.subr.mxu0 0.0
    %4482 = vmatpush1.msra.mxu0 0.0
    %4483 = vmatprep.subr.mxu0 0.0
    %4484 = vmatpush1.msra.mxu0 0.0
    %4485 = vmatprep.subr.mxu0 0.0
    %4486 = vmatpush1.msra.mxu0 0.0
    %4487 = vmatprep.subr.mxu0 0.0
    %4488 = vmatpush1.msra.mxu0 0.0
    %4489 = vmatprep.subr.mxu0 0.0
    %4490 = vmatpush1.msra.mxu0 0.0
    %4491 = vmatprep.subr.mxu0 0.0
    %4492 = vmatpush1.msra.mxu0 0.0
    %4493 = vmatprep.subr.mxu0 0.0
    %4494 = vmatpush1.msra.mxu0 0.0
    %4495 = vmatprep.subr.mxu0 0.0
    %4496 = vmatpush1.msra.mxu0 0.0
    %4497 = vmatprep.subr.mxu0 0.0
    %v4498 = vand.u32 %v3819, 4294901760
    %4499 = vmatpush1.msra.mxu0 %v4498
    %4500 = vmatprep.subr.mxu0 0.0
    %v4501 = vand.u32 %v3818, 4294901760
    %4502 = vmatpush1.msra.mxu0 %v4501
    %4503 = vmatprep.subr.mxu0 0.0
    %4504 = vmatpush2.msra.mxu0 0.0
    %4505 = vmatprep.subr.mxu0 0.0
    %4506 = vmatpush2.msra.mxu0 0.0
    %4507 = vmatprep.subr.mxu0 0.0
    %4508 = vmatpush2.msra.mxu0 0.0
    %4509 = vmatprep.subr.mxu0 0.0
    %4510 = vmatpush2.msra.mxu0 0.0
    %4511 = vmatprep.subr.mxu0 0.0
    %4512 = vmatpush2.msra.mxu0 0.0
    %4513 = vmatprep.subr.mxu0 0.0
    %4514 = vmatpush2.msra.mxu0 0.0
    %4515 = vmatprep.subr.mxu0 0.0
    %4516 = vmatpush2.msra.mxu0 0.0
    %4517 = vmatprep.subr.mxu0 0.0
    %4518 = vmatpush2.msra.mxu0 0.0
    %4519 = vmatprep.subr.mxu0 0.0
    %4520 = vmatpush2.msra.mxu0 0.0
    %4521 = vmatprep.subr.mxu0 0.0
    %4522 = vmatpush2.msra.mxu0 0.0
    %4523 = vmatprep.subr.mxu0 0.0
    %4524 = vmatpush2.msra.mxu0 0.0
    %4525 = vmatprep.subr.mxu0 0.0
    %4526 = vmatpush2.msra.mxu0 0.0
    %4527 = vmatprep.subr.mxu0 0.0
    %4528 = vmatpush2.msra.mxu0 0.0
    %4529 = vmatprep.subr.mxu0 0.0
    %4530 = vmatpush2.msra.mxu0 0.0
    %4531 = vmatprep.subr.mxu0 0.0
    %4532 = vmatpush2.msra.mxu0 0.0
    %4533 = vmatprep.subr.mxu0 0.0
    %4534 = vmatpush2.msra.mxu0 0.0
    %4535 = vmatprep.mubr.f32.mxu0 0.0
    %v4536 = vand.u32 %v4458, 4294901760
    %v4537 = vsub.f32 %v4458, %v4536
    %v4538 = vand.u32 %v4537, 4294901760
    %v4539 = vsub.f32 %v4537, %v4538
    %v4540 = vand.u32 %v4539, 4294901760
    %4541 = vmatmul.mubr.f32.gmra.mxu0 %v4540
    %v4542 = vpop.f32.mrf.mxu0
    %v4543 = vadd.f32 %v4436, %v4542
    %v4544 = vpop.f32.mrf.mxu0
    %4545 = vmatprep.mubr.f32.mxu0 0.0
    %v4546 = vand.u32 %v4461, 4294901760
    %v4547 = vsub.f32 %v4461, %v4546
    %v4548 = vand.u32 %v4547, 4294901760
    %v4549 = vsub.f32 %v4547, %v4548
    %v4550 = vand.u32 %v4549, 4294901760
    %4551 = vmatmul.mubr.f32.gmra.mxu0 %v4550
    %v4552 = vpop.f32.mrf.mxu0
    %v4553 = vadd.f32 %v4442, %v4552
    %v4554 = vpop.f32.mrf.mxu0
    %4555 = vmatprep.mubr.f32.mxu0 0.0
    %v4556 = vand.u32 %v4464, 4294901760
    %v4557 = vsub.f32 %v4464, %v4556
    %v4558 = vand.u32 %v4557, 4294901760
    %v4559 = vsub.f32 %v4557, %v4558
    %v4560 = vand.u32 %v4559, 4294901760
    %4561 = vmatmul.mubr.f32.gmra.mxu0 %v4560
    %v4562 = vpop.f32.mrf.mxu0
    %v4563 = vadd.f32 %v4448, %v4562
    %v4564 = vpop.f32.mrf.mxu0
    %4565 = vmatprep.mubr.f32.mxu0 0.0
    %v4566 = vand.u32 %v4467, 4294901760
    %v4567 = vsub.f32 %v4467, %v4566
    %v4568 = vand.u32 %v4567, 4294901760
    %v4569 = vsub.f32 %v4567, %v4568
    %v4570 = vand.u32 %v4569, 4294901760
    %4571 = vmatmul.mubr.f32.gmra.mxu0 %v4570
    %v4572 = vpop.f32.mrf.mxu0
    %v4573 = vadd.f32 %v4454, %v4572
    %v4574 = vpop.f32.mrf.mxu0
    %4575 = vdwg.mxu0
    %4576 = vmatprep.subr.mxu0 0.0
    %4577 = vmatpush1.msra.mxu0 0.0
    %4578 = vmatprep.subr.mxu0 0.0
    %4579 = vmatpush1.msra.mxu0 0.0
    %4580 = vmatprep.subr.mxu0 0.0
    %4581 = vmatpush1.msra.mxu0 0.0
    %4582 = vmatprep.subr.mxu0 0.0
    %4583 = vmatpush1.msra.mxu0 0.0
    %4584 = vmatprep.subr.mxu0 0.0
    %4585 = vmatpush1.msra.mxu0 0.0
    %4586 = vmatprep.subr.mxu0 0.0
    %4587 = vmatpush1.msra.mxu0 0.0
    %4588 = vmatprep.subr.mxu0 0.0
    %4589 = vmatpush1.msra.mxu0 0.0
    %4590 = vmatprep.subr.mxu0 0.0
    %4591 = vmatpush1.msra.mxu0 0.0
    %4592 = vmatprep.subr.mxu0 0.0
    %4593 = vmatpush1.msra.mxu0 0.0
    %4594 = vmatprep.subr.mxu0 0.0
    %4595 = vmatpush1.msra.mxu0 0.0
    %4596 = vmatprep.subr.mxu0 0.0
    %4597 = vmatpush1.msra.mxu0 0.0
    %4598 = vmatprep.subr.mxu0 0.0
    %4599 = vmatpush1.msra.mxu0 0.0
    %4600 = vmatprep.subr.mxu0 0.0
    %4601 = vmatpush1.msra.mxu0 0.0
    %4602 = vmatprep.subr.mxu0 0.0
    %4603 = vmatpush1.msra.mxu0 0.0
    %4604 = vmatprep.subr.mxu0 0.0
    %v4605 = vand.u32 %v3819, 4294901760
    %v4606 = vsub.f32 %v3819, %v4605
    %v4607 = vand.u32 %v4606, 4294901760
    %v4608 = vsub.f32 %v4606, %v4607
    %v4609 = vand.u32 %v4608, 4294901760
    %4610 = vmatpush1.msra.mxu0 %v4609
    %4611 = vmatprep.subr.mxu0 0.0
    %v4612 = vand.u32 %v3818, 4294901760
    %v4613 = vsub.f32 %v3818, %v4612
    %v4614 = vand.u32 %v4613, 4294901760
    %v4615 = vsub.f32 %v4613, %v4614
    %v4616 = vand.u32 %v4615, 4294901760
    %4617 = vmatpush1.msra.mxu0 %v4616
    %4618 = vmatprep.subr.mxu0 0.0
    %4619 = vmatpush2.msra.mxu0 0.0
    %4620 = vmatprep.subr.mxu0 0.0
    %4621 = vmatpush2.msra.mxu0 0.0
    %4622 = vmatprep.subr.mxu0 0.0
    %4623 = vmatpush2.msra.mxu0 0.0
    %4624 = vmatprep.subr.mxu0 0.0
    %4625 = vmatpush2.msra.mxu0 0.0
    %4626 = vmatprep.subr.mxu0 0.0
    %4627 = vmatpush2.msra.mxu0 0.0
    %4628 = vmatprep.subr.mxu0 0.0
    %4629 = vmatpush2.msra.mxu0 0.0
    %4630 = vmatprep.subr.mxu0 0.0
    %4631 = vmatpush2.msra.mxu0 0.0
    %4632 = vmatprep.subr.mxu0 0.0
    %4633 = vmatpush2.msra.mxu0 0.0
    %4634 = vmatprep.subr.mxu0 0.0
    %4635 = vmatpush2.msra.mxu0 0.0
    %4636 = vmatprep.subr.mxu0 0.0
    %4637 = vmatpush2.msra.mxu0 0.0
    %4638 = vmatprep.subr.mxu0 0.0
    %4639 = vmatpush2.msra.mxu0 0.0
    %4640 = vmatprep.subr.mxu0 0.0
    %4641 = vmatpush2.msra.mxu0 0.0
    %4642 = vmatprep.subr.mxu0 0.0
    %4643 = vmatpush2.msra.mxu0 0.0
    %4644 = vmatprep.subr.mxu0 0.0
    %4645 = vmatpush2.msra.mxu0 0.0
    %4646 = vmatprep.subr.mxu0 0.0
    %4647 = vmatpush2.msra.mxu0 0.0
    %4648 = vmatprep.subr.mxu0 0.0
    %4649 = vmatpush2.msra.mxu0 0.0
    %4650 = vmatprep.mubr.f32.mxu0 0.0
    %v4651 = vand.u32 %v4458, 4294901760
    %4652 = vmatmul.mubr.f32.gmra.mxu0 %v4651
    %v4653 = vpop.f32.mrf.mxu0
    %v4654 = vadd.f32 %v4543, %v4653
    %v4655 = vpop.f32.mrf.mxu0
    %4656 = vmatprep.mubr.f32.mxu0 0.0
    %v4657 = vand.u32 %v4461, 4294901760
    %4658 = vmatmul.mubr.f32.gmra.mxu0 %v4657
    %v4659 = vpop.f32.mrf.mxu0
    %v4660 = vadd.f32 %v4553, %v4659
    %v4661 = vpop.f32.mrf.mxu0
    %4662 = vmatprep.mubr.f32.mxu0 0.0
    %v4663 = vand.u32 %v4464, 4294901760
    %4664 = vmatmul.mubr.f32.gmra.mxu0 %v4663
    %v4665 = vpop.f32.mrf.mxu0
    %v4666 = vadd.f32 %v4563, %v4665
    %v4667 = vpop.f32.mrf.mxu0
    %4668 = vmatprep.mubr.f32.mxu0 0.0
    %v4669 = vand.u32 %v4467, 4294901760
    %4670 = vmatmul.mubr.f32.gmra.mxu0 %v4669
    %v4671 = vpop.f32.mrf.mxu0
    %v4672 = vadd.f32 %v4573, %v4671
    %v4673 = vpop.f32.mrf.mxu0
    %4674 = vdwg.mxu0
    %4675 = vmatprep.subr.mxu0 0.0
    %4676 = vmatpush1.msra.mxu0 0.0
    %4677 = vmatprep.subr.mxu0 0.0
    %4678 = vmatpush1.msra.mxu0 0.0
    %4679 = vmatprep.subr.mxu0 0.0
    %4680 = vmatpush1.msra.mxu0 0.0
    %4681 = vmatprep.subr.mxu0 0.0
    %4682 = vmatpush1.msra.mxu0 0.0
    %4683 = vmatprep.subr.mxu0 0.0
    %4684 = vmatpush1.msra.mxu0 0.0
    %4685 = vmatprep.subr.mxu0 0.0
    %4686 = vmatpush1.msra.mxu0 0.0
    %4687 = vmatprep.subr.mxu0 0.0
    %4688 = vmatpush1.msra.mxu0 0.0
    %4689 = vmatprep.subr.mxu0 0.0
    %4690 = vmatpush1.msra.mxu0 0.0
    %4691 = vmatprep.subr.mxu0 0.0
    %4692 = vmatpush1.msra.mxu0 0.0
    %4693 = vmatprep.subr.mxu0 0.0
    %4694 = vmatpush1.msra.mxu0 0.0
    %4695 = vmatprep.subr.mxu0 0.0
    %4696 = vmatpush1.msra.mxu0 0.0
    %4697 = vmatprep.subr.mxu0 0.0
    %4698 = vmatpush1.msra.mxu0 0.0
    %4699 = vmatprep.subr.mxu0 0.0
    %4700 = vmatpush1.msra.mxu0 0.0
    %4701 = vmatprep.subr.mxu0 0.0
    %4702 = vmatpush1.msra.mxu0 0.0
    %4703 = vmatprep.subr.mxu0 0.0
    %v4704 = vand.u32 %v3819, 4294901760
    %v4705 = vsub.f32 %v3819, %v4704
    %4706 = vmatpush1.msra.mxu0 %v4705
    %4707 = vmatprep.subr.mxu0 0.0
    %v4708 = vand.u32 %v3818, 4294901760
    %v4709 = vsub.f32 %v3818, %v4708
    %4710 = vmatpush1.msra.mxu0 %v4709
    %4711 = vmatprep.subr.mxu0 0.0
    %4712 = vmatpush2.msra.mxu0 0.0
    %4713 = vmatprep.subr.mxu0 0.0
    %4714 = vmatpush2.msra.mxu0 0.0
    %4715 = vmatprep.subr.mxu0 0.0
    %4716 = vmatpush2.msra.mxu0 0.0
    %4717 = vmatprep.subr.mxu0 0.0
    %4718 = vmatpush2.msra.mxu0 0.0
    %4719 = vmatprep.subr.mxu0 0.0
    %4720 = vmatpush2.msra.mxu0 0.0
    %4721 = vmatprep.subr.mxu0 0.0
    %4722 = vmatpush2.msra.mxu0 0.0
    %4723 = vmatprep.subr.mxu0 0.0
    %4724 = vmatpush2.msra.mxu0 0.0
    %4725 = vmatprep.subr.mxu0 0.0
    %4726 = vmatpush2.msra.mxu0 0.0
    %4727 = vmatprep.subr.mxu0 0.0
    %4728 = vmatpush2.msra.mxu0 0.0
    %4729 = vmatprep.subr.mxu0 0.0
    %4730 = vmatpush2.msra.mxu0 0.0
    %4731 = vmatprep.subr.mxu0 0.0
    %4732 = vmatpush2.msra.mxu0 0.0
    %4733 = vmatprep.subr.mxu0 0.0
    %4734 = vmatpush2.msra.mxu0 0.0
    %4735 = vmatprep.subr.mxu0 0.0
    %4736 = vmatpush2.msra.mxu0 0.0
    %4737 = vmatprep.subr.mxu0 0.0
    %4738 = vmatpush2.msra.mxu0 0.0
    %4739 = vmatprep.subr.mxu0 0.0
    %4740 = vmatpush2.msra.mxu0 0.0
    %4741 = vmatprep.subr.mxu0 0.0
    %4742 = vmatpush2.msra.mxu0 0.0
    %4743 = vmatprep.mubr.f32.mxu0 0.0
    %v4744 = vand.u32 %v4458, 4294901760
    %v4745 = vsub.f32 %v4458, %v4744
    %4746 = vmatmul.mubr.f32.gmra.mxu0 %v4745
    %v4747 = vpop.f32.mrf.mxu0
    %v4748 = vadd.f32 %v4654, %v4747
    %v4749 = vpop.f32.mrf.mxu0
    %4750 = vmatprep.mubr.f32.mxu0 0.0
    %v4751 = vand.u32 %v4461, 4294901760
    %v4752 = vsub.f32 %v4461, %v4751
    %4753 = vmatmul.mubr.f32.gmra.mxu0 %v4752
    %v4754 = vpop.f32.mrf.mxu0
    %v4755 = vadd.f32 %v4660, %v4754
    %v4756 = vpop.f32.mrf.mxu0
    %4757 = vmatprep.mubr.f32.mxu0 0.0
    %v4758 = vand.u32 %v4464, 4294901760
    %v4759 = vsub.f32 %v4464, %v4758
    %4760 = vmatmul.mubr.f32.gmra.mxu0 %v4759
    %v4761 = vpop.f32.mrf.mxu0
    %v4762 = vadd.f32 %v4666, %v4761
    %v4763 = vpop.f32.mrf.mxu0
    %4764 = vmatprep.mubr.f32.mxu0 0.0
    %v4765 = vand.u32 %v4467, 4294901760
    %v4766 = vsub.f32 %v4467, %v4765
    %4767 = vmatmul.mubr.f32.gmra.mxu0 %v4766
    %v4768 = vpop.f32.mrf.mxu0
    %v4769 = vadd.f32 %v4672, %v4768
    %v4770 = vpop.f32.mrf.mxu0
    %4771 = vdwg.mxu0
    %4772 = vmatprep.subr.mxu0 0.0
    %4773 = vmatpush1.msra.mxu0 0.0
    %4774 = vmatprep.subr.mxu0 0.0
    %4775 = vmatpush1.msra.mxu0 0.0
    %4776 = vmatprep.subr.mxu0 0.0
    %4777 = vmatpush1.msra.mxu0 0.0
    %4778 = vmatprep.subr.mxu0 0.0
    %4779 = vmatpush1.msra.mxu0 0.0
    %4780 = vmatprep.subr.mxu0 0.0
    %4781 = vmatpush1.msra.mxu0 0.0
    %4782 = vmatprep.subr.mxu0 0.0
    %4783 = vmatpush1.msra.mxu0 0.0
    %4784 = vmatprep.subr.mxu0 0.0
    %4785 = vmatpush1.msra.mxu0 0.0
    %4786 = vmatprep.subr.mxu0 0.0
    %4787 = vmatpush1.msra.mxu0 0.0
    %4788 = vmatprep.subr.mxu0 0.0
    %4789 = vmatpush1.msra.mxu0 0.0
    %4790 = vmatprep.subr.mxu0 0.0
    %4791 = vmatpush1.msra.mxu0 0.0
    %4792 = vmatprep.subr.mxu0 0.0
    %4793 = vmatpush1.msra.mxu0 0.0
    %4794 = vmatprep.subr.mxu0 0.0
    %4795 = vmatpush1.msra.mxu0 0.0
    %4796 = vmatprep.subr.mxu0 0.0
    %4797 = vmatpush1.msra.mxu0 0.0
    %4798 = vmatprep.subr.mxu0 0.0
    %4799 = vmatpush1.msra.mxu0 0.0
    %4800 = vmatprep.subr.mxu0 0.0
    %v4801 = vand.u32 %v3819, 4294901760
    %4802 = vmatpush1.msra.mxu0 %v4801
    %4803 = vmatprep.subr.mxu0 0.0
    %v4804 = vand.u32 %v3818, 4294901760
    %4805 = vmatpush1.msra.mxu0 %v4804
    %4806 = vmatprep.subr.mxu0 0.0
    %4807 = vmatpush2.msra.mxu0 0.0
    %4808 = vmatprep.subr.mxu0 0.0
    %4809 = vmatpush2.msra.mxu0 0.0
    %4810 = vmatprep.subr.mxu0 0.0
    %4811 = vmatpush2.msra.mxu0 0.0
    %4812 = vmatprep.subr.mxu0 0.0
    %4813 = vmatpush2.msra.mxu0 0.0
    %4814 = vmatprep.subr.mxu0 0.0
    %4815 = vmatpush2.msra.mxu0 0.0
    %4816 = vmatprep.subr.mxu0 0.0
    %4817 = vmatpush2.msra.mxu0 0.0
    %4818 = vmatprep.subr.mxu0 0.0
    %4819 = vmatpush2.msra.mxu0 0.0
    %4820 = vmatprep.subr.mxu0 0.0
    %4821 = vmatpush2.msra.mxu0 0.0
    %4822 = vmatprep.subr.mxu0 0.0
    %4823 = vmatpush2.msra.mxu0 0.0
    %4824 = vmatprep.subr.mxu0 0.0
    %4825 = vmatpush2.msra.mxu0 0.0
    %4826 = vmatprep.subr.mxu0 0.0
    %4827 = vmatpush2.msra.mxu0 0.0
    %4828 = vmatprep.subr.mxu0 0.0
    %4829 = vmatpush2.msra.mxu0 0.0
    %4830 = vmatprep.subr.mxu0 0.0
    %4831 = vmatpush2.msra.mxu0 0.0
    %4832 = vmatprep.subr.mxu0 0.0
    %4833 = vmatpush2.msra.mxu0 0.0
    %4834 = vmatprep.subr.mxu0 0.0
    %4835 = vmatpush2.msra.mxu0 0.0
    %4836 = vmatprep.subr.mxu0 0.0
    %4837 = vmatpush2.msra.mxu0 0.0
    %4838 = vmatprep.mubr.f32.mxu0 0.0
    %v4839 = vand.u32 %v4458, 4294901760
    %v4840 = vsub.f32 %v4458, %v4839
    %v4841 = vand.u32 %v4840, 4294901760
    %4842 = vmatmul.mubr.f32.gmra.mxu0 %v4841
    %v4843 = vpop.f32.mrf.mxu0
    %v4844 = vadd.f32 %v4748, %v4843
    %v4845 = vpop.f32.mrf.mxu0
    %4846 = vmatprep.mubr.f32.mxu0 0.0
    %v4847 = vand.u32 %v4461, 4294901760
    %v4848 = vsub.f32 %v4461, %v4847
    %v4849 = vand.u32 %v4848, 4294901760
    %4850 = vmatmul.mubr.f32.gmra.mxu0 %v4849
    %v4851 = vpop.f32.mrf.mxu0
    %v4852 = vadd.f32 %v4755, %v4851
    %v4853 = vpop.f32.mrf.mxu0
    %4854 = vmatprep.mubr.f32.mxu0 0.0
    %v4855 = vand.u32 %v4464, 4294901760
    %v4856 = vsub.f32 %v4464, %v4855
    %v4857 = vand.u32 %v4856, 4294901760
    %4858 = vmatmul.mubr.f32.gmra.mxu0 %v4857
    %v4859 = vpop.f32.mrf.mxu0
    %v4860 = vadd.f32 %v4762, %v4859
    %v4861 = vpop.f32.mrf.mxu0
    %4862 = vmatprep.mubr.f32.mxu0 0.0
    %v4863 = vand.u32 %v4467, 4294901760
    %v4864 = vsub.f32 %v4467, %v4863
    %v4865 = vand.u32 %v4864, 4294901760
    %4866 = vmatmul.mubr.f32.gmra.mxu0 %v4865
    %v4867 = vpop.f32.mrf.mxu0
    %v4868 = vadd.f32 %v4769, %v4867
    %v4869 = vpop.f32.mrf.mxu0
    %4870 = vdwg.mxu0
    %4871 = vmatprep.subr.mxu0 0.0
    %4872 = vmatpush1.msra.mxu0 0.0
    %4873 = vmatprep.subr.mxu0 0.0
    %4874 = vmatpush1.msra.mxu0 0.0
    %4875 = vmatprep.subr.mxu0 0.0
    %4876 = vmatpush1.msra.mxu0 0.0
    %4877 = vmatprep.subr.mxu0 0.0
    %4878 = vmatpush1.msra.mxu0 0.0
    %4879 = vmatprep.subr.mxu0 0.0
    %4880 = vmatpush1.msra.mxu0 0.0
    %4881 = vmatprep.subr.mxu0 0.0
    %4882 = vmatpush1.msra.mxu0 0.0
    %4883 = vmatprep.subr.mxu0 0.0
    %4884 = vmatpush1.msra.mxu0 0.0
    %4885 = vmatprep.subr.mxu0 0.0
    %4886 = vmatpush1.msra.mxu0 0.0
    %4887 = vmatprep.subr.mxu0 0.0
    %4888 = vmatpush1.msra.mxu0 0.0
    %4889 = vmatprep.subr.mxu0 0.0
    %4890 = vmatpush1.msra.mxu0 0.0
    %4891 = vmatprep.subr.mxu0 0.0
    %4892 = vmatpush1.msra.mxu0 0.0
    %4893 = vmatprep.subr.mxu0 0.0
    %4894 = vmatpush1.msra.mxu0 0.0
    %4895 = vmatprep.subr.mxu0 0.0
    %4896 = vmatpush1.msra.mxu0 0.0
    %4897 = vmatprep.subr.mxu0 0.0
    %4898 = vmatpush1.msra.mxu0 0.0
    %4899 = vmatprep.subr.mxu0 0.0
    %v4900 = vand.u32 %v3819, 4294901760
    %v4901 = vsub.f32 %v3819, %v4900
    %v4902 = vand.u32 %v4901, 4294901760
    %4903 = vmatpush1.msra.mxu0 %v4902
    %4904 = vmatprep.subr.mxu0 0.0
    %v4905 = vand.u32 %v3818, 4294901760
    %v4906 = vsub.f32 %v3818, %v4905
    %v4907 = vand.u32 %v4906, 4294901760
    %4908 = vmatpush1.msra.mxu0 %v4907
    %4909 = vmatprep.subr.mxu0 0.0
    %4910 = vmatpush2.msra.mxu0 0.0
    %4911 = vmatprep.subr.mxu0 0.0
    %4912 = vmatpush2.msra.mxu0 0.0
    %4913 = vmatprep.subr.mxu0 0.0
    %4914 = vmatpush2.msra.mxu0 0.0
    %4915 = vmatprep.subr.mxu0 0.0
    %4916 = vmatpush2.msra.mxu0 0.0
    %4917 = vmatprep.subr.mxu0 0.0
    %4918 = vmatpush2.msra.mxu0 0.0
    %4919 = vmatprep.subr.mxu0 0.0
    %4920 = vmatpush2.msra.mxu0 0.0
    %4921 = vmatprep.subr.mxu0 0.0
    %4922 = vmatpush2.msra.mxu0 0.0
    %4923 = vmatprep.subr.mxu0 0.0
    %4924 = vmatpush2.msra.mxu0 0.0
    %4925 = vmatprep.subr.mxu0 0.0
    %4926 = vmatpush2.msra.mxu0 0.0
    %4927 = vmatprep.subr.mxu0 0.0
    %4928 = vmatpush2.msra.mxu0 0.0
    %4929 = vmatprep.subr.mxu0 0.0
    %4930 = vmatpush2.msra.mxu0 0.0
    %4931 = vmatprep.subr.mxu0 0.0
    %4932 = vmatpush2.msra.mxu0 0.0
    %4933 = vmatprep.subr.mxu0 0.0
    %4934 = vmatpush2.msra.mxu0 0.0
    %4935 = vmatprep.subr.mxu0 0.0
    %4936 = vmatpush2.msra.mxu0 0.0
    %4937 = vmatprep.subr.mxu0 0.0
    %4938 = vmatpush2.msra.mxu0 0.0
    %4939 = vmatprep.subr.mxu0 0.0
    %4940 = vmatpush2.msra.mxu0 0.0
    %4941 = vmatprep.mubr.f32.mxu0 0.0
    %v4942 = vand.u32 %v4458, 4294901760
    %4943 = vmatmul.mubr.f32.gmra.mxu0 %v4942
    %v4944 = vpop.f32.mrf.mxu0
    %v4945 = vadd.f32 %v4844, %v4944
    %v4946 = vpop.f32.mrf.mxu0
    %4947 = vmatprep.mubr.f32.mxu0 0.0
    %v4948 = vand.u32 %v4461, 4294901760
    %4949 = vmatmul.mubr.f32.gmra.mxu0 %v4948
    %v4950 = vpop.f32.mrf.mxu0
    %v4951 = vadd.f32 %v4852, %v4950
    %v4952 = vpop.f32.mrf.mxu0
    %4953 = vmatprep.mubr.f32.mxu0 0.0
    %v4954 = vand.u32 %v4464, 4294901760
    %4955 = vmatmul.mubr.f32.gmra.mxu0 %v4954
    %v4956 = vpop.f32.mrf.mxu0
    %v4957 = vadd.f32 %v4860, %v4956
    %v4958 = vpop.f32.mrf.mxu0
    %4959 = vmatprep.mubr.f32.mxu0 0.0
    %v4960 = vand.u32 %v4467, 4294901760
    %4961 = vmatmul.mubr.f32.gmra.mxu0 %v4960
    %v4962 = vpop.f32.mrf.mxu0
    %v4963 = vadd.f32 %v4868, %v4962
    %v4964 = vpop.f32.mrf.mxu0
    %4965 = vdwg.mxu0
    %4966 = vmatprep.subr.mxu0 0.0
    %4967 = vmatpush1.msra.mxu0 0.0
    %4968 = vmatprep.subr.mxu0 0.0
    %4969 = vmatpush1.msra.mxu0 0.0
    %4970 = vmatprep.subr.mxu0 0.0
    %4971 = vmatpush1.msra.mxu0 0.0
    %4972 = vmatprep.subr.mxu0 0.0
    %4973 = vmatpush1.msra.mxu0 0.0
    %4974 = vmatprep.subr.mxu0 0.0
    %4975 = vmatpush1.msra.mxu0 0.0
    %4976 = vmatprep.subr.mxu0 0.0
    %4977 = vmatpush1.msra.mxu0 0.0
    %4978 = vmatprep.subr.mxu0 0.0
    %4979 = vmatpush1.msra.mxu0 0.0
    %4980 = vmatprep.subr.mxu0 0.0
    %4981 = vmatpush1.msra.mxu0 0.0
    %4982 = vmatprep.subr.mxu0 0.0
    %4983 = vmatpush1.msra.mxu0 0.0
    %4984 = vmatprep.subr.mxu0 0.0
    %4985 = vmatpush1.msra.mxu0 0.0
    %4986 = vmatprep.subr.mxu0 0.0
    %4987 = vmatpush1.msra.mxu0 0.0
    %4988 = vmatprep.subr.mxu0 0.0
    %4989 = vmatpush1.msra.mxu0 0.0
    %4990 = vmatprep.subr.mxu0 0.0
    %4991 = vmatpush1.msra.mxu0 0.0
    %4992 = vmatprep.subr.mxu0 0.0
    %4993 = vmatpush1.msra.mxu0 0.0
    %4994 = vmatprep.subr.mxu0 0.0
    %v4995 = vand.u32 %v3819, 4294901760
    %4996 = vmatpush1.msra.mxu0 %v4995
    %4997 = vmatprep.subr.mxu0 0.0
    %v4998 = vand.u32 %v3818, 4294901760
    %4999 = vmatpush1.msra.mxu0 %v4998
    %5000 = vmatprep.subr.mxu0 0.0
    %5001 = vmatpush2.msra.mxu0 0.0
    %5002 = vmatprep.subr.mxu0 0.0
    %5003 = vmatpush2.msra.mxu0 0.0
    %5004 = vmatprep.subr.mxu0 0.0
    %5005 = vmatpush2.msra.mxu0 0.0
    %5006 = vmatprep.subr.mxu0 0.0
    %5007 = vmatpush2.msra.mxu0 0.0
    %5008 = vmatprep.subr.mxu0 0.0
    %5009 = vmatpush2.msra.mxu0 0.0
    %5010 = vmatprep.subr.mxu0 0.0
    %5011 = vmatpush2.msra.mxu0 0.0
    %5012 = vmatprep.subr.mxu0 0.0
    %5013 = vmatpush2.msra.mxu0 0.0
    %5014 = vmatprep.subr.mxu0 0.0
    %5015 = vmatpush2.msra.mxu0 0.0
    %5016 = vmatprep.subr.mxu0 0.0
    %5017 = vmatpush2.msra.mxu0 0.0
    %5018 = vmatprep.subr.mxu0 0.0
    %5019 = vmatpush2.msra.mxu0 0.0
    %5020 = vmatprep.subr.mxu0 0.0
    %5021 = vmatpush2.msra.mxu0 0.0
    %5022 = vmatprep.subr.mxu0 0.0
    %5023 = vmatpush2.msra.mxu0 0.0
    %5024 = vmatprep.subr.mxu0 0.0
    %5025 = vmatpush2.msra.mxu0 0.0
    %5026 = vmatprep.subr.mxu0 0.0
    %5027 = vmatpush2.msra.mxu0 0.0
    %5028 = vmatprep.subr.mxu0 0.0
    %5029 = vmatpush2.msra.mxu0 0.0
    %5030 = vmatprep.subr.mxu0 0.0
    %5031 = vmatpush2.msra.mxu0 0.0
    %5032 = vmatprep.mubr.f32.mxu0 0.0
    %v5033 = vand.u32 %v4458, 4294901760
    %5034 = vmatmul.mubr.f32.gmra.mxu0 %v5033
    %v5035 = vpop.f32.mrf.mxu0
    %v5036 = vadd.f32 %v4945, %v5035
    %v5037 = vpop.f32.mrf.mxu0
    %5038 = vmatprep.mubr.f32.mxu0 0.0
    %v5039 = vand.u32 %v4461, 4294901760
    %5040 = vmatmul.mubr.f32.gmra.mxu0 %v5039
    %v5041 = vpop.f32.mrf.mxu0
    %v5042 = vadd.f32 %v4951, %v5041
    %v5043 = vpop.f32.mrf.mxu0
    %5044 = vmatprep.mubr.f32.mxu0 0.0
    %v5045 = vand.u32 %v4464, 4294901760
    %5046 = vmatmul.mubr.f32.gmra.mxu0 %v5045
    %v5047 = vpop.f32.mrf.mxu0
    %v5048 = vadd.f32 %v4957, %v5047
    %v5049 = vpop.f32.mrf.mxu0
    %5050 = vmatprep.mubr.f32.mxu0 0.0
    %v5051 = vand.u32 %v4467, 4294901760
    %5052 = vmatmul.mubr.f32.gmra.mxu0 %v5051
    %v5053 = vpop.f32.mrf.mxu0
    %v5054 = vadd.f32 %v4963, %v5053
    %v5055 = vpop.f32.mrf.mxu0
    %5056 = vdwg.mxu0
    %v5058 = vsel %vm1995, %v3857, 0
    %v5061 = vsel %vm1995, %v3858, 0
    %v5064 = vsel %vm1995, %v3859, 0
    %v5067 = vsel %vm1995, %v3860, 0
    %5069 = vmatprep.subr.mxu0 0.0
    %5070 = vmatpush1.msra.mxu0 0.0
    %5071 = vmatprep.subr.mxu0 0.0
    %5072 = vmatpush1.msra.mxu0 0.0
    %5073 = vmatprep.subr.mxu0 0.0
    %5074 = vmatpush1.msra.mxu0 0.0
    %5075 = vmatprep.subr.mxu0 0.0
    %5076 = vmatpush1.msra.mxu0 0.0
    %5077 = vmatprep.subr.mxu0 0.0
    %5078 = vmatpush1.msra.mxu0 0.0
    %5079 = vmatprep.subr.mxu0 0.0
    %5080 = vmatpush1.msra.mxu0 0.0
    %5081 = vmatprep.subr.mxu0 0.0
    %5082 = vmatpush1.msra.mxu0 0.0
    %5083 = vmatprep.subr.mxu0 0.0
    %5084 = vmatpush1.msra.mxu0 0.0
    %5085 = vmatprep.subr.mxu0 0.0
    %5086 = vmatpush1.msra.mxu0 0.0
    %5087 = vmatprep.subr.mxu0 0.0
    %5088 = vmatpush1.msra.mxu0 0.0
    %5089 = vmatprep.subr.mxu0 0.0
    %5090 = vmatpush1.msra.mxu0 0.0
    %5091 = vmatprep.subr.mxu0 0.0
    %5092 = vmatpush1.msra.mxu0 0.0
    %5093 = vmatprep.subr.mxu0 0.0
    %5094 = vmatpush1.msra.mxu0 0.0
    %5095 = vmatprep.subr.mxu0 0.0
    %5096 = vmatpush1.msra.mxu0 0.0
    %5097 = vmatprep.subr.mxu0 0.0
    %v5098 = vand.u32 %v3823, 4294901760
    %5099 = vmatpush1.msra.mxu0 %v5098
    %5100 = vmatprep.subr.mxu0 0.0
    %v5101 = vand.u32 %v3822, 4294901760
    %5102 = vmatpush1.msra.mxu0 %v5101
    %5103 = vmatprep.subr.mxu0 0.0
    %5104 = vmatpush2.msra.mxu0 0.0
    %5105 = vmatprep.subr.mxu0 0.0
    %5106 = vmatpush2.msra.mxu0 0.0
    %5107 = vmatprep.subr.mxu0 0.0
    %5108 = vmatpush2.msra.mxu0 0.0
    %5109 = vmatprep.subr.mxu0 0.0
    %5110 = vmatpush2.msra.mxu0 0.0
    %5111 = vmatprep.subr.mxu0 0.0
    %5112 = vmatpush2.msra.mxu0 0.0
    %5113 = vmatprep.subr.mxu0 0.0
    %5114 = vmatpush2.msra.mxu0 0.0
    %5115 = vmatprep.subr.mxu0 0.0
    %5116 = vmatpush2.msra.mxu0 0.0
    %5117 = vmatprep.subr.mxu0 0.0
    %5118 = vmatpush2.msra.mxu0 0.0
    %5119 = vmatprep.subr.mxu0 0.0
    %5120 = vmatpush2.msra.mxu0 0.0
    %5121 = vmatprep.subr.mxu0 0.0
    %5122 = vmatpush2.msra.mxu0 0.0
    %5123 = vmatprep.subr.mxu0 0.0
    %5124 = vmatpush2.msra.mxu0 0.0
    %5125 = vmatprep.subr.mxu0 0.0
    %5126 = vmatpush2.msra.mxu0 0.0
    %5127 = vmatprep.subr.mxu0 0.0
    %5128 = vmatpush2.msra.mxu0 0.0
    %5129 = vmatprep.subr.mxu0 0.0
    %5130 = vmatpush2.msra.mxu0 0.0
    %5131 = vmatprep.subr.mxu0 0.0
    %5132 = vmatpush2.msra.mxu0 0.0
    %5133 = vmatprep.subr.mxu0 0.0
    %5134 = vmatpush2.msra.mxu0 0.0
    %5135 = vmatprep.mubr.f32.mxu0 0.0
    %v5136 = vand.u32 %v5058, 4294901760
    %v5137 = vsub.f32 %v5058, %v5136
    %v5138 = vand.u32 %v5137, 4294901760
    %v5139 = vsub.f32 %v5137, %v5138
    %v5140 = vand.u32 %v5139, 4294901760
    %5141 = vmatmul.mubr.f32.gmra.mxu0 %v5140
    %v5142 = vpop.f32.mrf.mxu0
    %v5143 = vadd.f32 0.0, %v5142
    %v5144 = vpop.f32.mrf.mxu0
    %5145 = vmatprep.mubr.f32.mxu0 0.0
    %v5146 = vand.u32 %v5061, 4294901760
    %v5147 = vsub.f32 %v5061, %v5146
    %v5148 = vand.u32 %v5147, 4294901760
    %v5149 = vsub.f32 %v5147, %v5148
    %v5150 = vand.u32 %v5149, 4294901760
    %5151 = vmatmul.mubr.f32.gmra.mxu0 %v5150
    %v5152 = vpop.f32.mrf.mxu0
    %v5153 = vadd.f32 0.0, %v5152
    %v5154 = vpop.f32.mrf.mxu0
    %5155 = vmatprep.mubr.f32.mxu0 0.0
    %v5156 = vand.u32 %v5064, 4294901760
    %v5157 = vsub.f32 %v5064, %v5156
    %v5158 = vand.u32 %v5157, 4294901760
    %v5159 = vsub.f32 %v5157, %v5158
    %v5160 = vand.u32 %v5159, 4294901760
    %5161 = vmatmul.mubr.f32.gmra.mxu0 %v5160
    %v5162 = vpop.f32.mrf.mxu0
    %v5163 = vadd.f32 0.0, %v5162
    %v5164 = vpop.f32.mrf.mxu0
    %5165 = vmatprep.mubr.f32.mxu0 0.0
    %v5166 = vand.u32 %v5067, 4294901760
    %v5167 = vsub.f32 %v5067, %v5166
    %v5168 = vand.u32 %v5167, 4294901760
    %v5169 = vsub.f32 %v5167, %v5168
    %v5170 = vand.u32 %v5169, 4294901760
    %5171 = vmatmul.mubr.f32.gmra.mxu0 %v5170
    %v5172 = vpop.f32.mrf.mxu0
    %v5173 = vadd.f32 0.0, %v5172
    %v5174 = vpop.f32.mrf.mxu0
    %5175 = vdwg.mxu0
    %5176 = vmatprep.subr.mxu0 0.0
    %5177 = vmatpush1.msra.mxu0 0.0
    %5178 = vmatprep.subr.mxu0 0.0
    %5179 = vmatpush1.msra.mxu0 0.0
    %5180 = vmatprep.subr.mxu0 0.0
    %5181 = vmatpush1.msra.mxu0 0.0
    %5182 = vmatprep.subr.mxu0 0.0
    %5183 = vmatpush1.msra.mxu0 0.0
    %5184 = vmatprep.subr.mxu0 0.0
    %5185 = vmatpush1.msra.mxu0 0.0
    %5186 = vmatprep.subr.mxu0 0.0
    %5187 = vmatpush1.msra.mxu0 0.0
    %5188 = vmatprep.subr.mxu0 0.0
    %5189 = vmatpush1.msra.mxu0 0.0
    %5190 = vmatprep.subr.mxu0 0.0
    %5191 = vmatpush1.msra.mxu0 0.0
    %5192 = vmatprep.subr.mxu0 0.0
    %5193 = vmatpush1.msra.mxu0 0.0
    %5194 = vmatprep.subr.mxu0 0.0
    %5195 = vmatpush1.msra.mxu0 0.0
    %5196 = vmatprep.subr.mxu0 0.0
    %5197 = vmatpush1.msra.mxu0 0.0
    %5198 = vmatprep.subr.mxu0 0.0
    %5199 = vmatpush1.msra.mxu0 0.0
    %5200 = vmatprep.subr.mxu0 0.0
    %5201 = vmatpush1.msra.mxu0 0.0
    %5202 = vmatprep.subr.mxu0 0.0
    %5203 = vmatpush1.msra.mxu0 0.0
    %5204 = vmatprep.subr.mxu0 0.0
    %v5205 = vand.u32 %v3823, 4294901760
    %v5206 = vsub.f32 %v3823, %v5205
    %v5207 = vand.u32 %v5206, 4294901760
    %v5208 = vsub.f32 %v5206, %v5207
    %v5209 = vand.u32 %v5208, 4294901760
    %5210 = vmatpush1.msra.mxu0 %v5209
    %5211 = vmatprep.subr.mxu0 0.0
    %v5212 = vand.u32 %v3822, 4294901760
    %v5213 = vsub.f32 %v3822, %v5212
    %v5214 = vand.u32 %v5213, 4294901760
    %v5215 = vsub.f32 %v5213, %v5214
    %v5216 = vand.u32 %v5215, 4294901760
    %5217 = vmatpush1.msra.mxu0 %v5216
    %5218 = vmatprep.subr.mxu0 0.0
    %5219 = vmatpush2.msra.mxu0 0.0
    %5220 = vmatprep.subr.mxu0 0.0
    %5221 = vmatpush2.msra.mxu0 0.0
    %5222 = vmatprep.subr.mxu0 0.0
    %5223 = vmatpush2.msra.mxu0 0.0
    %5224 = vmatprep.subr.mxu0 0.0
    %5225 = vmatpush2.msra.mxu0 0.0
    %5226 = vmatprep.subr.mxu0 0.0
    %5227 = vmatpush2.msra.mxu0 0.0
    %5228 = vmatprep.subr.mxu0 0.0
    %5229 = vmatpush2.msra.mxu0 0.0
    %5230 = vmatprep.subr.mxu0 0.0
    %5231 = vmatpush2.msra.mxu0 0.0
    %5232 = vmatprep.subr.mxu0 0.0
    %5233 = vmatpush2.msra.mxu0 0.0
    %5234 = vmatprep.subr.mxu0 0.0
    %5235 = vmatpush2.msra.mxu0 0.0
    %5236 = vmatprep.subr.mxu0 0.0
    %5237 = vmatpush2.msra.mxu0 0.0
    %5238 = vmatprep.subr.mxu0 0.0
    %5239 = vmatpush2.msra.mxu0 0.0
    %5240 = vmatprep.subr.mxu0 0.0
    %5241 = vmatpush2.msra.mxu0 0.0
    %5242 = vmatprep.subr.mxu0 0.0
    %5243 = vmatpush2.msra.mxu0 0.0
    %5244 = vmatprep.subr.mxu0 0.0
    %5245 = vmatpush2.msra.mxu0 0.0
    %5246 = vmatprep.subr.mxu0 0.0
    %5247 = vmatpush2.msra.mxu0 0.0
    %5248 = vmatprep.subr.mxu0 0.0
    %5249 = vmatpush2.msra.mxu0 0.0
    %5250 = vmatprep.mubr.f32.mxu0 0.0
    %v5251 = vand.u32 %v5058, 4294901760
    %5252 = vmatmul.mubr.f32.gmra.mxu0 %v5251
    %v5253 = vpop.f32.mrf.mxu0
    %v5254 = vadd.f32 %v5143, %v5253
    %v5255 = vpop.f32.mrf.mxu0
    %5256 = vmatprep.mubr.f32.mxu0 0.0
    %v5257 = vand.u32 %v5061, 4294901760
    %5258 = vmatmul.mubr.f32.gmra.mxu0 %v5257
    %v5259 = vpop.f32.mrf.mxu0
    %v5260 = vadd.f32 %v5153, %v5259
    %v5261 = vpop.f32.mrf.mxu0
    %5262 = vmatprep.mubr.f32.mxu0 0.0
    %v5263 = vand.u32 %v5064, 4294901760
    %5264 = vmatmul.mubr.f32.gmra.mxu0 %v5263
    %v5265 = vpop.f32.mrf.mxu0
    %v5266 = vadd.f32 %v5163, %v5265
    %v5267 = vpop.f32.mrf.mxu0
    %5268 = vmatprep.mubr.f32.mxu0 0.0
    %v5269 = vand.u32 %v5067, 4294901760
    %5270 = vmatmul.mubr.f32.gmra.mxu0 %v5269
    %v5271 = vpop.f32.mrf.mxu0
    %v5272 = vadd.f32 %v5173, %v5271
    %v5273 = vpop.f32.mrf.mxu0
    %5274 = vdwg.mxu0
    %5275 = vmatprep.subr.mxu0 0.0
    %5276 = vmatpush1.msra.mxu0 0.0
    %5277 = vmatprep.subr.mxu0 0.0
    %5278 = vmatpush1.msra.mxu0 0.0
    %5279 = vmatprep.subr.mxu0 0.0
    %5280 = vmatpush1.msra.mxu0 0.0
    %5281 = vmatprep.subr.mxu0 0.0
    %5282 = vmatpush1.msra.mxu0 0.0
    %5283 = vmatprep.subr.mxu0 0.0
    %5284 = vmatpush1.msra.mxu0 0.0
    %5285 = vmatprep.subr.mxu0 0.0
    %5286 = vmatpush1.msra.mxu0 0.0
    %5287 = vmatprep.subr.mxu0 0.0
    %5288 = vmatpush1.msra.mxu0 0.0
    %5289 = vmatprep.subr.mxu0 0.0
    %5290 = vmatpush1.msra.mxu0 0.0
    %5291 = vmatprep.subr.mxu0 0.0
    %5292 = vmatpush1.msra.mxu0 0.0
    %5293 = vmatprep.subr.mxu0 0.0
    %5294 = vmatpush1.msra.mxu0 0.0
    %5295 = vmatprep.subr.mxu0 0.0
    %5296 = vmatpush1.msra.mxu0 0.0
    %5297 = vmatprep.subr.mxu0 0.0
    %5298 = vmatpush1.msra.mxu0 0.0
    %5299 = vmatprep.subr.mxu0 0.0
    %5300 = vmatpush1.msra.mxu0 0.0
    %5301 = vmatprep.subr.mxu0 0.0
    %5302 = vmatpush1.msra.mxu0 0.0
    %5303 = vmatprep.subr.mxu0 0.0
    %v5304 = vand.u32 %v3823, 4294901760
    %v5305 = vsub.f32 %v3823, %v5304
    %5306 = vmatpush1.msra.mxu0 %v5305
    %5307 = vmatprep.subr.mxu0 0.0
    %v5308 = vand.u32 %v3822, 4294901760
    %v5309 = vsub.f32 %v3822, %v5308
    %5310 = vmatpush1.msra.mxu0 %v5309
    %5311 = vmatprep.subr.mxu0 0.0
    %5312 = vmatpush2.msra.mxu0 0.0
    %5313 = vmatprep.subr.mxu0 0.0
    %5314 = vmatpush2.msra.mxu0 0.0
    %5315 = vmatprep.subr.mxu0 0.0
    %5316 = vmatpush2.msra.mxu0 0.0
    %5317 = vmatprep.subr.mxu0 0.0
    %5318 = vmatpush2.msra.mxu0 0.0
    %5319 = vmatprep.subr.mxu0 0.0
    %5320 = vmatpush2.msra.mxu0 0.0
    %5321 = vmatprep.subr.mxu0 0.0
    %5322 = vmatpush2.msra.mxu0 0.0
    %5323 = vmatprep.subr.mxu0 0.0
    %5324 = vmatpush2.msra.mxu0 0.0
    %5325 = vmatprep.subr.mxu0 0.0
    %5326 = vmatpush2.msra.mxu0 0.0
    %5327 = vmatprep.subr.mxu0 0.0
    %5328 = vmatpush2.msra.mxu0 0.0
    %5329 = vmatprep.subr.mxu0 0.0
    %5330 = vmatpush2.msra.mxu0 0.0
    %5331 = vmatprep.subr.mxu0 0.0
    %5332 = vmatpush2.msra.mxu0 0.0
    %5333 = vmatprep.subr.mxu0 0.0
    %5334 = vmatpush2.msra.mxu0 0.0
    %5335 = vmatprep.subr.mxu0 0.0
    %5336 = vmatpush2.msra.mxu0 0.0
    %5337 = vmatprep.subr.mxu0 0.0
    %5338 = vmatpush2.msra.mxu0 0.0
    %5339 = vmatprep.subr.mxu0 0.0
    %5340 = vmatpush2.msra.mxu0 0.0
    %5341 = vmatprep.subr.mxu0 0.0
    %5342 = vmatpush2.msra.mxu0 0.0
    %5343 = vmatprep.mubr.f32.mxu0 0.0
    %v5344 = vand.u32 %v5058, 4294901760
    %v5345 = vsub.f32 %v5058, %v5344
    %5346 = vmatmul.mubr.f32.gmra.mxu0 %v5345
    %v5347 = vpop.f32.mrf.mxu0
    %v5348 = vadd.f32 %v5254, %v5347
    %v5349 = vpop.f32.mrf.mxu0
    %5350 = vmatprep.mubr.f32.mxu0 0.0
    %v5351 = vand.u32 %v5061, 4294901760
    %v5352 = vsub.f32 %v5061, %v5351
    %5353 = vmatmul.mubr.f32.gmra.mxu0 %v5352
    %v5354 = vpop.f32.mrf.mxu0
    %v5355 = vadd.f32 %v5260, %v5354
    %v5356 = vpop.f32.mrf.mxu0
    %5357 = vmatprep.mubr.f32.mxu0 0.0
    %v5358 = vand.u32 %v5064, 4294901760
    %v5359 = vsub.f32 %v5064, %v5358
    %5360 = vmatmul.mubr.f32.gmra.mxu0 %v5359
    %v5361 = vpop.f32.mrf.mxu0
    %v5362 = vadd.f32 %v5266, %v5361
    %v5363 = vpop.f32.mrf.mxu0
    %5364 = vmatprep.mubr.f32.mxu0 0.0
    %v5365 = vand.u32 %v5067, 4294901760
    %v5366 = vsub.f32 %v5067, %v5365
    %5367 = vmatmul.mubr.f32.gmra.mxu0 %v5366
    %v5368 = vpop.f32.mrf.mxu0
    %v5369 = vadd.f32 %v5272, %v5368
    %v5370 = vpop.f32.mrf.mxu0
    %5371 = vdwg.mxu0
    %5372 = vmatprep.subr.mxu0 0.0
    %5373 = vmatpush1.msra.mxu0 0.0
    %5374 = vmatprep.subr.mxu0 0.0
    %5375 = vmatpush1.msra.mxu0 0.0
    %5376 = vmatprep.subr.mxu0 0.0
    %5377 = vmatpush1.msra.mxu0 0.0
    %5378 = vmatprep.subr.mxu0 0.0
    %5379 = vmatpush1.msra.mxu0 0.0
    %5380 = vmatprep.subr.mxu0 0.0
    %5381 = vmatpush1.msra.mxu0 0.0
    %5382 = vmatprep.subr.mxu0 0.0
    %5383 = vmatpush1.msra.mxu0 0.0
    %5384 = vmatprep.subr.mxu0 0.0
    %5385 = vmatpush1.msra.mxu0 0.0
    %5386 = vmatprep.subr.mxu0 0.0
    %5387 = vmatpush1.msra.mxu0 0.0
    %5388 = vmatprep.subr.mxu0 0.0
    %5389 = vmatpush1.msra.mxu0 0.0
    %5390 = vmatprep.subr.mxu0 0.0
    %5391 = vmatpush1.msra.mxu0 0.0
    %5392 = vmatprep.subr.mxu0 0.0
    %5393 = vmatpush1.msra.mxu0 0.0
    %5394 = vmatprep.subr.mxu0 0.0
    %5395 = vmatpush1.msra.mxu0 0.0
    %5396 = vmatprep.subr.mxu0 0.0
    %5397 = vmatpush1.msra.mxu0 0.0
    %5398 = vmatprep.subr.mxu0 0.0
    %5399 = vmatpush1.msra.mxu0 0.0
    %5400 = vmatprep.subr.mxu0 0.0
    %v5401 = vand.u32 %v3823, 4294901760
    %5402 = vmatpush1.msra.mxu0 %v5401
    %5403 = vmatprep.subr.mxu0 0.0
    %v5404 = vand.u32 %v3822, 4294901760
    %5405 = vmatpush1.msra.mxu0 %v5404
    %5406 = vmatprep.subr.mxu0 0.0
    %5407 = vmatpush2.msra.mxu0 0.0
    %5408 = vmatprep.subr.mxu0 0.0
    %5409 = vmatpush2.msra.mxu0 0.0
    %5410 = vmatprep.subr.mxu0 0.0
    %5411 = vmatpush2.msra.mxu0 0.0
    %5412 = vmatprep.subr.mxu0 0.0
    %5413 = vmatpush2.msra.mxu0 0.0
    %5414 = vmatprep.subr.mxu0 0.0
    %5415 = vmatpush2.msra.mxu0 0.0
    %5416 = vmatprep.subr.mxu0 0.0
    %5417 = vmatpush2.msra.mxu0 0.0
    %5418 = vmatprep.subr.mxu0 0.0
    %5419 = vmatpush2.msra.mxu0 0.0
    %5420 = vmatprep.subr.mxu0 0.0
    %5421 = vmatpush2.msra.mxu0 0.0
    %5422 = vmatprep.subr.mxu0 0.0
    %5423 = vmatpush2.msra.mxu0 0.0
    %5424 = vmatprep.subr.mxu0 0.0
    %5425 = vmatpush2.msra.mxu0 0.0
    %5426 = vmatprep.subr.mxu0 0.0
    %5427 = vmatpush2.msra.mxu0 0.0
    %5428 = vmatprep.subr.mxu0 0.0
    %5429 = vmatpush2.msra.mxu0 0.0
    %5430 = vmatprep.subr.mxu0 0.0
    %5431 = vmatpush2.msra.mxu0 0.0
    %5432 = vmatprep.subr.mxu0 0.0
    %5433 = vmatpush2.msra.mxu0 0.0
    %5434 = vmatprep.subr.mxu0 0.0
    %5435 = vmatpush2.msra.mxu0 0.0
    %5436 = vmatprep.subr.mxu0 0.0
    %5437 = vmatpush2.msra.mxu0 0.0
    %5438 = vmatprep.mubr.f32.mxu0 0.0
    %v5439 = vand.u32 %v5058, 4294901760
    %v5440 = vsub.f32 %v5058, %v5439
    %v5441 = vand.u32 %v5440, 4294901760
    %5442 = vmatmul.mubr.f32.gmra.mxu0 %v5441
    %v5443 = vpop.f32.mrf.mxu0
    %v5444 = vadd.f32 %v5348, %v5443
    %v5445 = vpop.f32.mrf.mxu0
    %5446 = vmatprep.mubr.f32.mxu0 0.0
    %v5447 = vand.u32 %v5061, 4294901760
    %v5448 = vsub.f32 %v5061, %v5447
    %v5449 = vand.u32 %v5448, 4294901760
    %5450 = vmatmul.mubr.f32.gmra.mxu0 %v5449
    %v5451 = vpop.f32.mrf.mxu0
    %v5452 = vadd.f32 %v5355, %v5451
    %v5453 = vpop.f32.mrf.mxu0
    %5454 = vmatprep.mubr.f32.mxu0 0.0
    %v5455 = vand.u32 %v5064, 4294901760
    %v5456 = vsub.f32 %v5064, %v5455
    %v5457 = vand.u32 %v5456, 4294901760
    %5458 = vmatmul.mubr.f32.gmra.mxu0 %v5457
    %v5459 = vpop.f32.mrf.mxu0
    %v5460 = vadd.f32 %v5362, %v5459
    %v5461 = vpop.f32.mrf.mxu0
    %5462 = vmatprep.mubr.f32.mxu0 0.0
    %v5463 = vand.u32 %v5067, 4294901760
    %v5464 = vsub.f32 %v5067, %v5463
    %v5465 = vand.u32 %v5464, 4294901760
    %5466 = vmatmul.mubr.f32.gmra.mxu0 %v5465
    %v5467 = vpop.f32.mrf.mxu0
    %v5468 = vadd.f32 %v5369, %v5467
    %v5469 = vpop.f32.mrf.mxu0
    %5470 = vdwg.mxu0
    %5471 = vmatprep.subr.mxu0 0.0
    %5472 = vmatpush1.msra.mxu0 0.0
    %5473 = vmatprep.subr.mxu0 0.0
    %5474 = vmatpush1.msra.mxu0 0.0
    %5475 = vmatprep.subr.mxu0 0.0
    %5476 = vmatpush1.msra.mxu0 0.0
    %5477 = vmatprep.subr.mxu0 0.0
    %5478 = vmatpush1.msra.mxu0 0.0
    %5479 = vmatprep.subr.mxu0 0.0
    %5480 = vmatpush1.msra.mxu0 0.0
    %5481 = vmatprep.subr.mxu0 0.0
    %5482 = vmatpush1.msra.mxu0 0.0
    %5483 = vmatprep.subr.mxu0 0.0
    %5484 = vmatpush1.msra.mxu0 0.0
    %5485 = vmatprep.subr.mxu0 0.0
    %5486 = vmatpush1.msra.mxu0 0.0
    %5487 = vmatprep.subr.mxu0 0.0
    %5488 = vmatpush1.msra.mxu0 0.0
    %5489 = vmatprep.subr.mxu0 0.0
    %5490 = vmatpush1.msra.mxu0 0.0
    %5491 = vmatprep.subr.mxu0 0.0
    %5492 = vmatpush1.msra.mxu0 0.0
    %5493 = vmatprep.subr.mxu0 0.0
    %5494 = vmatpush1.msra.mxu0 0.0
    %5495 = vmatprep.subr.mxu0 0.0
    %5496 = vmatpush1.msra.mxu0 0.0
    %5497 = vmatprep.subr.mxu0 0.0
    %5498 = vmatpush1.msra.mxu0 0.0
    %5499 = vmatprep.subr.mxu0 0.0
    %v5500 = vand.u32 %v3823, 4294901760
    %v5501 = vsub.f32 %v3823, %v5500
    %v5502 = vand.u32 %v5501, 4294901760
    %5503 = vmatpush1.msra.mxu0 %v5502
    %5504 = vmatprep.subr.mxu0 0.0
    %v5505 = vand.u32 %v3822, 4294901760
    %v5506 = vsub.f32 %v3822, %v5505
    %v5507 = vand.u32 %v5506, 4294901760
    %5508 = vmatpush1.msra.mxu0 %v5507
    %5509 = vmatprep.subr.mxu0 0.0
    %5510 = vmatpush2.msra.mxu0 0.0
    %5511 = vmatprep.subr.mxu0 0.0
    %5512 = vmatpush2.msra.mxu0 0.0
    %5513 = vmatprep.subr.mxu0 0.0
    %5514 = vmatpush2.msra.mxu0 0.0
    %5515 = vmatprep.subr.mxu0 0.0
    %5516 = vmatpush2.msra.mxu0 0.0
    %5517 = vmatprep.subr.mxu0 0.0
    %5518 = vmatpush2.msra.mxu0 0.0
    %5519 = vmatprep.subr.mxu0 0.0
    %5520 = vmatpush2.msra.mxu0 0.0
    %5521 = vmatprep.subr.mxu0 0.0
    %5522 = vmatpush2.msra.mxu0 0.0
    %5523 = vmatprep.subr.mxu0 0.0
    %5524 = vmatpush2.msra.mxu0 0.0
    %5525 = vmatprep.subr.mxu0 0.0
    %5526 = vmatpush2.msra.mxu0 0.0
    %5527 = vmatprep.subr.mxu0 0.0
    %5528 = vmatpush2.msra.mxu0 0.0
    %5529 = vmatprep.subr.mxu0 0.0
    %5530 = vmatpush2.msra.mxu0 0.0
    %5531 = vmatprep.subr.mxu0 0.0
    %5532 = vmatpush2.msra.mxu0 0.0
    %5533 = vmatprep.subr.mxu0 0.0
    %5534 = vmatpush2.msra.mxu0 0.0
    %5535 = vmatprep.subr.mxu0 0.0
    %5536 = vmatpush2.msra.mxu0 0.0
    %5537 = vmatprep.subr.mxu0 0.0
    %5538 = vmatpush2.msra.mxu0 0.0
    %5539 = vmatprep.subr.mxu0 0.0
    %5540 = vmatpush2.msra.mxu0 0.0
    %5541 = vmatprep.mubr.f32.mxu0 0.0
    %v5542 = vand.u32 %v5058, 4294901760
    %5543 = vmatmul.mubr.f32.gmra.mxu0 %v5542
    %v5544 = vpop.f32.mrf.mxu0
    %v5545 = vadd.f32 %v5444, %v5544
    %v5546 = vpop.f32.mrf.mxu0
    %5547 = vmatprep.mubr.f32.mxu0 0.0
    %v5548 = vand.u32 %v5061, 4294901760
    %5549 = vmatmul.mubr.f32.gmra.mxu0 %v5548
    %v5550 = vpop.f32.mrf.mxu0
    %v5551 = vadd.f32 %v5452, %v5550
    %v5552 = vpop.f32.mrf.mxu0
    %5553 = vmatprep.mubr.f32.mxu0 0.0
    %v5554 = vand.u32 %v5064, 4294901760
    %5555 = vmatmul.mubr.f32.gmra.mxu0 %v5554
    %v5556 = vpop.f32.mrf.mxu0
    %v5557 = vadd.f32 %v5460, %v5556
    %v5558 = vpop.f32.mrf.mxu0
    %5559 = vmatprep.mubr.f32.mxu0 0.0
    %v5560 = vand.u32 %v5067, 4294901760
    %5561 = vmatmul.mubr.f32.gmra.mxu0 %v5560
    %v5562 = vpop.f32.mrf.mxu0
    %v5563 = vadd.f32 %v5468, %v5562
    %v5564 = vpop.f32.mrf.mxu0
    %5565 = vdwg.mxu0
    %5566 = vmatprep.subr.mxu0 0.0
    %5567 = vmatpush1.msra.mxu0 0.0
    %5568 = vmatprep.subr.mxu0 0.0
    %5569 = vmatpush1.msra.mxu0 0.0
    %5570 = vmatprep.subr.mxu0 0.0
    %5571 = vmatpush1.msra.mxu0 0.0
    %5572 = vmatprep.subr.mxu0 0.0
    %5573 = vmatpush1.msra.mxu0 0.0
    %5574 = vmatprep.subr.mxu0 0.0
    %5575 = vmatpush1.msra.mxu0 0.0
    %5576 = vmatprep.subr.mxu0 0.0
    %5577 = vmatpush1.msra.mxu0 0.0
    %5578 = vmatprep.subr.mxu0 0.0
    %5579 = vmatpush1.msra.mxu0 0.0
    %5580 = vmatprep.subr.mxu0 0.0
    %5581 = vmatpush1.msra.mxu0 0.0
    %5582 = vmatprep.subr.mxu0 0.0
    %5583 = vmatpush1.msra.mxu0 0.0
    %5584 = vmatprep.subr.mxu0 0.0
    %5585 = vmatpush1.msra.mxu0 0.0
    %5586 = vmatprep.subr.mxu0 0.0
    %5587 = vmatpush1.msra.mxu0 0.0
    %5588 = vmatprep.subr.mxu0 0.0
    %5589 = vmatpush1.msra.mxu0 0.0
    %5590 = vmatprep.subr.mxu0 0.0
    %5591 = vmatpush1.msra.mxu0 0.0
    %5592 = vmatprep.subr.mxu0 0.0
    %5593 = vmatpush1.msra.mxu0 0.0
    %5594 = vmatprep.subr.mxu0 0.0
    %v5595 = vand.u32 %v3823, 4294901760
    %5596 = vmatpush1.msra.mxu0 %v5595
    %5597 = vmatprep.subr.mxu0 0.0
    %v5598 = vand.u32 %v3822, 4294901760
    %5599 = vmatpush1.msra.mxu0 %v5598
    %5600 = vmatprep.subr.mxu0 0.0
    %5601 = vmatpush2.msra.mxu0 0.0
    %5602 = vmatprep.subr.mxu0 0.0
    %5603 = vmatpush2.msra.mxu0 0.0
    %5604 = vmatprep.subr.mxu0 0.0
    %5605 = vmatpush2.msra.mxu0 0.0
    %5606 = vmatprep.subr.mxu0 0.0
    %5607 = vmatpush2.msra.mxu0 0.0
    %5608 = vmatprep.subr.mxu0 0.0
    %5609 = vmatpush2.msra.mxu0 0.0
    %5610 = vmatprep.subr.mxu0 0.0
    %5611 = vmatpush2.msra.mxu0 0.0
    %5612 = vmatprep.subr.mxu0 0.0
    %5613 = vmatpush2.msra.mxu0 0.0
    %5614 = vmatprep.subr.mxu0 0.0
    %5615 = vmatpush2.msra.mxu0 0.0
    %5616 = vmatprep.subr.mxu0 0.0
    %5617 = vmatpush2.msra.mxu0 0.0
    %5618 = vmatprep.subr.mxu0 0.0
    %5619 = vmatpush2.msra.mxu0 0.0
    %5620 = vmatprep.subr.mxu0 0.0
    %5621 = vmatpush2.msra.mxu0 0.0
    %5622 = vmatprep.subr.mxu0 0.0
    %5623 = vmatpush2.msra.mxu0 0.0
    %5624 = vmatprep.subr.mxu0 0.0
    %5625 = vmatpush2.msra.mxu0 0.0
    %5626 = vmatprep.subr.mxu0 0.0
    %5627 = vmatpush2.msra.mxu0 0.0
    %5628 = vmatprep.subr.mxu0 0.0
    %5629 = vmatpush2.msra.mxu0 0.0
    %5630 = vmatprep.subr.mxu0 0.0
    %5631 = vmatpush2.msra.mxu0 0.0
    %5632 = vmatprep.mubr.f32.mxu0 0.0
    %v5633 = vand.u32 %v5058, 4294901760
    %5634 = vmatmul.mubr.f32.gmra.mxu0 %v5633
    %v5635 = vpop.f32.mrf.mxu0
    %v5636 = vadd.f32 %v5545, %v5635
    %v5637 = vpop.f32.mrf.mxu0
    %5638 = vmatprep.mubr.f32.mxu0 0.0
    %v5639 = vand.u32 %v5061, 4294901760
    %5640 = vmatmul.mubr.f32.gmra.mxu0 %v5639
    %v5641 = vpop.f32.mrf.mxu0
    %v5642 = vadd.f32 %v5551, %v5641
    %v5643 = vpop.f32.mrf.mxu0
    %5644 = vmatprep.mubr.f32.mxu0 0.0
    %v5645 = vand.u32 %v5064, 4294901760
    %5646 = vmatmul.mubr.f32.gmra.mxu0 %v5645
    %v5647 = vpop.f32.mrf.mxu0
    %v5648 = vadd.f32 %v5557, %v5647
    %v5649 = vpop.f32.mrf.mxu0
    %5650 = vmatprep.mubr.f32.mxu0 0.0
    %v5651 = vand.u32 %v5067, 4294901760
    %5652 = vmatmul.mubr.f32.gmra.mxu0 %v5651
    %v5653 = vpop.f32.mrf.mxu0
    %v5654 = vadd.f32 %v5563, %v5653
    %v5655 = vpop.f32.mrf.mxu0
    %5656 = vdwg.mxu0
    %v5657 = vadd.f32 %v5036, %v5636
    %v5658 = vadd.f32 %v5042, %v5642
    %v5659 = vadd.f32 %v5048, %v5648
    %v5660 = vadd.f32 %v5054, %v5654
    %v5662 = vlaneseq
    %v5663 = vshrl.u32 %v5662, 7
    %v5664 = vsub.s32 0, %v5663
    %v5665 = vrot.slane %v3824, %v5664
    %v5667 = vadd.f32 %v5657, %v5665
    %v5668 = vadd.f32 %v5658, %v5665
    %v5669 = vadd.f32 %v5659, %v5665
    %v5670 = vadd.f32 %v5660, %v5665
    %vm5671 = vcmp.ge.f32.partialorder %v5667, 0.0
    %vm5672 = vcmp.ge.f32.partialorder %v5668, 0.0
    %vm5673 = vcmp.ge.f32.partialorder %v5669, 0.0
    %vm5674 = vcmp.ge.f32.partialorder %v5670, 0.0
    %v5675 = vmul.f32 %v5667, 0.1
    %v5676 = vmul.f32 %v5668, 0.1
    %v5677 = vmul.f32 %v5669, 0.1
    %v5678 = vmul.f32 %v5670, 0.1
    %v5679 = vsel %vm5671, %v5667, %v5675
    %v5680 = vsel %vm5672, %v5668, %v5676
    %v5681 = vsel %vm5673, %v5669, %v5677
    %v5682 = vsel %vm5674, %v5670, %v5678
    %5683 = vxpose.xlu0.b32.start [1/16] %v5679, 128
    %5684 = vxpose.xlu0.b32.cont [2/16] %v5680, 128
    %5685 = vxpose.xlu0.b32.cont [3/16] 0.0, 128
    %5686 = vxpose.xlu0.b32.cont [4/16] 0.0, 128
    %5687 = vxpose.xlu0.b32.cont [5/16] 0.0, 128
    %5688 = vxpose.xlu0.b32.cont [6/16] 0.0, 128
    %5689 = vxpose.xlu0.b32.cont [7/16] 0.0, 128
    %5690 = vxpose.xlu0.b32.cont [8/16] 0.0, 128
    %5691 = vxpose.xlu0.b32.cont [9/16] 0.0, 128
    %5692 = vxpose.xlu0.b32.cont [10/16] 0.0, 128
    %5693 = vxpose.xlu0.b32.cont [11/16] 0.0, 128
    %5694 = vxpose.xlu0.b32.cont [12/16] 0.0, 128
    %5695 = vxpose.xlu0.b32.cont [13/16] 0.0, 128
    %5696 = vxpose.xlu0.b32.cont [14/16] 0.0, 128
    %5697 = vxpose.xlu0.b32.cont [15/16] 0.0, 128
    %5698 = vxpose.xlu0.b32.end [16/16] 0.0, 128
    %v5699 = vpop.trf.xlu0
    %v5700 = vpop.trf.xlu0
    %v5701 = vpop.trf.xlu0
    %v5702 = vpop.trf.xlu0
    %v5703 = vpop.trf.xlu0
    %v5704 = vpop.trf.xlu0
    %v5705 = vpop.trf.xlu0
    %v5706 = vpop.trf.xlu0
    %v5707 = vpop.trf.xlu0
    %v5708 = vpop.trf.xlu0
    %v5709 = vpop.trf.xlu0
    %v5710 = vpop.trf.xlu0
    %v5711 = vpop.trf.xlu0
    %v5712 = vpop.trf.xlu0
    %v5713 = vpop.trf.xlu0
    %v5714 = vpop.trf.xlu0
    %5715 = vxpose.xlu0.b32.start [1/16] %v5681, 128
    %5716 = vxpose.xlu0.b32.cont [2/16] %v5682, 128
    %5717 = vxpose.xlu0.b32.cont [3/16] 0.0, 128
    %5718 = vxpose.xlu0.b32.cont [4/16] 0.0, 128
    %5719 = vxpose.xlu0.b32.cont [5/16] 0.0, 128
    %5720 = vxpose.xlu0.b32.cont [6/16] 0.0, 128
    %5721 = vxpose.xlu0.b32.cont [7/16] 0.0, 128
    %5722 = vxpose.xlu0.b32.cont [8/16] 0.0, 128
    %5723 = vxpose.xlu0.b32.cont [9/16] 0.0, 128
    %5724 = vxpose.xlu0.b32.cont [10/16] 0.0, 128
    %5725 = vxpose.xlu0.b32.cont [11/16] 0.0, 128
    %5726 = vxpose.xlu0.b32.cont [12/16] 0.0, 128
    %5727 = vxpose.xlu0.b32.cont [13/16] 0.0, 128
    %5728 = vxpose.xlu0.b32.cont [14/16] 0.0, 128
    %5729 = vxpose.xlu0.b32.cont [15/16] 0.0, 128
    %5730 = vxpose.xlu0.b32.end [16/16] 0.0, 128
    %v5731 = vpop.trf.xlu0
    %v5732 = vpop.trf.xlu0
    %v5733 = vpop.trf.xlu0
    %v5734 = vpop.trf.xlu0
    %v5735 = vpop.trf.xlu0
    %v5736 = vpop.trf.xlu0
    %v5737 = vpop.trf.xlu0
    %v5738 = vpop.trf.xlu0
    %v5739 = vpop.trf.xlu0
    %v5740 = vpop.trf.xlu0
    %v5741 = vpop.trf.xlu0
    %v5742 = vpop.trf.xlu0
    %v5743 = vpop.trf.xlu0
    %v5744 = vpop.trf.xlu0
    %v5745 = vpop.trf.xlu0
    %v5746 = vpop.trf.xlu0
    %v5747 = vld [vmem:[%s7] sm:$0xff]
    %v5748 = vld [vmem:[%s7 + $0x8] sm:$0xff]
    %v5749 = vld [vmem:[%s8] sm:$0x1]
    %v5751 = vlaneseq
    %v5752 = vshrl.u32 %v5751, 7
    %v5753 = vsub.s32 0, %v5752
    %v5754 = vrot.slane %v5749, %v5753
    %v5757 = vsel %vm1995, %v5699, 0
    %v5760 = vsel %vm1995, %v5731, 0
    %5762 = vmatprep.subr.mxu0 0.0
    %5763 = vmatpush1.msra.mxu0 0.0
    %5764 = vmatprep.subr.mxu0 0.0
    %5765 = vmatpush1.msra.mxu0 0.0
    %5766 = vmatprep.subr.mxu0 0.0
    %5767 = vmatpush1.msra.mxu0 0.0
    %5768 = vmatprep.subr.mxu0 0.0
    %5769 = vmatpush1.msra.mxu0 0.0
    %5770 = vmatprep.subr.mxu0 0.0
    %5771 = vmatpush1.msra.mxu0 0.0
    %5772 = vmatprep.subr.mxu0 0.0
    %5773 = vmatpush1.msra.mxu0 0.0
    %5774 = vmatprep.subr.mxu0 0.0
    %5775 = vmatpush1.msra.mxu0 0.0
    %5776 = vmatprep.subr.mxu0 0.0
    %5777 = vmatpush1.msra.mxu0 0.0
    %5778 = vmatprep.subr.mxu0 0.0
    %5779 = vmatpush1.msra.mxu0 0.0
    %5780 = vmatprep.subr.mxu0 0.0
    %5781 = vmatpush1.msra.mxu0 0.0
    %5782 = vmatprep.subr.mxu0 0.0
    %5783 = vmatpush1.msra.mxu0 0.0
    %5784 = vmatprep.subr.mxu0 0.0
    %5785 = vmatpush1.msra.mxu0 0.0
    %5786 = vmatprep.subr.mxu0 0.0
    %5787 = vmatpush1.msra.mxu0 0.0
    %5788 = vmatprep.subr.mxu0 0.0
    %5789 = vmatpush1.msra.mxu0 0.0
    %5790 = vmatprep.subr.mxu0 0.0
    %v5791 = vand.u32 %v5748, 4294901760
    %5792 = vmatpush1.msra.mxu0 %v5791
    %5793 = vmatprep.subr.mxu0 0.0
    %v5794 = vand.u32 %v5747, 4294901760
    %5795 = vmatpush1.msra.mxu0 %v5794
    %5796 = vmatprep.subr.mxu0 0.0
    %5797 = vmatpush2.msra.mxu0 0.0
    %5798 = vmatprep.subr.mxu0 0.0
    %5799 = vmatpush2.msra.mxu0 0.0
    %5800 = vmatprep.subr.mxu0 0.0
    %5801 = vmatpush2.msra.mxu0 0.0
    %5802 = vmatprep.subr.mxu0 0.0
    %5803 = vmatpush2.msra.mxu0 0.0
    %5804 = vmatprep.subr.mxu0 0.0
    %5805 = vmatpush2.msra.mxu0 0.0
    %5806 = vmatprep.subr.mxu0 0.0
    %5807 = vmatpush2.msra.mxu0 0.0
    %5808 = vmatprep.subr.mxu0 0.0
    %5809 = vmatpush2.msra.mxu0 0.0
    %5810 = vmatprep.subr.mxu0 0.0
    %5811 = vmatpush2.msra.mxu0 0.0
    %5812 = vmatprep.subr.mxu0 0.0
    %5813 = vmatpush2.msra.mxu0 0.0
    %5814 = vmatprep.subr.mxu0 0.0
    %5815 = vmatpush2.msra.mxu0 0.0
    %5816 = vmatprep.subr.mxu0 0.0
    %5817 = vmatpush2.msra.mxu0 0.0
    %5818 = vmatprep.subr.mxu0 0.0
    %5819 = vmatpush2.msra.mxu0 0.0
    %5820 = vmatprep.subr.mxu0 0.0
    %5821 = vmatpush2.msra.mxu0 0.0
    %5822 = vmatprep.subr.mxu0 0.0
    %5823 = vmatpush2.msra.mxu0 0.0
    %5824 = vmatprep.subr.mxu0 0.0
    %5825 = vmatpush2.msra.mxu0 0.0
    %5826 = vmatprep.subr.mxu0 0.0
    %5827 = vmatpush2.msra.mxu0 0.0
    %5828 = vmatprep.mubr.f32.mxu0 0.0
    %v5829 = vand.u32 %v5757, 4294901760
    %v5830 = vsub.f32 %v5757, %v5829
    %v5831 = vand.u32 %v5830, 4294901760
    %v5832 = vsub.f32 %v5830, %v5831
    %v5833 = vand.u32 %v5832, 4294901760
    %5834 = vmatmul.mubr.f32.gmra.mxu0 %v5833
    %v5835 = vpop.f32.mrf.mxu0
    %v5836 = vadd.f32 %v5754, %v5835
    %v5837 = vpop.f32.mrf.mxu0
    %5838 = vmatprep.mubr.f32.mxu0 0.0
    %v5839 = vand.u32 %v5760, 4294901760
    %v5840 = vsub.f32 %v5760, %v5839
    %v5841 = vand.u32 %v5840, 4294901760
    %v5842 = vsub.f32 %v5840, %v5841
    %v5843 = vand.u32 %v5842, 4294901760
    %5844 = vmatmul.mubr.f32.gmra.mxu0 %v5843
    %v5845 = vpop.f32.mrf.mxu0
    %v5846 = vadd.f32 %v5754, %v5845
    %v5847 = vpop.f32.mrf.mxu0
    %5848 = vdwg.mxu0
    %5849 = vmatprep.subr.mxu0 0.0
    %5850 = vmatpush1.msra.mxu0 0.0
    %5851 = vmatprep.subr.mxu0 0.0
    %5852 = vmatpush1.msra.mxu0 0.0
    %5853 = vmatprep.subr.mxu0 0.0
    %5854 = vmatpush1.msra.mxu0 0.0
    %5855 = vmatprep.subr.mxu0 0.0
    %5856 = vmatpush1.msra.mxu0 0.0
    %5857 = vmatprep.subr.mxu0 0.0
    %5858 = vmatpush1.msra.mxu0 0.0
    %5859 = vmatprep.subr.mxu0 0.0
    %5860 = vmatpush1.msra.mxu0 0.0
    %5861 = vmatprep.subr.mxu0 0.0
    %5862 = vmatpush1.msra.mxu0 0.0
    %5863 = vmatprep.subr.mxu0 0.0
    %5864 = vmatpush1.msra.mxu0 0.0
    %5865 = vmatprep.subr.mxu0 0.0
    %5866 = vmatpush1.msra.mxu0 0.0
    %5867 = vmatprep.subr.mxu0 0.0
    %5868 = vmatpush1.msra.mxu0 0.0
    %5869 = vmatprep.subr.mxu0 0.0
    %5870 = vmatpush1.msra.mxu0 0.0
    %5871 = vmatprep.subr.mxu0 0.0
    %5872 = vmatpush1.msra.mxu0 0.0
    %5873 = vmatprep.subr.mxu0 0.0
    %5874 = vmatpush1.msra.mxu0 0.0
    %5875 = vmatprep.subr.mxu0 0.0
    %5876 = vmatpush1.msra.mxu0 0.0
    %5877 = vmatprep.subr.mxu0 0.0
    %v5878 = vand.u32 %v5748, 4294901760
    %v5879 = vsub.f32 %v5748, %v5878
    %v5880 = vand.u32 %v5879, 4294901760
    %v5881 = vsub.f32 %v5879, %v5880
    %v5882 = vand.u32 %v5881, 4294901760
    %5883 = vmatpush1.msra.mxu0 %v5882
    %5884 = vmatprep.subr.mxu0 0.0
    %v5885 = vand.u32 %v5747, 4294901760
    %v5886 = vsub.f32 %v5747, %v5885
    %v5887 = vand.u32 %v5886, 4294901760
    %v5888 = vsub.f32 %v5886, %v5887
    %v5889 = vand.u32 %v5888, 4294901760
    %5890 = vmatpush1.msra.mxu0 %v5889
    %5891 = vmatprep.subr.mxu0 0.0
    %5892 = vmatpush2.msra.mxu0 0.0
    %5893 = vmatprep.subr.mxu0 0.0
    %5894 = vmatpush2.msra.mxu0 0.0
    %5895 = vmatprep.subr.mxu0 0.0
    %5896 = vmatpush2.msra.mxu0 0.0
    %5897 = vmatprep.subr.mxu0 0.0
    %5898 = vmatpush2.msra.mxu0 0.0
    %5899 = vmatprep.subr.mxu0 0.0
    %5900 = vmatpush2.msra.mxu0 0.0
    %5901 = vmatprep.subr.mxu0 0.0
    %5902 = vmatpush2.msra.mxu0 0.0
    %5903 = vmatprep.subr.mxu0 0.0
    %5904 = vmatpush2.msra.mxu0 0.0
    %5905 = vmatprep.subr.mxu0 0.0
    %5906 = vmatpush2.msra.mxu0 0.0
    %5907 = vmatprep.subr.mxu0 0.0
    %5908 = vmatpush2.msra.mxu0 0.0
    %5909 = vmatprep.subr.mxu0 0.0
    %5910 = vmatpush2.msra.mxu0 0.0
    %5911 = vmatprep.subr.mxu0 0.0
    %5912 = vmatpush2.msra.mxu0 0.0
    %5913 = vmatprep.subr.mxu0 0.0
    %5914 = vmatpush2.msra.mxu0 0.0
    %5915 = vmatprep.subr.mxu0 0.0
    %5916 = vmatpush2.msra.mxu0 0.0
    %5917 = vmatprep.subr.mxu0 0.0
    %5918 = vmatpush2.msra.mxu0 0.0
    %5919 = vmatprep.subr.mxu0 0.0
    %5920 = vmatpush2.msra.mxu0 0.0
    %5921 = vmatprep.subr.mxu0 0.0
    %5922 = vmatpush2.msra.mxu0 0.0
    %5923 = vmatprep.mubr.f32.mxu0 0.0
    %v5924 = vand.u32 %v5757, 4294901760
    %5925 = vmatmul.mubr.f32.gmra.mxu0 %v5924
    %v5926 = vpop.f32.mrf.mxu0
    %v5927 = vadd.f32 %v5836, %v5926
    %v5928 = vpop.f32.mrf.mxu0
    %5929 = vmatprep.mubr.f32.mxu0 0.0
    %v5930 = vand.u32 %v5760, 4294901760
    %5931 = vmatmul.mubr.f32.gmra.mxu0 %v5930
    %v5932 = vpop.f32.mrf.mxu0
    %v5933 = vadd.f32 %v5846, %v5932
    %v5934 = vpop.f32.mrf.mxu0
    %5935 = vdwg.mxu0
    %5936 = vmatprep.subr.mxu0 0.0
    %5937 = vmatpush1.msra.mxu0 0.0
    %5938 = vmatprep.subr.mxu0 0.0
    %5939 = vmatpush1.msra.mxu0 0.0
    %5940 = vmatprep.subr.mxu0 0.0
    %5941 = vmatpush1.msra.mxu0 0.0
    %5942 = vmatprep.subr.mxu0 0.0
    %5943 = vmatpush1.msra.mxu0 0.0
    %5944 = vmatprep.subr.mxu0 0.0
    %5945 = vmatpush1.msra.mxu0 0.0
    %5946 = vmatprep.subr.mxu0 0.0
    %5947 = vmatpush1.msra.mxu0 0.0
    %5948 = vmatprep.subr.mxu0 0.0
    %5949 = vmatpush1.msra.mxu0 0.0
    %5950 = vmatprep.subr.mxu0 0.0
    %5951 = vmatpush1.msra.mxu0 0.0
    %5952 = vmatprep.subr.mxu0 0.0
    %5953 = vmatpush1.msra.mxu0 0.0
    %5954 = vmatprep.subr.mxu0 0.0
    %5955 = vmatpush1.msra.mxu0 0.0
    %5956 = vmatprep.subr.mxu0 0.0
    %5957 = vmatpush1.msra.mxu0 0.0
    %5958 = vmatprep.subr.mxu0 0.0
    %5959 = vmatpush1.msra.mxu0 0.0
    %5960 = vmatprep.subr.mxu0 0.0
    %5961 = vmatpush1.msra.mxu0 0.0
    %5962 = vmatprep.subr.mxu0 0.0
    %5963 = vmatpush1.msra.mxu0 0.0
    %5964 = vmatprep.subr.mxu0 0.0
    %v5965 = vand.u32 %v5748, 4294901760
    %v5966 = vsub.f32 %v5748, %v5965
    %5967 = vmatpush1.msra.mxu0 %v5966
    %5968 = vmatprep.subr.mxu0 0.0
    %v5969 = vand.u32 %v5747, 4294901760
    %v5970 = vsub.f32 %v5747, %v5969
    %5971 = vmatpush1.msra.mxu0 %v5970
    %5972 = vmatprep.subr.mxu0 0.0
    %5973 = vmatpush2.msra.mxu0 0.0
    %5974 = vmatprep.subr.mxu0 0.0
    %5975 = vmatpush2.msra.mxu0 0.0
    %5976 = vmatprep.subr.mxu0 0.0
    %5977 = vmatpush2.msra.mxu0 0.0
    %5978 = vmatprep.subr.mxu0 0.0
    %5979 = vmatpush2.msra.mxu0 0.0
    %5980 = vmatprep.subr.mxu0 0.0
    %5981 = vmatpush2.msra.mxu0 0.0
    %5982 = vmatprep.subr.mxu0 0.0
    %5983 = vmatpush2.msra.mxu0 0.0
    %5984 = vmatprep.subr.mxu0 0.0
    %5985 = vmatpush2.msra.mxu0 0.0
    %5986 = vmatprep.subr.mxu0 0.0
    %5987 = vmatpush2.msra.mxu0 0.0
    %5988 = vmatprep.subr.mxu0 0.0
    %5989 = vmatpush2.msra.mxu0 0.0
    %5990 = vmatprep.subr.mxu0 0.0
    %5991 = vmatpush2.msra.mxu0 0.0
    %5992 = vmatprep.subr.mxu0 0.0
    %5993 = vmatpush2.msra.mxu0 0.0
    %5994 = vmatprep.subr.mxu0 0.0
    %5995 = vmatpush2.msra.mxu0 0.0
    %5996 = vmatprep.subr.mxu0 0.0
    %5997 = vmatpush2.msra.mxu0 0.0
    %5998 = vmatprep.subr.mxu0 0.0
    %5999 = vmatpush2.msra.mxu0 0.0
    %6000 = vmatprep.subr.mxu0 0.0
    %6001 = vmatpush2.msra.mxu0 0.0
    %6002 = vmatprep.subr.mxu0 0.0
    %6003 = vmatpush2.msra.mxu0 0.0
    %6004 = vmatprep.mubr.f32.mxu0 0.0
    %v6005 = vand.u32 %v5757, 4294901760
    %v6006 = vsub.f32 %v5757, %v6005
    %6007 = vmatmul.mubr.f32.gmra.mxu0 %v6006
    %v6008 = vpop.f32.mrf.mxu0
    %v6009 = vadd.f32 %v5927, %v6008
    %v6010 = vpop.f32.mrf.mxu0
    %6011 = vmatprep.mubr.f32.mxu0 0.0
    %v6012 = vand.u32 %v5760, 4294901760
    %v6013 = vsub.f32 %v5760, %v6012
    %6014 = vmatmul.mubr.f32.gmra.mxu0 %v6013
    %v6015 = vpop.f32.mrf.mxu0
    %v6016 = vadd.f32 %v5933, %v6015
    %v6017 = vpop.f32.mrf.mxu0
    %6018 = vdwg.mxu0
    %6019 = vmatprep.subr.mxu0 0.0
    %6020 = vmatpush1.msra.mxu0 0.0
    %6021 = vmatprep.subr.mxu0 0.0
    %6022 = vmatpush1.msra.mxu0 0.0
    %6023 = vmatprep.subr.mxu0 0.0
    %6024 = vmatpush1.msra.mxu0 0.0
    %6025 = vmatprep.subr.mxu0 0.0
    %6026 = vmatpush1.msra.mxu0 0.0
    %6027 = vmatprep.subr.mxu0 0.0
    %6028 = vmatpush1.msra.mxu0 0.0
    %6029 = vmatprep.subr.mxu0 0.0
    %6030 = vmatpush1.msra.mxu0 0.0
    %6031 = vmatprep.subr.mxu0 0.0
    %6032 = vmatpush1.msra.mxu0 0.0
    %6033 = vmatprep.subr.mxu0 0.0
    %6034 = vmatpush1.msra.mxu0 0.0
    %6035 = vmatprep.subr.mxu0 0.0
    %6036 = vmatpush1.msra.mxu0 0.0
    %6037 = vmatprep.subr.mxu0 0.0
    %6038 = vmatpush1.msra.mxu0 0.0
    %6039 = vmatprep.subr.mxu0 0.0
    %6040 = vmatpush1.msra.mxu0 0.0
    %6041 = vmatprep.subr.mxu0 0.0
    %6042 = vmatpush1.msra.mxu0 0.0
    %6043 = vmatprep.subr.mxu0 0.0
    %6044 = vmatpush1.msra.mxu0 0.0
    %6045 = vmatprep.subr.mxu0 0.0
    %6046 = vmatpush1.msra.mxu0 0.0
    %6047 = vmatprep.subr.mxu0 0.0
    %v6048 = vand.u32 %v5748, 4294901760
    %6049 = vmatpush1.msra.mxu0 %v6048
    %6050 = vmatprep.subr.mxu0 0.0
    %v6051 = vand.u32 %v5747, 4294901760
    %6052 = vmatpush1.msra.mxu0 %v6051
    %6053 = vmatprep.subr.mxu0 0.0
    %6054 = vmatpush2.msra.mxu0 0.0
    %6055 = vmatprep.subr.mxu0 0.0
    %6056 = vmatpush2.msra.mxu0 0.0
    %6057 = vmatprep.subr.mxu0 0.0
    %6058 = vmatpush2.msra.mxu0 0.0
    %6059 = vmatprep.subr.mxu0 0.0
    %6060 = vmatpush2.msra.mxu0 0.0
    %6061 = vmatprep.subr.mxu0 0.0
    %6062 = vmatpush2.msra.mxu0 0.0
    %6063 = vmatprep.subr.mxu0 0.0
    %6064 = vmatpush2.msra.mxu0 0.0
    %6065 = vmatprep.subr.mxu0 0.0
    %6066 = vmatpush2.msra.mxu0 0.0
    %6067 = vmatprep.subr.mxu0 0.0
    %6068 = vmatpush2.msra.mxu0 0.0
    %6069 = vmatprep.subr.mxu0 0.0
    %6070 = vmatpush2.msra.mxu0 0.0
    %6071 = vmatprep.subr.mxu0 0.0
    %6072 = vmatpush2.msra.mxu0 0.0
    %6073 = vmatprep.subr.mxu0 0.0
    %6074 = vmatpush2.msra.mxu0 0.0
    %6075 = vmatprep.subr.mxu0 0.0
    %6076 = vmatpush2.msra.mxu0 0.0
    %6077 = vmatprep.subr.mxu0 0.0
    %6078 = vmatpush2.msra.mxu0 0.0
    %6079 = vmatprep.subr.mxu0 0.0
    %6080 = vmatpush2.msra.mxu0 0.0
    %6081 = vmatprep.subr.mxu0 0.0
    %6082 = vmatpush2.msra.mxu0 0.0
    %6083 = vmatprep.subr.mxu0 0.0
    %6084 = vmatpush2.msra.mxu0 0.0
    %6085 = vmatprep.mubr.f32.mxu0 0.0
    %v6086 = vand.u32 %v5757, 4294901760
    %v6087 = vsub.f32 %v5757, %v6086
    %v6088 = vand.u32 %v6087, 4294901760
    %6089 = vmatmul.mubr.f32.gmra.mxu0 %v6088
    %v6090 = vpop.f32.mrf.mxu0
    %v6091 = vadd.f32 %v6009, %v6090
    %v6092 = vpop.f32.mrf.mxu0
    %6093 = vmatprep.mubr.f32.mxu0 0.0
    %v6094 = vand.u32 %v5760, 4294901760
    %v6095 = vsub.f32 %v5760, %v6094
    %v6096 = vand.u32 %v6095, 4294901760
    %6097 = vmatmul.mubr.f32.gmra.mxu0 %v6096
    %v6098 = vpop.f32.mrf.mxu0
    %v6099 = vadd.f32 %v6016, %v6098
    %v6100 = vpop.f32.mrf.mxu0
    %6101 = vdwg.mxu0
    %6102 = vmatprep.subr.mxu0 0.0
    %6103 = vmatpush1.msra.mxu0 0.0
    %6104 = vmatprep.subr.mxu0 0.0
    %6105 = vmatpush1.msra.mxu0 0.0
    %6106 = vmatprep.subr.mxu0 0.0
    %6107 = vmatpush1.msra.mxu0 0.0
    %6108 = vmatprep.subr.mxu0 0.0
    %6109 = vmatpush1.msra.mxu0 0.0
    %6110 = vmatprep.subr.mxu0 0.0
    %6111 = vmatpush1.msra.mxu0 0.0
    %6112 = vmatprep.subr.mxu0 0.0
    %6113 = vmatpush1.msra.mxu0 0.0
    %6114 = vmatprep.subr.mxu0 0.0
    %6115 = vmatpush1.msra.mxu0 0.0
    %6116 = vmatprep.subr.mxu0 0.0
    %6117 = vmatpush1.msra.mxu0 0.0
    %6118 = vmatprep.subr.mxu0 0.0
    %6119 = vmatpush1.msra.mxu0 0.0
    %6120 = vmatprep.subr.mxu0 0.0
    %6121 = vmatpush1.msra.mxu0 0.0
    %6122 = vmatprep.subr.mxu0 0.0
    %6123 = vmatpush1.msra.mxu0 0.0
    %6124 = vmatprep.subr.mxu0 0.0
    %6125 = vmatpush1.msra.mxu0 0.0
    %6126 = vmatprep.subr.mxu0 0.0
    %6127 = vmatpush1.msra.mxu0 0.0
    %6128 = vmatprep.subr.mxu0 0.0
    %6129 = vmatpush1.msra.mxu0 0.0
    %6130 = vmatprep.subr.mxu0 0.0
    %v6131 = vand.u32 %v5748, 4294901760
    %v6132 = vsub.f32 %v5748, %v6131
    %v6133 = vand.u32 %v6132, 4294901760
    %6134 = vmatpush1.msra.mxu0 %v6133
    %6135 = vmatprep.subr.mxu0 0.0
    %v6136 = vand.u32 %v5747, 4294901760
    %v6137 = vsub.f32 %v5747, %v6136
    %v6138 = vand.u32 %v6137, 4294901760
    %6139 = vmatpush1.msra.mxu0 %v6138
    %6140 = vmatprep.subr.mxu0 0.0
    %6141 = vmatpush2.msra.mxu0 0.0
    %6142 = vmatprep.subr.mxu0 0.0
    %6143 = vmatpush2.msra.mxu0 0.0
    %6144 = vmatprep.subr.mxu0 0.0
    %6145 = vmatpush2.msra.mxu0 0.0
    %6146 = vmatprep.subr.mxu0 0.0
    %6147 = vmatpush2.msra.mxu0 0.0
    %6148 = vmatprep.subr.mxu0 0.0
    %6149 = vmatpush2.msra.mxu0 0.0
    %6150 = vmatprep.subr.mxu0 0.0
    %6151 = vmatpush2.msra.mxu0 0.0
    %6152 = vmatprep.subr.mxu0 0.0
    %6153 = vmatpush2.msra.mxu0 0.0
    %6154 = vmatprep.subr.mxu0 0.0
    %6155 = vmatpush2.msra.mxu0 0.0
    %6156 = vmatprep.subr.mxu0 0.0
    %6157 = vmatpush2.msra.mxu0 0.0
    %6158 = vmatprep.subr.mxu0 0.0
    %6159 = vmatpush2.msra.mxu0 0.0
    %6160 = vmatprep.subr.mxu0 0.0
    %6161 = vmatpush2.msra.mxu0 0.0
    %6162 = vmatprep.subr.mxu0 0.0
    %6163 = vmatpush2.msra.mxu0 0.0
    %6164 = vmatprep.subr.mxu0 0.0
    %6165 = vmatpush2.msra.mxu0 0.0
    %6166 = vmatprep.subr.mxu0 0.0
    %6167 = vmatpush2.msra.mxu0 0.0
    %6168 = vmatprep.subr.mxu0 0.0
    %6169 = vmatpush2.msra.mxu0 0.0
    %6170 = vmatprep.subr.mxu0 0.0
    %6171 = vmatpush2.msra.mxu0 0.0
    %6172 = vmatprep.mubr.f32.mxu0 0.0
    %v6173 = vand.u32 %v5757, 4294901760
    %6174 = vmatmul.mubr.f32.gmra.mxu0 %v6173
    %v6175 = vpop.f32.mrf.mxu0
    %v6176 = vadd.f32 %v6091, %v6175
    %v6177 = vpop.f32.mrf.mxu0
    %6178 = vmatprep.mubr.f32.mxu0 0.0
    %v6179 = vand.u32 %v5760, 4294901760
    %6180 = vmatmul.mubr.f32.gmra.mxu0 %v6179
    %v6181 = vpop.f32.mrf.mxu0
    %v6182 = vadd.f32 %v6099, %v6181
    %v6183 = vpop.f32.mrf.mxu0
    %6184 = vdwg.mxu0
    %6185 = vmatprep.subr.mxu0 0.0
    %6186 = vmatpush1.msra.mxu0 0.0
    %6187 = vmatprep.subr.mxu0 0.0
    %6188 = vmatpush1.msra.mxu0 0.0
    %6189 = vmatprep.subr.mxu0 0.0
    %6190 = vmatpush1.msra.mxu0 0.0
    %6191 = vmatprep.subr.mxu0 0.0
    %6192 = vmatpush1.msra.mxu0 0.0
    %6193 = vmatprep.subr.mxu0 0.0
    %6194 = vmatpush1.msra.mxu0 0.0
    %6195 = vmatprep.subr.mxu0 0.0
    %6196 = vmatpush1.msra.mxu0 0.0
    %6197 = vmatprep.subr.mxu0 0.0
    %6198 = vmatpush1.msra.mxu0 0.0
    %6199 = vmatprep.subr.mxu0 0.0
    %6200 = vmatpush1.msra.mxu0 0.0
    %6201 = vmatprep.subr.mxu0 0.0
    %6202 = vmatpush1.msra.mxu0 0.0
    %6203 = vmatprep.subr.mxu0 0.0
    %6204 = vmatpush1.msra.mxu0 0.0
    %6205 = vmatprep.subr.mxu0 0.0
    %6206 = vmatpush1.msra.mxu0 0.0
    %6207 = vmatprep.subr.mxu0 0.0
    %6208 = vmatpush1.msra.mxu0 0.0
    %6209 = vmatprep.subr.mxu0 0.0
    %6210 = vmatpush1.msra.mxu0 0.0
    %6211 = vmatprep.subr.mxu0 0.0
    %6212 = vmatpush1.msra.mxu0 0.0
    %6213 = vmatprep.subr.mxu0 0.0
    %v6214 = vand.u32 %v5748, 4294901760
    %6215 = vmatpush1.msra.mxu0 %v6214
    %6216 = vmatprep.subr.mxu0 0.0
    %v6217 = vand.u32 %v5747, 4294901760
    %6218 = vmatpush1.msra.mxu0 %v6217
    %6219 = vmatprep.subr.mxu0 0.0
    %6220 = vmatpush2.msra.mxu0 0.0
    %6221 = vmatprep.subr.mxu0 0.0
    %6222 = vmatpush2.msra.mxu0 0.0
    %6223 = vmatprep.subr.mxu0 0.0
    %6224 = vmatpush2.msra.mxu0 0.0
    %6225 = vmatprep.subr.mxu0 0.0
    %6226 = vmatpush2.msra.mxu0 0.0
    %6227 = vmatprep.subr.mxu0 0.0
    %6228 = vmatpush2.msra.mxu0 0.0
    %6229 = vmatprep.subr.mxu0 0.0
    %6230 = vmatpush2.msra.mxu0 0.0
    %6231 = vmatprep.subr.mxu0 0.0
    %6232 = vmatpush2.msra.mxu0 0.0
    %6233 = vmatprep.subr.mxu0 0.0
    %6234 = vmatpush2.msra.mxu0 0.0
    %6235 = vmatprep.subr.mxu0 0.0
    %6236 = vmatpush2.msra.mxu0 0.0
    %6237 = vmatprep.subr.mxu0 0.0
    %6238 = vmatpush2.msra.mxu0 0.0
    %6239 = vmatprep.subr.mxu0 0.0
    %6240 = vmatpush2.msra.mxu0 0.0
    %6241 = vmatprep.subr.mxu0 0.0
    %6242 = vmatpush2.msra.mxu0 0.0
    %6243 = vmatprep.subr.mxu0 0.0
    %6244 = vmatpush2.msra.mxu0 0.0
    %6245 = vmatprep.subr.mxu0 0.0
    %6246 = vmatpush2.msra.mxu0 0.0
    %6247 = vmatprep.subr.mxu0 0.0
    %6248 = vmatpush2.msra.mxu0 0.0
    %6249 = vmatprep.subr.mxu0 0.0
    %6250 = vmatpush2.msra.mxu0 0.0
    %6251 = vmatprep.mubr.f32.mxu0 0.0
    %v6252 = vand.u32 %v5757, 4294901760
    %6253 = vmatmul.mubr.f32.gmra.mxu0 %v6252
    %v6254 = vpop.f32.mrf.mxu0
    %v6255 = vadd.f32 %v6176, %v6254
    %v6256 = vpop.f32.mrf.mxu0
    %6257 = vmatprep.mubr.f32.mxu0 0.0
    %v6258 = vand.u32 %v5760, 4294901760
    %6259 = vmatmul.mubr.f32.gmra.mxu0 %v6258
    %v6260 = vpop.f32.mrf.mxu0
    %v6261 = vadd.f32 %v6182, %v6260
    %v6262 = vpop.f32.mrf.mxu0
    %6263 = vdwg.mxu0
    %vm6264 = vcmp.ge.f32.partialorder %v6255, 0.0
    %vm6265 = vcmp.ge.f32.partialorder %v6261, 0.0
    %v6266 = vmul.f32 %v6255, 0.1
    %v6267 = vmul.f32 %v6261, 0.1
    %v6268 = vsel %vm6264, %v6255, %v6266
    %v6269 = vsel %vm6265, %v6261, %v6267
    %v6270 = vld [vmem:[%s9] sm:$0xff]
    %v6271 = vld [vmem:[%s9 + $0x8] sm:$0xff]
    %v6272 = vld [vmem:[%s9 + $0x10] sm:$0xff]
    %v6273 = vld [vmem:[%s9 + $0x18] sm:$0xff]
    %v6274 = vld [vmem:[%s10] sm:$0x1]
    %v6276 = vlaneseq
    %v6277 = vshrl.u32 %v6276, 7
    %v6278 = vsub.s32 0, %v6277
    %v6279 = vrot.slane %v6274, %v6278
    %vm6281 = vcmask 261120
    %v6283 = vsel %vm6281, %v6268, 0
    %v6286 = vsel %vm6281, %v6269, 0
    %6288 = vmatprep.subr.mxu0 0.0
    %6289 = vmatpush1.msra.mxu0 0.0
    %6290 = vmatprep.subr.mxu0 0.0
    %6291 = vmatpush1.msra.mxu0 0.0
    %6292 = vmatprep.subr.mxu0 0.0
    %6293 = vmatpush1.msra.mxu0 0.0
    %6294 = vmatprep.subr.mxu0 0.0
    %6295 = vmatpush1.msra.mxu0 0.0
    %6296 = vmatprep.subr.mxu0 0.0
    %6297 = vmatpush1.msra.mxu0 0.0
    %6298 = vmatprep.subr.mxu0 0.0
    %6299 = vmatpush1.msra.mxu0 0.0
    %6300 = vmatprep.subr.mxu0 0.0
    %6301 = vmatpush1.msra.mxu0 0.0
    %6302 = vmatprep.subr.mxu0 0.0
    %6303 = vmatpush1.msra.mxu0 0.0
    %6304 = vmatprep.subr.mxu0 0.0
    %6305 = vmatpush1.msra.mxu0 0.0
    %6306 = vmatprep.subr.mxu0 0.0
    %6307 = vmatpush1.msra.mxu0 0.0
    %6308 = vmatprep.subr.mxu0 0.0
    %6309 = vmatpush1.msra.mxu0 0.0
    %6310 = vmatprep.subr.mxu0 0.0
    %6311 = vmatpush1.msra.mxu0 0.0
    %6312 = vmatprep.subr.mxu0 0.0
    %v6313 = vand.u32 %v6273, 4294901760
    %6314 = vmatpush1.msra.mxu0 %v6313
    %6315 = vmatprep.subr.mxu0 0.0
    %v6316 = vand.u32 %v6272, 4294901760
    %6317 = vmatpush1.msra.mxu0 %v6316
    %6318 = vmatprep.subr.mxu0 0.0
    %v6319 = vand.u32 %v6271, 4294901760
    %6320 = vmatpush1.msra.mxu0 %v6319
    %6321 = vmatprep.subr.mxu0 0.0
    %v6322 = vand.u32 %v6270, 4294901760
    %6323 = vmatpush1.msra.mxu0 %v6322
    %6324 = vmatprep.subr.mxu0 0.0
    %6325 = vmatpush2.msra.mxu0 0.0
    %6326 = vmatprep.subr.mxu0 0.0
    %6327 = vmatpush2.msra.mxu0 0.0
    %6328 = vmatprep.subr.mxu0 0.0
    %6329 = vmatpush2.msra.mxu0 0.0
    %6330 = vmatprep.subr.mxu0 0.0
    %6331 = vmatpush2.msra.mxu0 0.0
    %6332 = vmatprep.subr.mxu0 0.0
    %6333 = vmatpush2.msra.mxu0 0.0
    %6334 = vmatprep.subr.mxu0 0.0
    %6335 = vmatpush2.msra.mxu0 0.0
    %6336 = vmatprep.subr.mxu0 0.0
    %6337 = vmatpush2.msra.mxu0 0.0
    %6338 = vmatprep.subr.mxu0 0.0
    %6339 = vmatpush2.msra.mxu0 0.0
    %6340 = vmatprep.subr.mxu0 0.0
    %6341 = vmatpush2.msra.mxu0 0.0
    %6342 = vmatprep.subr.mxu0 0.0
    %6343 = vmatpush2.msra.mxu0 0.0
    %6344 = vmatprep.subr.mxu0 0.0
    %6345 = vmatpush2.msra.mxu0 0.0
    %6346 = vmatprep.subr.mxu0 0.0
    %6347 = vmatpush2.msra.mxu0 0.0
    %6348 = vmatprep.subr.mxu0 0.0
    %6349 = vmatpush2.msra.mxu0 0.0
    %6350 = vmatprep.subr.mxu0 0.0
    %6351 = vmatpush2.msra.mxu0 0.0
    %6352 = vmatprep.subr.mxu0 0.0
    %6353 = vmatpush2.msra.mxu0 0.0
    %6354 = vmatprep.subr.mxu0 0.0
    %6355 = vmatpush2.msra.mxu0 0.0
    %6356 = vmatprep.mubr.f32.mxu0 0.0
    %v6357 = vand.u32 %v6283, 4294901760
    %v6358 = vsub.f32 %v6283, %v6357
    %v6359 = vand.u32 %v6358, 4294901760
    %v6360 = vsub.f32 %v6358, %v6359
    %v6361 = vand.u32 %v6360, 4294901760
    %6362 = vmatmul.mubr.f32.gmra.mxu0 %v6361
    %v6363 = vpop.f32.mrf.mxu0
    %v6364 = vadd.f32 %v6279, %v6363
    %v6365 = vpop.f32.mrf.mxu0
    %6366 = vmatprep.mubr.f32.mxu0 0.0
    %v6367 = vand.u32 %v6286, 4294901760
    %v6368 = vsub.f32 %v6286, %v6367
    %v6369 = vand.u32 %v6368, 4294901760
    %v6370 = vsub.f32 %v6368, %v6369
    %v6371 = vand.u32 %v6370, 4294901760
    %6372 = vmatmul.mubr.f32.gmra.mxu0 %v6371
    %v6373 = vpop.f32.mrf.mxu0
    %v6374 = vadd.f32 %v6279, %v6373
    %v6375 = vpop.f32.mrf.mxu0
    %6376 = vdwg.mxu0
    %6377 = vmatprep.subr.mxu0 0.0
    %6378 = vmatpush1.msra.mxu0 0.0
    %6379 = vmatprep.subr.mxu0 0.0
    %6380 = vmatpush1.msra.mxu0 0.0
    %6381 = vmatprep.subr.mxu0 0.0
    %6382 = vmatpush1.msra.mxu0 0.0
    %6383 = vmatprep.subr.mxu0 0.0
    %6384 = vmatpush1.msra.mxu0 0.0
    %6385 = vmatprep.subr.mxu0 0.0
    %6386 = vmatpush1.msra.mxu0 0.0
    %6387 = vmatprep.subr.mxu0 0.0
    %6388 = vmatpush1.msra.mxu0 0.0
    %6389 = vmatprep.subr.mxu0 0.0
    %6390 = vmatpush1.msra.mxu0 0.0
    %6391 = vmatprep.subr.mxu0 0.0
    %6392 = vmatpush1.msra.mxu0 0.0
    %6393 = vmatprep.subr.mxu0 0.0
    %6394 = vmatpush1.msra.mxu0 0.0
    %6395 = vmatprep.subr.mxu0 0.0
    %6396 = vmatpush1.msra.mxu0 0.0
    %6397 = vmatprep.subr.mxu0 0.0
    %6398 = vmatpush1.msra.mxu0 0.0
    %6399 = vmatprep.subr.mxu0 0.0
    %6400 = vmatpush1.msra.mxu0 0.0
    %6401 = vmatprep.subr.mxu0 0.0
    %v6402 = vand.u32 %v6273, 4294901760
    %v6403 = vsub.f32 %v6273, %v6402
    %v6404 = vand.u32 %v6403, 4294901760
    %v6405 = vsub.f32 %v6403, %v6404
    %v6406 = vand.u32 %v6405, 4294901760
    %6407 = vmatpush1.msra.mxu0 %v6406
    %6408 = vmatprep.subr.mxu0 0.0
    %v6409 = vand.u32 %v6272, 4294901760
    %v6410 = vsub.f32 %v6272, %v6409
    %v6411 = vand.u32 %v6410, 4294901760
    %v6412 = vsub.f32 %v6410, %v6411
    %v6413 = vand.u32 %v6412, 4294901760
    %6414 = vmatpush1.msra.mxu0 %v6413
    %6415 = vmatprep.subr.mxu0 0.0
    %v6416 = vand.u32 %v6271, 4294901760
    %v6417 = vsub.f32 %v6271, %v6416
    %v6418 = vand.u32 %v6417, 4294901760
    %v6419 = vsub.f32 %v6417, %v6418
    %v6420 = vand.u32 %v6419, 4294901760
    %6421 = vmatpush1.msra.mxu0 %v6420
    %6422 = vmatprep.subr.mxu0 0.0
    %v6423 = vand.u32 %v6270, 4294901760
    %v6424 = vsub.f32 %v6270, %v6423
    %v6425 = vand.u32 %v6424, 4294901760
    %v6426 = vsub.f32 %v6424, %v6425
    %v6427 = vand.u32 %v6426, 4294901760
    %6428 = vmatpush1.msra.mxu0 %v6427
    %6429 = vmatprep.subr.mxu0 0.0
    %6430 = vmatpush2.msra.mxu0 0.0
    %6431 = vmatprep.subr.mxu0 0.0
    %6432 = vmatpush2.msra.mxu0 0.0
    %6433 = vmatprep.subr.mxu0 0.0
    %6434 = vmatpush2.msra.mxu0 0.0
    %6435 = vmatprep.subr.mxu0 0.0
    %6436 = vmatpush2.msra.mxu0 0.0
    %6437 = vmatprep.subr.mxu0 0.0
    %6438 = vmatpush2.msra.mxu0 0.0
    %6439 = vmatprep.subr.mxu0 0.0
    %6440 = vmatpush2.msra.mxu0 0.0
    %6441 = vmatprep.subr.mxu0 0.0
    %6442 = vmatpush2.msra.mxu0 0.0
    %6443 = vmatprep.subr.mxu0 0.0
    %6444 = vmatpush2.msra.mxu0 0.0
    %6445 = vmatprep.subr.mxu0 0.0
    %6446 = vmatpush2.msra.mxu0 0.0
    %6447 = vmatprep.subr.mxu0 0.0
    %6448 = vmatpush2.msra.mxu0 0.0
    %6449 = vmatprep.subr.mxu0 0.0
    %6450 = vmatpush2.msra.mxu0 0.0
    %6451 = vmatprep.subr.mxu0 0.0
    %6452 = vmatpush2.msra.mxu0 0.0
    %6453 = vmatprep.subr.mxu0 0.0
    %6454 = vmatpush2.msra.mxu0 0.0
    %6455 = vmatprep.subr.mxu0 0.0
    %6456 = vmatpush2.msra.mxu0 0.0
    %6457 = vmatprep.subr.mxu0 0.0
    %6458 = vmatpush2.msra.mxu0 0.0
    %6459 = vmatprep.subr.mxu0 0.0
    %6460 = vmatpush2.msra.mxu0 0.0
    %6461 = vmatprep.mubr.f32.mxu0 0.0
    %v6462 = vand.u32 %v6283, 4294901760
    %6463 = vmatmul.mubr.f32.gmra.mxu0 %v6462
    %v6464 = vpop.f32.mrf.mxu0
    %v6465 = vadd.f32 %v6364, %v6464
    %v6466 = vpop.f32.mrf.mxu0
    %6467 = vmatprep.mubr.f32.mxu0 0.0
    %v6468 = vand.u32 %v6286, 4294901760
    %6469 = vmatmul.mubr.f32.gmra.mxu0 %v6468
    %v6470 = vpop.f32.mrf.mxu0
    %v6471 = vadd.f32 %v6374, %v6470
    %v6472 = vpop.f32.mrf.mxu0
    %6473 = vdwg.mxu0
    %6474 = vmatprep.subr.mxu0 0.0
    %6475 = vmatpush1.msra.mxu0 0.0
    %6476 = vmatprep.subr.mxu0 0.0
    %6477 = vmatpush1.msra.mxu0 0.0
    %6478 = vmatprep.subr.mxu0 0.0
    %6479 = vmatpush1.msra.mxu0 0.0
    %6480 = vmatprep.subr.mxu0 0.0
    %6481 = vmatpush1.msra.mxu0 0.0
    %6482 = vmatprep.subr.mxu0 0.0
    %6483 = vmatpush1.msra.mxu0 0.0
    %6484 = vmatprep.subr.mxu0 0.0
    %6485 = vmatpush1.msra.mxu0 0.0
    %6486 = vmatprep.subr.mxu0 0.0
    %6487 = vmatpush1.msra.mxu0 0.0
    %6488 = vmatprep.subr.mxu0 0.0
    %6489 = vmatpush1.msra.mxu0 0.0
    %6490 = vmatprep.subr.mxu0 0.0
    %6491 = vmatpush1.msra.mxu0 0.0
    %6492 = vmatprep.subr.mxu0 0.0
    %6493 = vmatpush1.msra.mxu0 0.0
    %6494 = vmatprep.subr.mxu0 0.0
    %6495 = vmatpush1.msra.mxu0 0.0
    %6496 = vmatprep.subr.mxu0 0.0
    %6497 = vmatpush1.msra.mxu0 0.0
    %6498 = vmatprep.subr.mxu0 0.0
    %v6499 = vand.u32 %v6273, 4294901760
    %v6500 = vsub.f32 %v6273, %v6499
    %6501 = vmatpush1.msra.mxu0 %v6500
    %6502 = vmatprep.subr.mxu0 0.0
    %v6503 = vand.u32 %v6272, 4294901760
    %v6504 = vsub.f32 %v6272, %v6503
    %6505 = vmatpush1.msra.mxu0 %v6504
    %6506 = vmatprep.subr.mxu0 0.0
    %v6507 = vand.u32 %v6271, 4294901760
    %v6508 = vsub.f32 %v6271, %v6507
    %6509 = vmatpush1.msra.mxu0 %v6508
    %6510 = vmatprep.subr.mxu0 0.0
    %v6511 = vand.u32 %v6270, 4294901760
    %v6512 = vsub.f32 %v6270, %v6511
    %6513 = vmatpush1.msra.mxu0 %v6512
    %6514 = vmatprep.subr.mxu0 0.0
    %6515 = vmatpush2.msra.mxu0 0.0
    %6516 = vmatprep.subr.mxu0 0.0
    %6517 = vmatpush2.msra.mxu0 0.0
    %6518 = vmatprep.subr.mxu0 0.0
    %6519 = vmatpush2.msra.mxu0 0.0
    %6520 = vmatprep.subr.mxu0 0.0
    %6521 = vmatpush2.msra.mxu0 0.0
    %6522 = vmatprep.subr.mxu0 0.0
    %6523 = vmatpush2.msra.mxu0 0.0
    %6524 = vmatprep.subr.mxu0 0.0
    %6525 = vmatpush2.msra.mxu0 0.0
    %6526 = vmatprep.subr.mxu0 0.0
    %6527 = vmatpush2.msra.mxu0 0.0
    %6528 = vmatprep.subr.mxu0 0.0
    %6529 = vmatpush2.msra.mxu0 0.0
    %6530 = vmatprep.subr.mxu0 0.0
    %6531 = vmatpush2.msra.mxu0 0.0
    %6532 = vmatprep.subr.mxu0 0.0
    %6533 = vmatpush2.msra.mxu0 0.0
    %6534 = vmatprep.subr.mxu0 0.0
    %6535 = vmatpush2.msra.mxu0 0.0
    %6536 = vmatprep.subr.mxu0 0.0
    %6537 = vmatpush2.msra.mxu0 0.0
    %6538 = vmatprep.subr.mxu0 0.0
    %6539 = vmatpush2.msra.mxu0 0.0
    %6540 = vmatprep.subr.mxu0 0.0
    %6541 = vmatpush2.msra.mxu0 0.0
    %6542 = vmatprep.subr.mxu0 0.0
    %6543 = vmatpush2.msra.mxu0 0.0
    %6544 = vmatprep.subr.mxu0 0.0
    %6545 = vmatpush2.msra.mxu0 0.0
    %6546 = vmatprep.mubr.f32.mxu0 0.0
    %v6547 = vand.u32 %v6283, 4294901760
    %v6548 = vsub.f32 %v6283, %v6547
    %6549 = vmatmul.mubr.f32.gmra.mxu0 %v6548
    %v6550 = vpop.f32.mrf.mxu0
    %v6551 = vadd.f32 %v6465, %v6550
    %v6552 = vpop.f32.mrf.mxu0
    %6553 = vmatprep.mubr.f32.mxu0 0.0
    %v6554 = vand.u32 %v6286, 4294901760
    %v6555 = vsub.f32 %v6286, %v6554
    %6556 = vmatmul.mubr.f32.gmra.mxu0 %v6555
    %v6557 = vpop.f32.mrf.mxu0
    %v6558 = vadd.f32 %v6471, %v6557
    %v6559 = vpop.f32.mrf.mxu0
    %6560 = vdwg.mxu0
    %6561 = vmatprep.subr.mxu0 0.0
    %6562 = vmatpush1.msra.mxu0 0.0
    %6563 = vmatprep.subr.mxu0 0.0
    %6564 = vmatpush1.msra.mxu0 0.0
    %6565 = vmatprep.subr.mxu0 0.0
    %6566 = vmatpush1.msra.mxu0 0.0
    %6567 = vmatprep.subr.mxu0 0.0
    %6568 = vmatpush1.msra.mxu0 0.0
    %6569 = vmatprep.subr.mxu0 0.0
    %6570 = vmatpush1.msra.mxu0 0.0
    %6571 = vmatprep.subr.mxu0 0.0
    %6572 = vmatpush1.msra.mxu0 0.0
    %6573 = vmatprep.subr.mxu0 0.0
    %6574 = vmatpush1.msra.mxu0 0.0
    %6575 = vmatprep.subr.mxu0 0.0
    %6576 = vmatpush1.msra.mxu0 0.0
    %6577 = vmatprep.subr.mxu0 0.0
    %6578 = vmatpush1.msra.mxu0 0.0
    %6579 = vmatprep.subr.mxu0 0.0
    %6580 = vmatpush1.msra.mxu0 0.0
    %6581 = vmatprep.subr.mxu0 0.0
    %6582 = vmatpush1.msra.mxu0 0.0
    %6583 = vmatprep.subr.mxu0 0.0
    %6584 = vmatpush1.msra.mxu0 0.0
    %6585 = vmatprep.subr.mxu0 0.0
    %v6586 = vand.u32 %v6273, 4294901760
    %6587 = vmatpush1.msra.mxu0 %v6586
    %6588 = vmatprep.subr.mxu0 0.0
    %v6589 = vand.u32 %v6272, 4294901760
    %6590 = vmatpush1.msra.mxu0 %v6589
    %6591 = vmatprep.subr.mxu0 0.0
    %v6592 = vand.u32 %v6271, 4294901760
    %6593 = vmatpush1.msra.mxu0 %v6592
    %6594 = vmatprep.subr.mxu0 0.0
    %v6595 = vand.u32 %v6270, 4294901760
    %6596 = vmatpush1.msra.mxu0 %v6595
    %6597 = vmatprep.subr.mxu0 0.0
    %6598 = vmatpush2.msra.mxu0 0.0
    %6599 = vmatprep.subr.mxu0 0.0
    %6600 = vmatpush2.msra.mxu0 0.0
    %6601 = vmatprep.subr.mxu0 0.0
    %6602 = vmatpush2.msra.mxu0 0.0
    %6603 = vmatprep.subr.mxu0 0.0
    %6604 = vmatpush2.msra.mxu0 0.0
    %6605 = vmatprep.subr.mxu0 0.0
    %6606 = vmatpush2.msra.mxu0 0.0
    %6607 = vmatprep.subr.mxu0 0.0
    %6608 = vmatpush2.msra.mxu0 0.0
    %6609 = vmatprep.subr.mxu0 0.0
    %6610 = vmatpush2.msra.mxu0 0.0
    %6611 = vmatprep.subr.mxu0 0.0
    %6612 = vmatpush2.msra.mxu0 0.0
    %6613 = vmatprep.subr.mxu0 0.0
    %6614 = vmatpush2.msra.mxu0 0.0
    %6615 = vmatprep.subr.mxu0 0.0
    %6616 = vmatpush2.msra.mxu0 0.0
    %6617 = vmatprep.subr.mxu0 0.0
    %6618 = vmatpush2.msra.mxu0 0.0
    %6619 = vmatprep.subr.mxu0 0.0
    %6620 = vmatpush2.msra.mxu0 0.0
    %6621 = vmatprep.subr.mxu0 0.0
    %6622 = vmatpush2.msra.mxu0 0.0
    %6623 = vmatprep.subr.mxu0 0.0
    %6624 = vmatpush2.msra.mxu0 0.0
    %6625 = vmatprep.subr.mxu0 0.0
    %6626 = vmatpush2.msra.mxu0 0.0
    %6627 = vmatprep.subr.mxu0 0.0
    %6628 = vmatpush2.msra.mxu0 0.0
    %6629 = vmatprep.mubr.f32.mxu0 0.0
    %v6630 = vand.u32 %v6283, 4294901760
    %v6631 = vsub.f32 %v6283, %v6630
    %v6632 = vand.u32 %v6631, 4294901760
    %6633 = vmatmul.mubr.f32.gmra.mxu0 %v6632
    %v6634 = vpop.f32.mrf.mxu0
    %v6635 = vadd.f32 %v6551, %v6634
    %v6636 = vpop.f32.mrf.mxu0
    %6637 = vmatprep.mubr.f32.mxu0 0.0
    %v6638 = vand.u32 %v6286, 4294901760
    %v6639 = vsub.f32 %v6286, %v6638
    %v6640 = vand.u32 %v6639, 4294901760
    %6641 = vmatmul.mubr.f32.gmra.mxu0 %v6640
    %v6642 = vpop.f32.mrf.mxu0
    %v6643 = vadd.f32 %v6558, %v6642
    %v6644 = vpop.f32.mrf.mxu0
    %6645 = vdwg.mxu0
    %6646 = vmatprep.subr.mxu0 0.0
    %6647 = vmatpush1.msra.mxu0 0.0
    %6648 = vmatprep.subr.mxu0 0.0
    %6649 = vmatpush1.msra.mxu0 0.0
    %6650 = vmatprep.subr.mxu0 0.0
    %6651 = vmatpush1.msra.mxu0 0.0
    %6652 = vmatprep.subr.mxu0 0.0
    %6653 = vmatpush1.msra.mxu0 0.0
    %6654 = vmatprep.subr.mxu0 0.0
    %6655 = vmatpush1.msra.mxu0 0.0
    %6656 = vmatprep.subr.mxu0 0.0
    %6657 = vmatpush1.msra.mxu0 0.0
    %6658 = vmatprep.subr.mxu0 0.0
    %6659 = vmatpush1.msra.mxu0 0.0
    %6660 = vmatprep.subr.mxu0 0.0
    %6661 = vmatpush1.msra.mxu0 0.0
    %6662 = vmatprep.subr.mxu0 0.0
    %6663 = vmatpush1.msra.mxu0 0.0
    %6664 = vmatprep.subr.mxu0 0.0
    %6665 = vmatpush1.msra.mxu0 0.0
    %6666 = vmatprep.subr.mxu0 0.0
    %6667 = vmatpush1.msra.mxu0 0.0
    %6668 = vmatprep.subr.mxu0 0.0
    %6669 = vmatpush1.msra.mxu0 0.0
    %6670 = vmatprep.subr.mxu0 0.0
    %v6671 = vand.u32 %v6273, 4294901760
    %v6672 = vsub.f32 %v6273, %v6671
    %v6673 = vand.u32 %v6672, 4294901760
    %6674 = vmatpush1.msra.mxu0 %v6673
    %6675 = vmatprep.subr.mxu0 0.0
    %v6676 = vand.u32 %v6272, 4294901760
    %v6677 = vsub.f32 %v6272, %v6676
    %v6678 = vand.u32 %v6677, 4294901760
    %6679 = vmatpush1.msra.mxu0 %v6678
    %6680 = vmatprep.subr.mxu0 0.0
    %v6681 = vand.u32 %v6271, 4294901760
    %v6682 = vsub.f32 %v6271, %v6681
    %v6683 = vand.u32 %v6682, 4294901760
    %6684 = vmatpush1.msra.mxu0 %v6683
    %6685 = vmatprep.subr.mxu0 0.0
    %v6686 = vand.u32 %v6270, 4294901760
    %v6687 = vsub.f32 %v6270, %v6686
    %v6688 = vand.u32 %v6687, 4294901760
    %6689 = vmatpush1.msra.mxu0 %v6688
    %6690 = vmatprep.subr.mxu0 0.0
    %6691 = vmatpush2.msra.mxu0 0.0
    %6692 = vmatprep.subr.mxu0 0.0
    %6693 = vmatpush2.msra.mxu0 0.0
    %6694 = vmatprep.subr.mxu0 0.0
    %6695 = vmatpush2.msra.mxu0 0.0
    %6696 = vmatprep.subr.mxu0 0.0
    %6697 = vmatpush2.msra.mxu0 0.0
    %6698 = vmatprep.subr.mxu0 0.0
    %6699 = vmatpush2.msra.mxu0 0.0
    %6700 = vmatprep.subr.mxu0 0.0
    %6701 = vmatpush2.msra.mxu0 0.0
    %6702 = vmatprep.subr.mxu0 0.0
    %6703 = vmatpush2.msra.mxu0 0.0
    %6704 = vmatprep.subr.mxu0 0.0
    %6705 = vmatpush2.msra.mxu0 0.0
    %6706 = vmatprep.subr.mxu0 0.0
    %6707 = vmatpush2.msra.mxu0 0.0
    %6708 = vmatprep.subr.mxu0 0.0
    %6709 = vmatpush2.msra.mxu0 0.0
    %6710 = vmatprep.subr.mxu0 0.0
    %6711 = vmatpush2.msra.mxu0 0.0
    %6712 = vmatprep.subr.mxu0 0.0
    %6713 = vmatpush2.msra.mxu0 0.0
    %6714 = vmatprep.subr.mxu0 0.0
    %6715 = vmatpush2.msra.mxu0 0.0
    %6716 = vmatprep.subr.mxu0 0.0
    %6717 = vmatpush2.msra.mxu0 0.0
    %6718 = vmatprep.subr.mxu0 0.0
    %6719 = vmatpush2.msra.mxu0 0.0
    %6720 = vmatprep.subr.mxu0 0.0
    %6721 = vmatpush2.msra.mxu0 0.0
    %6722 = vmatprep.mubr.f32.mxu0 0.0
    %v6723 = vand.u32 %v6283, 4294901760
    %6724 = vmatmul.mubr.f32.gmra.mxu0 %v6723
    %v6725 = vpop.f32.mrf.mxu0
    %v6726 = vadd.f32 %v6635, %v6725
    %v6727 = vpop.f32.mrf.mxu0
    %6728 = vmatprep.mubr.f32.mxu0 0.0
    %v6729 = vand.u32 %v6286, 4294901760
    %6730 = vmatmul.mubr.f32.gmra.mxu0 %v6729
    %v6731 = vpop.f32.mrf.mxu0
    %v6732 = vadd.f32 %v6643, %v6731
    %v6733 = vpop.f32.mrf.mxu0
    %6734 = vdwg.mxu0
    %6735 = vmatprep.subr.mxu0 0.0
    %6736 = vmatpush1.msra.mxu0 0.0
    %6737 = vmatprep.subr.mxu0 0.0
    %6738 = vmatpush1.msra.mxu0 0.0
    %6739 = vmatprep.subr.mxu0 0.0
    %6740 = vmatpush1.msra.mxu0 0.0
    %6741 = vmatprep.subr.mxu0 0.0
    %6742 = vmatpush1.msra.mxu0 0.0
    %6743 = vmatprep.subr.mxu0 0.0
    %6744 = vmatpush1.msra.mxu0 0.0
    %6745 = vmatprep.subr.mxu0 0.0
    %6746 = vmatpush1.msra.mxu0 0.0
    %6747 = vmatprep.subr.mxu0 0.0
    %6748 = vmatpush1.msra.mxu0 0.0
    %6749 = vmatprep.subr.mxu0 0.0
    %6750 = vmatpush1.msra.mxu0 0.0
    %6751 = vmatprep.subr.mxu0 0.0
    %6752 = vmatpush1.msra.mxu0 0.0
    %6753 = vmatprep.subr.mxu0 0.0
    %6754 = vmatpush1.msra.mxu0 0.0
    %6755 = vmatprep.subr.mxu0 0.0
    %6756 = vmatpush1.msra.mxu0 0.0
    %6757 = vmatprep.subr.mxu0 0.0
    %6758 = vmatpush1.msra.mxu0 0.0
    %6759 = vmatprep.subr.mxu0 0.0
    %v6760 = vand.u32 %v6273, 4294901760
    %6761 = vmatpush1.msra.mxu0 %v6760
    %6762 = vmatprep.subr.mxu0 0.0
    %v6763 = vand.u32 %v6272, 4294901760
    %6764 = vmatpush1.msra.mxu0 %v6763
    %6765 = vmatprep.subr.mxu0 0.0
    %v6766 = vand.u32 %v6271, 4294901760
    %6767 = vmatpush1.msra.mxu0 %v6766
    %6768 = vmatprep.subr.mxu0 0.0
    %v6769 = vand.u32 %v6270, 4294901760
    %6770 = vmatpush1.msra.mxu0 %v6769
    %6771 = vmatprep.subr.mxu0 0.0
    %6772 = vmatpush2.msra.mxu0 0.0
    %6773 = vmatprep.subr.mxu0 0.0
    %6774 = vmatpush2.msra.mxu0 0.0
    %6775 = vmatprep.subr.mxu0 0.0
    %6776 = vmatpush2.msra.mxu0 0.0
    %6777 = vmatprep.subr.mxu0 0.0
    %6778 = vmatpush2.msra.mxu0 0.0
    %6779 = vmatprep.subr.mxu0 0.0
    %6780 = vmatpush2.msra.mxu0 0.0
    %6781 = vmatprep.subr.mxu0 0.0
    %6782 = vmatpush2.msra.mxu0 0.0
    %6783 = vmatprep.subr.mxu0 0.0
    %6784 = vmatpush2.msra.mxu0 0.0
    %6785 = vmatprep.subr.mxu0 0.0
    %6786 = vmatpush2.msra.mxu0 0.0
    %6787 = vmatprep.subr.mxu0 0.0
    %6788 = vmatpush2.msra.mxu0 0.0
    %6789 = vmatprep.subr.mxu0 0.0
    %6790 = vmatpush2.msra.mxu0 0.0
    %6791 = vmatprep.subr.mxu0 0.0
    %6792 = vmatpush2.msra.mxu0 0.0
    %6793 = vmatprep.subr.mxu0 0.0
    %6794 = vmatpush2.msra.mxu0 0.0
    %6795 = vmatprep.subr.mxu0 0.0
    %6796 = vmatpush2.msra.mxu0 0.0
    %6797 = vmatprep.subr.mxu0 0.0
    %6798 = vmatpush2.msra.mxu0 0.0
    %6799 = vmatprep.subr.mxu0 0.0
    %6800 = vmatpush2.msra.mxu0 0.0
    %6801 = vmatprep.subr.mxu0 0.0
    %6802 = vmatpush2.msra.mxu0 0.0
    %6803 = vmatprep.mubr.f32.mxu0 0.0
    %v6804 = vand.u32 %v6283, 4294901760
    %6805 = vmatmul.mubr.f32.gmra.mxu0 %v6804
    %v6806 = vpop.f32.mrf.mxu0
    %v6807 = vadd.f32 %v6726, %v6806
    %v6808 = vpop.f32.mrf.mxu0
    %6809 = vmatprep.mubr.f32.mxu0 0.0
    %v6810 = vand.u32 %v6286, 4294901760
    %6811 = vmatmul.mubr.f32.gmra.mxu0 %v6810
    %v6812 = vpop.f32.mrf.mxu0
    %v6813 = vadd.f32 %v6732, %v6812
    %v6814 = vpop.f32.mrf.mxu0
    %6815 = vdwg.mxu0
    %vm6816 = vcmp.ge.f32.partialorder %v6807, 0.0
    %vm6817 = vcmp.ge.f32.partialorder %v6813, 0.0
    %v6818 = vmul.f32 %v6807, 0.1
    %v6819 = vmul.f32 %v6813, 0.1
    %v6820 = vsel %vm6816, %v6807, %v6818
    %v6821 = vsel %vm6817, %v6813, %v6819
    %v6822 = vld [vmem:[%s11] sm:$0xff]
    %v6823 = vld [vmem:[%s11 + $0x8] sm:$0xff]
    %v6824 = vld [vmem:[%s11 + $0x10] sm:$0xff]
    %v6825 = vld [vmem:[%s11 + $0x18] sm:$0xff]
    %v6826 = vld [vmem:[%s12] sm:$0x1]
    %v6828 = vlaneseq
    %v6829 = vshrl.u32 %v6828, 7
    %v6830 = vsub.s32 0, %v6829
    %v6831 = vrot.slane %v6826, %v6830
    %v6834 = vsel %vm6281, %v6820, 0
    %v6837 = vsel %vm6281, %v6821, 0
    %6839 = vmatprep.subr.mxu0 0.0
    %6840 = vmatpush1.msra.mxu0 0.0
    %6841 = vmatprep.subr.mxu0 0.0
    %6842 = vmatpush1.msra.mxu0 0.0
    %6843 = vmatprep.subr.mxu0 0.0
    %6844 = vmatpush1.msra.mxu0 0.0
    %6845 = vmatprep.subr.mxu0 0.0
    %6846 = vmatpush1.msra.mxu0 0.0
    %6847 = vmatprep.subr.mxu0 0.0
    %6848 = vmatpush1.msra.mxu0 0.0
    %6849 = vmatprep.subr.mxu0 0.0
    %6850 = vmatpush1.msra.mxu0 0.0
    %6851 = vmatprep.subr.mxu0 0.0
    %6852 = vmatpush1.msra.mxu0 0.0
    %6853 = vmatprep.subr.mxu0 0.0
    %6854 = vmatpush1.msra.mxu0 0.0
    %6855 = vmatprep.subr.mxu0 0.0
    %6856 = vmatpush1.msra.mxu0 0.0
    %6857 = vmatprep.subr.mxu0 0.0
    %6858 = vmatpush1.msra.mxu0 0.0
    %6859 = vmatprep.subr.mxu0 0.0
    %6860 = vmatpush1.msra.mxu0 0.0
    %6861 = vmatprep.subr.mxu0 0.0
    %6862 = vmatpush1.msra.mxu0 0.0
    %6863 = vmatprep.subr.mxu0 0.0
    %v6864 = vand.u32 %v6825, 4294901760
    %6865 = vmatpush1.msra.mxu0 %v6864
    %6866 = vmatprep.subr.mxu0 0.0
    %v6867 = vand.u32 %v6824, 4294901760
    %6868 = vmatpush1.msra.mxu0 %v6867
    %6869 = vmatprep.subr.mxu0 0.0
    %v6870 = vand.u32 %v6823, 4294901760
    %6871 = vmatpush1.msra.mxu0 %v6870
    %6872 = vmatprep.subr.mxu0 0.0
    %v6873 = vand.u32 %v6822, 4294901760
    %6874 = vmatpush1.msra.mxu0 %v6873
    %6875 = vmatprep.subr.mxu0 0.0
    %6876 = vmatpush2.msra.mxu0 0.0
    %6877 = vmatprep.subr.mxu0 0.0
    %6878 = vmatpush2.msra.mxu0 0.0
    %6879 = vmatprep.subr.mxu0 0.0
    %6880 = vmatpush2.msra.mxu0 0.0
    %6881 = vmatprep.subr.mxu0 0.0
    %6882 = vmatpush2.msra.mxu0 0.0
    %6883 = vmatprep.subr.mxu0 0.0
    %6884 = vmatpush2.msra.mxu0 0.0
    %6885 = vmatprep.subr.mxu0 0.0
    %6886 = vmatpush2.msra.mxu0 0.0
    %6887 = vmatprep.subr.mxu0 0.0
    %6888 = vmatpush2.msra.mxu0 0.0
    %6889 = vmatprep.subr.mxu0 0.0
    %6890 = vmatpush2.msra.mxu0 0.0
    %6891 = vmatprep.subr.mxu0 0.0
    %6892 = vmatpush2.msra.mxu0 0.0
    %6893 = vmatprep.subr.mxu0 0.0
    %6894 = vmatpush2.msra.mxu0 0.0
    %6895 = vmatprep.subr.mxu0 0.0
    %6896 = vmatpush2.msra.mxu0 0.0
    %6897 = vmatprep.subr.mxu0 0.0
    %6898 = vmatpush2.msra.mxu0 0.0
    %6899 = vmatprep.subr.mxu0 0.0
    %6900 = vmatpush2.msra.mxu0 0.0
    %6901 = vmatprep.subr.mxu0 0.0
    %6902 = vmatpush2.msra.mxu0 0.0
    %6903 = vmatprep.subr.mxu0 0.0
    %6904 = vmatpush2.msra.mxu0 0.0
    %6905 = vmatprep.subr.mxu0 0.0
    %6906 = vmatpush2.msra.mxu0 0.0
    %6907 = vmatprep.mubr.f32.mxu0 0.0
    %v6908 = vand.u32 %v6834, 4294901760
    %v6909 = vsub.f32 %v6834, %v6908
    %v6910 = vand.u32 %v6909, 4294901760
    %v6911 = vsub.f32 %v6909, %v6910
    %v6912 = vand.u32 %v6911, 4294901760
    %6913 = vmatmul.mubr.f32.gmra.mxu0 %v6912
    %v6914 = vpop.f32.mrf.mxu0
    %v6915 = vadd.f32 %v6831, %v6914
    %v6916 = vpop.f32.mrf.mxu0
    %6917 = vmatprep.mubr.f32.mxu0 0.0
    %v6918 = vand.u32 %v6837, 4294901760
    %v6919 = vsub.f32 %v6837, %v6918
    %v6920 = vand.u32 %v6919, 4294901760
    %v6921 = vsub.f32 %v6919, %v6920
    %v6922 = vand.u32 %v6921, 4294901760
    %6923 = vmatmul.mubr.f32.gmra.mxu0 %v6922
    %v6924 = vpop.f32.mrf.mxu0
    %v6925 = vadd.f32 %v6831, %v6924
    %v6926 = vpop.f32.mrf.mxu0
    %6927 = vdwg.mxu0
    %6928 = vmatprep.subr.mxu0 0.0
    %6929 = vmatpush1.msra.mxu0 0.0
    %6930 = vmatprep.subr.mxu0 0.0
    %6931 = vmatpush1.msra.mxu0 0.0
    %6932 = vmatprep.subr.mxu0 0.0
    %6933 = vmatpush1.msra.mxu0 0.0
    %6934 = vmatprep.subr.mxu0 0.0
    %6935 = vmatpush1.msra.mxu0 0.0
    %6936 = vmatprep.subr.mxu0 0.0
    %6937 = vmatpush1.msra.mxu0 0.0
    %6938 = vmatprep.subr.mxu0 0.0
    %6939 = vmatpush1.msra.mxu0 0.0
    %6940 = vmatprep.subr.mxu0 0.0
    %6941 = vmatpush1.msra.mxu0 0.0
    %6942 = vmatprep.subr.mxu0 0.0
    %6943 = vmatpush1.msra.mxu0 0.0
    %6944 = vmatprep.subr.mxu0 0.0
    %6945 = vmatpush1.msra.mxu0 0.0
    %6946 = vmatprep.subr.mxu0 0.0
    %6947 = vmatpush1.msra.mxu0 0.0
    %6948 = vmatprep.subr.mxu0 0.0
    %6949 = vmatpush1.msra.mxu0 0.0
    %6950 = vmatprep.subr.mxu0 0.0
    %6951 = vmatpush1.msra.mxu0 0.0
    %6952 = vmatprep.subr.mxu0 0.0
    %v6953 = vand.u32 %v6825, 4294901760
    %v6954 = vsub.f32 %v6825, %v6953
    %v6955 = vand.u32 %v6954, 4294901760
    %v6956 = vsub.f32 %v6954, %v6955
    %v6957 = vand.u32 %v6956, 4294901760
    %6958 = vmatpush1.msra.mxu0 %v6957
    %6959 = vmatprep.subr.mxu0 0.0
    %v6960 = vand.u32 %v6824, 4294901760
    %v6961 = vsub.f32 %v6824, %v6960
    %v6962 = vand.u32 %v6961, 4294901760
    %v6963 = vsub.f32 %v6961, %v6962
    %v6964 = vand.u32 %v6963, 4294901760
    %6965 = vmatpush1.msra.mxu0 %v6964
    %6966 = vmatprep.subr.mxu0 0.0
    %v6967 = vand.u32 %v6823, 4294901760
    %v6968 = vsub.f32 %v6823, %v6967
    %v6969 = vand.u32 %v6968, 4294901760
    %v6970 = vsub.f32 %v6968, %v6969
    %v6971 = vand.u32 %v6970, 4294901760
    %6972 = vmatpush1.msra.mxu0 %v6971
    %6973 = vmatprep.subr.mxu0 0.0
    %v6974 = vand.u32 %v6822, 4294901760
    %v6975 = vsub.f32 %v6822, %v6974
    %v6976 = vand.u32 %v6975, 4294901760
    %v6977 = vsub.f32 %v6975, %v6976
    %v6978 = vand.u32 %v6977, 4294901760
    %6979 = vmatpush1.msra.mxu0 %v6978
    %6980 = vmatprep.subr.mxu0 0.0
    %6981 = vmatpush2.msra.mxu0 0.0
    %6982 = vmatprep.subr.mxu0 0.0
    %6983 = vmatpush2.msra.mxu0 0.0
    %6984 = vmatprep.subr.mxu0 0.0
    %6985 = vmatpush2.msra.mxu0 0.0
    %6986 = vmatprep.subr.mxu0 0.0
    %6987 = vmatpush2.msra.mxu0 0.0
    %6988 = vmatprep.subr.mxu0 0.0
    %6989 = vmatpush2.msra.mxu0 0.0
    %6990 = vmatprep.subr.mxu0 0.0
    %6991 = vmatpush2.msra.mxu0 0.0
    %6992 = vmatprep.subr.mxu0 0.0
    %6993 = vmatpush2.msra.mxu0 0.0
    %6994 = vmatprep.subr.mxu0 0.0
    %6995 = vmatpush2.msra.mxu0 0.0
    %6996 = vmatprep.subr.mxu0 0.0
    %6997 = vmatpush2.msra.mxu0 0.0
    %6998 = vmatprep.subr.mxu0 0.0
    %6999 = vmatpush2.msra.mxu0 0.0
    %7000 = vmatprep.subr.mxu0 0.0
    %7001 = vmatpush2.msra.mxu0 0.0
    %7002 = vmatprep.subr.mxu0 0.0
    %7003 = vmatpush2.msra.mxu0 0.0
    %7004 = vmatprep.subr.mxu0 0.0
    %7005 = vmatpush2.msra.mxu0 0.0
    %7006 = vmatprep.subr.mxu0 0.0
    %7007 = vmatpush2.msra.mxu0 0.0
    %7008 = vmatprep.subr.mxu0 0.0
    %7009 = vmatpush2.msra.mxu0 0.0
    %7010 = vmatprep.subr.mxu0 0.0
    %7011 = vmatpush2.msra.mxu0 0.0
    %7012 = vmatprep.mubr.f32.mxu0 0.0
    %v7013 = vand.u32 %v6834, 4294901760
    %7014 = vmatmul.mubr.f32.gmra.mxu0 %v7013
    %v7015 = vpop.f32.mrf.mxu0
    %v7016 = vadd.f32 %v6915, %v7015
    %v7017 = vpop.f32.mrf.mxu0
    %7018 = vmatprep.mubr.f32.mxu0 0.0
    %v7019 = vand.u32 %v6837, 4294901760
    %7020 = vmatmul.mubr.f32.gmra.mxu0 %v7019
    %v7021 = vpop.f32.mrf.mxu0
    %v7022 = vadd.f32 %v6925, %v7021
    %v7023 = vpop.f32.mrf.mxu0
    %7024 = vdwg.mxu0
    %7025 = vmatprep.subr.mxu0 0.0
    %7026 = vmatpush1.msra.mxu0 0.0
    %7027 = vmatprep.subr.mxu0 0.0
    %7028 = vmatpush1.msra.mxu0 0.0
    %7029 = vmatprep.subr.mxu0 0.0
    %7030 = vmatpush1.msra.mxu0 0.0
    %7031 = vmatprep.subr.mxu0 0.0
    %7032 = vmatpush1.msra.mxu0 0.0
    %7033 = vmatprep.subr.mxu0 0.0
    %7034 = vmatpush1.msra.mxu0 0.0
    %7035 = vmatprep.subr.mxu0 0.0
    %7036 = vmatpush1.msra.mxu0 0.0
    %7037 = vmatprep.subr.mxu0 0.0
    %7038 = vmatpush1.msra.mxu0 0.0
    %7039 = vmatprep.subr.mxu0 0.0
    %7040 = vmatpush1.msra.mxu0 0.0
    %7041 = vmatprep.subr.mxu0 0.0
    %7042 = vmatpush1.msra.mxu0 0.0
    %7043 = vmatprep.subr.mxu0 0.0
    %7044 = vmatpush1.msra.mxu0 0.0
    %7045 = vmatprep.subr.mxu0 0.0
    %7046 = vmatpush1.msra.mxu0 0.0
    %7047 = vmatprep.subr.mxu0 0.0
    %7048 = vmatpush1.msra.mxu0 0.0
    %7049 = vmatprep.subr.mxu0 0.0
    %v7050 = vand.u32 %v6825, 4294901760
    %v7051 = vsub.f32 %v6825, %v7050
    %7052 = vmatpush1.msra.mxu0 %v7051
    %7053 = vmatprep.subr.mxu0 0.0
    %v7054 = vand.u32 %v6824, 4294901760
    %v7055 = vsub.f32 %v6824, %v7054
    %7056 = vmatpush1.msra.mxu0 %v7055
    %7057 = vmatprep.subr.mxu0 0.0
    %v7058 = vand.u32 %v6823, 4294901760
    %v7059 = vsub.f32 %v6823, %v7058
    %7060 = vmatpush1.msra.mxu0 %v7059
    %7061 = vmatprep.subr.mxu0 0.0
    %v7062 = vand.u32 %v6822, 4294901760
    %v7063 = vsub.f32 %v6822, %v7062
    %7064 = vmatpush1.msra.mxu0 %v7063
    %7065 = vmatprep.subr.mxu0 0.0
    %7066 = vmatpush2.msra.mxu0 0.0
    %7067 = vmatprep.subr.mxu0 0.0
    %7068 = vmatpush2.msra.mxu0 0.0
    %7069 = vmatprep.subr.mxu0 0.0
    %7070 = vmatpush2.msra.mxu0 0.0
    %7071 = vmatprep.subr.mxu0 0.0
    %7072 = vmatpush2.msra.mxu0 0.0
    %7073 = vmatprep.subr.mxu0 0.0
    %7074 = vmatpush2.msra.mxu0 0.0
    %7075 = vmatprep.subr.mxu0 0.0
    %7076 = vmatpush2.msra.mxu0 0.0
    %7077 = vmatprep.subr.mxu0 0.0
    %7078 = vmatpush2.msra.mxu0 0.0
    %7079 = vmatprep.subr.mxu0 0.0
    %7080 = vmatpush2.msra.mxu0 0.0
    %7081 = vmatprep.subr.mxu0 0.0
    %7082 = vmatpush2.msra.mxu0 0.0
    %7083 = vmatprep.subr.mxu0 0.0
    %7084 = vmatpush2.msra.mxu0 0.0
    %7085 = vmatprep.subr.mxu0 0.0
    %7086 = vmatpush2.msra.mxu0 0.0
    %7087 = vmatprep.subr.mxu0 0.0
    %7088 = vmatpush2.msra.mxu0 0.0
    %7089 = vmatprep.subr.mxu0 0.0
    %7090 = vmatpush2.msra.mxu0 0.0
    %7091 = vmatprep.subr.mxu0 0.0
    %7092 = vmatpush2.msra.mxu0 0.0
    %7093 = vmatprep.subr.mxu0 0.0
    %7094 = vmatpush2.msra.mxu0 0.0
    %7095 = vmatprep.subr.mxu0 0.0
    %7096 = vmatpush2.msra.mxu0 0.0
    %7097 = vmatprep.mubr.f32.mxu0 0.0
    %v7098 = vand.u32 %v6834, 4294901760
    %v7099 = vsub.f32 %v6834, %v7098
    %7100 = vmatmul.mubr.f32.gmra.mxu0 %v7099
    %v7101 = vpop.f32.mrf.mxu0
    %v7102 = vadd.f32 %v7016, %v7101
    %v7103 = vpop.f32.mrf.mxu0
    %7104 = vmatprep.mubr.f32.mxu0 0.0
    %v7105 = vand.u32 %v6837, 4294901760
    %v7106 = vsub.f32 %v6837, %v7105
    %7107 = vmatmul.mubr.f32.gmra.mxu0 %v7106
    %v7108 = vpop.f32.mrf.mxu0
    %v7109 = vadd.f32 %v7022, %v7108
    %v7110 = vpop.f32.mrf.mxu0
    %7111 = vdwg.mxu0
    %7112 = vmatprep.subr.mxu0 0.0
    %7113 = vmatpush1.msra.mxu0 0.0
    %7114 = vmatprep.subr.mxu0 0.0
    %7115 = vmatpush1.msra.mxu0 0.0
    %7116 = vmatprep.subr.mxu0 0.0
    %7117 = vmatpush1.msra.mxu0 0.0
    %7118 = vmatprep.subr.mxu0 0.0
    %7119 = vmatpush1.msra.mxu0 0.0
    %7120 = vmatprep.subr.mxu0 0.0
    %7121 = vmatpush1.msra.mxu0 0.0
    %7122 = vmatprep.subr.mxu0 0.0
    %7123 = vmatpush1.msra.mxu0 0.0
    %7124 = vmatprep.subr.mxu0 0.0
    %7125 = vmatpush1.msra.mxu0 0.0
    %7126 = vmatprep.subr.mxu0 0.0
    %7127 = vmatpush1.msra.mxu0 0.0
    %7128 = vmatprep.subr.mxu0 0.0
    %7129 = vmatpush1.msra.mxu0 0.0
    %7130 = vmatprep.subr.mxu0 0.0
    %7131 = vmatpush1.msra.mxu0 0.0
    %7132 = vmatprep.subr.mxu0 0.0
    %7133 = vmatpush1.msra.mxu0 0.0
    %7134 = vmatprep.subr.mxu0 0.0
    %7135 = vmatpush1.msra.mxu0 0.0
    %7136 = vmatprep.subr.mxu0 0.0
    %v7137 = vand.u32 %v6825, 4294901760
    %7138 = vmatpush1.msra.mxu0 %v7137
    %7139 = vmatprep.subr.mxu0 0.0
    %v7140 = vand.u32 %v6824, 4294901760
    %7141 = vmatpush1.msra.mxu0 %v7140
    %7142 = vmatprep.subr.mxu0 0.0
    %v7143 = vand.u32 %v6823, 4294901760
    %7144 = vmatpush1.msra.mxu0 %v7143
    %7145 = vmatprep.subr.mxu0 0.0
    %v7146 = vand.u32 %v6822, 4294901760
    %7147 = vmatpush1.msra.mxu0 %v7146
    %7148 = vmatprep.subr.mxu0 0.0
    %7149 = vmatpush2.msra.mxu0 0.0
    %7150 = vmatprep.subr.mxu0 0.0
    %7151 = vmatpush2.msra.mxu0 0.0
    %7152 = vmatprep.subr.mxu0 0.0
    %7153 = vmatpush2.msra.mxu0 0.0
    %7154 = vmatprep.subr.mxu0 0.0
    %7155 = vmatpush2.msra.mxu0 0.0
    %7156 = vmatprep.subr.mxu0 0.0
    %7157 = vmatpush2.msra.mxu0 0.0
    %7158 = vmatprep.subr.mxu0 0.0
    %7159 = vmatpush2.msra.mxu0 0.0
    %7160 = vmatprep.subr.mxu0 0.0
    %7161 = vmatpush2.msra.mxu0 0.0
    %7162 = vmatprep.subr.mxu0 0.0
    %7163 = vmatpush2.msra.mxu0 0.0
    %7164 = vmatprep.subr.mxu0 0.0
    %7165 = vmatpush2.msra.mxu0 0.0
    %7166 = vmatprep.subr.mxu0 0.0
    %7167 = vmatpush2.msra.mxu0 0.0
    %7168 = vmatprep.subr.mxu0 0.0
    %7169 = vmatpush2.msra.mxu0 0.0
    %7170 = vmatprep.subr.mxu0 0.0
    %7171 = vmatpush2.msra.mxu0 0.0
    %7172 = vmatprep.subr.mxu0 0.0
    %7173 = vmatpush2.msra.mxu0 0.0
    %7174 = vmatprep.subr.mxu0 0.0
    %7175 = vmatpush2.msra.mxu0 0.0
    %7176 = vmatprep.subr.mxu0 0.0
    %7177 = vmatpush2.msra.mxu0 0.0
    %7178 = vmatprep.subr.mxu0 0.0
    %7179 = vmatpush2.msra.mxu0 0.0
    %7180 = vmatprep.mubr.f32.mxu0 0.0
    %v7181 = vand.u32 %v6834, 4294901760
    %v7182 = vsub.f32 %v6834, %v7181
    %v7183 = vand.u32 %v7182, 4294901760
    %7184 = vmatmul.mubr.f32.gmra.mxu0 %v7183
    %v7185 = vpop.f32.mrf.mxu0
    %v7186 = vadd.f32 %v7102, %v7185
    %v7187 = vpop.f32.mrf.mxu0
    %7188 = vmatprep.mubr.f32.mxu0 0.0
    %v7189 = vand.u32 %v6837, 4294901760
    %v7190 = vsub.f32 %v6837, %v7189
    %v7191 = vand.u32 %v7190, 4294901760
    %7192 = vmatmul.mubr.f32.gmra.mxu0 %v7191
    %v7193 = vpop.f32.mrf.mxu0
    %v7194 = vadd.f32 %v7109, %v7193
    %v7195 = vpop.f32.mrf.mxu0
    %7196 = vdwg.mxu0
    %7197 = vmatprep.subr.mxu0 0.0
    %7198 = vmatpush1.msra.mxu0 0.0
    %7199 = vmatprep.subr.mxu0 0.0
    %7200 = vmatpush1.msra.mxu0 0.0
    %7201 = vmatprep.subr.mxu0 0.0
    %7202 = vmatpush1.msra.mxu0 0.0
    %7203 = vmatprep.subr.mxu0 0.0
    %7204 = vmatpush1.msra.mxu0 0.0
    %7205 = vmatprep.subr.mxu0 0.0
    %7206 = vmatpush1.msra.mxu0 0.0
    %7207 = vmatprep.subr.mxu0 0.0
    %7208 = vmatpush1.msra.mxu0 0.0
    %7209 = vmatprep.subr.mxu0 0.0
    %7210 = vmatpush1.msra.mxu0 0.0
    %7211 = vmatprep.subr.mxu0 0.0
    %7212 = vmatpush1.msra.mxu0 0.0
    %7213 = vmatprep.subr.mxu0 0.0
    %7214 = vmatpush1.msra.mxu0 0.0
    %7215 = vmatprep.subr.mxu0 0.0
    %7216 = vmatpush1.msra.mxu0 0.0
    %7217 = vmatprep.subr.mxu0 0.0
    %7218 = vmatpush1.msra.mxu0 0.0
    %7219 = vmatprep.subr.mxu0 0.0
    %7220 = vmatpush1.msra.mxu0 0.0
    %7221 = vmatprep.subr.mxu0 0.0
    %v7222 = vand.u32 %v6825, 4294901760
    %v7223 = vsub.f32 %v6825, %v7222
    %v7224 = vand.u32 %v7223, 4294901760
    %7225 = vmatpush1.msra.mxu0 %v7224
    %7226 = vmatprep.subr.mxu0 0.0
    %v7227 = vand.u32 %v6824, 4294901760
    %v7228 = vsub.f32 %v6824, %v7227
    %v7229 = vand.u32 %v7228, 4294901760
    %7230 = vmatpush1.msra.mxu0 %v7229
    %7231 = vmatprep.subr.mxu0 0.0
    %v7232 = vand.u32 %v6823, 4294901760
    %v7233 = vsub.f32 %v6823, %v7232
    %v7234 = vand.u32 %v7233, 4294901760
    %7235 = vmatpush1.msra.mxu0 %v7234
    %7236 = vmatprep.subr.mxu0 0.0
    %v7237 = vand.u32 %v6822, 4294901760
    %v7238 = vsub.f32 %v6822, %v7237
    %v7239 = vand.u32 %v7238, 4294901760
    %7240 = vmatpush1.msra.mxu0 %v7239
    %7241 = vmatprep.subr.mxu0 0.0
    %7242 = vmatpush2.msra.mxu0 0.0
    %7243 = vmatprep.subr.mxu0 0.0
    %7244 = vmatpush2.msra.mxu0 0.0
    %7245 = vmatprep.subr.mxu0 0.0
    %7246 = vmatpush2.msra.mxu0 0.0
    %7247 = vmatprep.subr.mxu0 0.0
    %7248 = vmatpush2.msra.mxu0 0.0
    %7249 = vmatprep.subr.mxu0 0.0
    %7250 = vmatpush2.msra.mxu0 0.0
    %7251 = vmatprep.subr.mxu0 0.0
    %7252 = vmatpush2.msra.mxu0 0.0
    %7253 = vmatprep.subr.mxu0 0.0
    %7254 = vmatpush2.msra.mxu0 0.0
    %7255 = vmatprep.subr.mxu0 0.0
    %7256 = vmatpush2.msra.mxu0 0.0
    %7257 = vmatprep.subr.mxu0 0.0
    %7258 = vmatpush2.msra.mxu0 0.0
    %7259 = vmatprep.subr.mxu0 0.0
    %7260 = vmatpush2.msra.mxu0 0.0
    %7261 = vmatprep.subr.mxu0 0.0
    %7262 = vmatpush2.msra.mxu0 0.0
    %7263 = vmatprep.subr.mxu0 0.0
    %7264 = vmatpush2.msra.mxu0 0.0
    %7265 = vmatprep.subr.mxu0 0.0
    %7266 = vmatpush2.msra.mxu0 0.0
    %7267 = vmatprep.subr.mxu0 0.0
    %7268 = vmatpush2.msra.mxu0 0.0
    %7269 = vmatprep.subr.mxu0 0.0
    %7270 = vmatpush2.msra.mxu0 0.0
    %7271 = vmatprep.subr.mxu0 0.0
    %7272 = vmatpush2.msra.mxu0 0.0
    %7273 = vmatprep.mubr.f32.mxu0 0.0
    %v7274 = vand.u32 %v6834, 4294901760
    %7275 = vmatmul.mubr.f32.gmra.mxu0 %v7274
    %v7276 = vpop.f32.mrf.mxu0
    %v7277 = vadd.f32 %v7186, %v7276
    %v7278 = vpop.f32.mrf.mxu0
    %7279 = vmatprep.mubr.f32.mxu0 0.0
    %v7280 = vand.u32 %v6837, 4294901760
    %7281 = vmatmul.mubr.f32.gmra.mxu0 %v7280
    %v7282 = vpop.f32.mrf.mxu0
    %v7283 = vadd.f32 %v7194, %v7282
    %v7284 = vpop.f32.mrf.mxu0
    %7285 = vdwg.mxu0
    %7286 = vmatprep.subr.mxu0 0.0
    %7287 = vmatpush1.msra.mxu0 0.0
    %7288 = vmatprep.subr.mxu0 0.0
    %7289 = vmatpush1.msra.mxu0 0.0
    %7290 = vmatprep.subr.mxu0 0.0
    %7291 = vmatpush1.msra.mxu0 0.0
    %7292 = vmatprep.subr.mxu0 0.0
    %7293 = vmatpush1.msra.mxu0 0.0
    %7294 = vmatprep.subr.mxu0 0.0
    %7295 = vmatpush1.msra.mxu0 0.0
    %7296 = vmatprep.subr.mxu0 0.0
    %7297 = vmatpush1.msra.mxu0 0.0
    %7298 = vmatprep.subr.mxu0 0.0
    %7299 = vmatpush1.msra.mxu0 0.0
    %7300 = vmatprep.subr.mxu0 0.0
    %7301 = vmatpush1.msra.mxu0 0.0
    %7302 = vmatprep.subr.mxu0 0.0
    %7303 = vmatpush1.msra.mxu0 0.0
    %7304 = vmatprep.subr.mxu0 0.0
    %7305 = vmatpush1.msra.mxu0 0.0
    %7306 = vmatprep.subr.mxu0 0.0
    %7307 = vmatpush1.msra.mxu0 0.0
    %7308 = vmatprep.subr.mxu0 0.0
    %7309 = vmatpush1.msra.mxu0 0.0
    %7310 = vmatprep.subr.mxu0 0.0
    %v7311 = vand.u32 %v6825, 4294901760
    %7312 = vmatpush1.msra.mxu0 %v7311
    %7313 = vmatprep.subr.mxu0 0.0
    %v7314 = vand.u32 %v6824, 4294901760
    %7315 = vmatpush1.msra.mxu0 %v7314
    %7316 = vmatprep.subr.mxu0 0.0
    %v7317 = vand.u32 %v6823, 4294901760
    %7318 = vmatpush1.msra.mxu0 %v7317
    %7319 = vmatprep.subr.mxu0 0.0
    %v7320 = vand.u32 %v6822, 4294901760
    %7321 = vmatpush1.msra.mxu0 %v7320
    %7322 = vmatprep.subr.mxu0 0.0
    %7323 = vmatpush2.msra.mxu0 0.0
    %7324 = vmatprep.subr.mxu0 0.0
    %7325 = vmatpush2.msra.mxu0 0.0
    %7326 = vmatprep.subr.mxu0 0.0
    %7327 = vmatpush2.msra.mxu0 0.0
    %7328 = vmatprep.subr.mxu0 0.0
    %7329 = vmatpush2.msra.mxu0 0.0
    %7330 = vmatprep.subr.mxu0 0.0
    %7331 = vmatpush2.msra.mxu0 0.0
    %7332 = vmatprep.subr.mxu0 0.0
    %7333 = vmatpush2.msra.mxu0 0.0
    %7334 = vmatprep.subr.mxu0 0.0
    %7335 = vmatpush2.msra.mxu0 0.0
    %7336 = vmatprep.subr.mxu0 0.0
    %7337 = vmatpush2.msra.mxu0 0.0
    %7338 = vmatprep.subr.mxu0 0.0
    %7339 = vmatpush2.msra.mxu0 0.0
    %7340 = vmatprep.subr.mxu0 0.0
    %7341 = vmatpush2.msra.mxu0 0.0
    %7342 = vmatprep.subr.mxu0 0.0
    %7343 = vmatpush2.msra.mxu0 0.0
    %7344 = vmatprep.subr.mxu0 0.0
    %7345 = vmatpush2.msra.mxu0 0.0
    %7346 = vmatprep.subr.mxu0 0.0
    %7347 = vmatpush2.msra.mxu0 0.0
    %7348 = vmatprep.subr.mxu0 0.0
    %7349 = vmatpush2.msra.mxu0 0.0
    %7350 = vmatprep.subr.mxu0 0.0
    %7351 = vmatpush2.msra.mxu0 0.0
    %7352 = vmatprep.subr.mxu0 0.0
    %7353 = vmatpush2.msra.mxu0 0.0
    %7354 = vmatprep.mubr.f32.mxu0 0.0
    %v7355 = vand.u32 %v6834, 4294901760
    %7356 = vmatmul.mubr.f32.gmra.mxu0 %v7355
    %v7357 = vpop.f32.mrf.mxu0
    %v7358 = vadd.f32 %v7277, %v7357
    %v7359 = vpop.f32.mrf.mxu0
    %7360 = vmatprep.mubr.f32.mxu0 0.0
    %v7361 = vand.u32 %v6837, 4294901760
    %7362 = vmatmul.mubr.f32.gmra.mxu0 %v7361
    %v7363 = vpop.f32.mrf.mxu0
    %v7364 = vadd.f32 %v7283, %v7363
    %v7365 = vpop.f32.mrf.mxu0
    %7366 = vdwg.mxu0
    %vm7367 = vcmp.ge.f32.partialorder %v7358, 0.0
    %vm7368 = vcmp.ge.f32.partialorder %v7364, 0.0
    %v7369 = vmul.f32 %v7358, 0.1
    %v7370 = vmul.f32 %v7364, 0.1
    %v7371 = vsel %vm7367, %v7358, %v7369
    %v7372 = vsel %vm7368, %v7364, %v7370
    %7373 = vst.msk [vmem:[#allocation2] sm:$0xff] %vm1995, %v7371
    %7374 = vst.msk [vmem:[#allocation2 + $0x8] sm:$0xff] %vm1995, %v7372
    // Predicated region
    $region54: #{tpu_custom_call.1} parent=1 // pred_check
      _
    $region55: #{tpu_custom_call.1} parent=1 // pred_check_branch
      %7376 = sbr.rel (0) target = $region57
    $region56: #{tpu_custom_call.1} parent=1 // pred_region
      %s7378 = ssub.s32 256, 256
      %7379 = vsyncadd [#allocation3], %s7378
      %s7380 = sshll.u32 [#allocation2], 4
      %s7381 = int_to_ptr.vmem [resolvable:$true] %s7380
      %7386 = dma.vmem_to_hbm [thread:$0]  %s7381, 256, %s13, [#allocation3], 128, 128, 8
    $region57: #{tpu_custom_call.1} parent=1 // pred_fallthru
      _
    // Predicated region
    $region58: #{tpu_custom_call.1} parent=1 // pred_check
      _
    $region59: #{tpu_custom_call.1} parent=1 // pred_check_branch
      %7388 = sbr.rel (0) target = $region61
    $region60: #{tpu_custom_call.1} parent=1 // pred_region
      %7389 = dma.done [#allocation3], 256
    $region61: #{tpu_custom_call.1} parent=1 // pred_fallthru
      _
    %7390 = vsyncpa [#allocation3], 1

</llo_original>
